<compile_context>
chip_gen: v7x
topology: tpu7x:2x2x1
jax: 0.10.0
libtpu: 0.0.40
codegen_flags: <defaults>
</compile_context>

<pallas_src>
import jax
import jax.numpy as jnp
from jax.experimental import pallas as pl
from jax.experimental.pallas import tpu as pltpu

BN_EPS = 1e-5


# ---------------------------------------------------------------------------
# Kernel 1: all PCBHighDivModule heads fused + in-kernel adaptive pooling.
# One batch element per grid step (grid axis is "parallel"; for large batches
# this naturally feeds both v7x TensorCores — row tiling only becomes useful
# once B*HW grows far beyond the MXU height).
# ---------------------------------------------------------------------------
def _make_pcb_fused_kernel(orders, ci, part, seg):
    def kernel(x_ref, wo_ref, wb_ref, pooled_ref):
        x = x_ref[0]                                   # (HW, C) f32
        xb = x.astype(jnp.bfloat16)
        hw, c = x.shape
        # ONE wide MXU matmul for every order-conv of every head (column-full).
        y_all = jnp.dot(xb, wo_ref[...],
                        preferred_element_type=jnp.float32)        # (HW, Mtot*ci)
        col = 0        # static column cursor (units of ci) into y_all
        prod_idx = 0   # static index into the stacked convb weights
        for h, order in enumerate(orders):
            gate = None
            for j in range(order):
                prod = y_all[:, col * ci:(col + 1) * ci]           # lane-aligned slice
                col += 1
                for _ in range(j):
                    prod = prod * y_all[:, col * ci:(col + 1) * ci]
                    col += 1
                prod = jnp.maximum(prod, 0.0)                      # ReLU (f32)
                g = jnp.dot(prod.astype(jnp.bfloat16), wb_ref[prod_idx],
                            preferred_element_type=jnp.float32)    # (HW, C)
                prod_idx += 1
                s = jax.nn.sigmoid(g)
                gate = s if gate is None else gate + s
            out_h = x * gate * (1.0 / order)                       # residual gate (f32)
            # AdaptiveAvgPool2d((part, 1)): mean over each contiguous stripe of
            # `seg` = (H // part) * W rows (HW is H-major, so stripes are contiguous
            # and seg is a multiple of 8 -> tile-aligned reshape).
            pooled = jnp.mean(out_h.reshape(part, seg, c), axis=1)  # (part, C)
            pooled_ref[0, h] = pooled.astype(pooled_ref.dtype)

    return kernel


def pcb_heads_pooled(x_bnc, wo_all, wb_all, orders, part, seg):
    """x_bnc: [B, HW, C] f32.  wo_all: [C, Mtot*Ci] bf16.  wb_all: [Nprod, Ci, C] bf16.
    Returns pooled features [B, n_heads, part, C] f32 (full feature never hits HBM)."""
    B, HW, C = x_bnc.shape
    n_heads = len(orders)
    Mci = wo_all.shape[1]
    n_prod, ci, _ = wb_all.shape
    return pl.pallas_call(
        _make_pcb_fused_kernel(orders, ci, part, seg),
        out_shape=jax.ShapeDtypeStruct((B, n_heads, part, C), jnp.float32),
        grid_spec=pltpu.PrefetchScalarGridSpec(
            num_scalar_prefetch=0,
            grid=(B,),
            in_specs=[
                pl.BlockSpec((1, HW, C), lambda b: (b, 0, 0)),
                pl.BlockSpec((C, Mci), lambda b: (0, 0)),          # fused order-conv weights
                pl.BlockSpec((n_prod, ci, C), lambda b: (0, 0, 0)),  # stacked convb weights
            ],
            out_specs=pl.BlockSpec((1, n_heads, part, C), lambda b: (b, 0, 0, 0)),
        ),
        compiler_params=pltpu.CompilerParams(
            dimension_semantics=("parallel",)),
    )(x_bnc, wo_all, wb_all)


# ---------------------------------------------------------------------------
# Kernel 2: classification head, one pooling stripe (part) per grid step:
#   fc_i (BN1d pre-folded) -> F.normalize*20 (rsqrt) ->
#   all `parts` classifiers in one lane-dense (H1, parts*Kp) matmul.
# ---------------------------------------------------------------------------
def _make_head_kernel(parts, b_per_group, kp):
    def kernel(f_ref, w1_ref, b1_ref, w2_ref, b2_ref, fea_ref, y_ref):
        f = f_ref[0]                                                # (Bc, C) pooled, f32
        h = jnp.dot(f.astype(jnp.bfloat16), w1_ref[0],
                    preferred_element_type=jnp.float32) + b1_ref[0]  # (Bc, H1)

        # F.normalize(dim=1) * 20 via rsqrt (EUP slot, co-issues with the matmuls)
        sumsq = jnp.sum(h * h, axis=-1, keepdims=True)
        fea = h * (20.0 * jax.lax.rsqrt(jnp.maximum(sumsq, 1e-24)))
        fea_ref[0] = fea.astype(fea_ref.dtype)

        # All `parts` classifiers as ONE matmul; class_num padded to kp=128 lanes.
        y_all = jnp.dot(fea.astype(jnp.bfloat16), w2_ref[0],
                        preferred_element_type=jnp.float32) + b2_ref[0]  # (Bc, parts*kp)
        bc = fea.shape[0]
        row = jax.lax.broadcasted_iota(jnp.int32, (bc, kp), 0)
        y_out = jnp.zeros((bc, kp), jnp.float32)
        for g in range(parts):
            yg = y_all[:, g * kp:(g + 1) * kp]                      # lane-aligned slice
            mask = (row >= g * b_per_group) & (row < (g + 1) * b_per_group)
            y_out = jnp.where(mask, yg, y_out)
        y_ref[0] = y_out.astype(y_ref.dtype)                        # unmasked 128-lane store

    return kernel


def head_apply(pooled_pbc, w1, b1, w2, b2, parts, b_per_group, kp):
    """pooled_pbc: [part, Bc, C] f32 (Bc = parts*B, head-major like torch.cat(x_, 0)).
    Returns (fea [part, Bc, H1], y [part, Bc, kp])."""
    P, Bc, C = pooled_pbc.shape
    H1 = w1.shape[-1]
    return pl.pallas_call(
        _make_head_kernel(parts, b_per_group, kp),
        out_shape=(jax.ShapeDtypeStruct((P, Bc, H1), jnp.float32),
                   jax.ShapeDtypeStruct((P, Bc, kp), jnp.float32)),
        grid_spec=pltpu.PrefetchScalarGridSpec(
            num_scalar_prefetch=0,
            grid=(P,),
            in_specs=[
                pl.BlockSpec((1, Bc, C), lambda p: (p, 0, 0)),        # pooled stripe p
                pl.BlockSpec((1, C, H1), lambda p: (p, 0, 0)),        # fc_p weight (BN folded)
                pl.BlockSpec((1, 1, H1), lambda p: (p, 0, 0)),        # fc_p bias
                pl.BlockSpec((1, H1, parts * kp), lambda p: (p, 0, 0)),  # fused classifiers
                pl.BlockSpec((1, 1, parts * kp), lambda p: (p, 0, 0)),
            ],
            out_specs=[pl.BlockSpec((1, Bc, H1), lambda p: (p, 0, 0)),
                       pl.BlockSpec((1, Bc, kp), lambda p: (p, 0, 0))],
        ),
        compiler_params=pltpu.CompilerParams(
            dimension_semantics=("parallel",)),
    )(pooled_pbc, w1, b1, w2, b2)


# ---------------------------------------------------------------------------
# Deterministic (synthetic) parameter construction following the module's init.
# ---------------------------------------------------------------------------
def make_pcb_params(key, orders, cin):
    ci = cin // 8 * 2
    std_o = (2.0 / cin) ** 0.5      # kaiming fan_in for 1x1 conv cin -> ci
    std_b = (2.0 / ci) ** 0.5       # kaiming fan_in for 1x1 conv ci -> cin
    wo_list, wb_list = [], []
    for order in orders:
        m = order * (order + 1) // 2
        key, ko, kb = jax.random.split(key, 3)
        wo_list.append(std_o * jax.random.normal(ko, (m, cin, ci)))   # per-weight [in, out]
        wb_list.append(std_b * jax.random.normal(kb, (order, ci, cin)))
    # fuse every order-conv of every head into one wide [cin, Mtot*ci] matrix
    wo_all = jnp.concatenate(
        [w.transpose(1, 0, 2).reshape(cin, -1) for w in wo_list], axis=1
    ).astype(jnp.bfloat16)
    wb_all = jnp.concatenate(wb_list, axis=0).astype(jnp.bfloat16)    # [Nprod, ci, cin]
    return wo_all, wb_all, key


def make_head_params(key, part, parts, c_in, hidden, class_num, kp):
    w1_list, b1_list, w2_list, b2_list = [], [], [], []
    for _ in range(part):
        key, k1, kbn = jax.random.split(key, 3)
        # fc: Linear(c_in, hidden), kaiming fan_out (std = sqrt(2/hidden)), bias 0
        w1 = (2.0 / hidden) ** 0.5 * jax.random.normal(k1, (hidden, c_in))
        # BatchNorm1d(hidden): gamma ~ N(1, 0.02), beta=0, running stats (0,1) (eval mode)
        gamma = 1.0 + 0.02 * jax.random.normal(kbn, (hidden,))
        beta = jnp.zeros((hidden,))
        mean = jnp.zeros((hidden,))
        var = jnp.ones((hidden,))
        scale = gamma * jax.lax.rsqrt(var + BN_EPS)          # fold eval-mode BN into Linear
        w1_list.append((w1 * scale[:, None]).T)              # (c_in, hidden)
        b1_list.append((beta + (0.0 - mean) * scale)[None, :])  # (1, hidden)
        w2_cols, b2_cols = [], []
        for _ in range(parts):
            key, kc = jax.random.split(key)
            w2 = 0.001 * jax.random.normal(kc, (class_num, hidden))   # classifier init
            w2p = jnp.zeros((hidden, kp)).at[:, :class_num].set(w2.T)  # pad K -> 128 lanes
            w2_cols.append(w2p)
            b2_cols.append(jnp.zeros((1, kp)))                          # bias 0 (padded)
        w2_list.append(jnp.concatenate(w2_cols, axis=1))      # (hidden, parts*kp)
        b2_list.append(jnp.concatenate(b2_cols, axis=1))      # (1, parts*kp)
    params = {
        "w1": jnp.stack(w1_list).astype(jnp.bfloat16),        # (part, c_in, hidden)
        "b1": jnp.stack(b1_list).astype(jnp.float32),         # (part, 1, hidden)
        "w2": jnp.stack(w2_list).astype(jnp.bfloat16),        # (part, hidden, parts*kp)
        "b2": jnp.stack(b2_list).astype(jnp.float32),         # (part, 1, parts*kp)
    }
    return params, key


def nchw_to_bnc(x_nchw):
    B, C, H, W = x_nchw.shape
    return jnp.transpose(x_nchw.reshape(B, C, H * W), (0, 2, 1))  # [B, HW, C]


# ---------------------------------------------------------------------------
if __name__ == "__main__":
    key = jax.random.PRNGKey(0)
    B = 2
    class_num = 10
    parts = 4            # number of PCBHighDivModule heads (orders 1..parts)
    part = 6             # number of vertical pooling stripes / fc branches
    in_channels = 512    # layer2 channel count (lane-dense: inter=128, hidden=256)
    hidden = 256
    K_PAD = 128          # class_num padded to a full lane tile for unmasked stores
    H, W = 12, 4         # small spatial stand-in
    # exact AdaptiveAvgPool2d((part,1)) equivalence needs H divisible by `part`
    assert H % part == 0, "H must be divisible by `part` for exact adaptive pooling"
    seg = (H // part) * W          # rows of HW per pooling stripe (multiple of 8 here)

    # TODO(synk): ResNet-50 conv1/bn1/maxpool/layer1/layer2 and layer3/layer4 are not
    # translated; the layer2 feature is synthesized and the 2048-channel stage is skipped.
    key, kx = jax.random.split(key)
    x2 = jax.random.normal(kx, (B, in_channels, H, W), jnp.float32)
    x2_bnc = nchw_to_bnc(x2)

    orders = tuple(range(1, parts + 1))
    wo_all, wb_all, key = make_pcb_params(key, orders, in_channels)
    head_params, key = make_head_params(key, part, parts, in_channels, hidden,
                                        class_num, K_PAD)

    # Kernel 1: 4 fused high-order heads + in-kernel adaptive pooling.
    pooled = pcb_heads_pooled(x2_bnc, wo_all, wb_all, orders, part, seg)  # (B, parts, part, C)

    # torch.cat(x_, 0): batch row of head h, sample b is h*B + b  ->  (part, parts*B, C)
    pooled_pbc = jnp.transpose(pooled, (2, 1, 0, 3)).reshape(part, parts * B, in_channels)

    # Kernel 2: dropout(p=0) is identity; fc(+folded BN1d) + normalize*20 + classifiers.
    fea_stack, y_stack = head_apply(pooled_pbc, head_params["w1"], head_params["b1"],
                                    head_params["w2"], head_params["b2"],
                                    parts, B, K_PAD)

    # Reassemble the PyTorch return structure:
    #   fea = [part x (parts*B, hidden)], y = [part*parts x (B, class_num)]
    #   with y[i*parts + j] = classifier_i_j(fea[i][j*B:(j+1)*B]).
    fea = [fea_stack[i] for i in range(part)]
    y = [y_stack[i, j * B:(j + 1) * B, :class_num]
         for i in range(part) for j in range(parts)]

    jax.block_until_ready((y, fea))
    assert len(y) == part * parts and y[0].shape == (B, class_num)
    assert len(fea) == part and fea[0].shape == (parts * B, hidden)
    print("KERNEL_OK")
</pallas_src>

<mosaic_0001>
module attributes {stable_mosaic.version = 11 : i64} {
  func.func @kernel(%arg0: i32, %arg1: memref<1x48x512xf32, #tpu.memory_space<vmem>>, %arg2: memref<512x2560xbf16, #tpu.memory_space<vmem>>, %arg3: memref<10x128x512xbf16, #tpu.memory_space<vmem>>, %arg4: memref<1x4x6x512xf32, #tpu.memory_space<vmem>>) attributes {dimension_semantics = [#tpu.dimension_semantics<parallel>], iteration_bounds = array<i64: 2>, scalar_prefetch = 0 : i64, scratch_operands = 0 : i64, tpu.core_type = #tpu.core_type<tc>, window_params = [{transform_indices = @transform_0, window_bounds = array<i64: 1, 48, 512>}, {pipeline_mode = #tpu.pipeline_mode<synchronous>, transform_indices = @transform_1, window_bounds = array<i64: 512, 2560>}, {pipeline_mode = #tpu.pipeline_mode<synchronous>, transform_indices = @transform_2, window_bounds = array<i64: 10, 128, 512>}, {transform_indices = @transform_3, window_bounds = array<i64: 1, 4, 6, 512>}]} {
    %c0 = arith.constant 0 : index
    %c0_0 = arith.constant 0 : index
    %c0_1 = arith.constant 0 : index
    %0 = vector.load %arg1[%c0, %c0_0, %c0_1] : memref<1x48x512xf32, #tpu.memory_space<vmem>>, vector<1x48x512xf32>
    %1 = vector.shape_cast %0 : vector<1x48x512xf32> to vector<48x512xf32>
    %2 = arith.truncf %1 : vector<48x512xf32> to vector<48x512xbf16>
    %c0_2 = arith.constant 0 : index
    %c0_3 = arith.constant 0 : index
    %3 = vector.load %arg2[%c0_2, %c0_3] : memref<512x2560xbf16, #tpu.memory_space<vmem>>, vector<512x2560xbf16>
    %cst = arith.constant dense<0.000000e+00> : vector<48x2560xf32>
    %4 = tpu.matmul %2, %3, %cst {dimension_numbers = #tpu.dot_dimension_numbers<[1], [0], [0], [1], [0, 0, 1, 1], [], []>} : vector<48x512xbf16>, vector<512x2560xbf16>, vector<48x2560xf32> -> vector<48x2560xf32>
    %5 = vector.extract_strided_slice %4 {offsets = [0, 0], sizes = [48, 128], strides = [1, 1]} : vector<48x2560xf32> to vector<48x128xf32>
    %cst_4 = arith.constant 0.000000e+00 : f32
    %6 = vector.broadcast %cst_4 : f32 to vector<48x128xf32>
    %7 = arith.maximumf %5, %6 : vector<48x128xf32>
    %8 = arith.truncf %7 : vector<48x128xf32> to vector<48x128xbf16>
    %c0_5 = arith.constant 0 : index
    %c0_6 = arith.constant 0 : index
    %c0_7 = arith.constant 0 : index
    %9 = vector.load %arg3[%c0_5, %c0_6, %c0_7] : memref<10x128x512xbf16, #tpu.memory_space<vmem>>, vector<1x128x512xbf16>
    %10 = vector.shape_cast %9 : vector<1x128x512xbf16> to vector<128x512xbf16>
    %cst_8 = arith.constant dense<0.000000e+00> : vector<48x512xf32>
    %11 = tpu.matmul %8, %10, %cst_8 {dimension_numbers = #tpu.dot_dimension_numbers<[1], [0], [0], [1], [0, 0, 1, 1], [], []>} : vector<48x128xbf16>, vector<128x512xbf16>, vector<48x512xf32> -> vector<48x512xf32>
    %12 = arith.negf %11 : vector<48x512xf32>
    %13 = math.exp %12 : vector<48x512xf32>
    %cst_9 = arith.constant 1.000000e+00 : f32
    %14 = vector.broadcast %cst_9 : f32 to vector<48x512xf32>
    %15 = arith.addf %14, %13 : vector<48x512xf32>
    %16 = arith.divf %14, %15 : vector<48x512xf32>
    %17 = arith.mulf %1, %16 : vector<48x512xf32>
    %cst_10 = arith.constant 1.000000e+00 : f32
    %18 = vector.broadcast %cst_10 : f32 to vector<48x512xf32>
    %19 = arith.mulf %17, %18 : vector<48x512xf32>
    %20 = vector.shape_cast %19 : vector<48x512xf32> to vector<6x8x512xf32>
    %cst_11 = arith.constant dense<0.000000e+00> : vector<6x512xf32>
    %21 = vector.multi_reduction <add>, %20, %cst_11 [1] : vector<6x8x512xf32> to vector<6x512xf32>
    %cst_12 = arith.constant 8.000000e+00 : f32
    %22 = vector.broadcast %cst_12 : f32 to vector<6x512xf32>
    %23 = arith.divf %21, %22 : vector<6x512xf32>
    %c0_13 = arith.constant 0 : index
    %c0_14 = arith.constant 0 : index
    %c0_15 = arith.constant 0 : index
    %c0_16 = arith.constant 0 : index
    %24 = vector.load %arg4[%c0_13, %c0_14, %c0_15, %c0_16] : memref<1x4x6x512xf32, #tpu.memory_space<vmem>>, vector<1x1x6x512xf32>
    %25 = vector.shape_cast %24 : vector<1x1x6x512xf32> to vector<6x512xf32>
    %26 = vector.shape_cast %23 : vector<6x512xf32> to vector<1x1x6x512xf32>
    tpu.vector_store %arg4[%c0_13, %c0_14, %c0_15, %c0_16], %26 {strides = array<i32>} : memref<1x4x6x512xf32, #tpu.memory_space<vmem>>, vector<1x1x6x512xf32>,
    %27 = vector.extract_strided_slice %4 {offsets = [0, 128], sizes = [48, 128], strides = [1, 1]} : vector<48x2560xf32> to vector<48x128xf32>
    %cst_17 = arith.constant 0.000000e+00 : f32
    %28 = vector.broadcast %cst_17 : f32 to vector<48x128xf32>
    %29 = arith.maximumf %27, %28 : vector<48x128xf32>
    %30 = arith.truncf %29 : vector<48x128xf32> to vector<48x128xbf16>
    %c1 = arith.constant 1 : index
    %c0_18 = arith.constant 0 : index
    %c0_19 = arith.constant 0 : index
    %31 = vector.load %arg3[%c1, %c0_18, %c0_19] : memref<10x128x512xbf16, #tpu.memory_space<vmem>>, vector<1x128x512xbf16>
    %32 = vector.shape_cast %31 : vector<1x128x512xbf16> to vector<128x512xbf16>
    %cst_20 = arith.constant dense<0.000000e+00> : vector<48x512xf32>
    %33 = tpu.matmul %30, %32, %cst_20 {dimension_numbers = #tpu.dot_dimension_numbers<[1], [0], [0], [1], [0, 0, 1, 1], [], []>} : vector<48x128xbf16>, vector<128x512xbf16>, vector<48x512xf32> -> vector<48x512xf32>
    %34 = arith.negf %33 : vector<48x512xf32>
    %35 = math.exp %34 : vector<48x512xf32>
    %cst_21 = arith.constant 1.000000e+00 : f32
    %36 = vector.broadcast %cst_21 : f32 to vector<48x512xf32>
    %37 = arith.addf %36, %35 : vector<48x512xf32>
    %38 = arith.divf %36, %37 : vector<48x512xf32>
    %39 = vector.extract_strided_slice %4 {offsets = [0, 256], sizes = [48, 128], strides = [1, 1]} : vector<48x2560xf32> to vector<48x128xf32>
    %40 = vector.extract_strided_slice %4 {offsets = [0, 384], sizes = [48, 128], strides = [1, 1]} : vector<48x2560xf32> to vector<48x128xf32>
    %41 = arith.mulf %39, %40 : vector<48x128xf32>
    %cst_22 = arith.constant 0.000000e+00 : f32
    %42 = vector.broadcast %cst_22 : f32 to vector<48x128xf32>
    %43 = arith.maximumf %41, %42 : vector<48x128xf32>
    %44 = arith.truncf %43 : vector<48x128xf32> to vector<48x128xbf16>
    %c2 = arith.constant 2 : index
    %c0_23 = arith.constant 0 : index
    %c0_24 = arith.constant 0 : index
    %45 = vector.load %arg3[%c2, %c0_23, %c0_24] : memref<10x128x512xbf16, #tpu.memory_space<vmem>>, vector<1x128x512xbf16>
    %46 = vector.shape_cast %45 : vector<1x128x512xbf16> to vector<128x512xbf16>
    %cst_25 = arith.constant dense<0.000000e+00> : vector<48x512xf32>
    %47 = tpu.matmul %44, %46, %cst_25 {dimension_numbers = #tpu.dot_dimension_numbers<[1], [0], [0], [1], [0, 0, 1, 1], [], []>} : vector<48x128xbf16>, vector<128x512xbf16>, vector<48x512xf32> -> vector<48x512xf32>
    %48 = arith.negf %47 : vector<48x512xf32>
    %49 = math.exp %48 : vector<48x512xf32>
    %cst_26 = arith.constant 1.000000e+00 : f32
    %50 = vector.broadcast %cst_26 : f32 to vector<48x512xf32>
    %51 = arith.addf %50, %49 : vector<48x512xf32>
    %52 = arith.divf %50, %51 : vector<48x512xf32>
    %53 = arith.addf %38, %52 : vector<48x512xf32>
    %54 = arith.mulf %1, %53 : vector<48x512xf32>
    %cst_27 = arith.constant 5.000000e-01 : f32
    %55 = vector.broadcast %cst_27 : f32 to vector<48x512xf32>
    %56 = arith.mulf %54, %55 : vector<48x512xf32>
    %57 = vector.shape_cast %56 : vector<48x512xf32> to vector<6x8x512xf32>
    %cst_28 = arith.constant dense<0.000000e+00> : vector<6x512xf32>
    %58 = vector.multi_reduction <add>, %57, %cst_28 [1] : vector<6x8x512xf32> to vector<6x512xf32>
    %cst_29 = arith.constant 8.000000e+00 : f32
    %59 = vector.broadcast %cst_29 : f32 to vector<6x512xf32>
    %60 = arith.divf %58, %59 : vector<6x512xf32>
    %c0_30 = arith.constant 0 : index
    %c1_31 = arith.constant 1 : index
    %c0_32 = arith.constant 0 : index
    %c0_33 = arith.constant 0 : index
    %61 = vector.load %arg4[%c0_30, %c1_31, %c0_32, %c0_33] : memref<1x4x6x512xf32, #tpu.memory_space<vmem>>, vector<1x1x6x512xf32>
    %62 = vector.shape_cast %61 : vector<1x1x6x512xf32> to vector<6x512xf32>
    %63 = vector.shape_cast %60 : vector<6x512xf32> to vector<1x1x6x512xf32>
    tpu.vector_store %arg4[%c0_30, %c1_31, %c0_32, %c0_33], %63 {strides = array<i32>} : memref<1x4x6x512xf32, #tpu.memory_space<vmem>>, vector<1x1x6x512xf32>,
    %64 = vector.extract_strided_slice %4 {offsets = [0, 512], sizes = [48, 128], strides = [1, 1]} : vector<48x2560xf32> to vector<48x128xf32>
    %cst_34 = arith.constant 0.000000e+00 : f32
    %65 = vector.broadcast %cst_34 : f32 to vector<48x128xf32>
    %66 = arith.maximumf %64, %65 : vector<48x128xf32>
    %67 = arith.truncf %66 : vector<48x128xf32> to vector<48x128xbf16>
    %c3 = arith.constant 3 : index
    %c0_35 = arith.constant 0 : index
    %c0_36 = arith.constant 0 : index
    %68 = vector.load %arg3[%c3, %c0_35, %c0_36] : memref<10x128x512xbf16, #tpu.memory_space<vmem>>, vector<1x128x512xbf16>
    %69 = vector.shape_cast %68 : vector<1x128x512xbf16> to vector<128x512xbf16>
    %cst_37 = arith.constant dense<0.000000e+00> : vector<48x512xf32>
    %70 = tpu.matmul %67, %69, %cst_37 {dimension_numbers = #tpu.dot_dimension_numbers<[1], [0], [0], [1], [0, 0, 1, 1], [], []>} : vector<48x128xbf16>, vector<128x512xbf16>, vector<48x512xf32> -> vector<48x512xf32>
    %71 = arith.negf %70 : vector<48x512xf32>
    %72 = math.exp %71 : vector<48x512xf32>
    %cst_38 = arith.constant 1.000000e+00 : f32
    %73 = vector.broadcast %cst_38 : f32 to vector<48x512xf32>
    %74 = arith.addf %73, %72 : vector<48x512xf32>
    %75 = arith.divf %73, %74 : vector<48x512xf32>
    %76 = vector.extract_strided_slice %4 {offsets = [0, 640], sizes = [48, 128], strides = [1, 1]} : vector<48x2560xf32> to vector<48x128xf32>
    %77 = vector.extract_strided_slice %4 {offsets = [0, 768], sizes = [48, 128], strides = [1, 1]} : vector<48x2560xf32> to vector<48x128xf32>
    %78 = arith.mulf %76, %77 : vector<48x128xf32>
    %cst_39 = arith.constant 0.000000e+00 : f32
    %79 = vector.broadcast %cst_39 : f32 to vector<48x128xf32>
    %80 = arith.maximumf %78, %79 : vector<48x128xf32>
    %81 = arith.truncf %80 : vector<48x128xf32> to vector<48x128xbf16>
    %c4 = arith.constant 4 : index
    %c0_40 = arith.constant 0 : index
    %c0_41 = arith.constant 0 : index
    %82 = vector.load %arg3[%c4, %c0_40, %c0_41] : memref<10x128x512xbf16, #tpu.memory_space<vmem>>, vector<1x128x512xbf16>
    %83 = vector.shape_cast %82 : vector<1x128x512xbf16> to vector<128x512xbf16>
    %cst_42 = arith.constant dense<0.000000e+00> : vector<48x512xf32>
    %84 = tpu.matmul %81, %83, %cst_42 {dimension_numbers = #tpu.dot_dimension_numbers<[1], [0], [0], [1], [0, 0, 1, 1], [], []>} : vector<48x128xbf16>, vector<128x512xbf16>, vector<48x512xf32> -> vector<48x512xf32>
    %85 = arith.negf %84 : vector<48x512xf32>
    %86 = math.exp %85 : vector<48x512xf32>
    %cst_43 = arith.constant 1.000000e+00 : f32
    %87 = vector.broadcast %cst_43 : f32 to vector<48x512xf32>
    %88 = arith.addf %87, %86 : vector<48x512xf32>
    %89 = arith.divf %87, %88 : vector<48x512xf32>
    %90 = arith.addf %75, %89 : vector<48x512xf32>
    %91 = vector.extract_strided_slice %4 {offsets = [0, 896], sizes = [48, 128], strides = [1, 1]} : vector<48x2560xf32> to vector<48x128xf32>
    %92 = vector.extract_strided_slice %4 {offsets = [0, 1024], sizes = [48, 128], strides = [1, 1]} : vector<48x2560xf32> to vector<48x128xf32>
    %93 = arith.mulf %91, %92 : vector<48x128xf32>
    %94 = vector.extract_strided_slice %4 {offsets = [0, 1152], sizes = [48, 128], strides = [1, 1]} : vector<48x2560xf32> to vector<48x128xf32>
    %95 = arith.mulf %93, %94 : vector<48x128xf32>
    %cst_44 = arith.constant 0.000000e+00 : f32
    %96 = vector.broadcast %cst_44 : f32 to vector<48x128xf32>
    %97 = arith.maximumf %95, %96 : vector<48x128xf32>
    %98 = arith.truncf %97 : vector<48x128xf32> to vector<48x128xbf16>
    %c5 = arith.constant 5 : index
    %c0_45 = arith.constant 0 : index
    %c0_46 = arith.constant 0 : index
    %99 = vector.load %arg3[%c5, %c0_45, %c0_46] : memref<10x128x512xbf16, #tpu.memory_space<vmem>>, vector<1x128x512xbf16>
    %100 = vector.shape_cast %99 : vector<1x128x512xbf16> to vector<128x512xbf16>
    %cst_47 = arith.constant dense<0.000000e+00> : vector<48x512xf32>
    %101 = tpu.matmul %98, %100, %cst_47 {dimension_numbers = #tpu.dot_dimension_numbers<[1], [0], [0], [1], [0, 0, 1, 1], [], []>} : vector<48x128xbf16>, vector<128x512xbf16>, vector<48x512xf32> -> vector<48x512xf32>
    %102 = arith.negf %101 : vector<48x512xf32>
    %103 = math.exp %102 : vector<48x512xf32>
    %cst_48 = arith.constant 1.000000e+00 : f32
    %104 = vector.broadcast %cst_48 : f32 to vector<48x512xf32>
    %105 = arith.addf %104, %103 : vector<48x512xf32>
    %106 = arith.divf %104, %105 : vector<48x512xf32>
    %107 = arith.addf %90, %106 : vector<48x512xf32>
    %108 = arith.mulf %1, %107 : vector<48x512xf32>
    %cst_49 = arith.constant 0.333333343 : f32
    %109 = vector.broadcast %cst_49 : f32 to vector<48x512xf32>
    %110 = arith.mulf %108, %109 : vector<48x512xf32>
    %111 = vector.shape_cast %110 : vector<48x512xf32> to vector<6x8x512xf32>
    %cst_50 = arith.constant dense<0.000000e+00> : vector<6x512xf32>
    %112 = vector.multi_reduction <add>, %111, %cst_50 [1] : vector<6x8x512xf32> to vector<6x512xf32>
    %cst_51 = arith.constant 8.000000e+00 : f32
    %113 = vector.broadcast %cst_51 : f32 to vector<6x512xf32>
    %114 = arith.divf %112, %113 : vector<6x512xf32>
    %c0_52 = arith.constant 0 : index
    %c2_53 = arith.constant 2 : index
    %c0_54 = arith.constant 0 : index
    %c0_55 = arith.constant 0 : index
    %115 = vector.load %arg4[%c0_52, %c2_53, %c0_54, %c0_55] : memref<1x4x6x512xf32, #tpu.memory_space<vmem>>, vector<1x1x6x512xf32>
    %116 = vector.shape_cast %115 : vector<1x1x6x512xf32> to vector<6x512xf32>
    %117 = vector.shape_cast %114 : vector<6x512xf32> to vector<1x1x6x512xf32>
    tpu.vector_store %arg4[%c0_52, %c2_53, %c0_54, %c0_55], %117 {strides = array<i32>} : memref<1x4x6x512xf32, #tpu.memory_space<vmem>>, vector<1x1x6x512xf32>,
    %118 = vector.extract_strided_slice %4 {offsets = [0, 1280], sizes = [48, 128], strides = [1, 1]} : vector<48x2560xf32> to vector<48x128xf32>
    %cst_56 = arith.constant 0.000000e+00 : f32
    %119 = vector.broadcast %cst_56 : f32 to vector<48x128xf32>
    %120 = arith.maximumf %118, %119 : vector<48x128xf32>
    %121 = arith.truncf %120 : vector<48x128xf32> to vector<48x128xbf16>
    %c6 = arith.constant 6 : index
    %c0_57 = arith.constant 0 : index
    %c0_58 = arith.constant 0 : index
    %122 = vector.load %arg3[%c6, %c0_57, %c0_58] : memref<10x128x512xbf16, #tpu.memory_space<vmem>>, vector<1x128x512xbf16>
    %123 = vector.shape_cast %122 : vector<1x128x512xbf16> to vector<128x512xbf16>
    %cst_59 = arith.constant dense<0.000000e+00> : vector<48x512xf32>
    %124 = tpu.matmul %121, %123, %cst_59 {dimension_numbers = #tpu.dot_dimension_numbers<[1], [0], [0], [1], [0, 0, 1, 1], [], []>} : vector<48x128xbf16>, vector<128x512xbf16>, vector<48x512xf32> -> vector<48x512xf32>
    %125 = arith.negf %124 : vector<48x512xf32>
    %126 = math.exp %125 : vector<48x512xf32>
    %cst_60 = arith.constant 1.000000e+00 : f32
    %127 = vector.broadcast %cst_60 : f32 to vector<48x512xf32>
    %128 = arith.addf %127, %126 : vector<48x512xf32>
    %129 = arith.divf %127, %128 : vector<48x512xf32>
    %130 = vector.extract_strided_slice %4 {offsets = [0, 1408], sizes = [48, 128], strides = [1, 1]} : vector<48x2560xf32> to vector<48x128xf32>
    %131 = vector.extract_strided_slice %4 {offsets = [0, 1536], sizes = [48, 128], strides = [1, 1]} : vector<48x2560xf32> to vector<48x128xf32>
    %132 = arith.mulf %130, %131 : vector<48x128xf32>
    %cst_61 = arith.constant 0.000000e+00 : f32
    %133 = vector.broadcast %cst_61 : f32 to vector<48x128xf32>
    %134 = arith.maximumf %132, %133 : vector<48x128xf32>
    %135 = arith.truncf %134 : vector<48x128xf32> to vector<48x128xbf16>
    %c7 = arith.constant 7 : index
    %c0_62 = arith.constant 0 : index
    %c0_63 = arith.constant 0 : index
    %136 = vector.load %arg3[%c7, %c0_62, %c0_63] : memref<10x128x512xbf16, #tpu.memory_space<vmem>>, vector<1x128x512xbf16>
    %137 = vector.shape_cast %136 : vector<1x128x512xbf16> to vector<128x512xbf16>
    %cst_64 = arith.constant dense<0.000000e+00> : vector<48x512xf32>
    %138 = tpu.matmul %135, %137, %cst_64 {dimension_numbers = #tpu.dot_dimension_numbers<[1], [0], [0], [1], [0, 0, 1, 1], [], []>} : vector<48x128xbf16>, vector<128x512xbf16>, vector<48x512xf32> -> vector<48x512xf32>
    %139 = arith.negf %138 : vector<48x512xf32>
    %140 = math.exp %139 : vector<48x512xf32>
    %cst_65 = arith.constant 1.000000e+00 : f32
    %141 = vector.broadcast %cst_65 : f32 to vector<48x512xf32>
    %142 = arith.addf %141, %140 : vector<48x512xf32>
    %143 = arith.divf %141, %142 : vector<48x512xf32>
    %144 = arith.addf %129, %143 : vector<48x512xf32>
    %145 = vector.extract_strided_slice %4 {offsets = [0, 1664], sizes = [48, 128], strides = [1, 1]} : vector<48x2560xf32> to vector<48x128xf32>
    %146 = vector.extract_strided_slice %4 {offsets = [0, 1792], sizes = [48, 128], strides = [1, 1]} : vector<48x2560xf32> to vector<48x128xf32>
    %147 = arith.mulf %145, %146 : vector<48x128xf32>
    %148 = vector.extract_strided_slice %4 {offsets = [0, 1920], sizes = [48, 128], strides = [1, 1]} : vector<48x2560xf32> to vector<48x128xf32>
    %149 = arith.mulf %147, %148 : vector<48x128xf32>
    %cst_66 = arith.constant 0.000000e+00 : f32
    %150 = vector.broadcast %cst_66 : f32 to vector<48x128xf32>
    %151 = arith.maximumf %149, %150 : vector<48x128xf32>
    %152 = arith.truncf %151 : vector<48x128xf32> to vector<48x128xbf16>
    %c8 = arith.constant 8 : index
    %c0_67 = arith.constant 0 : index
    %c0_68 = arith.constant 0 : index
    %153 = vector.load %arg3[%c8, %c0_67, %c0_68] : memref<10x128x512xbf16, #tpu.memory_space<vmem>>, vector<1x128x512xbf16>
    %154 = vector.shape_cast %153 : vector<1x128x512xbf16> to vector<128x512xbf16>
    %cst_69 = arith.constant dense<0.000000e+00> : vector<48x512xf32>
    %155 = tpu.matmul %152, %154, %cst_69 {dimension_numbers = #tpu.dot_dimension_numbers<[1], [0], [0], [1], [0, 0, 1, 1], [], []>} : vector<48x128xbf16>, vector<128x512xbf16>, vector<48x512xf32> -> vector<48x512xf32>
    %156 = arith.negf %155 : vector<48x512xf32>
    %157 = math.exp %156 : vector<48x512xf32>
    %cst_70 = arith.constant 1.000000e+00 : f32
    %158 = vector.broadcast %cst_70 : f32 to vector<48x512xf32>
    %159 = arith.addf %158, %157 : vector<48x512xf32>
    %160 = arith.divf %158, %159 : vector<48x512xf32>
    %161 = arith.addf %144, %160 : vector<48x512xf32>
    %162 = vector.extract_strided_slice %4 {offsets = [0, 2048], sizes = [48, 128], strides = [1, 1]} : vector<48x2560xf32> to vector<48x128xf32>
    %163 = vector.extract_strided_slice %4 {offsets = [0, 2176], sizes = [48, 128], strides = [1, 1]} : vector<48x2560xf32> to vector<48x128xf32>
    %164 = arith.mulf %162, %163 : vector<48x128xf32>
    %165 = vector.extract_strided_slice %4 {offsets = [0, 2304], sizes = [48, 128], strides = [1, 1]} : vector<48x2560xf32> to vector<48x128xf32>
    %166 = arith.mulf %164, %165 : vector<48x128xf32>
    %167 = vector.extract_strided_slice %4 {offsets = [0, 2432], sizes = [48, 128], strides = [1, 1]} : vector<48x2560xf32> to vector<48x128xf32>
    %168 = arith.mulf %166, %167 : vector<48x128xf32>
    %cst_71 = arith.constant 0.000000e+00 : f32
    %169 = vector.broadcast %cst_71 : f32 to vector<48x128xf32>
    %170 = arith.maximumf %168, %169 : vector<48x128xf32>
    %171 = arith.truncf %170 : vector<48x128xf32> to vector<48x128xbf16>
    %c9 = arith.constant 9 : index
    %c0_72 = arith.constant 0 : index
    %c0_73 = arith.constant 0 : index
    %172 = vector.load %arg3[%c9, %c0_72, %c0_73] : memref<10x128x512xbf16, #tpu.memory_space<vmem>>, vector<1x128x512xbf16>
    %173 = vector.shape_cast %172 : vector<1x128x512xbf16> to vector<128x512xbf16>
    %cst_74 = arith.constant dense<0.000000e+00> : vector<48x512xf32>
    %174 = tpu.matmul %171, %173, %cst_74 {dimension_numbers = #tpu.dot_dimension_numbers<[1], [0], [0], [1], [0, 0, 1, 1], [], []>} : vector<48x128xbf16>, vector<128x512xbf16>, vector<48x512xf32> -> vector<48x512xf32>
    %175 = arith.negf %174 : vector<48x512xf32>
    %176 = math.exp %175 : vector<48x512xf32>
    %cst_75 = arith.constant 1.000000e+00 : f32
    %177 = vector.broadcast %cst_75 : f32 to vector<48x512xf32>
    %178 = arith.addf %177, %176 : vector<48x512xf32>
    %179 = arith.divf %177, %178 : vector<48x512xf32>
    %180 = arith.addf %161, %179 : vector<48x512xf32>
    %181 = arith.mulf %1, %180 : vector<48x512xf32>
    %cst_76 = arith.constant 2.500000e-01 : f32
    %182 = vector.broadcast %cst_76 : f32 to vector<48x512xf32>
    %183 = arith.mulf %181, %182 : vector<48x512xf32>
    %184 = vector.shape_cast %183 : vector<48x512xf32> to vector<6x8x512xf32>
    %cst_77 = arith.constant dense<0.000000e+00> : vector<6x512xf32>
    %185 = vector.multi_reduction <add>, %184, %cst_77 [1] : vector<6x8x512xf32> to vector<6x512xf32>
    %cst_78 = arith.constant 8.000000e+00 : f32
    %186 = vector.broadcast %cst_78 : f32 to vector<6x512xf32>
    %187 = arith.divf %185, %186 : vector<6x512xf32>
    %c0_79 = arith.constant 0 : index
    %c3_80 = arith.constant 3 : index
    %c0_81 = arith.constant 0 : index
    %c0_82 = arith.constant 0 : index
    %188 = vector.load %arg4[%c0_79, %c3_80, %c0_81, %c0_82] : memref<1x4x6x512xf32, #tpu.memory_space<vmem>>, vector<1x1x6x512xf32>
    %189 = vector.shape_cast %188 : vector<1x1x6x512xf32> to vector<6x512xf32>
    %190 = vector.shape_cast %187 : vector<6x512xf32> to vector<1x1x6x512xf32>
    tpu.vector_store %arg4[%c0_79, %c3_80, %c0_81, %c0_82], %190 {strides = array<i32>} : memref<1x4x6x512xf32, #tpu.memory_space<vmem>>, vector<1x1x6x512xf32>,
    return
  }
  func.func @transform_0(%arg0: i32) -> (i32, i32, i32) {
    %c0_i32 = arith.constant 0 : i32
    %c0_i32_0 = arith.constant 0 : i32
    %c0_i32_1 = arith.constant 0 : i32
    return %arg0, %c0_i32, %c0_i32_0 : i32, i32, i32
  }
  func.func @transform_1(%arg0: i32) -> (i32, i32) {
    %c0_i32 = arith.constant 0 : i32
    %c0_i32_0 = arith.constant 0 : i32
    %c0_i32_1 = arith.constant 0 : i32
    return %c0_i32, %c0_i32_0 : i32, i32
  }
  func.func @transform_2(%arg0: i32) -> (i32, i32, i32) {
    %c0_i32 = arith.constant 0 : i32
    %c0_i32_0 = arith.constant 0 : i32
    %c0_i32_1 = arith.constant 0 : i32
    %c0_i32_2 = arith.constant 0 : i32
    return %c0_i32, %c0_i32_0, %c0_i32_1 : i32, i32, i32
  }
  func.func @transform_3(%arg0: i32) -> (i32, i32, i32, i32) {
    %c0_i32 = arith.constant 0 : i32
    %c0_i32_0 = arith.constant 0 : i32
    %c0_i32_1 = arith.constant 0 : i32
    %c0_i32_2 = arith.constant 0 : i32
    return %arg0, %c0_i32, %c0_i32_0, %c0_i32_1 : i32, i32, i32, i32
  }
}

</mosaic_0001>

<llo_original>
// kernel: tpu_custom_call.1
$region0: #{tpu_custom_call.1}
  #allocation0 [shape = 'u32[]', space=smem, size = 0x4, offset = 0x4, fixed_abs, tag = 'smem constant byte address 0x4 - core index']
  #allocation1 [shape = 'u32[144,128]{1,0:T(1,128)}', space=vmem, size = 0x12000, scoped, tag = 'internal scratch']
  %s0 = inlined_call_operand.hbm [shape: f32[2,48,512], index: 0, kind: input, shape index: {}]
  %s1 = inlined_call_operand.hbm [shape: bf16[512,2560], index: 1, kind: input, shape index: {}]
  %s2 = inlined_call_operand.hbm [shape: bf16[10,128,512], index: 2, kind: input, shape index: {}]
  %s3 = inlined_call_operand.vmem [shape: f32[2,4,6,512], index: 3, kind: output, shape index: {}]
  %s4 = sld [smem:[#allocation0]]
  $region57: #{tpu_custom_call.1} parent=0
    _
  %s6 = ssub.s32 1, %s4
  %s7 = scalar_select 0, %s6, %s4
  $region1: #{tpu_custom_call.1} parent=0
    #allocation2 [shape = 'u8[196608]{0}', space=vmem, size = 0x30000, scoped, tag = 'input window, operand 0']
    #allocation3 [shape = 's32[2]{0}', space=sflag, size = 0x8, scoped, tag = 'scoped memory for tpu_custom_call.1']
    #allocation4 [shape = 'u8[2621440]{0}', space=vmem, size = 0x280000, scoped, tag = 'input window, operand 1, single buffered']
    #allocation5 [shape = 's32[1]{0}', space=sflag, size = 0x4, scoped, tag = 'scoped memory for tpu_custom_call.1']
    #allocation6 [shape = 'u8[1310720]{0}', space=vmem, size = 0x140000, scoped, tag = 'input window, operand 2, single buffered']
    %8 = vsyncpa [#allocation3], 0
    %s9 = scalar_lea.sflag [#allocation3], 1
    %10 = vsyncpa %s9, 0
    %11 = vsyncpa [#allocation5], 0
    loop: start=0, step=1, limit=4
    $region2: #{tpu_custom_call.1} parent=1 // loop_pre_header
      _
    $region3: #{tpu_custom_call.1} parent=1 // loop_header
      %s13 = sphi 0, %s17
      %p14 = scmp.ge.s32.totalorder %s13, 4
      %s23 = sphi 0, %s25
      %s26 = sphi 0, %s23
      %s27 = sphi 0, %s26
      %s43 = sphi 0, %s27
      %s47 = sphi 0, %s47
      %s49 = sphi 0, %s47
      %s50 = sphi 0, %s49
      %s64 = sphi 0, %s50
      %s68 = sphi 0, %s68
      %s70 = sphi 0, %s68
      %s71 = sphi 0, %s70
      %s85 = sphi 0, %s71
      %s91 = sphi 0, %s93
      %s94 = sphi 0, %s91
      %s95 = sphi 0, %s94
      %s111 = sphi 0, %s95
    $region4: #{tpu_custom_call.1} parent=1 // loop_header_branch
      %16 = sbr.rel (%p14) target = $region8
    $region5: #{tpu_custom_call.1} parent=1 // loop_body
      %s18 = ssub.s32 %s13, 1
      %s19 = ssub.s32 %s13, 2
      %s20 = sadd.s32 %s13, 1
      %s21 = ssub.s32 %s13, %s20
      %p22 = scmp.eq.s32.totalorder %s21, 0
      %s24 = sadd.s32 %s23, 1
      %s25 = scalar_select %p22, %s23, %s24
      %p28 = pneg %p22
      %p29 = scmp.eq.s32.totalorder %s13, 1
      %p30 = por %p28, %p29
      %p31 = scmp.ne.s32.totalorder %s23, %s26
      %p32 = scmp.eq.s32.totalorder %s13, 0
      %p33 = por %p31, %p32
      %p34 = scmp.ne.s32.totalorder %s23, %s26
      %p35 = scmp.eq.s32.totalorder %s18, 1
      %p36 = por %p34, %p35
      %p37 = scmp.ne.s32.totalorder %s26, %s27
      %p38 = scmp.eq.s32.totalorder %s18, 0
      %p39 = por %p37, %p38
      %p40 = scmp.ne.s32.totalorder %s26, %s27
      %p41 = scmp.eq.s32.totalorder %s19, 1
      %p42 = por %p40, %p41
      %p44 = scmp.ne.s32.totalorder %s27, %s43
      %p45 = scmp.eq.s32.totalorder %s19, 0
      %p46 = por %p44, %p45
      %s48 = sadd.s32 %s47, 1
      %p51 = scmp.eq.s32.totalorder %s13, 1
      %p52 = scmp.ne.s32.totalorder %s47, %s49
      %p53 = scmp.eq.s32.totalorder %s13, 0
      %p54 = por %p52, %p53
      %p55 = scmp.ne.s32.totalorder %s47, %s49
      %p56 = scmp.eq.s32.totalorder %s18, 1
      %p57 = por %p55, %p56
      %p58 = scmp.ne.s32.totalorder %s49, %s50
      %p59 = scmp.eq.s32.totalorder %s18, 0
      %p60 = por %p58, %p59
      %p61 = scmp.ne.s32.totalorder %s49, %s50
      %p62 = scmp.eq.s32.totalorder %s19, 1
      %p63 = por %p61, %p62
      %p65 = scmp.ne.s32.totalorder %s50, %s64
      %p66 = scmp.eq.s32.totalorder %s19, 0
      %p67 = por %p65, %p66
      %s69 = sadd.s32 %s68, 1
      %p72 = scmp.eq.s32.totalorder %s13, 1
      %p73 = scmp.ne.s32.totalorder %s68, %s70
      %p74 = scmp.eq.s32.totalorder %s13, 0
      %p75 = por %p73, %p74
      %p76 = scmp.ne.s32.totalorder %s68, %s70
      %p77 = scmp.eq.s32.totalorder %s18, 1
      %p78 = por %p76, %p77
      %p79 = scmp.ne.s32.totalorder %s70, %s71
      %p80 = scmp.eq.s32.totalorder %s18, 0
      %p81 = por %p79, %p80
      %p82 = scmp.ne.s32.totalorder %s70, %s71
      %p83 = scmp.eq.s32.totalorder %s19, 1
      %p84 = por %p82, %p83
      %p86 = scmp.ne.s32.totalorder %s71, %s85
      %p87 = scmp.eq.s32.totalorder %s19, 0
      %p88 = por %p86, %p87
      %s89 = ssub.s32 %s13, %s20
      %p90 = scmp.eq.s32.totalorder %s89, 0
      %s92 = sadd.s32 %s91, 1
      %s93 = scalar_select %p90, %s91, %s92
      %p96 = pneg %p90
      %p97 = scmp.eq.s32.totalorder %s13, 1
      %p98 = por %p96, %p97
      %p99 = scmp.ne.s32.totalorder %s91, %s94
      %p100 = scmp.eq.s32.totalorder %s13, 0
      %p101 = por %p99, %p100
      %p102 = scmp.ne.s32.totalorder %s91, %s94
      %p103 = scmp.eq.s32.totalorder %s18, 1
      %p104 = por %p102, %p103
      %p105 = scmp.ne.s32.totalorder %s94, %s95
      %p106 = scmp.eq.s32.totalorder %s18, 0
      %p107 = por %p105, %p106
      %p108 = scmp.ne.s32.totalorder %s94, %s95
      %p109 = scmp.eq.s32.totalorder %s19, 1
      %p110 = por %p108, %p109
      %p112 = scmp.ne.s32.totalorder %s95, %s111
      %p113 = scmp.eq.s32.totalorder %s19, 0
      %p114 = por %p112, %p113
      %p115 = scmp.le.s32.totalorder 1, %s13
      %p116 = scmp.lt.s32.totalorder %s13, 3
      %p117 = pnand %p115, %p116
      %p118 = pneg %p117
      // Predicated region
      $region9: #{tpu_custom_call.1} parent=5 // pred_check
        _
      $region10: #{tpu_custom_call.1} parent=5 // pred_check_branch
        %120 = sbr.rel (%p117) target = $region12
      $region11: #{tpu_custom_call.1} parent=5 // pred_region
        %s121 = ssub.s32 %s13, 1
        // Predicated region
        $region13: #{tpu_custom_call.1} parent=11 // pred_check
          %p122 = pneg %p60
        $region14: #{tpu_custom_call.1} parent=11 // pred_check_branch
          %124 = sbr.rel (%p122) target = $region16
        $region15: #{tpu_custom_call.1} parent=11 // pred_region
          %s126 = ssub.s32 81920, 81920
          %127 = vsyncadd [#allocation5], %s126
          %s128 = sshll.u32 [#allocation4], 4
          %s129 = int_to_ptr.vmem [resolvable:$true] %s128
          %134 = dma.hbm_to_vmem [thread:$0]  %s1, 81920, %s129, [#allocation5], 1280, 1280, 80
        $region16: #{tpu_custom_call.1} parent=11 // pred_fallthru
          _
        // Predicated region
        $region17: #{tpu_custom_call.1} parent=11 // pred_check
          %p135 = pneg %p81
        $region18: #{tpu_custom_call.1} parent=11 // pred_check_branch
          %137 = sbr.rel (%p135) target = $region20
        $region19: #{tpu_custom_call.1} parent=11 // pred_region
          %s139 = ssub.s32 40960, 40960
          %140 = vsyncadd [#allocation5], %s139
          %s141 = sshll.u32 [#allocation6], 4
          %s142 = int_to_ptr.vmem [resolvable:$true] %s141
          %147 = dma.hbm_to_vmem [thread:$0]  %s2, 40960, %s142, [#allocation5], 256, 256, 16
        $region20: #{tpu_custom_call.1} parent=11 // pred_fallthru
          _
      $region12: #{tpu_custom_call.1} parent=5 // pred_fallthru
        _
      %p148 = scmp.lt.s32.totalorder %s13, 2
      // Predicated region
      $region21: #{tpu_custom_call.1} parent=5 // pred_check
        %p149 = pneg %p148
      $region22: #{tpu_custom_call.1} parent=5 // pred_check_branch
        %151 = sbr.rel (%p149) target = $region24
      $region23: #{tpu_custom_call.1} parent=5 // pred_region
        // Predicated region
        $region25: #{tpu_custom_call.1} parent=23 // pred_check
          %p152 = pneg %p33
        $region26: #{tpu_custom_call.1} parent=23 // pred_check_branch
          %154 = sbr.rel (%p152) target = $region28
        $region27: #{tpu_custom_call.1} parent=23 // pred_region
          %s155 = sand.u32 %s23, 1
          %s156 = scalar_lea.sflag [#allocation3], %s155
          %s157 = sand.u32 %s23, 1
          %s158 = smul.addr %s157, 192
          %s159 = scalar_lea.vmem [#allocation2], %s158
          %s161 = ssub.s32 3072, 3072
          %162 = vsyncadd %s156, %s161
          %s163 = smul.addr %s13, 24
          %s164 = smul.addr %s163, 128
          %s165 = scalar_lea.hbm %s0, %s164
          %s166 = sshll.u32 %s159, 4
          %s167 = int_to_ptr.vmem [resolvable:$true] %s166
          %172 = dma.hbm_to_vmem [thread:$0]  %s165, 3072, %s167, %s156, 512, 512, 32
        $region28: #{tpu_custom_call.1} parent=23 // pred_fallthru
          _
      $region24: #{tpu_custom_call.1} parent=5 // pred_fallthru
        _
      %p173 = scmp.le.s32.totalorder 1, %s13
      %p174 = scmp.lt.s32.totalorder %s13, 3
      %p175 = pnand %p173, %p174
      %p176 = pneg %p175
      // Predicated region
      $region29: #{tpu_custom_call.1} parent=5 // pred_check
        _
      $region30: #{tpu_custom_call.1} parent=5 // pred_check_branch
        %178 = sbr.rel (%p175) target = $region32
      $region31: #{tpu_custom_call.1} parent=5 // pred_region
        %s179 = ssub.s32 %s13, 1
        %s180 = sand.u32 %s26, 1
        %s181 = scalar_lea.sflag [#allocation3], %s180
        %s182 = sand.u32 %s26, 1
        %s183 = smul.addr %s182, 192
        %s184 = scalar_lea.vmem [#allocation2], %s183
        // Predicated region
        $region33: #{tpu_custom_call.1} parent=31 // pred_check
          %p185 = pneg %p39
        $region34: #{tpu_custom_call.1} parent=31 // pred_check_branch
          %187 = sbr.rel (%p185) target = $region36
        $region35: #{tpu_custom_call.1} parent=31 // pred_region
          %188 = dma.done %s181, 3072
        $region36: #{tpu_custom_call.1} parent=31 // pred_fallthru
          _
        // Predicated region
        $region37: #{tpu_custom_call.1} parent=31 // pred_check
          %p189 = pneg %p60
        $region38: #{tpu_custom_call.1} parent=31 // pred_check_branch
          %191 = sbr.rel (%p189) target = $region40
        $region39: #{tpu_custom_call.1} parent=31 // pred_region
          %192 = dma.done [#allocation5], 81920
        $region40: #{tpu_custom_call.1} parent=31 // pred_fallthru
          _
        // Predicated region
        $region41: #{tpu_custom_call.1} parent=31 // pred_check
          %p193 = pneg %p81
        $region42: #{tpu_custom_call.1} parent=31 // pred_check_branch
          %195 = sbr.rel (%p193) target = $region44
        $region43: #{tpu_custom_call.1} parent=31 // pred_region
          %196 = dma.done [#allocation5], 40960
        $region44: #{tpu_custom_call.1} parent=31 // pred_fallthru
          _
        %s197 = sand.u32 %s26, 1
        %s198 = scalar_lea.sflag [#allocation3], %s197
        %s199 = sand.u32 %s26, 1
        %s200 = smul.addr %s199, 192
        %s201 = scalar_lea.vmem [#allocation2], %s200
        %p202 = pneg %p39
        %p203 = pneg %p36
        %p204 = pneg %p60
        %p205 = pneg %p57
        %p206 = pneg %p81
        %p207 = pneg %p78
        %p208 = pneg %p107
        %p209 = pneg %p104
        %p210 = scmp.lt.s32.totalorder %s18, 1
        %s211 = scalar_select %p210, %s18, 1
        %s212 = smul.addr %s211, 16
        %s213 = smul.addr %s212, 8
        %s214 = scalar_lea.vmem %s3, %s213
        %p215 = scmp.lt.s32.totalorder %s18, 1
        %s216 = scalar_select %p215, %s18, 1
        %s217 = smul.addr %s216, 16
        %s218 = smul.addr %s217, 8
        %s219 = scalar_lea.vmem %s3, %s218
        %v221 = vld [vmem:[%s184] sm:$0xff]
        %v222 = vld [vmem:[%s184 + $0x8] sm:$0xff]
        %v223 = vld [vmem:[%s184 + $0x10] sm:$0xff]
        %v224 = vld [vmem:[%s184 + $0x18] sm:$0xff]
        %v225 = vld [vmem:[%s184 + $0x20] sm:$0xff]
        %v226 = vld [vmem:[%s184 + $0x28] sm:$0xff]
        %v227 = vld [vmem:[%s184 + $0x30] sm:$0xff]
        %v228 = vld [vmem:[%s184 + $0x38] sm:$0xff]
        %v229 = vld [vmem:[%s184 + $0x40] sm:$0xff]
        %v230 = vld [vmem:[%s184 + $0x48] sm:$0xff]
        %v231 = vld [vmem:[%s184 + $0x50] sm:$0xff]
        %v232 = vld [vmem:[%s184 + $0x58] sm:$0xff]
        %v233 = vld [vmem:[%s184 + $0x60] sm:$0xff]
        %v234 = vld [vmem:[%s184 + $0x68] sm:$0xff]
        %v235 = vld [vmem:[%s184 + $0x70] sm:$0xff]
        %v236 = vld [vmem:[%s184 + $0x78] sm:$0xff]
        %v237 = vld [vmem:[%s184 + $0x80] sm:$0xff]
        %v238 = vld [vmem:[%s184 + $0x88] sm:$0xff]
        %v239 = vld [vmem:[%s184 + $0x90] sm:$0xff]
        %v240 = vld [vmem:[%s184 + $0x98] sm:$0xff]
        %v241 = vld [vmem:[%s184 + $0xa0] sm:$0xff]
        %v242 = vld [vmem:[%s184 + $0xa8] sm:$0xff]
        %v243 = vld [vmem:[%s184 + $0xb0] sm:$0xff]
        %v244 = vld [vmem:[%s184 + $0xb8] sm:$0xff]
        %v245 = vpack.c.bf16 %v225, %v221
        %v246 = vpack.c.bf16 %v226, %v222
        %v247 = vpack.c.bf16 %v227, %v223
        %v248 = vpack.c.bf16 %v228, %v224
        %v249 = vpack.c.bf16 %v233, %v229
        %v250 = vpack.c.bf16 %v234, %v230
        %v251 = vpack.c.bf16 %v235, %v231
        %v252 = vpack.c.bf16 %v236, %v232
        %v253 = vpack.c.bf16 %v241, %v237
        %v254 = vpack.c.bf16 %v242, %v238
        %v255 = vpack.c.bf16 %v243, %v239
        %v256 = vpack.c.bf16 %v244, %v240
        %v257 = vld [vmem:[#allocation4] sm:$0xff]
        %v258 = vld [vmem:[#allocation4 + $0x8] sm:$0xff]
        %v259 = vld [vmem:[#allocation4 + $0x10] sm:$0xff]
        %v260 = vld [vmem:[#allocation4 + $0x18] sm:$0xff]
        %v261 = vld [vmem:[#allocation4 + $0x20] sm:$0xff]
        %v262 = vld [vmem:[#allocation4 + $0x28] sm:$0xff]
        %v263 = vld [vmem:[#allocation4 + $0x30] sm:$0xff]
        %v264 = vld [vmem:[#allocation4 + $0x38] sm:$0xff]
        %v265 = vld [vmem:[#allocation4 + $0x40] sm:$0xff]
        %v266 = vld [vmem:[#allocation4 + $0x48] sm:$0xff]
        %v267 = vld [vmem:[#allocation4 + $0x50] sm:$0xff]
        %v268 = vld [vmem:[#allocation4 + $0x58] sm:$0xff]
        %v269 = vld [vmem:[#allocation4 + $0x60] sm:$0xff]
        %v270 = vld [vmem:[#allocation4 + $0x68] sm:$0xff]
        %v271 = vld [vmem:[#allocation4 + $0x70] sm:$0xff]
        %v272 = vld [vmem:[#allocation4 + $0x78] sm:$0xff]
        %v273 = vld [vmem:[#allocation4 + $0x80] sm:$0xff]
        %v274 = vld [vmem:[#allocation4 + $0x88] sm:$0xff]
        %v275 = vld [vmem:[#allocation4 + $0x90] sm:$0xff]
        %v276 = vld [vmem:[#allocation4 + $0x98] sm:$0xff]
        %v277 = vld [vmem:[#allocation4 + $0xa0] sm:$0xff]
        %v278 = vld [vmem:[#allocation4 + $0xa8] sm:$0xff]
        %v279 = vld [vmem:[#allocation4 + $0xb0] sm:$0xff]
        %v280 = vld [vmem:[#allocation4 + $0xb8] sm:$0xff]
        %v281 = vld [vmem:[#allocation4 + $0xc0] sm:$0xff]
        %v282 = vld [vmem:[#allocation4 + $0xc8] sm:$0xff]
        %v283 = vld [vmem:[#allocation4 + $0xd0] sm:$0xff]
        %v284 = vld [vmem:[#allocation4 + $0xd8] sm:$0xff]
        %v285 = vld [vmem:[#allocation4 + $0xe0] sm:$0xff]
        %v286 = vld [vmem:[#allocation4 + $0xe8] sm:$0xff]
        %v287 = vld [vmem:[#allocation4 + $0xf0] sm:$0xff]
        %v288 = vld [vmem:[#allocation4 + $0xf8] sm:$0xff]
        %v289 = vld [vmem:[#allocation4 + $0x100] sm:$0xff]
        %v290 = vld [vmem:[#allocation4 + $0x108] sm:$0xff]
        %v291 = vld [vmem:[#allocation4 + $0x110] sm:$0xff]
        %v292 = vld [vmem:[#allocation4 + $0x118] sm:$0xff]
        %v293 = vld [vmem:[#allocation4 + $0x120] sm:$0xff]
        %v294 = vld [vmem:[#allocation4 + $0x128] sm:$0xff]
        %v295 = vld [vmem:[#allocation4 + $0x130] sm:$0xff]
        %v296 = vld [vmem:[#allocation4 + $0x138] sm:$0xff]
        %v297 = vld [vmem:[#allocation4 + $0x140] sm:$0xff]
        %v298 = vld [vmem:[#allocation4 + $0x148] sm:$0xff]
        %v299 = vld [vmem:[#allocation4 + $0x150] sm:$0xff]
        %v300 = vld [vmem:[#allocation4 + $0x158] sm:$0xff]
        %v301 = vld [vmem:[#allocation4 + $0x160] sm:$0xff]
        %v302 = vld [vmem:[#allocation4 + $0x168] sm:$0xff]
        %v303 = vld [vmem:[#allocation4 + $0x170] sm:$0xff]
        %v304 = vld [vmem:[#allocation4 + $0x178] sm:$0xff]
        %v305 = vld [vmem:[#allocation4 + $0x180] sm:$0xff]
        %v306 = vld [vmem:[#allocation4 + $0x188] sm:$0xff]
        %v307 = vld [vmem:[#allocation4 + $0x190] sm:$0xff]
        %v308 = vld [vmem:[#allocation4 + $0x198] sm:$0xff]
        %v309 = vld [vmem:[#allocation4 + $0x1a0] sm:$0xff]
        %v310 = vld [vmem:[#allocation4 + $0x1a8] sm:$0xff]
        %v311 = vld [vmem:[#allocation4 + $0x1b0] sm:$0xff]
        %v312 = vld [vmem:[#allocation4 + $0x1b8] sm:$0xff]
        %v313 = vld [vmem:[#allocation4 + $0x1c0] sm:$0xff]
        %v314 = vld [vmem:[#allocation4 + $0x1c8] sm:$0xff]
        %v315 = vld [vmem:[#allocation4 + $0x1d0] sm:$0xff]
        %v316 = vld [vmem:[#allocation4 + $0x1d8] sm:$0xff]
        %v317 = vld [vmem:[#allocation4 + $0x1e0] sm:$0xff]
        %v318 = vld [vmem:[#allocation4 + $0x1e8] sm:$0xff]
        %v319 = vld [vmem:[#allocation4 + $0x1f0] sm:$0xff]
        %v320 = vld [vmem:[#allocation4 + $0x1f8] sm:$0xff]
        %v321 = vld [vmem:[#allocation4 + $0x200] sm:$0xff]
        %v322 = vld [vmem:[#allocation4 + $0x208] sm:$0xff]
        %v323 = vld [vmem:[#allocation4 + $0x210] sm:$0xff]
        %v324 = vld [vmem:[#allocation4 + $0x218] sm:$0xff]
        %v325 = vld [vmem:[#allocation4 + $0x220] sm:$0xff]
        %v326 = vld [vmem:[#allocation4 + $0x228] sm:$0xff]
        %v327 = vld [vmem:[#allocation4 + $0x230] sm:$0xff]
        %v328 = vld [vmem:[#allocation4 + $0x238] sm:$0xff]
        %v329 = vld [vmem:[#allocation4 + $0x240] sm:$0xff]
        %v330 = vld [vmem:[#allocation4 + $0x248] sm:$0xff]
        %v331 = vld [vmem:[#allocation4 + $0x250] sm:$0xff]
        %v332 = vld [vmem:[#allocation4 + $0x258] sm:$0xff]
        %v333 = vld [vmem:[#allocation4 + $0x260] sm:$0xff]
        %v334 = vld [vmem:[#allocation4 + $0x268] sm:$0xff]
        %v335 = vld [vmem:[#allocation4 + $0x270] sm:$0xff]
        %v336 = vld [vmem:[#allocation4 + $0x278] sm:$0xff]
        %v337 = vld [vmem:[#allocation4 + $0x280] sm:$0xff]
        %v338 = vld [vmem:[#allocation4 + $0x288] sm:$0xff]
        %v339 = vld [vmem:[#allocation4 + $0x290] sm:$0xff]
        %v340 = vld [vmem:[#allocation4 + $0x298] sm:$0xff]
        %v341 = vld [vmem:[#allocation4 + $0x2a0] sm:$0xff]
        %v342 = vld [vmem:[#allocation4 + $0x2a8] sm:$0xff]
        %v343 = vld [vmem:[#allocation4 + $0x2b0] sm:$0xff]
        %v344 = vld [vmem:[#allocation4 + $0x2b8] sm:$0xff]
        %v345 = vld [vmem:[#allocation4 + $0x2c0] sm:$0xff]
        %v346 = vld [vmem:[#allocation4 + $0x2c8] sm:$0xff]
        %v347 = vld [vmem:[#allocation4 + $0x2d0] sm:$0xff]
        %v348 = vld [vmem:[#allocation4 + $0x2d8] sm:$0xff]
        %v349 = vld [vmem:[#allocation4 + $0x2e0] sm:$0xff]
        %v350 = vld [vmem:[#allocation4 + $0x2e8] sm:$0xff]
        %v351 = vld [vmem:[#allocation4 + $0x2f0] sm:$0xff]
        %v352 = vld [vmem:[#allocation4 + $0x2f8] sm:$0xff]
        %v353 = vld [vmem:[#allocation4 + $0x300] sm:$0xff]
        %v354 = vld [vmem:[#allocation4 + $0x308] sm:$0xff]
        %v355 = vld [vmem:[#allocation4 + $0x310] sm:$0xff]
        %v356 = vld [vmem:[#allocation4 + $0x318] sm:$0xff]
        %v357 = vld [vmem:[#allocation4 + $0x320] sm:$0xff]
        %v358 = vld [vmem:[#allocation4 + $0x328] sm:$0xff]
        %v359 = vld [vmem:[#allocation4 + $0x330] sm:$0xff]
        %v360 = vld [vmem:[#allocation4 + $0x338] sm:$0xff]
        %v361 = vld [vmem:[#allocation4 + $0x340] sm:$0xff]
        %v362 = vld [vmem:[#allocation4 + $0x348] sm:$0xff]
        %v363 = vld [vmem:[#allocation4 + $0x350] sm:$0xff]
        %v364 = vld [vmem:[#allocation4 + $0x358] sm:$0xff]
        %v365 = vld [vmem:[#allocation4 + $0x360] sm:$0xff]
        %v366 = vld [vmem:[#allocation4 + $0x368] sm:$0xff]
        %v367 = vld [vmem:[#allocation4 + $0x370] sm:$0xff]
        %v368 = vld [vmem:[#allocation4 + $0x378] sm:$0xff]
        %v369 = vld [vmem:[#allocation4 + $0x380] sm:$0xff]
        %v370 = vld [vmem:[#allocation4 + $0x388] sm:$0xff]
        %v371 = vld [vmem:[#allocation4 + $0x390] sm:$0xff]
        %v372 = vld [vmem:[#allocation4 + $0x398] sm:$0xff]
        %v373 = vld [vmem:[#allocation4 + $0x3a0] sm:$0xff]
        %v374 = vld [vmem:[#allocation4 + $0x3a8] sm:$0xff]
        %v375 = vld [vmem:[#allocation4 + $0x3b0] sm:$0xff]
        %v376 = vld [vmem:[#allocation4 + $0x3b8] sm:$0xff]
        %v377 = vld [vmem:[#allocation4 + $0x3c0] sm:$0xff]
        %v378 = vld [vmem:[#allocation4 + $0x3c8] sm:$0xff]
        %v379 = vld [vmem:[#allocation4 + $0x3d0] sm:$0xff]
        %v380 = vld [vmem:[#allocation4 + $0x3d8] sm:$0xff]
        %v381 = vld [vmem:[#allocation4 + $0x3e0] sm:$0xff]
        %v382 = vld [vmem:[#allocation4 + $0x3e8] sm:$0xff]
        %v383 = vld [vmem:[#allocation4 + $0x3f0] sm:$0xff]
        %v384 = vld [vmem:[#allocation4 + $0x3f8] sm:$0xff]
        %v385 = vld [vmem:[#allocation4 + $0x400] sm:$0xff]
        %v386 = vld [vmem:[#allocation4 + $0x408] sm:$0xff]
        %v387 = vld [vmem:[#allocation4 + $0x410] sm:$0xff]
        %v388 = vld [vmem:[#allocation4 + $0x418] sm:$0xff]
        %v389 = vld [vmem:[#allocation4 + $0x420] sm:$0xff]
        %v390 = vld [vmem:[#allocation4 + $0x428] sm:$0xff]
        %v391 = vld [vmem:[#allocation4 + $0x430] sm:$0xff]
        %v392 = vld [vmem:[#allocation4 + $0x438] sm:$0xff]
        %v393 = vld [vmem:[#allocation4 + $0x440] sm:$0xff]
        %v394 = vld [vmem:[#allocation4 + $0x448] sm:$0xff]
        %v395 = vld [vmem:[#allocation4 + $0x450] sm:$0xff]
        %v396 = vld [vmem:[#allocation4 + $0x458] sm:$0xff]
        %v397 = vld [vmem:[#allocation4 + $0x460] sm:$0xff]
        %v398 = vld [vmem:[#allocation4 + $0x468] sm:$0xff]
        %v399 = vld [vmem:[#allocation4 + $0x470] sm:$0xff]
        %v400 = vld [vmem:[#allocation4 + $0x478] sm:$0xff]
        %v401 = vld [vmem:[#allocation4 + $0x480] sm:$0xff]
        %v402 = vld [vmem:[#allocation4 + $0x488] sm:$0xff]
        %v403 = vld [vmem:[#allocation4 + $0x490] sm:$0xff]
        %v404 = vld [vmem:[#allocation4 + $0x498] sm:$0xff]
        %v405 = vld [vmem:[#allocation4 + $0x4a0] sm:$0xff]
        %v406 = vld [vmem:[#allocation4 + $0x4a8] sm:$0xff]
        %v407 = vld [vmem:[#allocation4 + $0x4b0] sm:$0xff]
        %v408 = vld [vmem:[#allocation4 + $0x4b8] sm:$0xff]
        %v409 = vld [vmem:[#allocation4 + $0x4c0] sm:$0xff]
        %v410 = vld [vmem:[#allocation4 + $0x4c8] sm:$0xff]
        %v411 = vld [vmem:[#allocation4 + $0x4d0] sm:$0xff]
        %v412 = vld [vmem:[#allocation4 + $0x4d8] sm:$0xff]
        %v413 = vld [vmem:[#allocation4 + $0x4e0] sm:$0xff]
        %v414 = vld [vmem:[#allocation4 + $0x4e8] sm:$0xff]
        %v415 = vld [vmem:[#allocation4 + $0x4f0] sm:$0xff]
        %v416 = vld [vmem:[#allocation4 + $0x4f8] sm:$0xff]
        %v417 = vld [vmem:[#allocation4 + $0x500] sm:$0xff]
        %v418 = vld [vmem:[#allocation4 + $0x508] sm:$0xff]
        %v419 = vld [vmem:[#allocation4 + $0x510] sm:$0xff]
        %v420 = vld [vmem:[#allocation4 + $0x518] sm:$0xff]
        %v421 = vld [vmem:[#allocation4 + $0x520] sm:$0xff]
        %v422 = vld [vmem:[#allocation4 + $0x528] sm:$0xff]
        %v423 = vld [vmem:[#allocation4 + $0x530] sm:$0xff]
        %v424 = vld [vmem:[#allocation4 + $0x538] sm:$0xff]
        %v425 = vld [vmem:[#allocation4 + $0x540] sm:$0xff]
        %v426 = vld [vmem:[#allocation4 + $0x548] sm:$0xff]
        %v427 = vld [vmem:[#allocation4 + $0x550] sm:$0xff]
        %v428 = vld [vmem:[#allocation4 + $0x558] sm:$0xff]
        %v429 = vld [vmem:[#allocation4 + $0x560] sm:$0xff]
        %v430 = vld [vmem:[#allocation4 + $0x568] sm:$0xff]
        %v431 = vld [vmem:[#allocation4 + $0x570] sm:$0xff]
        %v432 = vld [vmem:[#allocation4 + $0x578] sm:$0xff]
        %v433 = vld [vmem:[#allocation4 + $0x580] sm:$0xff]
        %v434 = vld [vmem:[#allocation4 + $0x588] sm:$0xff]
        %v435 = vld [vmem:[#allocation4 + $0x590] sm:$0xff]
        %v436 = vld [vmem:[#allocation4 + $0x598] sm:$0xff]
        %v437 = vld [vmem:[#allocation4 + $0x5a0] sm:$0xff]
        %v438 = vld [vmem:[#allocation4 + $0x5a8] sm:$0xff]
        %v439 = vld [vmem:[#allocation4 + $0x5b0] sm:$0xff]
        %v440 = vld [vmem:[#allocation4 + $0x5b8] sm:$0xff]
        %v441 = vld [vmem:[#allocation4 + $0x5c0] sm:$0xff]
        %v442 = vld [vmem:[#allocation4 + $0x5c8] sm:$0xff]
        %v443 = vld [vmem:[#allocation4 + $0x5d0] sm:$0xff]
        %v444 = vld [vmem:[#allocation4 + $0x5d8] sm:$0xff]
        %v445 = vld [vmem:[#allocation4 + $0x5e0] sm:$0xff]
        %v446 = vld [vmem:[#allocation4 + $0x5e8] sm:$0xff]
        %v447 = vld [vmem:[#allocation4 + $0x5f0] sm:$0xff]
        %v448 = vld [vmem:[#allocation4 + $0x5f8] sm:$0xff]
        %v449 = vld [vmem:[#allocation4 + $0x600] sm:$0xff]
        %v450 = vld [vmem:[#allocation4 + $0x608] sm:$0xff]
        %v451 = vld [vmem:[#allocation4 + $0x610] sm:$0xff]
        %v452 = vld [vmem:[#allocation4 + $0x618] sm:$0xff]
        %v453 = vld [vmem:[#allocation4 + $0x620] sm:$0xff]
        %v454 = vld [vmem:[#allocation4 + $0x628] sm:$0xff]
        %v455 = vld [vmem:[#allocation4 + $0x630] sm:$0xff]
        %v456 = vld [vmem:[#allocation4 + $0x638] sm:$0xff]
        %v457 = vld [vmem:[#allocation4 + $0x640] sm:$0xff]
        %v458 = vld [vmem:[#allocation4 + $0x648] sm:$0xff]
        %v459 = vld [vmem:[#allocation4 + $0x650] sm:$0xff]
        %v460 = vld [vmem:[#allocation4 + $0x658] sm:$0xff]
        %v461 = vld [vmem:[#allocation4 + $0x660] sm:$0xff]
        %v462 = vld [vmem:[#allocation4 + $0x668] sm:$0xff]
        %v463 = vld [vmem:[#allocation4 + $0x670] sm:$0xff]
        %v464 = vld [vmem:[#allocation4 + $0x678] sm:$0xff]
        %v465 = vld [vmem:[#allocation4 + $0x680] sm:$0xff]
        %v466 = vld [vmem:[#allocation4 + $0x688] sm:$0xff]
        %v467 = vld [vmem:[#allocation4 + $0x690] sm:$0xff]
        %v468 = vld [vmem:[#allocation4 + $0x698] sm:$0xff]
        %v469 = vld [vmem:[#allocation4 + $0x6a0] sm:$0xff]
        %v470 = vld [vmem:[#allocation4 + $0x6a8] sm:$0xff]
        %v471 = vld [vmem:[#allocation4 + $0x6b0] sm:$0xff]
        %v472 = vld [vmem:[#allocation4 + $0x6b8] sm:$0xff]
        %v473 = vld [vmem:[#allocation4 + $0x6c0] sm:$0xff]
        %v474 = vld [vmem:[#allocation4 + $0x6c8] sm:$0xff]
        %v475 = vld [vmem:[#allocation4 + $0x6d0] sm:$0xff]
        %v476 = vld [vmem:[#allocation4 + $0x6d8] sm:$0xff]
        %v477 = vld [vmem:[#allocation4 + $0x6e0] sm:$0xff]
        %v478 = vld [vmem:[#allocation4 + $0x6e8] sm:$0xff]
        %v479 = vld [vmem:[#allocation4 + $0x6f0] sm:$0xff]
        %v480 = vld [vmem:[#allocation4 + $0x6f8] sm:$0xff]
        %v481 = vld [vmem:[#allocation4 + $0x700] sm:$0xff]
        %v482 = vld [vmem:[#allocation4 + $0x708] sm:$0xff]
        %v483 = vld [vmem:[#allocation4 + $0x710] sm:$0xff]
        %v484 = vld [vmem:[#allocation4 + $0x718] sm:$0xff]
        %v485 = vld [vmem:[#allocation4 + $0x720] sm:$0xff]
        %v486 = vld [vmem:[#allocation4 + $0x728] sm:$0xff]
        %v487 = vld [vmem:[#allocation4 + $0x730] sm:$0xff]
        %v488 = vld [vmem:[#allocation4 + $0x738] sm:$0xff]
        %v489 = vld [vmem:[#allocation4 + $0x740] sm:$0xff]
        %v490 = vld [vmem:[#allocation4 + $0x748] sm:$0xff]
        %v491 = vld [vmem:[#allocation4 + $0x750] sm:$0xff]
        %v492 = vld [vmem:[#allocation4 + $0x758] sm:$0xff]
        %v493 = vld [vmem:[#allocation4 + $0x760] sm:$0xff]
        %v494 = vld [vmem:[#allocation4 + $0x768] sm:$0xff]
        %v495 = vld [vmem:[#allocation4 + $0x770] sm:$0xff]
        %v496 = vld [vmem:[#allocation4 + $0x778] sm:$0xff]
        %v497 = vld [vmem:[#allocation4 + $0x780] sm:$0xff]
        %v498 = vld [vmem:[#allocation4 + $0x788] sm:$0xff]
        %v499 = vld [vmem:[#allocation4 + $0x790] sm:$0xff]
        %v500 = vld [vmem:[#allocation4 + $0x798] sm:$0xff]
        %v501 = vld [vmem:[#allocation4 + $0x7a0] sm:$0xff]
        %v502 = vld [vmem:[#allocation4 + $0x7a8] sm:$0xff]
        %v503 = vld [vmem:[#allocation4 + $0x7b0] sm:$0xff]
        %v504 = vld [vmem:[#allocation4 + $0x7b8] sm:$0xff]
        %v505 = vld [vmem:[#allocation4 + $0x7c0] sm:$0xff]
        %v506 = vld [vmem:[#allocation4 + $0x7c8] sm:$0xff]
        %v507 = vld [vmem:[#allocation4 + $0x7d0] sm:$0xff]
        %v508 = vld [vmem:[#allocation4 + $0x7d8] sm:$0xff]
        %v509 = vld [vmem:[#allocation4 + $0x7e0] sm:$0xff]
        %v510 = vld [vmem:[#allocation4 + $0x7e8] sm:$0xff]
        %v511 = vld [vmem:[#allocation4 + $0x7f0] sm:$0xff]
        %v512 = vld [vmem:[#allocation4 + $0x7f8] sm:$0xff]
        %v513 = vld [vmem:[#allocation4 + $0x800] sm:$0xff]
        %v514 = vld [vmem:[#allocation4 + $0x808] sm:$0xff]
        %v515 = vld [vmem:[#allocation4 + $0x810] sm:$0xff]
        %v516 = vld [vmem:[#allocation4 + $0x818] sm:$0xff]
        %v517 = vld [vmem:[#allocation4 + $0x820] sm:$0xff]
        %v518 = vld [vmem:[#allocation4 + $0x828] sm:$0xff]
        %v519 = vld [vmem:[#allocation4 + $0x830] sm:$0xff]
        %v520 = vld [vmem:[#allocation4 + $0x838] sm:$0xff]
        %v521 = vld [vmem:[#allocation4 + $0x840] sm:$0xff]
        %v522 = vld [vmem:[#allocation4 + $0x848] sm:$0xff]
        %v523 = vld [vmem:[#allocation4 + $0x850] sm:$0xff]
        %v524 = vld [vmem:[#allocation4 + $0x858] sm:$0xff]
        %v525 = vld [vmem:[#allocation4 + $0x860] sm:$0xff]
        %v526 = vld [vmem:[#allocation4 + $0x868] sm:$0xff]
        %v527 = vld [vmem:[#allocation4 + $0x870] sm:$0xff]
        %v528 = vld [vmem:[#allocation4 + $0x878] sm:$0xff]
        %v529 = vld [vmem:[#allocation4 + $0x880] sm:$0xff]
        %v530 = vld [vmem:[#allocation4 + $0x888] sm:$0xff]
        %v531 = vld [vmem:[#allocation4 + $0x890] sm:$0xff]
        %v532 = vld [vmem:[#allocation4 + $0x898] sm:$0xff]
        %v533 = vld [vmem:[#allocation4 + $0x8a0] sm:$0xff]
        %v534 = vld [vmem:[#allocation4 + $0x8a8] sm:$0xff]
        %v535 = vld [vmem:[#allocation4 + $0x8b0] sm:$0xff]
        %v536 = vld [vmem:[#allocation4 + $0x8b8] sm:$0xff]
        %v537 = vld [vmem:[#allocation4 + $0x8c0] sm:$0xff]
        %v538 = vld [vmem:[#allocation4 + $0x8c8] sm:$0xff]
        %v539 = vld [vmem:[#allocation4 + $0x8d0] sm:$0xff]
        %v540 = vld [vmem:[#allocation4 + $0x8d8] sm:$0xff]
        %v541 = vld [vmem:[#allocation4 + $0x8e0] sm:$0xff]
        %v542 = vld [vmem:[#allocation4 + $0x8e8] sm:$0xff]
        %v543 = vld [vmem:[#allocation4 + $0x8f0] sm:$0xff]
        %v544 = vld [vmem:[#allocation4 + $0x8f8] sm:$0xff]
        %v545 = vld [vmem:[#allocation4 + $0x900] sm:$0xff]
        %v546 = vld [vmem:[#allocation4 + $0x908] sm:$0xff]
        %v547 = vld [vmem:[#allocation4 + $0x910] sm:$0xff]
        %v548 = vld [vmem:[#allocation4 + $0x918] sm:$0xff]
        %v549 = vld [vmem:[#allocation4 + $0x920] sm:$0xff]
        %v550 = vld [vmem:[#allocation4 + $0x928] sm:$0xff]
        %v551 = vld [vmem:[#allocation4 + $0x930] sm:$0xff]
        %v552 = vld [vmem:[#allocation4 + $0x938] sm:$0xff]
        %v553 = vld [vmem:[#allocation4 + $0x940] sm:$0xff]
        %v554 = vld [vmem:[#allocation4 + $0x948] sm:$0xff]
        %v555 = vld [vmem:[#allocation4 + $0x950] sm:$0xff]
        %v556 = vld [vmem:[#allocation4 + $0x958] sm:$0xff]
        %v557 = vld [vmem:[#allocation4 + $0x960] sm:$0xff]
        %v558 = vld [vmem:[#allocation4 + $0x968] sm:$0xff]
        %v559 = vld [vmem:[#allocation4 + $0x970] sm:$0xff]
        %v560 = vld [vmem:[#allocation4 + $0x978] sm:$0xff]
        %v561 = vld [vmem:[#allocation4 + $0x980] sm:$0xff]
        %v562 = vld [vmem:[#allocation4 + $0x988] sm:$0xff]
        %v563 = vld [vmem:[#allocation4 + $0x990] sm:$0xff]
        %v564 = vld [vmem:[#allocation4 + $0x998] sm:$0xff]
        %v565 = vld [vmem:[#allocation4 + $0x9a0] sm:$0xff]
        %v566 = vld [vmem:[#allocation4 + $0x9a8] sm:$0xff]
        %v567 = vld [vmem:[#allocation4 + $0x9b0] sm:$0xff]
        %v568 = vld [vmem:[#allocation4 + $0x9b8] sm:$0xff]
        %v569 = vld [vmem:[#allocation4 + $0x9c0] sm:$0xff]
        %v570 = vld [vmem:[#allocation4 + $0x9c8] sm:$0xff]
        %v571 = vld [vmem:[#allocation4 + $0x9d0] sm:$0xff]
        %v572 = vld [vmem:[#allocation4 + $0x9d8] sm:$0xff]
        %v573 = vld [vmem:[#allocation4 + $0x9e0] sm:$0xff]
        %v574 = vld [vmem:[#allocation4 + $0x9e8] sm:$0xff]
        %v575 = vld [vmem:[#allocation4 + $0x9f0] sm:$0xff]
        %v576 = vld [vmem:[#allocation4 + $0x9f8] sm:$0xff]
        %v577 = vld [vmem:[#allocation4 + $0xa00] sm:$0xff]
        %v578 = vld [vmem:[#allocation4 + $0xa08] sm:$0xff]
        %v579 = vld [vmem:[#allocation4 + $0xa10] sm:$0xff]
        %v580 = vld [vmem:[#allocation4 + $0xa18] sm:$0xff]
        %v581 = vld [vmem:[#allocation4 + $0xa20] sm:$0xff]
        %v582 = vld [vmem:[#allocation4 + $0xa28] sm:$0xff]
        %v583 = vld [vmem:[#allocation4 + $0xa30] sm:$0xff]
        %v584 = vld [vmem:[#allocation4 + $0xa38] sm:$0xff]
        %v585 = vld [vmem:[#allocation4 + $0xa40] sm:$0xff]
        %v586 = vld [vmem:[#allocation4 + $0xa48] sm:$0xff]
        %v587 = vld [vmem:[#allocation4 + $0xa50] sm:$0xff]
        %v588 = vld [vmem:[#allocation4 + $0xa58] sm:$0xff]
        %v589 = vld [vmem:[#allocation4 + $0xa60] sm:$0xff]
        %v590 = vld [vmem:[#allocation4 + $0xa68] sm:$0xff]
        %v591 = vld [vmem:[#allocation4 + $0xa70] sm:$0xff]
        %v592 = vld [vmem:[#allocation4 + $0xa78] sm:$0xff]
        %v593 = vld [vmem:[#allocation4 + $0xa80] sm:$0xff]
        %v594 = vld [vmem:[#allocation4 + $0xa88] sm:$0xff]
        %v595 = vld [vmem:[#allocation4 + $0xa90] sm:$0xff]
        %v596 = vld [vmem:[#allocation4 + $0xa98] sm:$0xff]
        %v597 = vld [vmem:[#allocation4 + $0xaa0] sm:$0xff]
        %v598 = vld [vmem:[#allocation4 + $0xaa8] sm:$0xff]
        %v599 = vld [vmem:[#allocation4 + $0xab0] sm:$0xff]
        %v600 = vld [vmem:[#allocation4 + $0xab8] sm:$0xff]
        %v601 = vld [vmem:[#allocation4 + $0xac0] sm:$0xff]
        %v602 = vld [vmem:[#allocation4 + $0xac8] sm:$0xff]
        %v603 = vld [vmem:[#allocation4 + $0xad0] sm:$0xff]
        %v604 = vld [vmem:[#allocation4 + $0xad8] sm:$0xff]
        %v605 = vld [vmem:[#allocation4 + $0xae0] sm:$0xff]
        %v606 = vld [vmem:[#allocation4 + $0xae8] sm:$0xff]
        %v607 = vld [vmem:[#allocation4 + $0xaf0] sm:$0xff]
        %v608 = vld [vmem:[#allocation4 + $0xaf8] sm:$0xff]
        %v609 = vld [vmem:[#allocation4 + $0xb00] sm:$0xff]
        %v610 = vld [vmem:[#allocation4 + $0xb08] sm:$0xff]
        %v611 = vld [vmem:[#allocation4 + $0xb10] sm:$0xff]
        %v612 = vld [vmem:[#allocation4 + $0xb18] sm:$0xff]
        %v613 = vld [vmem:[#allocation4 + $0xb20] sm:$0xff]
        %v614 = vld [vmem:[#allocation4 + $0xb28] sm:$0xff]
        %v615 = vld [vmem:[#allocation4 + $0xb30] sm:$0xff]
        %v616 = vld [vmem:[#allocation4 + $0xb38] sm:$0xff]
        %v617 = vld [vmem:[#allocation4 + $0xb40] sm:$0xff]
        %v618 = vld [vmem:[#allocation4 + $0xb48] sm:$0xff]
        %v619 = vld [vmem:[#allocation4 + $0xb50] sm:$0xff]
        %v620 = vld [vmem:[#allocation4 + $0xb58] sm:$0xff]
        %v621 = vld [vmem:[#allocation4 + $0xb60] sm:$0xff]
        %v622 = vld [vmem:[#allocation4 + $0xb68] sm:$0xff]
        %v623 = vld [vmem:[#allocation4 + $0xb70] sm:$0xff]
        %v624 = vld [vmem:[#allocation4 + $0xb78] sm:$0xff]
        %v625 = vld [vmem:[#allocation4 + $0xb80] sm:$0xff]
        %v626 = vld [vmem:[#allocation4 + $0xb88] sm:$0xff]
        %v627 = vld [vmem:[#allocation4 + $0xb90] sm:$0xff]
        %v628 = vld [vmem:[#allocation4 + $0xb98] sm:$0xff]
        %v629 = vld [vmem:[#allocation4 + $0xba0] sm:$0xff]
        %v630 = vld [vmem:[#allocation4 + $0xba8] sm:$0xff]
        %v631 = vld [vmem:[#allocation4 + $0xbb0] sm:$0xff]
        %v632 = vld [vmem:[#allocation4 + $0xbb8] sm:$0xff]
        %v633 = vld [vmem:[#allocation4 + $0xbc0] sm:$0xff]
        %v634 = vld [vmem:[#allocation4 + $0xbc8] sm:$0xff]
        %v635 = vld [vmem:[#allocation4 + $0xbd0] sm:$0xff]
        %v636 = vld [vmem:[#allocation4 + $0xbd8] sm:$0xff]
        %v637 = vld [vmem:[#allocation4 + $0xbe0] sm:$0xff]
        %v638 = vld [vmem:[#allocation4 + $0xbe8] sm:$0xff]
        %v639 = vld [vmem:[#allocation4 + $0xbf0] sm:$0xff]
        %v640 = vld [vmem:[#allocation4 + $0xbf8] sm:$0xff]
        %v641 = vld [vmem:[#allocation4 + $0xc00] sm:$0xff]
        %v642 = vld [vmem:[#allocation4 + $0xc08] sm:$0xff]
        %v643 = vld [vmem:[#allocation4 + $0xc10] sm:$0xff]
        %v644 = vld [vmem:[#allocation4 + $0xc18] sm:$0xff]
        %v645 = vld [vmem:[#allocation4 + $0xc20] sm:$0xff]
        %v646 = vld [vmem:[#allocation4 + $0xc28] sm:$0xff]
        %v647 = vld [vmem:[#allocation4 + $0xc30] sm:$0xff]
        %v648 = vld [vmem:[#allocation4 + $0xc38] sm:$0xff]
        %v649 = vld [vmem:[#allocation4 + $0xc40] sm:$0xff]
        %v650 = vld [vmem:[#allocation4 + $0xc48] sm:$0xff]
        %v651 = vld [vmem:[#allocation4 + $0xc50] sm:$0xff]
        %v652 = vld [vmem:[#allocation4 + $0xc58] sm:$0xff]
        %v653 = vld [vmem:[#allocation4 + $0xc60] sm:$0xff]
        %v654 = vld [vmem:[#allocation4 + $0xc68] sm:$0xff]
        %v655 = vld [vmem:[#allocation4 + $0xc70] sm:$0xff]
        %v656 = vld [vmem:[#allocation4 + $0xc78] sm:$0xff]
        %v657 = vld [vmem:[#allocation4 + $0xc80] sm:$0xff]
        %v658 = vld [vmem:[#allocation4 + $0xc88] sm:$0xff]
        %v659 = vld [vmem:[#allocation4 + $0xc90] sm:$0xff]
        %v660 = vld [vmem:[#allocation4 + $0xc98] sm:$0xff]
        %v661 = vld [vmem:[#allocation4 + $0xca0] sm:$0xff]
        %v662 = vld [vmem:[#allocation4 + $0xca8] sm:$0xff]
        %v663 = vld [vmem:[#allocation4 + $0xcb0] sm:$0xff]
        %v664 = vld [vmem:[#allocation4 + $0xcb8] sm:$0xff]
        %v665 = vld [vmem:[#allocation4 + $0xcc0] sm:$0xff]
        %v666 = vld [vmem:[#allocation4 + $0xcc8] sm:$0xff]
        %v667 = vld [vmem:[#allocation4 + $0xcd0] sm:$0xff]
        %v668 = vld [vmem:[#allocation4 + $0xcd8] sm:$0xff]
        %v669 = vld [vmem:[#allocation4 + $0xce0] sm:$0xff]
        %v670 = vld [vmem:[#allocation4 + $0xce8] sm:$0xff]
        %v671 = vld [vmem:[#allocation4 + $0xcf0] sm:$0xff]
        %v672 = vld [vmem:[#allocation4 + $0xcf8] sm:$0xff]
        %v673 = vld [vmem:[#allocation4 + $0xd00] sm:$0xff]
        %v674 = vld [vmem:[#allocation4 + $0xd08] sm:$0xff]
        %v675 = vld [vmem:[#allocation4 + $0xd10] sm:$0xff]
        %v676 = vld [vmem:[#allocation4 + $0xd18] sm:$0xff]
        %v677 = vld [vmem:[#allocation4 + $0xd20] sm:$0xff]
        %v678 = vld [vmem:[#allocation4 + $0xd28] sm:$0xff]
        %v679 = vld [vmem:[#allocation4 + $0xd30] sm:$0xff]
        %v680 = vld [vmem:[#allocation4 + $0xd38] sm:$0xff]
        %v681 = vld [vmem:[#allocation4 + $0xd40] sm:$0xff]
        %v682 = vld [vmem:[#allocation4 + $0xd48] sm:$0xff]
        %v683 = vld [vmem:[#allocation4 + $0xd50] sm:$0xff]
        %v684 = vld [vmem:[#allocation4 + $0xd58] sm:$0xff]
        %v685 = vld [vmem:[#allocation4 + $0xd60] sm:$0xff]
        %v686 = vld [vmem:[#allocation4 + $0xd68] sm:$0xff]
        %v687 = vld [vmem:[#allocation4 + $0xd70] sm:$0xff]
        %v688 = vld [vmem:[#allocation4 + $0xd78] sm:$0xff]
        %v689 = vld [vmem:[#allocation4 + $0xd80] sm:$0xff]
        %v690 = vld [vmem:[#allocation4 + $0xd88] sm:$0xff]
        %v691 = vld [vmem:[#allocation4 + $0xd90] sm:$0xff]
        %v692 = vld [vmem:[#allocation4 + $0xd98] sm:$0xff]
        %v693 = vld [vmem:[#allocation4 + $0xda0] sm:$0xff]
        %v694 = vld [vmem:[#allocation4 + $0xda8] sm:$0xff]
        %v695 = vld [vmem:[#allocation4 + $0xdb0] sm:$0xff]
        %v696 = vld [vmem:[#allocation4 + $0xdb8] sm:$0xff]
        %v697 = vld [vmem:[#allocation4 + $0xdc0] sm:$0xff]
        %v698 = vld [vmem:[#allocation4 + $0xdc8] sm:$0xff]
        %v699 = vld [vmem:[#allocation4 + $0xdd0] sm:$0xff]
        %v700 = vld [vmem:[#allocation4 + $0xdd8] sm:$0xff]
        %v701 = vld [vmem:[#allocation4 + $0xde0] sm:$0xff]
        %v702 = vld [vmem:[#allocation4 + $0xde8] sm:$0xff]
        %v703 = vld [vmem:[#allocation4 + $0xdf0] sm:$0xff]
        %v704 = vld [vmem:[#allocation4 + $0xdf8] sm:$0xff]
        %v705 = vld [vmem:[#allocation4 + $0xe00] sm:$0xff]
        %v706 = vld [vmem:[#allocation4 + $0xe08] sm:$0xff]
        %v707 = vld [vmem:[#allocation4 + $0xe10] sm:$0xff]
        %v708 = vld [vmem:[#allocation4 + $0xe18] sm:$0xff]
        %v709 = vld [vmem:[#allocation4 + $0xe20] sm:$0xff]
        %v710 = vld [vmem:[#allocation4 + $0xe28] sm:$0xff]
        %v711 = vld [vmem:[#allocation4 + $0xe30] sm:$0xff]
        %v712 = vld [vmem:[#allocation4 + $0xe38] sm:$0xff]
        %v713 = vld [vmem:[#allocation4 + $0xe40] sm:$0xff]
        %v714 = vld [vmem:[#allocation4 + $0xe48] sm:$0xff]
        %v715 = vld [vmem:[#allocation4 + $0xe50] sm:$0xff]
        %v716 = vld [vmem:[#allocation4 + $0xe58] sm:$0xff]
        %v717 = vld [vmem:[#allocation4 + $0xe60] sm:$0xff]
        %v718 = vld [vmem:[#allocation4 + $0xe68] sm:$0xff]
        %v719 = vld [vmem:[#allocation4 + $0xe70] sm:$0xff]
        %v720 = vld [vmem:[#allocation4 + $0xe78] sm:$0xff]
        %v721 = vld [vmem:[#allocation4 + $0xe80] sm:$0xff]
        %v722 = vld [vmem:[#allocation4 + $0xe88] sm:$0xff]
        %v723 = vld [vmem:[#allocation4 + $0xe90] sm:$0xff]
        %v724 = vld [vmem:[#allocation4 + $0xe98] sm:$0xff]
        %v725 = vld [vmem:[#allocation4 + $0xea0] sm:$0xff]
        %v726 = vld [vmem:[#allocation4 + $0xea8] sm:$0xff]
        %v727 = vld [vmem:[#allocation4 + $0xeb0] sm:$0xff]
        %v728 = vld [vmem:[#allocation4 + $0xeb8] sm:$0xff]
        %v729 = vld [vmem:[#allocation4 + $0xec0] sm:$0xff]
        %v730 = vld [vmem:[#allocation4 + $0xec8] sm:$0xff]
        %v731 = vld [vmem:[#allocation4 + $0xed0] sm:$0xff]
        %v732 = vld [vmem:[#allocation4 + $0xed8] sm:$0xff]
        %v733 = vld [vmem:[#allocation4 + $0xee0] sm:$0xff]
        %v734 = vld [vmem:[#allocation4 + $0xee8] sm:$0xff]
        %v735 = vld [vmem:[#allocation4 + $0xef0] sm:$0xff]
        %v736 = vld [vmem:[#allocation4 + $0xef8] sm:$0xff]
        %v737 = vld [vmem:[#allocation4 + $0xf00] sm:$0xff]
        %v738 = vld [vmem:[#allocation4 + $0xf08] sm:$0xff]
        %v739 = vld [vmem:[#allocation4 + $0xf10] sm:$0xff]
        %v740 = vld [vmem:[#allocation4 + $0xf18] sm:$0xff]
        %v741 = vld [vmem:[#allocation4 + $0xf20] sm:$0xff]
        %v742 = vld [vmem:[#allocation4 + $0xf28] sm:$0xff]
        %v743 = vld [vmem:[#allocation4 + $0xf30] sm:$0xff]
        %v744 = vld [vmem:[#allocation4 + $0xf38] sm:$0xff]
        %v745 = vld [vmem:[#allocation4 + $0xf40] sm:$0xff]
        %v746 = vld [vmem:[#allocation4 + $0xf48] sm:$0xff]
        %v747 = vld [vmem:[#allocation4 + $0xf50] sm:$0xff]
        %v748 = vld [vmem:[#allocation4 + $0xf58] sm:$0xff]
        %v749 = vld [vmem:[#allocation4 + $0xf60] sm:$0xff]
        %v750 = vld [vmem:[#allocation4 + $0xf68] sm:$0xff]
        %v751 = vld [vmem:[#allocation4 + $0xf70] sm:$0xff]
        %v752 = vld [vmem:[#allocation4 + $0xf78] sm:$0xff]
        %v753 = vld [vmem:[#allocation4 + $0xf80] sm:$0xff]
        %v754 = vld [vmem:[#allocation4 + $0xf88] sm:$0xff]
        %v755 = vld [vmem:[#allocation4 + $0xf90] sm:$0xff]
        %v756 = vld [vmem:[#allocation4 + $0xf98] sm:$0xff]
        %v757 = vld [vmem:[#allocation4 + $0xfa0] sm:$0xff]
        %v758 = vld [vmem:[#allocation4 + $0xfa8] sm:$0xff]
        %v759 = vld [vmem:[#allocation4 + $0xfb0] sm:$0xff]
        %v760 = vld [vmem:[#allocation4 + $0xfb8] sm:$0xff]
        %v761 = vld [vmem:[#allocation4 + $0xfc0] sm:$0xff]
        %v762 = vld [vmem:[#allocation4 + $0xfc8] sm:$0xff]
        %v763 = vld [vmem:[#allocation4 + $0xfd0] sm:$0xff]
        %v764 = vld [vmem:[#allocation4 + $0xfd8] sm:$0xff]
        %v765 = vld [vmem:[#allocation4 + $0xfe0] sm:$0xff]
        %v766 = vld [vmem:[#allocation4 + $0xfe8] sm:$0xff]
        %v767 = vld [vmem:[#allocation4 + $0xff0] sm:$0xff]
        %v768 = vld [vmem:[#allocation4 + $0xff8] sm:$0xff]
        %v769 = vld [vmem:[#allocation4 + $0x1000] sm:$0xff]
        %v770 = vld [vmem:[#allocation4 + $0x1008] sm:$0xff]
        %v771 = vld [vmem:[#allocation4 + $0x1010] sm:$0xff]
        %v772 = vld [vmem:[#allocation4 + $0x1018] sm:$0xff]
        %v773 = vld [vmem:[#allocation4 + $0x1020] sm:$0xff]
        %v774 = vld [vmem:[#allocation4 + $0x1028] sm:$0xff]
        %v775 = vld [vmem:[#allocation4 + $0x1030] sm:$0xff]
        %v776 = vld [vmem:[#allocation4 + $0x1038] sm:$0xff]
        %v777 = vld [vmem:[#allocation4 + $0x1040] sm:$0xff]
        %v778 = vld [vmem:[#allocation4 + $0x1048] sm:$0xff]
        %v779 = vld [vmem:[#allocation4 + $0x1050] sm:$0xff]
        %v780 = vld [vmem:[#allocation4 + $0x1058] sm:$0xff]
        %v781 = vld [vmem:[#allocation4 + $0x1060] sm:$0xff]
        %v782 = vld [vmem:[#allocation4 + $0x1068] sm:$0xff]
        %v783 = vld [vmem:[#allocation4 + $0x1070] sm:$0xff]
        %v784 = vld [vmem:[#allocation4 + $0x1078] sm:$0xff]
        %v785 = vld [vmem:[#allocation4 + $0x1080] sm:$0xff]
        %v786 = vld [vmem:[#allocation4 + $0x1088] sm:$0xff]
        %v787 = vld [vmem:[#allocation4 + $0x1090] sm:$0xff]
        %v788 = vld [vmem:[#allocation4 + $0x1098] sm:$0xff]
        %v789 = vld [vmem:[#allocation4 + $0x10a0] sm:$0xff]
        %v790 = vld [vmem:[#allocation4 + $0x10a8] sm:$0xff]
        %v791 = vld [vmem:[#allocation4 + $0x10b0] sm:$0xff]
        %v792 = vld [vmem:[#allocation4 + $0x10b8] sm:$0xff]
        %v793 = vld [vmem:[#allocation4 + $0x10c0] sm:$0xff]
        %v794 = vld [vmem:[#allocation4 + $0x10c8] sm:$0xff]
        %v795 = vld [vmem:[#allocation4 + $0x10d0] sm:$0xff]
        %v796 = vld [vmem:[#allocation4 + $0x10d8] sm:$0xff]
        %v797 = vld [vmem:[#allocation4 + $0x10e0] sm:$0xff]
        %v798 = vld [vmem:[#allocation4 + $0x10e8] sm:$0xff]
        %v799 = vld [vmem:[#allocation4 + $0x10f0] sm:$0xff]
        %v800 = vld [vmem:[#allocation4 + $0x10f8] sm:$0xff]
        %v801 = vld [vmem:[#allocation4 + $0x1100] sm:$0xff]
        %v802 = vld [vmem:[#allocation4 + $0x1108] sm:$0xff]
        %v803 = vld [vmem:[#allocation4 + $0x1110] sm:$0xff]
        %v804 = vld [vmem:[#allocation4 + $0x1118] sm:$0xff]
        %v805 = vld [vmem:[#allocation4 + $0x1120] sm:$0xff]
        %v806 = vld [vmem:[#allocation4 + $0x1128] sm:$0xff]
        %v807 = vld [vmem:[#allocation4 + $0x1130] sm:$0xff]
        %v808 = vld [vmem:[#allocation4 + $0x1138] sm:$0xff]
        %v809 = vld [vmem:[#allocation4 + $0x1140] sm:$0xff]
        %v810 = vld [vmem:[#allocation4 + $0x1148] sm:$0xff]
        %v811 = vld [vmem:[#allocation4 + $0x1150] sm:$0xff]
        %v812 = vld [vmem:[#allocation4 + $0x1158] sm:$0xff]
        %v813 = vld [vmem:[#allocation4 + $0x1160] sm:$0xff]
        %v814 = vld [vmem:[#allocation4 + $0x1168] sm:$0xff]
        %v815 = vld [vmem:[#allocation4 + $0x1170] sm:$0xff]
        %v816 = vld [vmem:[#allocation4 + $0x1178] sm:$0xff]
        %v817 = vld [vmem:[#allocation4 + $0x1180] sm:$0xff]
        %v818 = vld [vmem:[#allocation4 + $0x1188] sm:$0xff]
        %v819 = vld [vmem:[#allocation4 + $0x1190] sm:$0xff]
        %v820 = vld [vmem:[#allocation4 + $0x1198] sm:$0xff]
        %v821 = vld [vmem:[#allocation4 + $0x11a0] sm:$0xff]
        %v822 = vld [vmem:[#allocation4 + $0x11a8] sm:$0xff]
        %v823 = vld [vmem:[#allocation4 + $0x11b0] sm:$0xff]
        %v824 = vld [vmem:[#allocation4 + $0x11b8] sm:$0xff]
        %v825 = vld [vmem:[#allocation4 + $0x11c0] sm:$0xff]
        %v826 = vld [vmem:[#allocation4 + $0x11c8] sm:$0xff]
        %v827 = vld [vmem:[#allocation4 + $0x11d0] sm:$0xff]
        %v828 = vld [vmem:[#allocation4 + $0x11d8] sm:$0xff]
        %v829 = vld [vmem:[#allocation4 + $0x11e0] sm:$0xff]
        %v830 = vld [vmem:[#allocation4 + $0x11e8] sm:$0xff]
        %v831 = vld [vmem:[#allocation4 + $0x11f0] sm:$0xff]
        %v832 = vld [vmem:[#allocation4 + $0x11f8] sm:$0xff]
        %v833 = vld [vmem:[#allocation4 + $0x1200] sm:$0xff]
        %v834 = vld [vmem:[#allocation4 + $0x1208] sm:$0xff]
        %v835 = vld [vmem:[#allocation4 + $0x1210] sm:$0xff]
        %v836 = vld [vmem:[#allocation4 + $0x1218] sm:$0xff]
        %v837 = vld [vmem:[#allocation4 + $0x1220] sm:$0xff]
        %v838 = vld [vmem:[#allocation4 + $0x1228] sm:$0xff]
        %v839 = vld [vmem:[#allocation4 + $0x1230] sm:$0xff]
        %v840 = vld [vmem:[#allocation4 + $0x1238] sm:$0xff]
        %v841 = vld [vmem:[#allocation4 + $0x1240] sm:$0xff]
        %v842 = vld [vmem:[#allocation4 + $0x1248] sm:$0xff]
        %v843 = vld [vmem:[#allocation4 + $0x1250] sm:$0xff]
        %v844 = vld [vmem:[#allocation4 + $0x1258] sm:$0xff]
        %v845 = vld [vmem:[#allocation4 + $0x1260] sm:$0xff]
        %v846 = vld [vmem:[#allocation4 + $0x1268] sm:$0xff]
        %v847 = vld [vmem:[#allocation4 + $0x1270] sm:$0xff]
        %v848 = vld [vmem:[#allocation4 + $0x1278] sm:$0xff]
        %v849 = vld [vmem:[#allocation4 + $0x1280] sm:$0xff]
        %v850 = vld [vmem:[#allocation4 + $0x1288] sm:$0xff]
        %v851 = vld [vmem:[#allocation4 + $0x1290] sm:$0xff]
        %v852 = vld [vmem:[#allocation4 + $0x1298] sm:$0xff]
        %v853 = vld [vmem:[#allocation4 + $0x12a0] sm:$0xff]
        %v854 = vld [vmem:[#allocation4 + $0x12a8] sm:$0xff]
        %v855 = vld [vmem:[#allocation4 + $0x12b0] sm:$0xff]
        %v856 = vld [vmem:[#allocation4 + $0x12b8] sm:$0xff]
        %v857 = vld [vmem:[#allocation4 + $0x12c0] sm:$0xff]
        %v858 = vld [vmem:[#allocation4 + $0x12c8] sm:$0xff]
        %v859 = vld [vmem:[#allocation4 + $0x12d0] sm:$0xff]
        %v860 = vld [vmem:[#allocation4 + $0x12d8] sm:$0xff]
        %v861 = vld [vmem:[#allocation4 + $0x12e0] sm:$0xff]
        %v862 = vld [vmem:[#allocation4 + $0x12e8] sm:$0xff]
        %v863 = vld [vmem:[#allocation4 + $0x12f0] sm:$0xff]
        %v864 = vld [vmem:[#allocation4 + $0x12f8] sm:$0xff]
        %v865 = vld [vmem:[#allocation4 + $0x1300] sm:$0xff]
        %v866 = vld [vmem:[#allocation4 + $0x1308] sm:$0xff]
        %v867 = vld [vmem:[#allocation4 + $0x1310] sm:$0xff]
        %v868 = vld [vmem:[#allocation4 + $0x1318] sm:$0xff]
        %v869 = vld [vmem:[#allocation4 + $0x1320] sm:$0xff]
        %v870 = vld [vmem:[#allocation4 + $0x1328] sm:$0xff]
        %v871 = vld [vmem:[#allocation4 + $0x1330] sm:$0xff]
        %v872 = vld [vmem:[#allocation4 + $0x1338] sm:$0xff]
        %v873 = vld [vmem:[#allocation4 + $0x1340] sm:$0xff]
        %v874 = vld [vmem:[#allocation4 + $0x1348] sm:$0xff]
        %v875 = vld [vmem:[#allocation4 + $0x1350] sm:$0xff]
        %v876 = vld [vmem:[#allocation4 + $0x1358] sm:$0xff]
        %v877 = vld [vmem:[#allocation4 + $0x1360] sm:$0xff]
        %v878 = vld [vmem:[#allocation4 + $0x1368] sm:$0xff]
        %v879 = vld [vmem:[#allocation4 + $0x1370] sm:$0xff]
        %v880 = vld [vmem:[#allocation4 + $0x1378] sm:$0xff]
        %v881 = vld [vmem:[#allocation4 + $0x1380] sm:$0xff]
        %v882 = vld [vmem:[#allocation4 + $0x1388] sm:$0xff]
        %v883 = vld [vmem:[#allocation4 + $0x1390] sm:$0xff]
        %v884 = vld [vmem:[#allocation4 + $0x1398] sm:$0xff]
        %v885 = vld [vmem:[#allocation4 + $0x13a0] sm:$0xff]
        %v886 = vld [vmem:[#allocation4 + $0x13a8] sm:$0xff]
        %v887 = vld [vmem:[#allocation4 + $0x13b0] sm:$0xff]
        %v888 = vld [vmem:[#allocation4 + $0x13b8] sm:$0xff]
        %v889 = vld [vmem:[#allocation4 + $0x13c0] sm:$0xff]
        %v890 = vld [vmem:[#allocation4 + $0x13c8] sm:$0xff]
        %v891 = vld [vmem:[#allocation4 + $0x13d0] sm:$0xff]
        %v892 = vld [vmem:[#allocation4 + $0x13d8] sm:$0xff]
        %v893 = vld [vmem:[#allocation4 + $0x13e0] sm:$0xff]
        %v894 = vld [vmem:[#allocation4 + $0x13e8] sm:$0xff]
        %v895 = vld [vmem:[#allocation4 + $0x13f0] sm:$0xff]
        %v896 = vld [vmem:[#allocation4 + $0x13f8] sm:$0xff]
        %v1537 = vunpack.c.l.b16 %v257
        %v1538 = vunpack.c.h.b16 %v257
        %v1539 = vunpack.c.l.b16 %v258
        %v1540 = vunpack.c.h.b16 %v258
        %v1541 = vunpack.c.l.b16 %v259
        %v1542 = vunpack.c.h.b16 %v259
        %v1543 = vunpack.c.l.b16 %v260
        %v1544 = vunpack.c.h.b16 %v260
        %v1545 = vunpack.c.l.b16 %v261
        %v1546 = vunpack.c.h.b16 %v261
        %v1547 = vunpack.c.l.b16 %v262
        %v1548 = vunpack.c.h.b16 %v262
        %v1549 = vunpack.c.l.b16 %v263
        %v1550 = vunpack.c.h.b16 %v263
        %v1551 = vunpack.c.l.b16 %v264
        %v1552 = vunpack.c.h.b16 %v264
        %v1553 = vunpack.c.l.b16 %v265
        %v1554 = vunpack.c.h.b16 %v265
        %v1555 = vunpack.c.l.b16 %v266
        %v1556 = vunpack.c.h.b16 %v266
        %v1557 = vunpack.c.l.b16 %v267
        %v1558 = vunpack.c.h.b16 %v267
        %v1559 = vunpack.c.l.b16 %v268
        %v1560 = vunpack.c.h.b16 %v268
        %v1561 = vunpack.c.l.b16 %v269
        %v1562 = vunpack.c.h.b16 %v269
        %v1563 = vunpack.c.l.b16 %v270
        %v1564 = vunpack.c.h.b16 %v270
        %v1565 = vunpack.c.l.b16 %v271
        %v1566 = vunpack.c.h.b16 %v271
        %v1567 = vunpack.c.l.b16 %v272
        %v1568 = vunpack.c.h.b16 %v272
        %v1569 = vunpack.c.l.b16 %v273
        %v1570 = vunpack.c.h.b16 %v273
        %v1571 = vunpack.c.l.b16 %v274
        %v1572 = vunpack.c.h.b16 %v274
        %v1573 = vunpack.c.l.b16 %v275
        %v1574 = vunpack.c.h.b16 %v275
        %v1575 = vunpack.c.l.b16 %v276
        %v1576 = vunpack.c.h.b16 %v276
        %v1577 = vunpack.c.l.b16 %v277
        %v1578 = vunpack.c.h.b16 %v277
        %v1579 = vunpack.c.l.b16 %v278
        %v1580 = vunpack.c.h.b16 %v278
        %v1581 = vunpack.c.l.b16 %v279
        %v1582 = vunpack.c.h.b16 %v279
        %v1583 = vunpack.c.l.b16 %v280
        %v1584 = vunpack.c.h.b16 %v280
        %v1585 = vunpack.c.l.b16 %v281
        %v1586 = vunpack.c.h.b16 %v281
        %v1587 = vunpack.c.l.b16 %v282
        %v1588 = vunpack.c.h.b16 %v282
        %v1589 = vunpack.c.l.b16 %v283
        %v1590 = vunpack.c.h.b16 %v283
        %v1591 = vunpack.c.l.b16 %v284
        %v1592 = vunpack.c.h.b16 %v284
        %v1593 = vunpack.c.l.b16 %v285
        %v1594 = vunpack.c.h.b16 %v285
        %v1595 = vunpack.c.l.b16 %v286
        %v1596 = vunpack.c.h.b16 %v286
        %v1597 = vunpack.c.l.b16 %v287
        %v1598 = vunpack.c.h.b16 %v287
        %v1599 = vunpack.c.l.b16 %v288
        %v1600 = vunpack.c.h.b16 %v288
        %v1601 = vunpack.c.l.b16 %v289
        %v1602 = vunpack.c.h.b16 %v289
        %v1603 = vunpack.c.l.b16 %v290
        %v1604 = vunpack.c.h.b16 %v290
        %v1605 = vunpack.c.l.b16 %v291
        %v1606 = vunpack.c.h.b16 %v291
        %v1607 = vunpack.c.l.b16 %v292
        %v1608 = vunpack.c.h.b16 %v292
        %v1609 = vunpack.c.l.b16 %v293
        %v1610 = vunpack.c.h.b16 %v293
        %v1611 = vunpack.c.l.b16 %v294
        %v1612 = vunpack.c.h.b16 %v294
        %v1613 = vunpack.c.l.b16 %v295
        %v1614 = vunpack.c.h.b16 %v295
        %v1615 = vunpack.c.l.b16 %v296
        %v1616 = vunpack.c.h.b16 %v296
        %v1617 = vunpack.c.l.b16 %v297
        %v1618 = vunpack.c.h.b16 %v297
        %v1619 = vunpack.c.l.b16 %v298
        %v1620 = vunpack.c.h.b16 %v298
        %v1621 = vunpack.c.l.b16 %v299
        %v1622 = vunpack.c.h.b16 %v299
        %v1623 = vunpack.c.l.b16 %v300
        %v1624 = vunpack.c.h.b16 %v300
        %v1625 = vunpack.c.l.b16 %v301
        %v1626 = vunpack.c.h.b16 %v301
        %v1627 = vunpack.c.l.b16 %v302
        %v1628 = vunpack.c.h.b16 %v302
        %v1629 = vunpack.c.l.b16 %v303
        %v1630 = vunpack.c.h.b16 %v303
        %v1631 = vunpack.c.l.b16 %v304
        %v1632 = vunpack.c.h.b16 %v304
        %v1633 = vunpack.c.l.b16 %v305
        %v1634 = vunpack.c.h.b16 %v305
        %v1635 = vunpack.c.l.b16 %v306
        %v1636 = vunpack.c.h.b16 %v306
        %v1637 = vunpack.c.l.b16 %v307
        %v1638 = vunpack.c.h.b16 %v307
        %v1639 = vunpack.c.l.b16 %v308
        %v1640 = vunpack.c.h.b16 %v308
        %v1641 = vunpack.c.l.b16 %v309
        %v1642 = vunpack.c.h.b16 %v309
        %v1643 = vunpack.c.l.b16 %v310
        %v1644 = vunpack.c.h.b16 %v310
        %v1645 = vunpack.c.l.b16 %v311
        %v1646 = vunpack.c.h.b16 %v311
        %v1647 = vunpack.c.l.b16 %v312
        %v1648 = vunpack.c.h.b16 %v312
        %v1649 = vunpack.c.l.b16 %v313
        %v1650 = vunpack.c.h.b16 %v313
        %v1651 = vunpack.c.l.b16 %v314
        %v1652 = vunpack.c.h.b16 %v314
        %v1653 = vunpack.c.l.b16 %v315
        %v1654 = vunpack.c.h.b16 %v315
        %v1655 = vunpack.c.l.b16 %v316
        %v1656 = vunpack.c.h.b16 %v316
        %v1657 = vunpack.c.l.b16 %v317
        %v1658 = vunpack.c.h.b16 %v317
        %v1659 = vunpack.c.l.b16 %v318
        %v1660 = vunpack.c.h.b16 %v318
        %v1661 = vunpack.c.l.b16 %v319
        %v1662 = vunpack.c.h.b16 %v319
        %v1663 = vunpack.c.l.b16 %v320
        %v1664 = vunpack.c.h.b16 %v320
        %v1665 = vunpack.c.l.b16 %v321
        %v1666 = vunpack.c.h.b16 %v321
        %v1667 = vunpack.c.l.b16 %v322
        %v1668 = vunpack.c.h.b16 %v322
        %v1669 = vunpack.c.l.b16 %v323
        %v1670 = vunpack.c.h.b16 %v323
        %v1671 = vunpack.c.l.b16 %v324
        %v1672 = vunpack.c.h.b16 %v324
        %v1673 = vunpack.c.l.b16 %v325
        %v1674 = vunpack.c.h.b16 %v325
        %v1675 = vunpack.c.l.b16 %v326
        %v1676 = vunpack.c.h.b16 %v326
        %v1677 = vunpack.c.l.b16 %v327
        %v1678 = vunpack.c.h.b16 %v327
        %v1679 = vunpack.c.l.b16 %v328
        %v1680 = vunpack.c.h.b16 %v328
        %v1681 = vunpack.c.l.b16 %v329
        %v1682 = vunpack.c.h.b16 %v329
        %v1683 = vunpack.c.l.b16 %v330
        %v1684 = vunpack.c.h.b16 %v330
        %v1685 = vunpack.c.l.b16 %v331
        %v1686 = vunpack.c.h.b16 %v331
        %v1687 = vunpack.c.l.b16 %v332
        %v1688 = vunpack.c.h.b16 %v332
        %v1689 = vunpack.c.l.b16 %v333
        %v1690 = vunpack.c.h.b16 %v333
        %v1691 = vunpack.c.l.b16 %v334
        %v1692 = vunpack.c.h.b16 %v334
        %v1693 = vunpack.c.l.b16 %v335
        %v1694 = vunpack.c.h.b16 %v335
        %v1695 = vunpack.c.l.b16 %v336
        %v1696 = vunpack.c.h.b16 %v336
        %v1697 = vunpack.c.l.b16 %v337
        %v1698 = vunpack.c.h.b16 %v337
        %v1699 = vunpack.c.l.b16 %v338
        %v1700 = vunpack.c.h.b16 %v338
        %v1701 = vunpack.c.l.b16 %v339
        %v1702 = vunpack.c.h.b16 %v339
        %v1703 = vunpack.c.l.b16 %v340
        %v1704 = vunpack.c.h.b16 %v340
        %v1705 = vunpack.c.l.b16 %v341
        %v1706 = vunpack.c.h.b16 %v341
        %v1707 = vunpack.c.l.b16 %v342
        %v1708 = vunpack.c.h.b16 %v342
        %v1709 = vunpack.c.l.b16 %v343
        %v1710 = vunpack.c.h.b16 %v343
        %v1711 = vunpack.c.l.b16 %v344
        %v1712 = vunpack.c.h.b16 %v344
        %v1713 = vunpack.c.l.b16 %v345
        %v1714 = vunpack.c.h.b16 %v345
        %v1715 = vunpack.c.l.b16 %v346
        %v1716 = vunpack.c.h.b16 %v346
        %v1717 = vunpack.c.l.b16 %v347
        %v1718 = vunpack.c.h.b16 %v347
        %v1719 = vunpack.c.l.b16 %v348
        %v1720 = vunpack.c.h.b16 %v348
        %v1721 = vunpack.c.l.b16 %v349
        %v1722 = vunpack.c.h.b16 %v349
        %v1723 = vunpack.c.l.b16 %v350
        %v1724 = vunpack.c.h.b16 %v350
        %v1725 = vunpack.c.l.b16 %v351
        %v1726 = vunpack.c.h.b16 %v351
        %v1727 = vunpack.c.l.b16 %v352
        %v1728 = vunpack.c.h.b16 %v352
        %v1729 = vunpack.c.l.b16 %v353
        %v1730 = vunpack.c.h.b16 %v353
        %v1731 = vunpack.c.l.b16 %v354
        %v1732 = vunpack.c.h.b16 %v354
        %v1733 = vunpack.c.l.b16 %v355
        %v1734 = vunpack.c.h.b16 %v355
        %v1735 = vunpack.c.l.b16 %v356
        %v1736 = vunpack.c.h.b16 %v356
        %v1737 = vunpack.c.l.b16 %v357
        %v1738 = vunpack.c.h.b16 %v357
        %v1739 = vunpack.c.l.b16 %v358
        %v1740 = vunpack.c.h.b16 %v358
        %v1741 = vunpack.c.l.b16 %v359
        %v1742 = vunpack.c.h.b16 %v359
        %v1743 = vunpack.c.l.b16 %v360
        %v1744 = vunpack.c.h.b16 %v360
        %v1745 = vunpack.c.l.b16 %v361
        %v1746 = vunpack.c.h.b16 %v361
        %v1747 = vunpack.c.l.b16 %v362
        %v1748 = vunpack.c.h.b16 %v362
        %v1749 = vunpack.c.l.b16 %v363
        %v1750 = vunpack.c.h.b16 %v363
        %v1751 = vunpack.c.l.b16 %v364
        %v1752 = vunpack.c.h.b16 %v364
        %v1753 = vunpack.c.l.b16 %v365
        %v1754 = vunpack.c.h.b16 %v365
        %v1755 = vunpack.c.l.b16 %v366
        %v1756 = vunpack.c.h.b16 %v366
        %v1757 = vunpack.c.l.b16 %v367
        %v1758 = vunpack.c.h.b16 %v367
        %v1759 = vunpack.c.l.b16 %v368
        %v1760 = vunpack.c.h.b16 %v368
        %v1761 = vunpack.c.l.b16 %v369
        %v1762 = vunpack.c.h.b16 %v369
        %v1763 = vunpack.c.l.b16 %v370
        %v1764 = vunpack.c.h.b16 %v370
        %v1765 = vunpack.c.l.b16 %v371
        %v1766 = vunpack.c.h.b16 %v371
        %v1767 = vunpack.c.l.b16 %v372
        %v1768 = vunpack.c.h.b16 %v372
        %v1769 = vunpack.c.l.b16 %v373
        %v1770 = vunpack.c.h.b16 %v373
        %v1771 = vunpack.c.l.b16 %v374
        %v1772 = vunpack.c.h.b16 %v374
        %v1773 = vunpack.c.l.b16 %v375
        %v1774 = vunpack.c.h.b16 %v375
        %v1775 = vunpack.c.l.b16 %v376
        %v1776 = vunpack.c.h.b16 %v376
        %v1777 = vunpack.c.l.b16 %v377
        %v1778 = vunpack.c.h.b16 %v377
        %v1779 = vunpack.c.l.b16 %v378
        %v1780 = vunpack.c.h.b16 %v378
        %v1781 = vunpack.c.l.b16 %v379
        %v1782 = vunpack.c.h.b16 %v379
        %v1783 = vunpack.c.l.b16 %v380
        %v1784 = vunpack.c.h.b16 %v380
        %v1785 = vunpack.c.l.b16 %v381
        %v1786 = vunpack.c.h.b16 %v381
        %v1787 = vunpack.c.l.b16 %v382
        %v1788 = vunpack.c.h.b16 %v382
        %v1789 = vunpack.c.l.b16 %v383
        %v1790 = vunpack.c.h.b16 %v383
        %v1791 = vunpack.c.l.b16 %v384
        %v1792 = vunpack.c.h.b16 %v384
        %v1793 = vunpack.c.l.b16 %v385
        %v1794 = vunpack.c.h.b16 %v385
        %v1795 = vunpack.c.l.b16 %v386
        %v1796 = vunpack.c.h.b16 %v386
        %v1797 = vunpack.c.l.b16 %v387
        %v1798 = vunpack.c.h.b16 %v387
        %v1799 = vunpack.c.l.b16 %v388
        %v1800 = vunpack.c.h.b16 %v388
        %v1801 = vunpack.c.l.b16 %v389
        %v1802 = vunpack.c.h.b16 %v389
        %v1803 = vunpack.c.l.b16 %v390
        %v1804 = vunpack.c.h.b16 %v390
        %v1805 = vunpack.c.l.b16 %v391
        %v1806 = vunpack.c.h.b16 %v391
        %v1807 = vunpack.c.l.b16 %v392
        %v1808 = vunpack.c.h.b16 %v392
        %v1809 = vunpack.c.l.b16 %v393
        %v1810 = vunpack.c.h.b16 %v393
        %v1811 = vunpack.c.l.b16 %v394
        %v1812 = vunpack.c.h.b16 %v394
        %v1813 = vunpack.c.l.b16 %v395
        %v1814 = vunpack.c.h.b16 %v395
        %v1815 = vunpack.c.l.b16 %v396
        %v1816 = vunpack.c.h.b16 %v396
        %v1817 = vunpack.c.l.b16 %v397
        %v1818 = vunpack.c.h.b16 %v397
        %v1819 = vunpack.c.l.b16 %v398
        %v1820 = vunpack.c.h.b16 %v398
        %v1821 = vunpack.c.l.b16 %v399
        %v1822 = vunpack.c.h.b16 %v399
        %v1823 = vunpack.c.l.b16 %v400
        %v1824 = vunpack.c.h.b16 %v400
        %v1825 = vunpack.c.l.b16 %v401
        %v1826 = vunpack.c.h.b16 %v401
        %v1827 = vunpack.c.l.b16 %v402
        %v1828 = vunpack.c.h.b16 %v402
        %v1829 = vunpack.c.l.b16 %v403
        %v1830 = vunpack.c.h.b16 %v403
        %v1831 = vunpack.c.l.b16 %v404
        %v1832 = vunpack.c.h.b16 %v404
        %v1833 = vunpack.c.l.b16 %v405
        %v1834 = vunpack.c.h.b16 %v405
        %v1835 = vunpack.c.l.b16 %v406
        %v1836 = vunpack.c.h.b16 %v406
        %v1837 = vunpack.c.l.b16 %v407
        %v1838 = vunpack.c.h.b16 %v407
        %v1839 = vunpack.c.l.b16 %v408
        %v1840 = vunpack.c.h.b16 %v408
        %v1841 = vunpack.c.l.b16 %v409
        %v1842 = vunpack.c.h.b16 %v409
        %v1843 = vunpack.c.l.b16 %v410
        %v1844 = vunpack.c.h.b16 %v410
        %v1845 = vunpack.c.l.b16 %v411
        %v1846 = vunpack.c.h.b16 %v411
        %v1847 = vunpack.c.l.b16 %v412
        %v1848 = vunpack.c.h.b16 %v412
        %v1849 = vunpack.c.l.b16 %v413
        %v1850 = vunpack.c.h.b16 %v413
        %v1851 = vunpack.c.l.b16 %v414
        %v1852 = vunpack.c.h.b16 %v414
        %v1853 = vunpack.c.l.b16 %v415
        %v1854 = vunpack.c.h.b16 %v415
        %v1855 = vunpack.c.l.b16 %v416
        %v1856 = vunpack.c.h.b16 %v416
        %v1857 = vunpack.c.l.b16 %v417
        %v1858 = vunpack.c.h.b16 %v417
        %v1859 = vunpack.c.l.b16 %v418
        %v1860 = vunpack.c.h.b16 %v418
        %v1861 = vunpack.c.l.b16 %v419
        %v1862 = vunpack.c.h.b16 %v419
        %v1863 = vunpack.c.l.b16 %v420
        %v1864 = vunpack.c.h.b16 %v420
        %v1865 = vunpack.c.l.b16 %v421
        %v1866 = vunpack.c.h.b16 %v421
        %v1867 = vunpack.c.l.b16 %v422
        %v1868 = vunpack.c.h.b16 %v422
        %v1869 = vunpack.c.l.b16 %v423
        %v1870 = vunpack.c.h.b16 %v423
        %v1871 = vunpack.c.l.b16 %v424
        %v1872 = vunpack.c.h.b16 %v424
        %v1873 = vunpack.c.l.b16 %v425
        %v1874 = vunpack.c.h.b16 %v425
        %v1875 = vunpack.c.l.b16 %v426
        %v1876 = vunpack.c.h.b16 %v426
        %v1877 = vunpack.c.l.b16 %v427
        %v1878 = vunpack.c.h.b16 %v427
        %v1879 = vunpack.c.l.b16 %v428
        %v1880 = vunpack.c.h.b16 %v428
        %v1881 = vunpack.c.l.b16 %v429
        %v1882 = vunpack.c.h.b16 %v429
        %v1883 = vunpack.c.l.b16 %v430
        %v1884 = vunpack.c.h.b16 %v430
        %v1885 = vunpack.c.l.b16 %v431
        %v1886 = vunpack.c.h.b16 %v431
        %v1887 = vunpack.c.l.b16 %v432
        %v1888 = vunpack.c.h.b16 %v432
        %v1889 = vunpack.c.l.b16 %v433
        %v1890 = vunpack.c.h.b16 %v433
        %v1891 = vunpack.c.l.b16 %v434
        %v1892 = vunpack.c.h.b16 %v434
        %v1893 = vunpack.c.l.b16 %v435
        %v1894 = vunpack.c.h.b16 %v435
        %v1895 = vunpack.c.l.b16 %v436
        %v1896 = vunpack.c.h.b16 %v436
        %v1897 = vunpack.c.l.b16 %v437
        %v1898 = vunpack.c.h.b16 %v437
        %v1899 = vunpack.c.l.b16 %v438
        %v1900 = vunpack.c.h.b16 %v438
        %v1901 = vunpack.c.l.b16 %v439
        %v1902 = vunpack.c.h.b16 %v439
        %v1903 = vunpack.c.l.b16 %v440
        %v1904 = vunpack.c.h.b16 %v440
        %v1905 = vunpack.c.l.b16 %v441
        %v1906 = vunpack.c.h.b16 %v441
        %v1907 = vunpack.c.l.b16 %v442
        %v1908 = vunpack.c.h.b16 %v442
        %v1909 = vunpack.c.l.b16 %v443
        %v1910 = vunpack.c.h.b16 %v443
        %v1911 = vunpack.c.l.b16 %v444
        %v1912 = vunpack.c.h.b16 %v444
        %v1913 = vunpack.c.l.b16 %v445
        %v1914 = vunpack.c.h.b16 %v445
        %v1915 = vunpack.c.l.b16 %v446
        %v1916 = vunpack.c.h.b16 %v446
        %v1917 = vunpack.c.l.b16 %v447
        %v1918 = vunpack.c.h.b16 %v447
        %v1919 = vunpack.c.l.b16 %v448
        %v1920 = vunpack.c.h.b16 %v448
        %v1921 = vunpack.c.l.b16 %v449
        %v1922 = vunpack.c.h.b16 %v449
        %v1923 = vunpack.c.l.b16 %v450
        %v1924 = vunpack.c.h.b16 %v450
        %v1925 = vunpack.c.l.b16 %v451
        %v1926 = vunpack.c.h.b16 %v451
        %v1927 = vunpack.c.l.b16 %v452
        %v1928 = vunpack.c.h.b16 %v452
        %v1929 = vunpack.c.l.b16 %v453
        %v1930 = vunpack.c.h.b16 %v453
        %v1931 = vunpack.c.l.b16 %v454
        %v1932 = vunpack.c.h.b16 %v454
        %v1933 = vunpack.c.l.b16 %v455
        %v1934 = vunpack.c.h.b16 %v455
        %v1935 = vunpack.c.l.b16 %v456
        %v1936 = vunpack.c.h.b16 %v456
        %v1937 = vunpack.c.l.b16 %v457
        %v1938 = vunpack.c.h.b16 %v457
        %v1939 = vunpack.c.l.b16 %v458
        %v1940 = vunpack.c.h.b16 %v458
        %v1941 = vunpack.c.l.b16 %v459
        %v1942 = vunpack.c.h.b16 %v459
        %v1943 = vunpack.c.l.b16 %v460
        %v1944 = vunpack.c.h.b16 %v460
        %v1945 = vunpack.c.l.b16 %v461
        %v1946 = vunpack.c.h.b16 %v461
        %v1947 = vunpack.c.l.b16 %v462
        %v1948 = vunpack.c.h.b16 %v462
        %v1949 = vunpack.c.l.b16 %v463
        %v1950 = vunpack.c.h.b16 %v463
        %v1951 = vunpack.c.l.b16 %v464
        %v1952 = vunpack.c.h.b16 %v464
        %v1953 = vunpack.c.l.b16 %v465
        %v1954 = vunpack.c.h.b16 %v465
        %v1955 = vunpack.c.l.b16 %v466
        %v1956 = vunpack.c.h.b16 %v466
        %v1957 = vunpack.c.l.b16 %v467
        %v1958 = vunpack.c.h.b16 %v467
        %v1959 = vunpack.c.l.b16 %v468
        %v1960 = vunpack.c.h.b16 %v468
        %v1961 = vunpack.c.l.b16 %v469
        %v1962 = vunpack.c.h.b16 %v469
        %v1963 = vunpack.c.l.b16 %v470
        %v1964 = vunpack.c.h.b16 %v470
        %v1965 = vunpack.c.l.b16 %v471
        %v1966 = vunpack.c.h.b16 %v471
        %v1967 = vunpack.c.l.b16 %v472
        %v1968 = vunpack.c.h.b16 %v472
        %v1969 = vunpack.c.l.b16 %v473
        %v1970 = vunpack.c.h.b16 %v473
        %v1971 = vunpack.c.l.b16 %v474
        %v1972 = vunpack.c.h.b16 %v474
        %v1973 = vunpack.c.l.b16 %v475
        %v1974 = vunpack.c.h.b16 %v475
        %v1975 = vunpack.c.l.b16 %v476
        %v1976 = vunpack.c.h.b16 %v476
        %v1977 = vunpack.c.l.b16 %v477
        %v1978 = vunpack.c.h.b16 %v477
        %v1979 = vunpack.c.l.b16 %v478
        %v1980 = vunpack.c.h.b16 %v478
        %v1981 = vunpack.c.l.b16 %v479
        %v1982 = vunpack.c.h.b16 %v479
        %v1983 = vunpack.c.l.b16 %v480
        %v1984 = vunpack.c.h.b16 %v480
        %v1985 = vunpack.c.l.b16 %v481
        %v1986 = vunpack.c.h.b16 %v481
        %v1987 = vunpack.c.l.b16 %v482
        %v1988 = vunpack.c.h.b16 %v482
        %v1989 = vunpack.c.l.b16 %v483
        %v1990 = vunpack.c.h.b16 %v483
        %v1991 = vunpack.c.l.b16 %v484
        %v1992 = vunpack.c.h.b16 %v484
        %v1993 = vunpack.c.l.b16 %v485
        %v1994 = vunpack.c.h.b16 %v485
        %v1995 = vunpack.c.l.b16 %v486
        %v1996 = vunpack.c.h.b16 %v486
        %v1997 = vunpack.c.l.b16 %v487
        %v1998 = vunpack.c.h.b16 %v487
        %v1999 = vunpack.c.l.b16 %v488
        %v2000 = vunpack.c.h.b16 %v488
        %v2001 = vunpack.c.l.b16 %v489
        %v2002 = vunpack.c.h.b16 %v489
        %v2003 = vunpack.c.l.b16 %v490
        %v2004 = vunpack.c.h.b16 %v490
        %v2005 = vunpack.c.l.b16 %v491
        %v2006 = vunpack.c.h.b16 %v491
        %v2007 = vunpack.c.l.b16 %v492
        %v2008 = vunpack.c.h.b16 %v492
        %v2009 = vunpack.c.l.b16 %v493
        %v2010 = vunpack.c.h.b16 %v493
        %v2011 = vunpack.c.l.b16 %v494
        %v2012 = vunpack.c.h.b16 %v494
        %v2013 = vunpack.c.l.b16 %v495
        %v2014 = vunpack.c.h.b16 %v495
        %v2015 = vunpack.c.l.b16 %v496
        %v2016 = vunpack.c.h.b16 %v496
        %v2017 = vunpack.c.l.b16 %v497
        %v2018 = vunpack.c.h.b16 %v497
        %v2019 = vunpack.c.l.b16 %v498
        %v2020 = vunpack.c.h.b16 %v498
        %v2021 = vunpack.c.l.b16 %v499
        %v2022 = vunpack.c.h.b16 %v499
        %v2023 = vunpack.c.l.b16 %v500
        %v2024 = vunpack.c.h.b16 %v500
        %v2025 = vunpack.c.l.b16 %v501
        %v2026 = vunpack.c.h.b16 %v501
        %v2027 = vunpack.c.l.b16 %v502
        %v2028 = vunpack.c.h.b16 %v502
        %v2029 = vunpack.c.l.b16 %v503
        %v2030 = vunpack.c.h.b16 %v503
        %v2031 = vunpack.c.l.b16 %v504
        %v2032 = vunpack.c.h.b16 %v504
        %v2033 = vunpack.c.l.b16 %v505
        %v2034 = vunpack.c.h.b16 %v505
        %v2035 = vunpack.c.l.b16 %v506
        %v2036 = vunpack.c.h.b16 %v506
        %v2037 = vunpack.c.l.b16 %v507
        %v2038 = vunpack.c.h.b16 %v507
        %v2039 = vunpack.c.l.b16 %v508
        %v2040 = vunpack.c.h.b16 %v508
        %v2041 = vunpack.c.l.b16 %v509
        %v2042 = vunpack.c.h.b16 %v509
        %v2043 = vunpack.c.l.b16 %v510
        %v2044 = vunpack.c.h.b16 %v510
        %v2045 = vunpack.c.l.b16 %v511
        %v2046 = vunpack.c.h.b16 %v511
        %v2047 = vunpack.c.l.b16 %v512
        %v2048 = vunpack.c.h.b16 %v512
        %v2049 = vunpack.c.l.b16 %v513
        %v2050 = vunpack.c.h.b16 %v513
        %v2051 = vunpack.c.l.b16 %v514
        %v2052 = vunpack.c.h.b16 %v514
        %v2053 = vunpack.c.l.b16 %v515
        %v2054 = vunpack.c.h.b16 %v515
        %v2055 = vunpack.c.l.b16 %v516
        %v2056 = vunpack.c.h.b16 %v516
        %v2057 = vunpack.c.l.b16 %v517
        %v2058 = vunpack.c.h.b16 %v517
        %v2059 = vunpack.c.l.b16 %v518
        %v2060 = vunpack.c.h.b16 %v518
        %v2061 = vunpack.c.l.b16 %v519
        %v2062 = vunpack.c.h.b16 %v519
        %v2063 = vunpack.c.l.b16 %v520
        %v2064 = vunpack.c.h.b16 %v520
        %v2065 = vunpack.c.l.b16 %v521
        %v2066 = vunpack.c.h.b16 %v521
        %v2067 = vunpack.c.l.b16 %v522
        %v2068 = vunpack.c.h.b16 %v522
        %v2069 = vunpack.c.l.b16 %v523
        %v2070 = vunpack.c.h.b16 %v523
        %v2071 = vunpack.c.l.b16 %v524
        %v2072 = vunpack.c.h.b16 %v524
        %v2073 = vunpack.c.l.b16 %v525
        %v2074 = vunpack.c.h.b16 %v525
        %v2075 = vunpack.c.l.b16 %v526
        %v2076 = vunpack.c.h.b16 %v526
        %v2077 = vunpack.c.l.b16 %v527
        %v2078 = vunpack.c.h.b16 %v527
        %v2079 = vunpack.c.l.b16 %v528
        %v2080 = vunpack.c.h.b16 %v528
        %v2081 = vunpack.c.l.b16 %v529
        %v2082 = vunpack.c.h.b16 %v529
        %v2083 = vunpack.c.l.b16 %v530
        %v2084 = vunpack.c.h.b16 %v530
        %v2085 = vunpack.c.l.b16 %v531
        %v2086 = vunpack.c.h.b16 %v531
        %v2087 = vunpack.c.l.b16 %v532
        %v2088 = vunpack.c.h.b16 %v532
        %v2089 = vunpack.c.l.b16 %v533
        %v2090 = vunpack.c.h.b16 %v533
        %v2091 = vunpack.c.l.b16 %v534
        %v2092 = vunpack.c.h.b16 %v534
        %v2093 = vunpack.c.l.b16 %v535
        %v2094 = vunpack.c.h.b16 %v535
        %v2095 = vunpack.c.l.b16 %v536
        %v2096 = vunpack.c.h.b16 %v536
        %v2097 = vunpack.c.l.b16 %v537
        %v2098 = vunpack.c.h.b16 %v537
        %v2099 = vunpack.c.l.b16 %v538
        %v2100 = vunpack.c.h.b16 %v538
        %v2101 = vunpack.c.l.b16 %v539
        %v2102 = vunpack.c.h.b16 %v539
        %v2103 = vunpack.c.l.b16 %v540
        %v2104 = vunpack.c.h.b16 %v540
        %v2105 = vunpack.c.l.b16 %v541
        %v2106 = vunpack.c.h.b16 %v541
        %v2107 = vunpack.c.l.b16 %v542
        %v2108 = vunpack.c.h.b16 %v542
        %v2109 = vunpack.c.l.b16 %v543
        %v2110 = vunpack.c.h.b16 %v543
        %v2111 = vunpack.c.l.b16 %v544
        %v2112 = vunpack.c.h.b16 %v544
        %v2113 = vunpack.c.l.b16 %v545
        %v2114 = vunpack.c.h.b16 %v545
        %v2115 = vunpack.c.l.b16 %v546
        %v2116 = vunpack.c.h.b16 %v546
        %v2117 = vunpack.c.l.b16 %v547
        %v2118 = vunpack.c.h.b16 %v547
        %v2119 = vunpack.c.l.b16 %v548
        %v2120 = vunpack.c.h.b16 %v548
        %v2121 = vunpack.c.l.b16 %v549
        %v2122 = vunpack.c.h.b16 %v549
        %v2123 = vunpack.c.l.b16 %v550
        %v2124 = vunpack.c.h.b16 %v550
        %v2125 = vunpack.c.l.b16 %v551
        %v2126 = vunpack.c.h.b16 %v551
        %v2127 = vunpack.c.l.b16 %v552
        %v2128 = vunpack.c.h.b16 %v552
        %v2129 = vunpack.c.l.b16 %v553
        %v2130 = vunpack.c.h.b16 %v553
        %v2131 = vunpack.c.l.b16 %v554
        %v2132 = vunpack.c.h.b16 %v554
        %v2133 = vunpack.c.l.b16 %v555
        %v2134 = vunpack.c.h.b16 %v555
        %v2135 = vunpack.c.l.b16 %v556
        %v2136 = vunpack.c.h.b16 %v556
        %v2137 = vunpack.c.l.b16 %v557
        %v2138 = vunpack.c.h.b16 %v557
        %v2139 = vunpack.c.l.b16 %v558
        %v2140 = vunpack.c.h.b16 %v558
        %v2141 = vunpack.c.l.b16 %v559
        %v2142 = vunpack.c.h.b16 %v559
        %v2143 = vunpack.c.l.b16 %v560
        %v2144 = vunpack.c.h.b16 %v560
        %v2145 = vunpack.c.l.b16 %v561
        %v2146 = vunpack.c.h.b16 %v561
        %v2147 = vunpack.c.l.b16 %v562
        %v2148 = vunpack.c.h.b16 %v562
        %v2149 = vunpack.c.l.b16 %v563
        %v2150 = vunpack.c.h.b16 %v563
        %v2151 = vunpack.c.l.b16 %v564
        %v2152 = vunpack.c.h.b16 %v564
        %v2153 = vunpack.c.l.b16 %v565
        %v2154 = vunpack.c.h.b16 %v565
        %v2155 = vunpack.c.l.b16 %v566
        %v2156 = vunpack.c.h.b16 %v566
        %v2157 = vunpack.c.l.b16 %v567
        %v2158 = vunpack.c.h.b16 %v567
        %v2159 = vunpack.c.l.b16 %v568
        %v2160 = vunpack.c.h.b16 %v568
        %v2161 = vunpack.c.l.b16 %v569
        %v2162 = vunpack.c.h.b16 %v569
        %v2163 = vunpack.c.l.b16 %v570
        %v2164 = vunpack.c.h.b16 %v570
        %v2165 = vunpack.c.l.b16 %v571
        %v2166 = vunpack.c.h.b16 %v571
        %v2167 = vunpack.c.l.b16 %v572
        %v2168 = vunpack.c.h.b16 %v572
        %v2169 = vunpack.c.l.b16 %v573
        %v2170 = vunpack.c.h.b16 %v573
        %v2171 = vunpack.c.l.b16 %v574
        %v2172 = vunpack.c.h.b16 %v574
        %v2173 = vunpack.c.l.b16 %v575
        %v2174 = vunpack.c.h.b16 %v575
        %v2175 = vunpack.c.l.b16 %v576
        %v2176 = vunpack.c.h.b16 %v576
        %v2177 = vunpack.c.l.b16 %v577
        %v2178 = vunpack.c.h.b16 %v577
        %v2179 = vunpack.c.l.b16 %v578
        %v2180 = vunpack.c.h.b16 %v578
        %v2181 = vunpack.c.l.b16 %v579
        %v2182 = vunpack.c.h.b16 %v579
        %v2183 = vunpack.c.l.b16 %v580
        %v2184 = vunpack.c.h.b16 %v580
        %v2185 = vunpack.c.l.b16 %v581
        %v2186 = vunpack.c.h.b16 %v581
        %v2187 = vunpack.c.l.b16 %v582
        %v2188 = vunpack.c.h.b16 %v582
        %v2189 = vunpack.c.l.b16 %v583
        %v2190 = vunpack.c.h.b16 %v583
        %v2191 = vunpack.c.l.b16 %v584
        %v2192 = vunpack.c.h.b16 %v584
        %v2193 = vunpack.c.l.b16 %v585
        %v2194 = vunpack.c.h.b16 %v585
        %v2195 = vunpack.c.l.b16 %v586
        %v2196 = vunpack.c.h.b16 %v586
        %v2197 = vunpack.c.l.b16 %v587
        %v2198 = vunpack.c.h.b16 %v587
        %v2199 = vunpack.c.l.b16 %v588
        %v2200 = vunpack.c.h.b16 %v588
        %v2201 = vunpack.c.l.b16 %v589
        %v2202 = vunpack.c.h.b16 %v589
        %v2203 = vunpack.c.l.b16 %v590
        %v2204 = vunpack.c.h.b16 %v590
        %v2205 = vunpack.c.l.b16 %v591
        %v2206 = vunpack.c.h.b16 %v591
        %v2207 = vunpack.c.l.b16 %v592
        %v2208 = vunpack.c.h.b16 %v592
        %v2209 = vunpack.c.l.b16 %v593
        %v2210 = vunpack.c.h.b16 %v593
        %v2211 = vunpack.c.l.b16 %v594
        %v2212 = vunpack.c.h.b16 %v594
        %v2213 = vunpack.c.l.b16 %v595
        %v2214 = vunpack.c.h.b16 %v595
        %v2215 = vunpack.c.l.b16 %v596
        %v2216 = vunpack.c.h.b16 %v596
        %v2217 = vunpack.c.l.b16 %v597
        %v2218 = vunpack.c.h.b16 %v597
        %v2219 = vunpack.c.l.b16 %v598
        %v2220 = vunpack.c.h.b16 %v598
        %v2221 = vunpack.c.l.b16 %v599
        %v2222 = vunpack.c.h.b16 %v599
        %v2223 = vunpack.c.l.b16 %v600
        %v2224 = vunpack.c.h.b16 %v600
        %v2225 = vunpack.c.l.b16 %v601
        %v2226 = vunpack.c.h.b16 %v601
        %v2227 = vunpack.c.l.b16 %v602
        %v2228 = vunpack.c.h.b16 %v602
        %v2229 = vunpack.c.l.b16 %v603
        %v2230 = vunpack.c.h.b16 %v603
        %v2231 = vunpack.c.l.b16 %v604
        %v2232 = vunpack.c.h.b16 %v604
        %v2233 = vunpack.c.l.b16 %v605
        %v2234 = vunpack.c.h.b16 %v605
        %v2235 = vunpack.c.l.b16 %v606
        %v2236 = vunpack.c.h.b16 %v606
        %v2237 = vunpack.c.l.b16 %v607
        %v2238 = vunpack.c.h.b16 %v607
        %v2239 = vunpack.c.l.b16 %v608
        %v2240 = vunpack.c.h.b16 %v608
        %v2241 = vunpack.c.l.b16 %v609
        %v2242 = vunpack.c.h.b16 %v609
        %v2243 = vunpack.c.l.b16 %v610
        %v2244 = vunpack.c.h.b16 %v610
        %v2245 = vunpack.c.l.b16 %v611
        %v2246 = vunpack.c.h.b16 %v611
        %v2247 = vunpack.c.l.b16 %v612
        %v2248 = vunpack.c.h.b16 %v612
        %v2249 = vunpack.c.l.b16 %v613
        %v2250 = vunpack.c.h.b16 %v613
        %v2251 = vunpack.c.l.b16 %v614
        %v2252 = vunpack.c.h.b16 %v614
        %v2253 = vunpack.c.l.b16 %v615
        %v2254 = vunpack.c.h.b16 %v615
        %v2255 = vunpack.c.l.b16 %v616
        %v2256 = vunpack.c.h.b16 %v616
        %v2257 = vunpack.c.l.b16 %v617
        %v2258 = vunpack.c.h.b16 %v617
        %v2259 = vunpack.c.l.b16 %v618
        %v2260 = vunpack.c.h.b16 %v618
        %v2261 = vunpack.c.l.b16 %v619
        %v2262 = vunpack.c.h.b16 %v619
        %v2263 = vunpack.c.l.b16 %v620
        %v2264 = vunpack.c.h.b16 %v620
        %v2265 = vunpack.c.l.b16 %v621
        %v2266 = vunpack.c.h.b16 %v621
        %v2267 = vunpack.c.l.b16 %v622
        %v2268 = vunpack.c.h.b16 %v622
        %v2269 = vunpack.c.l.b16 %v623
        %v2270 = vunpack.c.h.b16 %v623
        %v2271 = vunpack.c.l.b16 %v624
        %v2272 = vunpack.c.h.b16 %v624
        %v2273 = vunpack.c.l.b16 %v625
        %v2274 = vunpack.c.h.b16 %v625
        %v2275 = vunpack.c.l.b16 %v626
        %v2276 = vunpack.c.h.b16 %v626
        %v2277 = vunpack.c.l.b16 %v627
        %v2278 = vunpack.c.h.b16 %v627
        %v2279 = vunpack.c.l.b16 %v628
        %v2280 = vunpack.c.h.b16 %v628
        %v2281 = vunpack.c.l.b16 %v629
        %v2282 = vunpack.c.h.b16 %v629
        %v2283 = vunpack.c.l.b16 %v630
        %v2284 = vunpack.c.h.b16 %v630
        %v2285 = vunpack.c.l.b16 %v631
        %v2286 = vunpack.c.h.b16 %v631
        %v2287 = vunpack.c.l.b16 %v632
        %v2288 = vunpack.c.h.b16 %v632
        %v2289 = vunpack.c.l.b16 %v633
        %v2290 = vunpack.c.h.b16 %v633
        %v2291 = vunpack.c.l.b16 %v634
        %v2292 = vunpack.c.h.b16 %v634
        %v2293 = vunpack.c.l.b16 %v635
        %v2294 = vunpack.c.h.b16 %v635
        %v2295 = vunpack.c.l.b16 %v636
        %v2296 = vunpack.c.h.b16 %v636
        %v2297 = vunpack.c.l.b16 %v637
        %v2298 = vunpack.c.h.b16 %v637
        %v2299 = vunpack.c.l.b16 %v638
        %v2300 = vunpack.c.h.b16 %v638
        %v2301 = vunpack.c.l.b16 %v639
        %v2302 = vunpack.c.h.b16 %v639
        %v2303 = vunpack.c.l.b16 %v640
        %v2304 = vunpack.c.h.b16 %v640
        %v2305 = vunpack.c.l.b16 %v641
        %v2306 = vunpack.c.h.b16 %v641
        %v2307 = vunpack.c.l.b16 %v642
        %v2308 = vunpack.c.h.b16 %v642
        %v2309 = vunpack.c.l.b16 %v643
        %v2310 = vunpack.c.h.b16 %v643
        %v2311 = vunpack.c.l.b16 %v644
        %v2312 = vunpack.c.h.b16 %v644
        %v2313 = vunpack.c.l.b16 %v645
        %v2314 = vunpack.c.h.b16 %v645
        %v2315 = vunpack.c.l.b16 %v646
        %v2316 = vunpack.c.h.b16 %v646
        %v2317 = vunpack.c.l.b16 %v647
        %v2318 = vunpack.c.h.b16 %v647
        %v2319 = vunpack.c.l.b16 %v648
        %v2320 = vunpack.c.h.b16 %v648
        %v2321 = vunpack.c.l.b16 %v649
        %v2322 = vunpack.c.h.b16 %v649
        %v2323 = vunpack.c.l.b16 %v650
        %v2324 = vunpack.c.h.b16 %v650
        %v2325 = vunpack.c.l.b16 %v651
        %v2326 = vunpack.c.h.b16 %v651
        %v2327 = vunpack.c.l.b16 %v652
        %v2328 = vunpack.c.h.b16 %v652
        %v2329 = vunpack.c.l.b16 %v653
        %v2330 = vunpack.c.h.b16 %v653
        %v2331 = vunpack.c.l.b16 %v654
        %v2332 = vunpack.c.h.b16 %v654
        %v2333 = vunpack.c.l.b16 %v655
        %v2334 = vunpack.c.h.b16 %v655
        %v2335 = vunpack.c.l.b16 %v656
        %v2336 = vunpack.c.h.b16 %v656
        %v2337 = vunpack.c.l.b16 %v657
        %v2338 = vunpack.c.h.b16 %v657
        %v2339 = vunpack.c.l.b16 %v658
        %v2340 = vunpack.c.h.b16 %v658
        %v2341 = vunpack.c.l.b16 %v659
        %v2342 = vunpack.c.h.b16 %v659
        %v2343 = vunpack.c.l.b16 %v660
        %v2344 = vunpack.c.h.b16 %v660
        %v2345 = vunpack.c.l.b16 %v661
        %v2346 = vunpack.c.h.b16 %v661
        %v2347 = vunpack.c.l.b16 %v662
        %v2348 = vunpack.c.h.b16 %v662
        %v2349 = vunpack.c.l.b16 %v663
        %v2350 = vunpack.c.h.b16 %v663
        %v2351 = vunpack.c.l.b16 %v664
        %v2352 = vunpack.c.h.b16 %v664
        %v2353 = vunpack.c.l.b16 %v665
        %v2354 = vunpack.c.h.b16 %v665
        %v2355 = vunpack.c.l.b16 %v666
        %v2356 = vunpack.c.h.b16 %v666
        %v2357 = vunpack.c.l.b16 %v667
        %v2358 = vunpack.c.h.b16 %v667
        %v2359 = vunpack.c.l.b16 %v668
        %v2360 = vunpack.c.h.b16 %v668
        %v2361 = vunpack.c.l.b16 %v669
        %v2362 = vunpack.c.h.b16 %v669
        %v2363 = vunpack.c.l.b16 %v670
        %v2364 = vunpack.c.h.b16 %v670
        %v2365 = vunpack.c.l.b16 %v671
        %v2366 = vunpack.c.h.b16 %v671
        %v2367 = vunpack.c.l.b16 %v672
        %v2368 = vunpack.c.h.b16 %v672
        %v2369 = vunpack.c.l.b16 %v673
        %v2370 = vunpack.c.h.b16 %v673
        %v2371 = vunpack.c.l.b16 %v674
        %v2372 = vunpack.c.h.b16 %v674
        %v2373 = vunpack.c.l.b16 %v675
        %v2374 = vunpack.c.h.b16 %v675
        %v2375 = vunpack.c.l.b16 %v676
        %v2376 = vunpack.c.h.b16 %v676
        %v2377 = vunpack.c.l.b16 %v677
        %v2378 = vunpack.c.h.b16 %v677
        %v2379 = vunpack.c.l.b16 %v678
        %v2380 = vunpack.c.h.b16 %v678
        %v2381 = vunpack.c.l.b16 %v679
        %v2382 = vunpack.c.h.b16 %v679
        %v2383 = vunpack.c.l.b16 %v680
        %v2384 = vunpack.c.h.b16 %v680
        %v2385 = vunpack.c.l.b16 %v681
        %v2386 = vunpack.c.h.b16 %v681
        %v2387 = vunpack.c.l.b16 %v682
        %v2388 = vunpack.c.h.b16 %v682
        %v2389 = vunpack.c.l.b16 %v683
        %v2390 = vunpack.c.h.b16 %v683
        %v2391 = vunpack.c.l.b16 %v684
        %v2392 = vunpack.c.h.b16 %v684
        %v2393 = vunpack.c.l.b16 %v685
        %v2394 = vunpack.c.h.b16 %v685
        %v2395 = vunpack.c.l.b16 %v686
        %v2396 = vunpack.c.h.b16 %v686
        %v2397 = vunpack.c.l.b16 %v687
        %v2398 = vunpack.c.h.b16 %v687
        %v2399 = vunpack.c.l.b16 %v688
        %v2400 = vunpack.c.h.b16 %v688
        %v2401 = vunpack.c.l.b16 %v689
        %v2402 = vunpack.c.h.b16 %v689
        %v2403 = vunpack.c.l.b16 %v690
        %v2404 = vunpack.c.h.b16 %v690
        %v2405 = vunpack.c.l.b16 %v691
        %v2406 = vunpack.c.h.b16 %v691
        %v2407 = vunpack.c.l.b16 %v692
        %v2408 = vunpack.c.h.b16 %v692
        %v2409 = vunpack.c.l.b16 %v693
        %v2410 = vunpack.c.h.b16 %v693
        %v2411 = vunpack.c.l.b16 %v694
        %v2412 = vunpack.c.h.b16 %v694
        %v2413 = vunpack.c.l.b16 %v695
        %v2414 = vunpack.c.h.b16 %v695
        %v2415 = vunpack.c.l.b16 %v696
        %v2416 = vunpack.c.h.b16 %v696
        %v2417 = vunpack.c.l.b16 %v697
        %v2418 = vunpack.c.h.b16 %v697
        %v2419 = vunpack.c.l.b16 %v698
        %v2420 = vunpack.c.h.b16 %v698
        %v2421 = vunpack.c.l.b16 %v699
        %v2422 = vunpack.c.h.b16 %v699
        %v2423 = vunpack.c.l.b16 %v700
        %v2424 = vunpack.c.h.b16 %v700
        %v2425 = vunpack.c.l.b16 %v701
        %v2426 = vunpack.c.h.b16 %v701
        %v2427 = vunpack.c.l.b16 %v702
        %v2428 = vunpack.c.h.b16 %v702
        %v2429 = vunpack.c.l.b16 %v703
        %v2430 = vunpack.c.h.b16 %v703
        %v2431 = vunpack.c.l.b16 %v704
        %v2432 = vunpack.c.h.b16 %v704
        %v2433 = vunpack.c.l.b16 %v705
        %v2434 = vunpack.c.h.b16 %v705
        %v2435 = vunpack.c.l.b16 %v706
        %v2436 = vunpack.c.h.b16 %v706
        %v2437 = vunpack.c.l.b16 %v707
        %v2438 = vunpack.c.h.b16 %v707
        %v2439 = vunpack.c.l.b16 %v708
        %v2440 = vunpack.c.h.b16 %v708
        %v2441 = vunpack.c.l.b16 %v709
        %v2442 = vunpack.c.h.b16 %v709
        %v2443 = vunpack.c.l.b16 %v710
        %v2444 = vunpack.c.h.b16 %v710
        %v2445 = vunpack.c.l.b16 %v711
        %v2446 = vunpack.c.h.b16 %v711
        %v2447 = vunpack.c.l.b16 %v712
        %v2448 = vunpack.c.h.b16 %v712
        %v2449 = vunpack.c.l.b16 %v713
        %v2450 = vunpack.c.h.b16 %v713
        %v2451 = vunpack.c.l.b16 %v714
        %v2452 = vunpack.c.h.b16 %v714
        %v2453 = vunpack.c.l.b16 %v715
        %v2454 = vunpack.c.h.b16 %v715
        %v2455 = vunpack.c.l.b16 %v716
        %v2456 = vunpack.c.h.b16 %v716
        %v2457 = vunpack.c.l.b16 %v717
        %v2458 = vunpack.c.h.b16 %v717
        %v2459 = vunpack.c.l.b16 %v718
        %v2460 = vunpack.c.h.b16 %v718
        %v2461 = vunpack.c.l.b16 %v719
        %v2462 = vunpack.c.h.b16 %v719
        %v2463 = vunpack.c.l.b16 %v720
        %v2464 = vunpack.c.h.b16 %v720
        %v2465 = vunpack.c.l.b16 %v721
        %v2466 = vunpack.c.h.b16 %v721
        %v2467 = vunpack.c.l.b16 %v722
        %v2468 = vunpack.c.h.b16 %v722
        %v2469 = vunpack.c.l.b16 %v723
        %v2470 = vunpack.c.h.b16 %v723
        %v2471 = vunpack.c.l.b16 %v724
        %v2472 = vunpack.c.h.b16 %v724
        %v2473 = vunpack.c.l.b16 %v725
        %v2474 = vunpack.c.h.b16 %v725
        %v2475 = vunpack.c.l.b16 %v726
        %v2476 = vunpack.c.h.b16 %v726
        %v2477 = vunpack.c.l.b16 %v727
        %v2478 = vunpack.c.h.b16 %v727
        %v2479 = vunpack.c.l.b16 %v728
        %v2480 = vunpack.c.h.b16 %v728
        %v2481 = vunpack.c.l.b16 %v729
        %v2482 = vunpack.c.h.b16 %v729
        %v2483 = vunpack.c.l.b16 %v730
        %v2484 = vunpack.c.h.b16 %v730
        %v2485 = vunpack.c.l.b16 %v731
        %v2486 = vunpack.c.h.b16 %v731
        %v2487 = vunpack.c.l.b16 %v732
        %v2488 = vunpack.c.h.b16 %v732
        %v2489 = vunpack.c.l.b16 %v733
        %v2490 = vunpack.c.h.b16 %v733
        %v2491 = vunpack.c.l.b16 %v734
        %v2492 = vunpack.c.h.b16 %v734
        %v2493 = vunpack.c.l.b16 %v735
        %v2494 = vunpack.c.h.b16 %v735
        %v2495 = vunpack.c.l.b16 %v736
        %v2496 = vunpack.c.h.b16 %v736
        %v2497 = vunpack.c.l.b16 %v737
        %v2498 = vunpack.c.h.b16 %v737
        %v2499 = vunpack.c.l.b16 %v738
        %v2500 = vunpack.c.h.b16 %v738
        %v2501 = vunpack.c.l.b16 %v739
        %v2502 = vunpack.c.h.b16 %v739
        %v2503 = vunpack.c.l.b16 %v740
        %v2504 = vunpack.c.h.b16 %v740
        %v2505 = vunpack.c.l.b16 %v741
        %v2506 = vunpack.c.h.b16 %v741
        %v2507 = vunpack.c.l.b16 %v742
        %v2508 = vunpack.c.h.b16 %v742
        %v2509 = vunpack.c.l.b16 %v743
        %v2510 = vunpack.c.h.b16 %v743
        %v2511 = vunpack.c.l.b16 %v744
        %v2512 = vunpack.c.h.b16 %v744
        %v2513 = vunpack.c.l.b16 %v745
        %v2514 = vunpack.c.h.b16 %v745
        %v2515 = vunpack.c.l.b16 %v746
        %v2516 = vunpack.c.h.b16 %v746
        %v2517 = vunpack.c.l.b16 %v747
        %v2518 = vunpack.c.h.b16 %v747
        %v2519 = vunpack.c.l.b16 %v748
        %v2520 = vunpack.c.h.b16 %v748
        %v2521 = vunpack.c.l.b16 %v749
        %v2522 = vunpack.c.h.b16 %v749
        %v2523 = vunpack.c.l.b16 %v750
        %v2524 = vunpack.c.h.b16 %v750
        %v2525 = vunpack.c.l.b16 %v751
        %v2526 = vunpack.c.h.b16 %v751
        %v2527 = vunpack.c.l.b16 %v752
        %v2528 = vunpack.c.h.b16 %v752
        %v2529 = vunpack.c.l.b16 %v753
        %v2530 = vunpack.c.h.b16 %v753
        %v2531 = vunpack.c.l.b16 %v754
        %v2532 = vunpack.c.h.b16 %v754
        %v2533 = vunpack.c.l.b16 %v755
        %v2534 = vunpack.c.h.b16 %v755
        %v2535 = vunpack.c.l.b16 %v756
        %v2536 = vunpack.c.h.b16 %v756
        %v2537 = vunpack.c.l.b16 %v757
        %v2538 = vunpack.c.h.b16 %v757
        %v2539 = vunpack.c.l.b16 %v758
        %v2540 = vunpack.c.h.b16 %v758
        %v2541 = vunpack.c.l.b16 %v759
        %v2542 = vunpack.c.h.b16 %v759
        %v2543 = vunpack.c.l.b16 %v760
        %v2544 = vunpack.c.h.b16 %v760
        %v2545 = vunpack.c.l.b16 %v761
        %v2546 = vunpack.c.h.b16 %v761
        %v2547 = vunpack.c.l.b16 %v762
        %v2548 = vunpack.c.h.b16 %v762
        %v2549 = vunpack.c.l.b16 %v763
        %v2550 = vunpack.c.h.b16 %v763
        %v2551 = vunpack.c.l.b16 %v764
        %v2552 = vunpack.c.h.b16 %v764
        %v2553 = vunpack.c.l.b16 %v765
        %v2554 = vunpack.c.h.b16 %v765
        %v2555 = vunpack.c.l.b16 %v766
        %v2556 = vunpack.c.h.b16 %v766
        %v2557 = vunpack.c.l.b16 %v767
        %v2558 = vunpack.c.h.b16 %v767
        %v2559 = vunpack.c.l.b16 %v768
        %v2560 = vunpack.c.h.b16 %v768
        %v2561 = vunpack.c.l.b16 %v769
        %v2562 = vunpack.c.h.b16 %v769
        %v2563 = vunpack.c.l.b16 %v770
        %v2564 = vunpack.c.h.b16 %v770
        %v2565 = vunpack.c.l.b16 %v771
        %v2566 = vunpack.c.h.b16 %v771
        %v2567 = vunpack.c.l.b16 %v772
        %v2568 = vunpack.c.h.b16 %v772
        %v2569 = vunpack.c.l.b16 %v773
        %v2570 = vunpack.c.h.b16 %v773
        %v2571 = vunpack.c.l.b16 %v774
        %v2572 = vunpack.c.h.b16 %v774
        %v2573 = vunpack.c.l.b16 %v775
        %v2574 = vunpack.c.h.b16 %v775
        %v2575 = vunpack.c.l.b16 %v776
        %v2576 = vunpack.c.h.b16 %v776
        %v2577 = vunpack.c.l.b16 %v777
        %v2578 = vunpack.c.h.b16 %v777
        %v2579 = vunpack.c.l.b16 %v778
        %v2580 = vunpack.c.h.b16 %v778
        %v2581 = vunpack.c.l.b16 %v779
        %v2582 = vunpack.c.h.b16 %v779
        %v2583 = vunpack.c.l.b16 %v780
        %v2584 = vunpack.c.h.b16 %v780
        %v2585 = vunpack.c.l.b16 %v781
        %v2586 = vunpack.c.h.b16 %v781
        %v2587 = vunpack.c.l.b16 %v782
        %v2588 = vunpack.c.h.b16 %v782
        %v2589 = vunpack.c.l.b16 %v783
        %v2590 = vunpack.c.h.b16 %v783
        %v2591 = vunpack.c.l.b16 %v784
        %v2592 = vunpack.c.h.b16 %v784
        %v2593 = vunpack.c.l.b16 %v785
        %v2594 = vunpack.c.h.b16 %v785
        %v2595 = vunpack.c.l.b16 %v786
        %v2596 = vunpack.c.h.b16 %v786
        %v2597 = vunpack.c.l.b16 %v787
        %v2598 = vunpack.c.h.b16 %v787
        %v2599 = vunpack.c.l.b16 %v788
        %v2600 = vunpack.c.h.b16 %v788
        %v2601 = vunpack.c.l.b16 %v789
        %v2602 = vunpack.c.h.b16 %v789
        %v2603 = vunpack.c.l.b16 %v790
        %v2604 = vunpack.c.h.b16 %v790
        %v2605 = vunpack.c.l.b16 %v791
        %v2606 = vunpack.c.h.b16 %v791
        %v2607 = vunpack.c.l.b16 %v792
        %v2608 = vunpack.c.h.b16 %v792
        %v2609 = vunpack.c.l.b16 %v793
        %v2610 = vunpack.c.h.b16 %v793
        %v2611 = vunpack.c.l.b16 %v794
        %v2612 = vunpack.c.h.b16 %v794
        %v2613 = vunpack.c.l.b16 %v795
        %v2614 = vunpack.c.h.b16 %v795
        %v2615 = vunpack.c.l.b16 %v796
        %v2616 = vunpack.c.h.b16 %v796
        %v2617 = vunpack.c.l.b16 %v797
        %v2618 = vunpack.c.h.b16 %v797
        %v2619 = vunpack.c.l.b16 %v798
        %v2620 = vunpack.c.h.b16 %v798
        %v2621 = vunpack.c.l.b16 %v799
        %v2622 = vunpack.c.h.b16 %v799
        %v2623 = vunpack.c.l.b16 %v800
        %v2624 = vunpack.c.h.b16 %v800
        %v2625 = vunpack.c.l.b16 %v801
        %v2626 = vunpack.c.h.b16 %v801
        %v2627 = vunpack.c.l.b16 %v802
        %v2628 = vunpack.c.h.b16 %v802
        %v2629 = vunpack.c.l.b16 %v803
        %v2630 = vunpack.c.h.b16 %v803
        %v2631 = vunpack.c.l.b16 %v804
        %v2632 = vunpack.c.h.b16 %v804
        %v2633 = vunpack.c.l.b16 %v805
        %v2634 = vunpack.c.h.b16 %v805
        %v2635 = vunpack.c.l.b16 %v806
        %v2636 = vunpack.c.h.b16 %v806
        %v2637 = vunpack.c.l.b16 %v807
        %v2638 = vunpack.c.h.b16 %v807
        %v2639 = vunpack.c.l.b16 %v808
        %v2640 = vunpack.c.h.b16 %v808
        %v2641 = vunpack.c.l.b16 %v809
        %v2642 = vunpack.c.h.b16 %v809
        %v2643 = vunpack.c.l.b16 %v810
        %v2644 = vunpack.c.h.b16 %v810
        %v2645 = vunpack.c.l.b16 %v811
        %v2646 = vunpack.c.h.b16 %v811
        %v2647 = vunpack.c.l.b16 %v812
        %v2648 = vunpack.c.h.b16 %v812
        %v2649 = vunpack.c.l.b16 %v813
        %v2650 = vunpack.c.h.b16 %v813
        %v2651 = vunpack.c.l.b16 %v814
        %v2652 = vunpack.c.h.b16 %v814
        %v2653 = vunpack.c.l.b16 %v815
        %v2654 = vunpack.c.h.b16 %v815
        %v2655 = vunpack.c.l.b16 %v816
        %v2656 = vunpack.c.h.b16 %v816
        %v2657 = vunpack.c.l.b16 %v817
        %v2658 = vunpack.c.h.b16 %v817
        %v2659 = vunpack.c.l.b16 %v818
        %v2660 = vunpack.c.h.b16 %v818
        %v2661 = vunpack.c.l.b16 %v819
        %v2662 = vunpack.c.h.b16 %v819
        %v2663 = vunpack.c.l.b16 %v820
        %v2664 = vunpack.c.h.b16 %v820
        %v2665 = vunpack.c.l.b16 %v821
        %v2666 = vunpack.c.h.b16 %v821
        %v2667 = vunpack.c.l.b16 %v822
        %v2668 = vunpack.c.h.b16 %v822
        %v2669 = vunpack.c.l.b16 %v823
        %v2670 = vunpack.c.h.b16 %v823
        %v2671 = vunpack.c.l.b16 %v824
        %v2672 = vunpack.c.h.b16 %v824
        %v2673 = vunpack.c.l.b16 %v825
        %v2674 = vunpack.c.h.b16 %v825
        %v2675 = vunpack.c.l.b16 %v826
        %v2676 = vunpack.c.h.b16 %v826
        %v2677 = vunpack.c.l.b16 %v827
        %v2678 = vunpack.c.h.b16 %v827
        %v2679 = vunpack.c.l.b16 %v828
        %v2680 = vunpack.c.h.b16 %v828
        %v2681 = vunpack.c.l.b16 %v829
        %v2682 = vunpack.c.h.b16 %v829
        %v2683 = vunpack.c.l.b16 %v830
        %v2684 = vunpack.c.h.b16 %v830
        %v2685 = vunpack.c.l.b16 %v831
        %v2686 = vunpack.c.h.b16 %v831
        %v2687 = vunpack.c.l.b16 %v832
        %v2688 = vunpack.c.h.b16 %v832
        %v2689 = vunpack.c.l.b16 %v833
        %v2690 = vunpack.c.h.b16 %v833
        %v2691 = vunpack.c.l.b16 %v834
        %v2692 = vunpack.c.h.b16 %v834
        %v2693 = vunpack.c.l.b16 %v835
        %v2694 = vunpack.c.h.b16 %v835
        %v2695 = vunpack.c.l.b16 %v836
        %v2696 = vunpack.c.h.b16 %v836
        %v2697 = vunpack.c.l.b16 %v837
        %v2698 = vunpack.c.h.b16 %v837
        %v2699 = vunpack.c.l.b16 %v838
        %v2700 = vunpack.c.h.b16 %v838
        %v2701 = vunpack.c.l.b16 %v839
        %v2702 = vunpack.c.h.b16 %v839
        %v2703 = vunpack.c.l.b16 %v840
        %v2704 = vunpack.c.h.b16 %v840
        %v2705 = vunpack.c.l.b16 %v841
        %v2706 = vunpack.c.h.b16 %v841
        %v2707 = vunpack.c.l.b16 %v842
        %v2708 = vunpack.c.h.b16 %v842
        %v2709 = vunpack.c.l.b16 %v843
        %v2710 = vunpack.c.h.b16 %v843
        %v2711 = vunpack.c.l.b16 %v844
        %v2712 = vunpack.c.h.b16 %v844
        %v2713 = vunpack.c.l.b16 %v845
        %v2714 = vunpack.c.h.b16 %v845
        %v2715 = vunpack.c.l.b16 %v846
        %v2716 = vunpack.c.h.b16 %v846
        %v2717 = vunpack.c.l.b16 %v847
        %v2718 = vunpack.c.h.b16 %v847
        %v2719 = vunpack.c.l.b16 %v848
        %v2720 = vunpack.c.h.b16 %v848
        %v2721 = vunpack.c.l.b16 %v849
        %v2722 = vunpack.c.h.b16 %v849
        %v2723 = vunpack.c.l.b16 %v850
        %v2724 = vunpack.c.h.b16 %v850
        %v2725 = vunpack.c.l.b16 %v851
        %v2726 = vunpack.c.h.b16 %v851
        %v2727 = vunpack.c.l.b16 %v852
        %v2728 = vunpack.c.h.b16 %v852
        %v2729 = vunpack.c.l.b16 %v853
        %v2730 = vunpack.c.h.b16 %v853
        %v2731 = vunpack.c.l.b16 %v854
        %v2732 = vunpack.c.h.b16 %v854
        %v2733 = vunpack.c.l.b16 %v855
        %v2734 = vunpack.c.h.b16 %v855
        %v2735 = vunpack.c.l.b16 %v856
        %v2736 = vunpack.c.h.b16 %v856
        %v2737 = vunpack.c.l.b16 %v857
        %v2738 = vunpack.c.h.b16 %v857
        %v2739 = vunpack.c.l.b16 %v858
        %v2740 = vunpack.c.h.b16 %v858
        %v2741 = vunpack.c.l.b16 %v859
        %v2742 = vunpack.c.h.b16 %v859
        %v2743 = vunpack.c.l.b16 %v860
        %v2744 = vunpack.c.h.b16 %v860
        %v2745 = vunpack.c.l.b16 %v861
        %v2746 = vunpack.c.h.b16 %v861
        %v2747 = vunpack.c.l.b16 %v862
        %v2748 = vunpack.c.h.b16 %v862
        %v2749 = vunpack.c.l.b16 %v863
        %v2750 = vunpack.c.h.b16 %v863
        %v2751 = vunpack.c.l.b16 %v864
        %v2752 = vunpack.c.h.b16 %v864
        %v2753 = vunpack.c.l.b16 %v865
        %v2754 = vunpack.c.h.b16 %v865
        %v2755 = vunpack.c.l.b16 %v866
        %v2756 = vunpack.c.h.b16 %v866
        %v2757 = vunpack.c.l.b16 %v867
        %v2758 = vunpack.c.h.b16 %v867
        %v2759 = vunpack.c.l.b16 %v868
        %v2760 = vunpack.c.h.b16 %v868
        %v2761 = vunpack.c.l.b16 %v869
        %v2762 = vunpack.c.h.b16 %v869
        %v2763 = vunpack.c.l.b16 %v870
        %v2764 = vunpack.c.h.b16 %v870
        %v2765 = vunpack.c.l.b16 %v871
        %v2766 = vunpack.c.h.b16 %v871
        %v2767 = vunpack.c.l.b16 %v872
        %v2768 = vunpack.c.h.b16 %v872
        %v2769 = vunpack.c.l.b16 %v873
        %v2770 = vunpack.c.h.b16 %v873
        %v2771 = vunpack.c.l.b16 %v874
        %v2772 = vunpack.c.h.b16 %v874
        %v2773 = vunpack.c.l.b16 %v875
        %v2774 = vunpack.c.h.b16 %v875
        %v2775 = vunpack.c.l.b16 %v876
        %v2776 = vunpack.c.h.b16 %v876
        %v2777 = vunpack.c.l.b16 %v877
        %v2778 = vunpack.c.h.b16 %v877
        %v2779 = vunpack.c.l.b16 %v878
        %v2780 = vunpack.c.h.b16 %v878
        %v2781 = vunpack.c.l.b16 %v879
        %v2782 = vunpack.c.h.b16 %v879
        %v2783 = vunpack.c.l.b16 %v880
        %v2784 = vunpack.c.h.b16 %v880
        %v2785 = vunpack.c.l.b16 %v881
        %v2786 = vunpack.c.h.b16 %v881
        %v2787 = vunpack.c.l.b16 %v882
        %v2788 = vunpack.c.h.b16 %v882
        %v2789 = vunpack.c.l.b16 %v883
        %v2790 = vunpack.c.h.b16 %v883
        %v2791 = vunpack.c.l.b16 %v884
        %v2792 = vunpack.c.h.b16 %v884
        %v2793 = vunpack.c.l.b16 %v885
        %v2794 = vunpack.c.h.b16 %v885
        %v2795 = vunpack.c.l.b16 %v886
        %v2796 = vunpack.c.h.b16 %v886
        %v2797 = vunpack.c.l.b16 %v887
        %v2798 = vunpack.c.h.b16 %v887
        %v2799 = vunpack.c.l.b16 %v888
        %v2800 = vunpack.c.h.b16 %v888
        %v2801 = vunpack.c.l.b16 %v889
        %v2802 = vunpack.c.h.b16 %v889
        %v2803 = vunpack.c.l.b16 %v890
        %v2804 = vunpack.c.h.b16 %v890
        %v2805 = vunpack.c.l.b16 %v891
        %v2806 = vunpack.c.h.b16 %v891
        %v2807 = vunpack.c.l.b16 %v892
        %v2808 = vunpack.c.h.b16 %v892
        %v2809 = vunpack.c.l.b16 %v893
        %v2810 = vunpack.c.h.b16 %v893
        %v2811 = vunpack.c.l.b16 %v894
        %v2812 = vunpack.c.h.b16 %v894
        %v2813 = vunpack.c.l.b16 %v895
        %v2814 = vunpack.c.h.b16 %v895
        %v2815 = vunpack.c.l.b16 %v896
        %v2816 = vunpack.c.h.b16 %v896
        %v2817 = vpack.c.b16 %v1557, %v1537
        %v2818 = vpack.c.b16 %v1558, %v1538
        %v2819 = vpack.c.b16 %v1559, %v1539
        %v2820 = vpack.c.b16 %v1560, %v1540
        %v2821 = vpack.c.b16 %v1561, %v1541
        %v2822 = vpack.c.b16 %v1562, %v1542
        %v2823 = vpack.c.b16 %v1563, %v1543
        %v2824 = vpack.c.b16 %v1564, %v1544
        %v2825 = vpack.c.b16 %v1565, %v1545
        %v2826 = vpack.c.b16 %v1566, %v1546
        %v2827 = vpack.c.b16 %v1567, %v1547
        %v2828 = vpack.c.b16 %v1568, %v1548
        %v2829 = vpack.c.b16 %v1569, %v1549
        %v2830 = vpack.c.b16 %v1570, %v1550
        %v2831 = vpack.c.b16 %v1571, %v1551
        %v2832 = vpack.c.b16 %v1572, %v1552
        %v2833 = vpack.c.b16 %v1573, %v1553
        %v2834 = vpack.c.b16 %v1574, %v1554
        %v2835 = vpack.c.b16 %v1575, %v1555
        %v2836 = vpack.c.b16 %v1576, %v1556
        %v2837 = vpack.c.b16 %v1597, %v1577
        %v2838 = vpack.c.b16 %v1598, %v1578
        %v2839 = vpack.c.b16 %v1599, %v1579
        %v2840 = vpack.c.b16 %v1600, %v1580
        %v2841 = vpack.c.b16 %v1601, %v1581
        %v2842 = vpack.c.b16 %v1602, %v1582
        %v2843 = vpack.c.b16 %v1603, %v1583
        %v2844 = vpack.c.b16 %v1604, %v1584
        %v2845 = vpack.c.b16 %v1605, %v1585
        %v2846 = vpack.c.b16 %v1606, %v1586
        %v2847 = vpack.c.b16 %v1607, %v1587
        %v2848 = vpack.c.b16 %v1608, %v1588
        %v2849 = vpack.c.b16 %v1609, %v1589
        %v2850 = vpack.c.b16 %v1610, %v1590
        %v2851 = vpack.c.b16 %v1611, %v1591
        %v2852 = vpack.c.b16 %v1612, %v1592
        %v2853 = vpack.c.b16 %v1613, %v1593
        %v2854 = vpack.c.b16 %v1614, %v1594
        %v2855 = vpack.c.b16 %v1615, %v1595
        %v2856 = vpack.c.b16 %v1616, %v1596
        %v2857 = vpack.c.b16 %v1637, %v1617
        %v2858 = vpack.c.b16 %v1638, %v1618
        %v2859 = vpack.c.b16 %v1639, %v1619
        %v2860 = vpack.c.b16 %v1640, %v1620
        %v2861 = vpack.c.b16 %v1641, %v1621
        %v2862 = vpack.c.b16 %v1642, %v1622
        %v2863 = vpack.c.b16 %v1643, %v1623
        %v2864 = vpack.c.b16 %v1644, %v1624
        %v2865 = vpack.c.b16 %v1645, %v1625
        %v2866 = vpack.c.b16 %v1646, %v1626
        %v2867 = vpack.c.b16 %v1647, %v1627
        %v2868 = vpack.c.b16 %v1648, %v1628
        %v2869 = vpack.c.b16 %v1649, %v1629
        %v2870 = vpack.c.b16 %v1650, %v1630
        %v2871 = vpack.c.b16 %v1651, %v1631
        %v2872 = vpack.c.b16 %v1652, %v1632
        %v2873 = vpack.c.b16 %v1653, %v1633
        %v2874 = vpack.c.b16 %v1654, %v1634
        %v2875 = vpack.c.b16 %v1655, %v1635
        %v2876 = vpack.c.b16 %v1656, %v1636
        %v2877 = vpack.c.b16 %v1677, %v1657
        %v2878 = vpack.c.b16 %v1678, %v1658
        %v2879 = vpack.c.b16 %v1679, %v1659
        %v2880 = vpack.c.b16 %v1680, %v1660
        %v2881 = vpack.c.b16 %v1681, %v1661
        %v2882 = vpack.c.b16 %v1682, %v1662
        %v2883 = vpack.c.b16 %v1683, %v1663
        %v2884 = vpack.c.b16 %v1684, %v1664
        %v2885 = vpack.c.b16 %v1685, %v1665
        %v2886 = vpack.c.b16 %v1686, %v1666
        %v2887 = vpack.c.b16 %v1687, %v1667
        %v2888 = vpack.c.b16 %v1688, %v1668
        %v2889 = vpack.c.b16 %v1689, %v1669
        %v2890 = vpack.c.b16 %v1690, %v1670
        %v2891 = vpack.c.b16 %v1691, %v1671
        %v2892 = vpack.c.b16 %v1692, %v1672
        %v2893 = vpack.c.b16 %v1693, %v1673
        %v2894 = vpack.c.b16 %v1694, %v1674
        %v2895 = vpack.c.b16 %v1695, %v1675
        %v2896 = vpack.c.b16 %v1696, %v1676
        %v2897 = vpack.c.b16 %v1717, %v1697
        %v2898 = vpack.c.b16 %v1718, %v1698
        %v2899 = vpack.c.b16 %v1719, %v1699
        %v2900 = vpack.c.b16 %v1720, %v1700
        %v2901 = vpack.c.b16 %v1721, %v1701
        %v2902 = vpack.c.b16 %v1722, %v1702
        %v2903 = vpack.c.b16 %v1723, %v1703
        %v2904 = vpack.c.b16 %v1724, %v1704
        %v2905 = vpack.c.b16 %v1725, %v1705
        %v2906 = vpack.c.b16 %v1726, %v1706
        %v2907 = vpack.c.b16 %v1727, %v1707
        %v2908 = vpack.c.b16 %v1728, %v1708
        %v2909 = vpack.c.b16 %v1729, %v1709
        %v2910 = vpack.c.b16 %v1730, %v1710
        %v2911 = vpack.c.b16 %v1731, %v1711
        %v2912 = vpack.c.b16 %v1732, %v1712
        %v2913 = vpack.c.b16 %v1733, %v1713
        %v2914 = vpack.c.b16 %v1734, %v1714
        %v2915 = vpack.c.b16 %v1735, %v1715
        %v2916 = vpack.c.b16 %v1736, %v1716
        %v2917 = vpack.c.b16 %v1757, %v1737
        %v2918 = vpack.c.b16 %v1758, %v1738
        %v2919 = vpack.c.b16 %v1759, %v1739
        %v2920 = vpack.c.b16 %v1760, %v1740
        %v2921 = vpack.c.b16 %v1761, %v1741
        %v2922 = vpack.c.b16 %v1762, %v1742
        %v2923 = vpack.c.b16 %v1763, %v1743
        %v2924 = vpack.c.b16 %v1764, %v1744
        %v2925 = vpack.c.b16 %v1765, %v1745
        %v2926 = vpack.c.b16 %v1766, %v1746
        %v2927 = vpack.c.b16 %v1767, %v1747
        %v2928 = vpack.c.b16 %v1768, %v1748
        %v2929 = vpack.c.b16 %v1769, %v1749
        %v2930 = vpack.c.b16 %v1770, %v1750
        %v2931 = vpack.c.b16 %v1771, %v1751
        %v2932 = vpack.c.b16 %v1772, %v1752
        %v2933 = vpack.c.b16 %v1773, %v1753
        %v2934 = vpack.c.b16 %v1774, %v1754
        %v2935 = vpack.c.b16 %v1775, %v1755
        %v2936 = vpack.c.b16 %v1776, %v1756
        %v2937 = vpack.c.b16 %v1797, %v1777
        %v2938 = vpack.c.b16 %v1798, %v1778
        %v2939 = vpack.c.b16 %v1799, %v1779
        %v2940 = vpack.c.b16 %v1800, %v1780
        %v2941 = vpack.c.b16 %v1801, %v1781
        %v2942 = vpack.c.b16 %v1802, %v1782
        %v2943 = vpack.c.b16 %v1803, %v1783
        %v2944 = vpack.c.b16 %v1804, %v1784
        %v2945 = vpack.c.b16 %v1805, %v1785
        %v2946 = vpack.c.b16 %v1806, %v1786
        %v2947 = vpack.c.b16 %v1807, %v1787
        %v2948 = vpack.c.b16 %v1808, %v1788
        %v2949 = vpack.c.b16 %v1809, %v1789
        %v2950 = vpack.c.b16 %v1810, %v1790
        %v2951 = vpack.c.b16 %v1811, %v1791
        %v2952 = vpack.c.b16 %v1812, %v1792
        %v2953 = vpack.c.b16 %v1813, %v1793
        %v2954 = vpack.c.b16 %v1814, %v1794
        %v2955 = vpack.c.b16 %v1815, %v1795
        %v2956 = vpack.c.b16 %v1816, %v1796
        %v2957 = vpack.c.b16 %v1837, %v1817
        %v2958 = vpack.c.b16 %v1838, %v1818
        %v2959 = vpack.c.b16 %v1839, %v1819
        %v2960 = vpack.c.b16 %v1840, %v1820
        %v2961 = vpack.c.b16 %v1841, %v1821
        %v2962 = vpack.c.b16 %v1842, %v1822
        %v2963 = vpack.c.b16 %v1843, %v1823
        %v2964 = vpack.c.b16 %v1844, %v1824
        %v2965 = vpack.c.b16 %v1845, %v1825
        %v2966 = vpack.c.b16 %v1846, %v1826
        %v2967 = vpack.c.b16 %v1847, %v1827
        %v2968 = vpack.c.b16 %v1848, %v1828
        %v2969 = vpack.c.b16 %v1849, %v1829
        %v2970 = vpack.c.b16 %v1850, %v1830
        %v2971 = vpack.c.b16 %v1851, %v1831
        %v2972 = vpack.c.b16 %v1852, %v1832
        %v2973 = vpack.c.b16 %v1853, %v1833
        %v2974 = vpack.c.b16 %v1854, %v1834
        %v2975 = vpack.c.b16 %v1855, %v1835
        %v2976 = vpack.c.b16 %v1856, %v1836
        %v2977 = vpack.c.b16 %v1877, %v1857
        %v2978 = vpack.c.b16 %v1878, %v1858
        %v2979 = vpack.c.b16 %v1879, %v1859
        %v2980 = vpack.c.b16 %v1880, %v1860
        %v2981 = vpack.c.b16 %v1881, %v1861
        %v2982 = vpack.c.b16 %v1882, %v1862
        %v2983 = vpack.c.b16 %v1883, %v1863
        %v2984 = vpack.c.b16 %v1884, %v1864
        %v2985 = vpack.c.b16 %v1885, %v1865
        %v2986 = vpack.c.b16 %v1886, %v1866
        %v2987 = vpack.c.b16 %v1887, %v1867
        %v2988 = vpack.c.b16 %v1888, %v1868
        %v2989 = vpack.c.b16 %v1889, %v1869
        %v2990 = vpack.c.b16 %v1890, %v1870
        %v2991 = vpack.c.b16 %v1891, %v1871
        %v2992 = vpack.c.b16 %v1892, %v1872
        %v2993 = vpack.c.b16 %v1893, %v1873
        %v2994 = vpack.c.b16 %v1894, %v1874
        %v2995 = vpack.c.b16 %v1895, %v1875
        %v2996 = vpack.c.b16 %v1896, %v1876
        %v2997 = vpack.c.b16 %v1917, %v1897
        %v2998 = vpack.c.b16 %v1918, %v1898
        %v2999 = vpack.c.b16 %v1919, %v1899
        %v3000 = vpack.c.b16 %v1920, %v1900
        %v3001 = vpack.c.b16 %v1921, %v1901
        %v3002 = vpack.c.b16 %v1922, %v1902
        %v3003 = vpack.c.b16 %v1923, %v1903
        %v3004 = vpack.c.b16 %v1924, %v1904
        %v3005 = vpack.c.b16 %v1925, %v1905
        %v3006 = vpack.c.b16 %v1926, %v1906
        %v3007 = vpack.c.b16 %v1927, %v1907
        %v3008 = vpack.c.b16 %v1928, %v1908
        %v3009 = vpack.c.b16 %v1929, %v1909
        %v3010 = vpack.c.b16 %v1930, %v1910
        %v3011 = vpack.c.b16 %v1931, %v1911
        %v3012 = vpack.c.b16 %v1932, %v1912
        %v3013 = vpack.c.b16 %v1933, %v1913
        %v3014 = vpack.c.b16 %v1934, %v1914
        %v3015 = vpack.c.b16 %v1935, %v1915
        %v3016 = vpack.c.b16 %v1936, %v1916
        %v3017 = vpack.c.b16 %v1957, %v1937
        %v3018 = vpack.c.b16 %v1958, %v1938
        %v3019 = vpack.c.b16 %v1959, %v1939
        %v3020 = vpack.c.b16 %v1960, %v1940
        %v3021 = vpack.c.b16 %v1961, %v1941
        %v3022 = vpack.c.b16 %v1962, %v1942
        %v3023 = vpack.c.b16 %v1963, %v1943
        %v3024 = vpack.c.b16 %v1964, %v1944
        %v3025 = vpack.c.b16 %v1965, %v1945
        %v3026 = vpack.c.b16 %v1966, %v1946
        %v3027 = vpack.c.b16 %v1967, %v1947
        %v3028 = vpack.c.b16 %v1968, %v1948
        %v3029 = vpack.c.b16 %v1969, %v1949
        %v3030 = vpack.c.b16 %v1970, %v1950
        %v3031 = vpack.c.b16 %v1971, %v1951
        %v3032 = vpack.c.b16 %v1972, %v1952
        %v3033 = vpack.c.b16 %v1973, %v1953
        %v3034 = vpack.c.b16 %v1974, %v1954
        %v3035 = vpack.c.b16 %v1975, %v1955
        %v3036 = vpack.c.b16 %v1976, %v1956
        %v3037 = vpack.c.b16 %v1997, %v1977
        %v3038 = vpack.c.b16 %v1998, %v1978
        %v3039 = vpack.c.b16 %v1999, %v1979
        %v3040 = vpack.c.b16 %v2000, %v1980
        %v3041 = vpack.c.b16 %v2001, %v1981
        %v3042 = vpack.c.b16 %v2002, %v1982
        %v3043 = vpack.c.b16 %v2003, %v1983
        %v3044 = vpack.c.b16 %v2004, %v1984
        %v3045 = vpack.c.b16 %v2005, %v1985
        %v3046 = vpack.c.b16 %v2006, %v1986
        %v3047 = vpack.c.b16 %v2007, %v1987
        %v3048 = vpack.c.b16 %v2008, %v1988
        %v3049 = vpack.c.b16 %v2009, %v1989
        %v3050 = vpack.c.b16 %v2010, %v1990
        %v3051 = vpack.c.b16 %v2011, %v1991
        %v3052 = vpack.c.b16 %v2012, %v1992
        %v3053 = vpack.c.b16 %v2013, %v1993
        %v3054 = vpack.c.b16 %v2014, %v1994
        %v3055 = vpack.c.b16 %v2015, %v1995
        %v3056 = vpack.c.b16 %v2016, %v1996
        %v3057 = vpack.c.b16 %v2037, %v2017
        %v3058 = vpack.c.b16 %v2038, %v2018
        %v3059 = vpack.c.b16 %v2039, %v2019
        %v3060 = vpack.c.b16 %v2040, %v2020
        %v3061 = vpack.c.b16 %v2041, %v2021
        %v3062 = vpack.c.b16 %v2042, %v2022
        %v3063 = vpack.c.b16 %v2043, %v2023
        %v3064 = vpack.c.b16 %v2044, %v2024
        %v3065 = vpack.c.b16 %v2045, %v2025
        %v3066 = vpack.c.b16 %v2046, %v2026
        %v3067 = vpack.c.b16 %v2047, %v2027
        %v3068 = vpack.c.b16 %v2048, %v2028
        %v3069 = vpack.c.b16 %v2049, %v2029
        %v3070 = vpack.c.b16 %v2050, %v2030
        %v3071 = vpack.c.b16 %v2051, %v2031
        %v3072 = vpack.c.b16 %v2052, %v2032
        %v3073 = vpack.c.b16 %v2053, %v2033
        %v3074 = vpack.c.b16 %v2054, %v2034
        %v3075 = vpack.c.b16 %v2055, %v2035
        %v3076 = vpack.c.b16 %v2056, %v2036
        %v3077 = vpack.c.b16 %v2077, %v2057
        %v3078 = vpack.c.b16 %v2078, %v2058
        %v3079 = vpack.c.b16 %v2079, %v2059
        %v3080 = vpack.c.b16 %v2080, %v2060
        %v3081 = vpack.c.b16 %v2081, %v2061
        %v3082 = vpack.c.b16 %v2082, %v2062
        %v3083 = vpack.c.b16 %v2083, %v2063
        %v3084 = vpack.c.b16 %v2084, %v2064
        %v3085 = vpack.c.b16 %v2085, %v2065
        %v3086 = vpack.c.b16 %v2086, %v2066
        %v3087 = vpack.c.b16 %v2087, %v2067
        %v3088 = vpack.c.b16 %v2088, %v2068
        %v3089 = vpack.c.b16 %v2089, %v2069
        %v3090 = vpack.c.b16 %v2090, %v2070
        %v3091 = vpack.c.b16 %v2091, %v2071
        %v3092 = vpack.c.b16 %v2092, %v2072
        %v3093 = vpack.c.b16 %v2093, %v2073
        %v3094 = vpack.c.b16 %v2094, %v2074
        %v3095 = vpack.c.b16 %v2095, %v2075
        %v3096 = vpack.c.b16 %v2096, %v2076
        %v3097 = vpack.c.b16 %v2117, %v2097
        %v3098 = vpack.c.b16 %v2118, %v2098
        %v3099 = vpack.c.b16 %v2119, %v2099
        %v3100 = vpack.c.b16 %v2120, %v2100
        %v3101 = vpack.c.b16 %v2121, %v2101
        %v3102 = vpack.c.b16 %v2122, %v2102
        %v3103 = vpack.c.b16 %v2123, %v2103
        %v3104 = vpack.c.b16 %v2124, %v2104
        %v3105 = vpack.c.b16 %v2125, %v2105
        %v3106 = vpack.c.b16 %v2126, %v2106
        %v3107 = vpack.c.b16 %v2127, %v2107
        %v3108 = vpack.c.b16 %v2128, %v2108
        %v3109 = vpack.c.b16 %v2129, %v2109
        %v3110 = vpack.c.b16 %v2130, %v2110
        %v3111 = vpack.c.b16 %v2131, %v2111
        %v3112 = vpack.c.b16 %v2132, %v2112
        %v3113 = vpack.c.b16 %v2133, %v2113
        %v3114 = vpack.c.b16 %v2134, %v2114
        %v3115 = vpack.c.b16 %v2135, %v2115
        %v3116 = vpack.c.b16 %v2136, %v2116
        %v3117 = vpack.c.b16 %v2157, %v2137
        %v3118 = vpack.c.b16 %v2158, %v2138
        %v3119 = vpack.c.b16 %v2159, %v2139
        %v3120 = vpack.c.b16 %v2160, %v2140
        %v3121 = vpack.c.b16 %v2161, %v2141
        %v3122 = vpack.c.b16 %v2162, %v2142
        %v3123 = vpack.c.b16 %v2163, %v2143
        %v3124 = vpack.c.b16 %v2164, %v2144
        %v3125 = vpack.c.b16 %v2165, %v2145
        %v3126 = vpack.c.b16 %v2166, %v2146
        %v3127 = vpack.c.b16 %v2167, %v2147
        %v3128 = vpack.c.b16 %v2168, %v2148
        %v3129 = vpack.c.b16 %v2169, %v2149
        %v3130 = vpack.c.b16 %v2170, %v2150
        %v3131 = vpack.c.b16 %v2171, %v2151
        %v3132 = vpack.c.b16 %v2172, %v2152
        %v3133 = vpack.c.b16 %v2173, %v2153
        %v3134 = vpack.c.b16 %v2174, %v2154
        %v3135 = vpack.c.b16 %v2175, %v2155
        %v3136 = vpack.c.b16 %v2176, %v2156
        %v3137 = vpack.c.b16 %v2197, %v2177
        %v3138 = vpack.c.b16 %v2198, %v2178
        %v3139 = vpack.c.b16 %v2199, %v2179
        %v3140 = vpack.c.b16 %v2200, %v2180
        %v3141 = vpack.c.b16 %v2201, %v2181
        %v3142 = vpack.c.b16 %v2202, %v2182
        %v3143 = vpack.c.b16 %v2203, %v2183
        %v3144 = vpack.c.b16 %v2204, %v2184
        %v3145 = vpack.c.b16 %v2205, %v2185
        %v3146 = vpack.c.b16 %v2206, %v2186
        %v3147 = vpack.c.b16 %v2207, %v2187
        %v3148 = vpack.c.b16 %v2208, %v2188
        %v3149 = vpack.c.b16 %v2209, %v2189
        %v3150 = vpack.c.b16 %v2210, %v2190
        %v3151 = vpack.c.b16 %v2211, %v2191
        %v3152 = vpack.c.b16 %v2212, %v2192
        %v3153 = vpack.c.b16 %v2213, %v2193
        %v3154 = vpack.c.b16 %v2214, %v2194
        %v3155 = vpack.c.b16 %v2215, %v2195
        %v3156 = vpack.c.b16 %v2216, %v2196
        %v3157 = vpack.c.b16 %v2237, %v2217
        %v3158 = vpack.c.b16 %v2238, %v2218
        %v3159 = vpack.c.b16 %v2239, %v2219
        %v3160 = vpack.c.b16 %v2240, %v2220
        %v3161 = vpack.c.b16 %v2241, %v2221
        %v3162 = vpack.c.b16 %v2242, %v2222
        %v3163 = vpack.c.b16 %v2243, %v2223
        %v3164 = vpack.c.b16 %v2244, %v2224
        %v3165 = vpack.c.b16 %v2245, %v2225
        %v3166 = vpack.c.b16 %v2246, %v2226
        %v3167 = vpack.c.b16 %v2247, %v2227
        %v3168 = vpack.c.b16 %v2248, %v2228
        %v3169 = vpack.c.b16 %v2249, %v2229
        %v3170 = vpack.c.b16 %v2250, %v2230
        %v3171 = vpack.c.b16 %v2251, %v2231
        %v3172 = vpack.c.b16 %v2252, %v2232
        %v3173 = vpack.c.b16 %v2253, %v2233
        %v3174 = vpack.c.b16 %v2254, %v2234
        %v3175 = vpack.c.b16 %v2255, %v2235
        %v3176 = vpack.c.b16 %v2256, %v2236
        %v3177 = vpack.c.b16 %v2277, %v2257
        %v3178 = vpack.c.b16 %v2278, %v2258
        %v3179 = vpack.c.b16 %v2279, %v2259
        %v3180 = vpack.c.b16 %v2280, %v2260
        %v3181 = vpack.c.b16 %v2281, %v2261
        %v3182 = vpack.c.b16 %v2282, %v2262
        %v3183 = vpack.c.b16 %v2283, %v2263
        %v3184 = vpack.c.b16 %v2284, %v2264
        %v3185 = vpack.c.b16 %v2285, %v2265
        %v3186 = vpack.c.b16 %v2286, %v2266
        %v3187 = vpack.c.b16 %v2287, %v2267
        %v3188 = vpack.c.b16 %v2288, %v2268
        %v3189 = vpack.c.b16 %v2289, %v2269
        %v3190 = vpack.c.b16 %v2290, %v2270
        %v3191 = vpack.c.b16 %v2291, %v2271
        %v3192 = vpack.c.b16 %v2292, %v2272
        %v3193 = vpack.c.b16 %v2293, %v2273
        %v3194 = vpack.c.b16 %v2294, %v2274
        %v3195 = vpack.c.b16 %v2295, %v2275
        %v3196 = vpack.c.b16 %v2296, %v2276
        %v3197 = vpack.c.b16 %v2317, %v2297
        %v3198 = vpack.c.b16 %v2318, %v2298
        %v3199 = vpack.c.b16 %v2319, %v2299
        %v3200 = vpack.c.b16 %v2320, %v2300
        %v3201 = vpack.c.b16 %v2321, %v2301
        %v3202 = vpack.c.b16 %v2322, %v2302
        %v3203 = vpack.c.b16 %v2323, %v2303
        %v3204 = vpack.c.b16 %v2324, %v2304
        %v3205 = vpack.c.b16 %v2325, %v2305
        %v3206 = vpack.c.b16 %v2326, %v2306
        %v3207 = vpack.c.b16 %v2327, %v2307
        %v3208 = vpack.c.b16 %v2328, %v2308
        %v3209 = vpack.c.b16 %v2329, %v2309
        %v3210 = vpack.c.b16 %v2330, %v2310
        %v3211 = vpack.c.b16 %v2331, %v2311
        %v3212 = vpack.c.b16 %v2332, %v2312
        %v3213 = vpack.c.b16 %v2333, %v2313
        %v3214 = vpack.c.b16 %v2334, %v2314
        %v3215 = vpack.c.b16 %v2335, %v2315
        %v3216 = vpack.c.b16 %v2336, %v2316
        %v3217 = vpack.c.b16 %v2357, %v2337
        %v3218 = vpack.c.b16 %v2358, %v2338
        %v3219 = vpack.c.b16 %v2359, %v2339
        %v3220 = vpack.c.b16 %v2360, %v2340
        %v3221 = vpack.c.b16 %v2361, %v2341
        %v3222 = vpack.c.b16 %v2362, %v2342
        %v3223 = vpack.c.b16 %v2363, %v2343
        %v3224 = vpack.c.b16 %v2364, %v2344
        %v3225 = vpack.c.b16 %v2365, %v2345
        %v3226 = vpack.c.b16 %v2366, %v2346
        %v3227 = vpack.c.b16 %v2367, %v2347
        %v3228 = vpack.c.b16 %v2368, %v2348
        %v3229 = vpack.c.b16 %v2369, %v2349
        %v3230 = vpack.c.b16 %v2370, %v2350
        %v3231 = vpack.c.b16 %v2371, %v2351
        %v3232 = vpack.c.b16 %v2372, %v2352
        %v3233 = vpack.c.b16 %v2373, %v2353
        %v3234 = vpack.c.b16 %v2374, %v2354
        %v3235 = vpack.c.b16 %v2375, %v2355
        %v3236 = vpack.c.b16 %v2376, %v2356
        %v3237 = vpack.c.b16 %v2397, %v2377
        %v3238 = vpack.c.b16 %v2398, %v2378
        %v3239 = vpack.c.b16 %v2399, %v2379
        %v3240 = vpack.c.b16 %v2400, %v2380
        %v3241 = vpack.c.b16 %v2401, %v2381
        %v3242 = vpack.c.b16 %v2402, %v2382
        %v3243 = vpack.c.b16 %v2403, %v2383
        %v3244 = vpack.c.b16 %v2404, %v2384
        %v3245 = vpack.c.b16 %v2405, %v2385
        %v3246 = vpack.c.b16 %v2406, %v2386
        %v3247 = vpack.c.b16 %v2407, %v2387
        %v3248 = vpack.c.b16 %v2408, %v2388
        %v3249 = vpack.c.b16 %v2409, %v2389
        %v3250 = vpack.c.b16 %v2410, %v2390
        %v3251 = vpack.c.b16 %v2411, %v2391
        %v3252 = vpack.c.b16 %v2412, %v2392
        %v3253 = vpack.c.b16 %v2413, %v2393
        %v3254 = vpack.c.b16 %v2414, %v2394
        %v3255 = vpack.c.b16 %v2415, %v2395
        %v3256 = vpack.c.b16 %v2416, %v2396
        %v3257 = vpack.c.b16 %v2437, %v2417
        %v3258 = vpack.c.b16 %v2438, %v2418
        %v3259 = vpack.c.b16 %v2439, %v2419
        %v3260 = vpack.c.b16 %v2440, %v2420
        %v3261 = vpack.c.b16 %v2441, %v2421
        %v3262 = vpack.c.b16 %v2442, %v2422
        %v3263 = vpack.c.b16 %v2443, %v2423
        %v3264 = vpack.c.b16 %v2444, %v2424
        %v3265 = vpack.c.b16 %v2445, %v2425
        %v3266 = vpack.c.b16 %v2446, %v2426
        %v3267 = vpack.c.b16 %v2447, %v2427
        %v3268 = vpack.c.b16 %v2448, %v2428
        %v3269 = vpack.c.b16 %v2449, %v2429
        %v3270 = vpack.c.b16 %v2450, %v2430
        %v3271 = vpack.c.b16 %v2451, %v2431
        %v3272 = vpack.c.b16 %v2452, %v2432
        %v3273 = vpack.c.b16 %v2453, %v2433
        %v3274 = vpack.c.b16 %v2454, %v2434
        %v3275 = vpack.c.b16 %v2455, %v2435
        %v3276 = vpack.c.b16 %v2456, %v2436
        %v3277 = vpack.c.b16 %v2477, %v2457
        %v3278 = vpack.c.b16 %v2478, %v2458
        %v3279 = vpack.c.b16 %v2479, %v2459
        %v3280 = vpack.c.b16 %v2480, %v2460
        %v3281 = vpack.c.b16 %v2481, %v2461
        %v3282 = vpack.c.b16 %v2482, %v2462
        %v3283 = vpack.c.b16 %v2483, %v2463
        %v3284 = vpack.c.b16 %v2484, %v2464
        %v3285 = vpack.c.b16 %v2485, %v2465
        %v3286 = vpack.c.b16 %v2486, %v2466
        %v3287 = vpack.c.b16 %v2487, %v2467
        %v3288 = vpack.c.b16 %v2488, %v2468
        %v3289 = vpack.c.b16 %v2489, %v2469
        %v3290 = vpack.c.b16 %v2490, %v2470
        %v3291 = vpack.c.b16 %v2491, %v2471
        %v3292 = vpack.c.b16 %v2492, %v2472
        %v3293 = vpack.c.b16 %v2493, %v2473
        %v3294 = vpack.c.b16 %v2494, %v2474
        %v3295 = vpack.c.b16 %v2495, %v2475
        %v3296 = vpack.c.b16 %v2496, %v2476
        %v3297 = vpack.c.b16 %v2517, %v2497
        %v3298 = vpack.c.b16 %v2518, %v2498
        %v3299 = vpack.c.b16 %v2519, %v2499
        %v3300 = vpack.c.b16 %v2520, %v2500
        %v3301 = vpack.c.b16 %v2521, %v2501
        %v3302 = vpack.c.b16 %v2522, %v2502
        %v3303 = vpack.c.b16 %v2523, %v2503
        %v3304 = vpack.c.b16 %v2524, %v2504
        %v3305 = vpack.c.b16 %v2525, %v2505
        %v3306 = vpack.c.b16 %v2526, %v2506
        %v3307 = vpack.c.b16 %v2527, %v2507
        %v3308 = vpack.c.b16 %v2528, %v2508
        %v3309 = vpack.c.b16 %v2529, %v2509
        %v3310 = vpack.c.b16 %v2530, %v2510
        %v3311 = vpack.c.b16 %v2531, %v2511
        %v3312 = vpack.c.b16 %v2532, %v2512
        %v3313 = vpack.c.b16 %v2533, %v2513
        %v3314 = vpack.c.b16 %v2534, %v2514
        %v3315 = vpack.c.b16 %v2535, %v2515
        %v3316 = vpack.c.b16 %v2536, %v2516
        %v3317 = vpack.c.b16 %v2557, %v2537
        %v3318 = vpack.c.b16 %v2558, %v2538
        %v3319 = vpack.c.b16 %v2559, %v2539
        %v3320 = vpack.c.b16 %v2560, %v2540
        %v3321 = vpack.c.b16 %v2561, %v2541
        %v3322 = vpack.c.b16 %v2562, %v2542
        %v3323 = vpack.c.b16 %v2563, %v2543
        %v3324 = vpack.c.b16 %v2564, %v2544
        %v3325 = vpack.c.b16 %v2565, %v2545
        %v3326 = vpack.c.b16 %v2566, %v2546
        %v3327 = vpack.c.b16 %v2567, %v2547
        %v3328 = vpack.c.b16 %v2568, %v2548
        %v3329 = vpack.c.b16 %v2569, %v2549
        %v3330 = vpack.c.b16 %v2570, %v2550
        %v3331 = vpack.c.b16 %v2571, %v2551
        %v3332 = vpack.c.b16 %v2572, %v2552
        %v3333 = vpack.c.b16 %v2573, %v2553
        %v3334 = vpack.c.b16 %v2574, %v2554
        %v3335 = vpack.c.b16 %v2575, %v2555
        %v3336 = vpack.c.b16 %v2576, %v2556
        %v3337 = vpack.c.b16 %v2597, %v2577
        %v3338 = vpack.c.b16 %v2598, %v2578
        %v3339 = vpack.c.b16 %v2599, %v2579
        %v3340 = vpack.c.b16 %v2600, %v2580
        %v3341 = vpack.c.b16 %v2601, %v2581
        %v3342 = vpack.c.b16 %v2602, %v2582
        %v3343 = vpack.c.b16 %v2603, %v2583
        %v3344 = vpack.c.b16 %v2604, %v2584
        %v3345 = vpack.c.b16 %v2605, %v2585
        %v3346 = vpack.c.b16 %v2606, %v2586
        %v3347 = vpack.c.b16 %v2607, %v2587
        %v3348 = vpack.c.b16 %v2608, %v2588
        %v3349 = vpack.c.b16 %v2609, %v2589
        %v3350 = vpack.c.b16 %v2610, %v2590
        %v3351 = vpack.c.b16 %v2611, %v2591
        %v3352 = vpack.c.b16 %v2612, %v2592
        %v3353 = vpack.c.b16 %v2613, %v2593
        %v3354 = vpack.c.b16 %v2614, %v2594
        %v3355 = vpack.c.b16 %v2615, %v2595
        %v3356 = vpack.c.b16 %v2616, %v2596
        %v3357 = vpack.c.b16 %v2637, %v2617
        %v3358 = vpack.c.b16 %v2638, %v2618
        %v3359 = vpack.c.b16 %v2639, %v2619
        %v3360 = vpack.c.b16 %v2640, %v2620
        %v3361 = vpack.c.b16 %v2641, %v2621
        %v3362 = vpack.c.b16 %v2642, %v2622
        %v3363 = vpack.c.b16 %v2643, %v2623
        %v3364 = vpack.c.b16 %v2644, %v2624
        %v3365 = vpack.c.b16 %v2645, %v2625
        %v3366 = vpack.c.b16 %v2646, %v2626
        %v3367 = vpack.c.b16 %v2647, %v2627
        %v3368 = vpack.c.b16 %v2648, %v2628
        %v3369 = vpack.c.b16 %v2649, %v2629
        %v3370 = vpack.c.b16 %v2650, %v2630
        %v3371 = vpack.c.b16 %v2651, %v2631
        %v3372 = vpack.c.b16 %v2652, %v2632
        %v3373 = vpack.c.b16 %v2653, %v2633
        %v3374 = vpack.c.b16 %v2654, %v2634
        %v3375 = vpack.c.b16 %v2655, %v2635
        %v3376 = vpack.c.b16 %v2656, %v2636
        %v3377 = vpack.c.b16 %v2677, %v2657
        %v3378 = vpack.c.b16 %v2678, %v2658
        %v3379 = vpack.c.b16 %v2679, %v2659
        %v3380 = vpack.c.b16 %v2680, %v2660
        %v3381 = vpack.c.b16 %v2681, %v2661
        %v3382 = vpack.c.b16 %v2682, %v2662
        %v3383 = vpack.c.b16 %v2683, %v2663
        %v3384 = vpack.c.b16 %v2684, %v2664
        %v3385 = vpack.c.b16 %v2685, %v2665
        %v3386 = vpack.c.b16 %v2686, %v2666
        %v3387 = vpack.c.b16 %v2687, %v2667
        %v3388 = vpack.c.b16 %v2688, %v2668
        %v3389 = vpack.c.b16 %v2689, %v2669
        %v3390 = vpack.c.b16 %v2690, %v2670
        %v3391 = vpack.c.b16 %v2691, %v2671
        %v3392 = vpack.c.b16 %v2692, %v2672
        %v3393 = vpack.c.b16 %v2693, %v2673
        %v3394 = vpack.c.b16 %v2694, %v2674
        %v3395 = vpack.c.b16 %v2695, %v2675
        %v3396 = vpack.c.b16 %v2696, %v2676
        %v3397 = vpack.c.b16 %v2717, %v2697
        %v3398 = vpack.c.b16 %v2718, %v2698
        %v3399 = vpack.c.b16 %v2719, %v2699
        %v3400 = vpack.c.b16 %v2720, %v2700
        %v3401 = vpack.c.b16 %v2721, %v2701
        %v3402 = vpack.c.b16 %v2722, %v2702
        %v3403 = vpack.c.b16 %v2723, %v2703
        %v3404 = vpack.c.b16 %v2724, %v2704
        %v3405 = vpack.c.b16 %v2725, %v2705
        %v3406 = vpack.c.b16 %v2726, %v2706
        %v3407 = vpack.c.b16 %v2727, %v2707
        %v3408 = vpack.c.b16 %v2728, %v2708
        %v3409 = vpack.c.b16 %v2729, %v2709
        %v3410 = vpack.c.b16 %v2730, %v2710
        %v3411 = vpack.c.b16 %v2731, %v2711
        %v3412 = vpack.c.b16 %v2732, %v2712
        %v3413 = vpack.c.b16 %v2733, %v2713
        %v3414 = vpack.c.b16 %v2734, %v2714
        %v3415 = vpack.c.b16 %v2735, %v2715
        %v3416 = vpack.c.b16 %v2736, %v2716
        %v3417 = vpack.c.b16 %v2757, %v2737
        %v3418 = vpack.c.b16 %v2758, %v2738
        %v3419 = vpack.c.b16 %v2759, %v2739
        %v3420 = vpack.c.b16 %v2760, %v2740
        %v3421 = vpack.c.b16 %v2761, %v2741
        %v3422 = vpack.c.b16 %v2762, %v2742
        %v3423 = vpack.c.b16 %v2763, %v2743
        %v3424 = vpack.c.b16 %v2764, %v2744
        %v3425 = vpack.c.b16 %v2765, %v2745
        %v3426 = vpack.c.b16 %v2766, %v2746
        %v3427 = vpack.c.b16 %v2767, %v2747
        %v3428 = vpack.c.b16 %v2768, %v2748
        %v3429 = vpack.c.b16 %v2769, %v2749
        %v3430 = vpack.c.b16 %v2770, %v2750
        %v3431 = vpack.c.b16 %v2771, %v2751
        %v3432 = vpack.c.b16 %v2772, %v2752
        %v3433 = vpack.c.b16 %v2773, %v2753
        %v3434 = vpack.c.b16 %v2774, %v2754
        %v3435 = vpack.c.b16 %v2775, %v2755
        %v3436 = vpack.c.b16 %v2776, %v2756
        %v3437 = vpack.c.b16 %v2797, %v2777
        %v3438 = vpack.c.b16 %v2798, %v2778
        %v3439 = vpack.c.b16 %v2799, %v2779
        %v3440 = vpack.c.b16 %v2800, %v2780
        %v3441 = vpack.c.b16 %v2801, %v2781
        %v3442 = vpack.c.b16 %v2802, %v2782
        %v3443 = vpack.c.b16 %v2803, %v2783
        %v3444 = vpack.c.b16 %v2804, %v2784
        %v3445 = vpack.c.b16 %v2805, %v2785
        %v3446 = vpack.c.b16 %v2806, %v2786
        %v3447 = vpack.c.b16 %v2807, %v2787
        %v3448 = vpack.c.b16 %v2808, %v2788
        %v3449 = vpack.c.b16 %v2809, %v2789
        %v3450 = vpack.c.b16 %v2810, %v2790
        %v3451 = vpack.c.b16 %v2811, %v2791
        %v3452 = vpack.c.b16 %v2812, %v2792
        %v3453 = vpack.c.b16 %v2813, %v2793
        %v3454 = vpack.c.b16 %v2814, %v2794
        %v3455 = vpack.c.b16 %v2815, %v2795
        %v3456 = vpack.c.b16 %v2816, %v2796
        %4097 = vmatprep.subr.bf16.mxu0 %v2818
        %4098 = vmatpush1.bf16.msra.mxu0 %v2817
        %4099 = vmatprep.subr.bf16.mxu0 %v2838
        %4100 = vmatpush1.bf16.msra.mxu0 %v2837
        %4101 = vmatprep.subr.bf16.mxu0 %v2858
        %4102 = vmatpush1.bf16.msra.mxu0 %v2857
        %4103 = vmatprep.subr.bf16.mxu0 %v2878
        %4104 = vmatpush1.bf16.msra.mxu0 %v2877
        %4105 = vmatprep.subr.bf16.mxu0 %v2898
        %4106 = vmatpush1.bf16.msra.mxu0 %v2897
        %4107 = vmatprep.subr.bf16.mxu0 %v2918
        %4108 = vmatpush1.bf16.msra.mxu0 %v2917
        %4109 = vmatprep.subr.bf16.mxu0 %v2938
        %4110 = vmatpush1.bf16.msra.mxu0 %v2937
        %4111 = vmatprep.subr.bf16.mxu0 %v2958
        %4112 = vmatpush1.bf16.msra.mxu0 %v2957
        %4113 = vmatprep.subr.bf16.mxu0 %v2978
        %4114 = vmatpush1.bf16.msra.mxu0 %v2977
        %4115 = vmatprep.subr.bf16.mxu0 %v2998
        %4116 = vmatpush1.bf16.msra.mxu0 %v2997
        %4117 = vmatprep.subr.bf16.mxu0 %v3018
        %4118 = vmatpush1.bf16.msra.mxu0 %v3017
        %4119 = vmatprep.subr.bf16.mxu0 %v3038
        %4120 = vmatpush1.bf16.msra.mxu0 %v3037
        %4121 = vmatprep.subr.bf16.mxu0 %v3058
        %4122 = vmatpush1.bf16.msra.mxu0 %v3057
        %4123 = vmatprep.subr.bf16.mxu0 %v3078
        %4124 = vmatpush1.bf16.msra.mxu0 %v3077
        %4125 = vmatprep.subr.bf16.mxu0 %v3098
        %4126 = vmatpush1.bf16.msra.mxu0 %v3097
        %4127 = vmatprep.subr.bf16.mxu0 %v3118
        %4128 = vmatpush1.bf16.msra.mxu0 %v3117
        %4129 = vmatprep.mubr.bf16.mxu0 %v246
        %4130 = vmatmul.mubr.bf16.gmra.mrb[0].mxu0 %v245
        %v4131 = vpop.f32.mrb[0].mxu0
        %v4132 = vadd.f32 0.0, %v4131
        %v4133 = vpop.f32.mrb[0].mxu0
        %v4134 = vadd.f32 0.0, %v4133
        %v4135 = vpop.f32.mrb[0].mxu0
        %v4136 = vadd.f32 0.0, %v4135
        %v4137 = vpop.f32.mrb[0].mxu0
        %v4138 = vadd.f32 0.0, %v4137
        %4139 = vmatprep.mubr.bf16.mxu0 %v250
        %4140 = vmatmul.mubr.bf16.gmra.mrb[0].mxu0 %v249
        %v4141 = vpop.f32.mrb[0].mxu0
        %v4142 = vadd.f32 0.0, %v4141
        %v4143 = vpop.f32.mrb[0].mxu0
        %v4144 = vadd.f32 0.0, %v4143
        %v4145 = vpop.f32.mrb[0].mxu0
        %v4146 = vadd.f32 0.0, %v4145
        %v4147 = vpop.f32.mrb[0].mxu0
        %v4148 = vadd.f32 0.0, %v4147
        %4149 = vmatprep.mubr.bf16.mxu0 %v254
        %4150 = vmatmul.mubr.bf16.gmra.mrb[0].mxu0 %v253
        %v4151 = vpop.f32.mrb[0].mxu0
        %v4152 = vadd.f32 0.0, %v4151
        %v4153 = vpop.f32.mrb[0].mxu0
        %v4154 = vadd.f32 0.0, %v4153
        %v4155 = vpop.f32.mrb[0].mxu0
        %v4156 = vadd.f32 0.0, %v4155
        %v4157 = vpop.f32.mrb[0].mxu0
        %v4158 = vadd.f32 0.0, %v4157
        %4159 = vdwg.mxu0
        %4160 = vmatprep.subr.bf16.mxu0 %v3138
        %4161 = vmatpush1.bf16.msra.mxu0 %v3137
        %4162 = vmatprep.subr.bf16.mxu0 %v3158
        %4163 = vmatpush1.bf16.msra.mxu0 %v3157
        %4164 = vmatprep.subr.bf16.mxu0 %v3178
        %4165 = vmatpush1.bf16.msra.mxu0 %v3177
        %4166 = vmatprep.subr.bf16.mxu0 %v3198
        %4167 = vmatpush1.bf16.msra.mxu0 %v3197
        %4168 = vmatprep.subr.bf16.mxu0 %v3218
        %4169 = vmatpush1.bf16.msra.mxu0 %v3217
        %4170 = vmatprep.subr.bf16.mxu0 %v3238
        %4171 = vmatpush1.bf16.msra.mxu0 %v3237
        %4172 = vmatprep.subr.bf16.mxu0 %v3258
        %4173 = vmatpush1.bf16.msra.mxu0 %v3257
        %4174 = vmatprep.subr.bf16.mxu0 %v3278
        %4175 = vmatpush1.bf16.msra.mxu0 %v3277
        %4176 = vmatprep.subr.bf16.mxu0 %v3298
        %4177 = vmatpush1.bf16.msra.mxu0 %v3297
        %4178 = vmatprep.subr.bf16.mxu0 %v3318
        %4179 = vmatpush1.bf16.msra.mxu0 %v3317
        %4180 = vmatprep.subr.bf16.mxu0 %v3338
        %4181 = vmatpush1.bf16.msra.mxu0 %v3337
        %4182 = vmatprep.subr.bf16.mxu0 %v3358
        %4183 = vmatpush1.bf16.msra.mxu0 %v3357
        %4184 = vmatprep.subr.bf16.mxu0 %v3378
        %4185 = vmatpush1.bf16.msra.mxu0 %v3377
        %4186 = vmatprep.subr.bf16.mxu0 %v3398
        %4187 = vmatpush1.bf16.msra.mxu0 %v3397
        %4188 = vmatprep.subr.bf16.mxu0 %v3418
        %4189 = vmatpush1.bf16.msra.mxu0 %v3417
        %4190 = vmatprep.subr.bf16.mxu0 %v3438
        %4191 = vmatpush1.bf16.msra.mxu0 %v3437
        %4192 = vmatprep.mubr.bf16.mxu0 %v248
        %4193 = vmatmul.mubr.bf16.gmra.mrb[0].mxu0 %v247
        %v4194 = vpop.f32.mrb[0].mxu0
        %v4195 = vadd.f32 %v4132, %v4194
        %v4196 = vpop.f32.mrb[0].mxu0
        %v4197 = vadd.f32 %v4134, %v4196
        %v4198 = vpop.f32.mrb[0].mxu0
        %v4199 = vadd.f32 %v4136, %v4198
        %v4200 = vpop.f32.mrb[0].mxu0
        %v4201 = vadd.f32 %v4138, %v4200
        %4202 = vmatprep.mubr.bf16.mxu0 %v252
        %4203 = vmatmul.mubr.bf16.gmra.mrb[0].mxu0 %v251
        %v4204 = vpop.f32.mrb[0].mxu0
        %v4205 = vadd.f32 %v4142, %v4204
        %v4206 = vpop.f32.mrb[0].mxu0
        %v4207 = vadd.f32 %v4144, %v4206
        %v4208 = vpop.f32.mrb[0].mxu0
        %v4209 = vadd.f32 %v4146, %v4208
        %v4210 = vpop.f32.mrb[0].mxu0
        %v4211 = vadd.f32 %v4148, %v4210
        %4212 = vmatprep.mubr.bf16.mxu0 %v256
        %4213 = vmatmul.mubr.bf16.gmra.mrb[0].mxu0 %v255
        %v4214 = vpop.f32.mrb[0].mxu0
        %v4215 = vadd.f32 %v4152, %v4214
        %v4216 = vpop.f32.mrb[0].mxu0
        %v4217 = vadd.f32 %v4154, %v4216
        %v4218 = vpop.f32.mrb[0].mxu0
        %v4219 = vadd.f32 %v4156, %v4218
        %v4220 = vpop.f32.mrb[0].mxu0
        %v4221 = vadd.f32 %v4158, %v4220
        %4222 = vdwg.mxu0
        %4223 = vmatprep.subr.bf16.mxu0 %v2820
        %4224 = vmatpush1.bf16.msra.mxu0 %v2819
        %4225 = vmatprep.subr.bf16.mxu0 %v2840
        %4226 = vmatpush1.bf16.msra.mxu0 %v2839
        %4227 = vmatprep.subr.bf16.mxu0 %v2860
        %4228 = vmatpush1.bf16.msra.mxu0 %v2859
        %4229 = vmatprep.subr.bf16.mxu0 %v2880
        %4230 = vmatpush1.bf16.msra.mxu0 %v2879
        %4231 = vmatprep.subr.bf16.mxu0 %v2900
        %4232 = vmatpush1.bf16.msra.mxu0 %v2899
        %4233 = vmatprep.subr.bf16.mxu0 %v2920
        %4234 = vmatpush1.bf16.msra.mxu0 %v2919
        %4235 = vmatprep.subr.bf16.mxu0 %v2940
        %4236 = vmatpush1.bf16.msra.mxu0 %v2939
        %4237 = vmatprep.subr.bf16.mxu0 %v2960
        %4238 = vmatpush1.bf16.msra.mxu0 %v2959
        %4239 = vmatprep.subr.bf16.mxu0 %v2980
        %4240 = vmatpush1.bf16.msra.mxu0 %v2979
        %4241 = vmatprep.subr.bf16.mxu0 %v3000
        %4242 = vmatpush1.bf16.msra.mxu0 %v2999
        %4243 = vmatprep.subr.bf16.mxu0 %v3020
        %4244 = vmatpush1.bf16.msra.mxu0 %v3019
        %4245 = vmatprep.subr.bf16.mxu0 %v3040
        %4246 = vmatpush1.bf16.msra.mxu0 %v3039
        %4247 = vmatprep.subr.bf16.mxu0 %v3060
        %4248 = vmatpush1.bf16.msra.mxu0 %v3059
        %4249 = vmatprep.subr.bf16.mxu0 %v3080
        %4250 = vmatpush1.bf16.msra.mxu0 %v3079
        %4251 = vmatprep.subr.bf16.mxu0 %v3100
        %4252 = vmatpush1.bf16.msra.mxu0 %v3099
        %4253 = vmatprep.subr.bf16.mxu0 %v3120
        %4254 = vmatpush1.bf16.msra.mxu0 %v3119
        %4255 = vmatprep.mubr.bf16.mxu0 %v246
        %4256 = vmatmul.mubr.bf16.gmra.mrb[0].mxu0 %v245
        %v4257 = vpop.f32.mrb[0].mxu0
        %v4258 = vadd.f32 0.0, %v4257
        %v4259 = vpop.f32.mrb[0].mxu0
        %v4260 = vadd.f32 0.0, %v4259
        %v4261 = vpop.f32.mrb[0].mxu0
        %v4262 = vadd.f32 0.0, %v4261
        %v4263 = vpop.f32.mrb[0].mxu0
        %v4264 = vadd.f32 0.0, %v4263
        %4265 = vmatprep.mubr.bf16.mxu0 %v250
        %4266 = vmatmul.mubr.bf16.gmra.mrb[0].mxu0 %v249
        %v4267 = vpop.f32.mrb[0].mxu0
        %v4268 = vadd.f32 0.0, %v4267
        %v4269 = vpop.f32.mrb[0].mxu0
        %v4270 = vadd.f32 0.0, %v4269
        %v4271 = vpop.f32.mrb[0].mxu0
        %v4272 = vadd.f32 0.0, %v4271
        %v4273 = vpop.f32.mrb[0].mxu0
        %v4274 = vadd.f32 0.0, %v4273
        %4275 = vmatprep.mubr.bf16.mxu0 %v254
        %4276 = vmatmul.mubr.bf16.gmra.mrb[0].mxu0 %v253
        %v4277 = vpop.f32.mrb[0].mxu0
        %v4278 = vadd.f32 0.0, %v4277
        %v4279 = vpop.f32.mrb[0].mxu0
        %v4280 = vadd.f32 0.0, %v4279
        %v4281 = vpop.f32.mrb[0].mxu0
        %v4282 = vadd.f32 0.0, %v4281
        %v4283 = vpop.f32.mrb[0].mxu0
        %v4284 = vadd.f32 0.0, %v4283
        %4285 = vdwg.mxu0
        %4286 = vmatprep.subr.bf16.mxu0 %v3140
        %4287 = vmatpush1.bf16.msra.mxu0 %v3139
        %4288 = vmatprep.subr.bf16.mxu0 %v3160
        %4289 = vmatpush1.bf16.msra.mxu0 %v3159
        %4290 = vmatprep.subr.bf16.mxu0 %v3180
        %4291 = vmatpush1.bf16.msra.mxu0 %v3179
        %4292 = vmatprep.subr.bf16.mxu0 %v3200
        %4293 = vmatpush1.bf16.msra.mxu0 %v3199
        %4294 = vmatprep.subr.bf16.mxu0 %v3220
        %4295 = vmatpush1.bf16.msra.mxu0 %v3219
        %4296 = vmatprep.subr.bf16.mxu0 %v3240
        %4297 = vmatpush1.bf16.msra.mxu0 %v3239
        %4298 = vmatprep.subr.bf16.mxu0 %v3260
        %4299 = vmatpush1.bf16.msra.mxu0 %v3259
        %4300 = vmatprep.subr.bf16.mxu0 %v3280
        %4301 = vmatpush1.bf16.msra.mxu0 %v3279
        %4302 = vmatprep.subr.bf16.mxu0 %v3300
        %4303 = vmatpush1.bf16.msra.mxu0 %v3299
        %4304 = vmatprep.subr.bf16.mxu0 %v3320
        %4305 = vmatpush1.bf16.msra.mxu0 %v3319
        %4306 = vmatprep.subr.bf16.mxu0 %v3340
        %4307 = vmatpush1.bf16.msra.mxu0 %v3339
        %4308 = vmatprep.subr.bf16.mxu0 %v3360
        %4309 = vmatpush1.bf16.msra.mxu0 %v3359
        %4310 = vmatprep.subr.bf16.mxu0 %v3380
        %4311 = vmatpush1.bf16.msra.mxu0 %v3379
        %4312 = vmatprep.subr.bf16.mxu0 %v3400
        %4313 = vmatpush1.bf16.msra.mxu0 %v3399
        %4314 = vmatprep.subr.bf16.mxu0 %v3420
        %4315 = vmatpush1.bf16.msra.mxu0 %v3419
        %4316 = vmatprep.subr.bf16.mxu0 %v3440
        %4317 = vmatpush1.bf16.msra.mxu0 %v3439
        %4318 = vmatprep.mubr.bf16.mxu0 %v248
        %4319 = vmatmul.mubr.bf16.gmra.mrb[0].mxu0 %v247
        %v4320 = vpop.f32.mrb[0].mxu0
        %v4321 = vadd.f32 %v4258, %v4320
        %v4322 = vpop.f32.mrb[0].mxu0
        %v4323 = vadd.f32 %v4260, %v4322
        %v4324 = vpop.f32.mrb[0].mxu0
        %v4325 = vadd.f32 %v4262, %v4324
        %v4326 = vpop.f32.mrb[0].mxu0
        %v4327 = vadd.f32 %v4264, %v4326
        %4328 = vmatprep.mubr.bf16.mxu0 %v252
        %4329 = vmatmul.mubr.bf16.gmra.mrb[0].mxu0 %v251
        %v4330 = vpop.f32.mrb[0].mxu0
        %v4331 = vadd.f32 %v4268, %v4330
        %v4332 = vpop.f32.mrb[0].mxu0
        %v4333 = vadd.f32 %v4270, %v4332
        %v4334 = vpop.f32.mrb[0].mxu0
        %v4335 = vadd.f32 %v4272, %v4334
        %v4336 = vpop.f32.mrb[0].mxu0
        %v4337 = vadd.f32 %v4274, %v4336
        %4338 = vmatprep.mubr.bf16.mxu0 %v256
        %4339 = vmatmul.mubr.bf16.gmra.mrb[0].mxu0 %v255
        %v4340 = vpop.f32.mrb[0].mxu0
        %v4341 = vadd.f32 %v4278, %v4340
        %v4342 = vpop.f32.mrb[0].mxu0
        %v4343 = vadd.f32 %v4280, %v4342
        %v4344 = vpop.f32.mrb[0].mxu0
        %v4345 = vadd.f32 %v4282, %v4344
        %v4346 = vpop.f32.mrb[0].mxu0
        %v4347 = vadd.f32 %v4284, %v4346
        %4348 = vdwg.mxu0
        %4349 = vmatprep.subr.bf16.mxu0 %v2822
        %4350 = vmatpush1.bf16.msra.mxu0 %v2821
        %4351 = vmatprep.subr.bf16.mxu0 %v2842
        %4352 = vmatpush1.bf16.msra.mxu0 %v2841
        %4353 = vmatprep.subr.bf16.mxu0 %v2862
        %4354 = vmatpush1.bf16.msra.mxu0 %v2861
        %4355 = vmatprep.subr.bf16.mxu0 %v2882
        %4356 = vmatpush1.bf16.msra.mxu0 %v2881
        %4357 = vmatprep.subr.bf16.mxu0 %v2902
        %4358 = vmatpush1.bf16.msra.mxu0 %v2901
        %4359 = vmatprep.subr.bf16.mxu0 %v2922
        %4360 = vmatpush1.bf16.msra.mxu0 %v2921
        %4361 = vmatprep.subr.bf16.mxu0 %v2942
        %4362 = vmatpush1.bf16.msra.mxu0 %v2941
        %4363 = vmatprep.subr.bf16.mxu0 %v2962
        %4364 = vmatpush1.bf16.msra.mxu0 %v2961
        %4365 = vmatprep.subr.bf16.mxu0 %v2982
        %4366 = vmatpush1.bf16.msra.mxu0 %v2981
        %4367 = vmatprep.subr.bf16.mxu0 %v3002
        %4368 = vmatpush1.bf16.msra.mxu0 %v3001
        %4369 = vmatprep.subr.bf16.mxu0 %v3022
        %4370 = vmatpush1.bf16.msra.mxu0 %v3021
        %4371 = vmatprep.subr.bf16.mxu0 %v3042
        %4372 = vmatpush1.bf16.msra.mxu0 %v3041
        %4373 = vmatprep.subr.bf16.mxu0 %v3062
        %4374 = vmatpush1.bf16.msra.mxu0 %v3061
        %4375 = vmatprep.subr.bf16.mxu0 %v3082
        %4376 = vmatpush1.bf16.msra.mxu0 %v3081
        %4377 = vmatprep.subr.bf16.mxu0 %v3102
        %4378 = vmatpush1.bf16.msra.mxu0 %v3101
        %4379 = vmatprep.subr.bf16.mxu0 %v3122
        %4380 = vmatpush1.bf16.msra.mxu0 %v3121
        %4381 = vmatprep.mubr.bf16.mxu0 %v246
        %4382 = vmatmul.mubr.bf16.gmra.mrb[0].mxu0 %v245
        %v4383 = vpop.f32.mrb[0].mxu0
        %v4384 = vadd.f32 0.0, %v4383
        %v4385 = vpop.f32.mrb[0].mxu0
        %v4386 = vadd.f32 0.0, %v4385
        %v4387 = vpop.f32.mrb[0].mxu0
        %v4388 = vadd.f32 0.0, %v4387
        %v4389 = vpop.f32.mrb[0].mxu0
        %v4390 = vadd.f32 0.0, %v4389
        %4391 = vmatprep.mubr.bf16.mxu0 %v250
        %4392 = vmatmul.mubr.bf16.gmra.mrb[0].mxu0 %v249
        %v4393 = vpop.f32.mrb[0].mxu0
        %v4394 = vadd.f32 0.0, %v4393
        %v4395 = vpop.f32.mrb[0].mxu0
        %v4396 = vadd.f32 0.0, %v4395
        %v4397 = vpop.f32.mrb[0].mxu0
        %v4398 = vadd.f32 0.0, %v4397
        %v4399 = vpop.f32.mrb[0].mxu0
        %v4400 = vadd.f32 0.0, %v4399
        %4401 = vmatprep.mubr.bf16.mxu0 %v254
        %4402 = vmatmul.mubr.bf16.gmra.mrb[0].mxu0 %v253
        %v4403 = vpop.f32.mrb[0].mxu0
        %v4404 = vadd.f32 0.0, %v4403
        %v4405 = vpop.f32.mrb[0].mxu0
        %v4406 = vadd.f32 0.0, %v4405
        %v4407 = vpop.f32.mrb[0].mxu0
        %v4408 = vadd.f32 0.0, %v4407
        %v4409 = vpop.f32.mrb[0].mxu0
        %v4410 = vadd.f32 0.0, %v4409
        %4411 = vdwg.mxu0
        %4412 = vmatprep.subr.bf16.mxu0 %v3142
        %4413 = vmatpush1.bf16.msra.mxu0 %v3141
        %4414 = vmatprep.subr.bf16.mxu0 %v3162
        %4415 = vmatpush1.bf16.msra.mxu0 %v3161
        %4416 = vmatprep.subr.bf16.mxu0 %v3182
        %4417 = vmatpush1.bf16.msra.mxu0 %v3181
        %4418 = vmatprep.subr.bf16.mxu0 %v3202
        %4419 = vmatpush1.bf16.msra.mxu0 %v3201
        %4420 = vmatprep.subr.bf16.mxu0 %v3222
        %4421 = vmatpush1.bf16.msra.mxu0 %v3221
        %4422 = vmatprep.subr.bf16.mxu0 %v3242
        %4423 = vmatpush1.bf16.msra.mxu0 %v3241
        %4424 = vmatprep.subr.bf16.mxu0 %v3262
        %4425 = vmatpush1.bf16.msra.mxu0 %v3261
        %4426 = vmatprep.subr.bf16.mxu0 %v3282
        %4427 = vmatpush1.bf16.msra.mxu0 %v3281
        %4428 = vmatprep.subr.bf16.mxu0 %v3302
        %4429 = vmatpush1.bf16.msra.mxu0 %v3301
        %4430 = vmatprep.subr.bf16.mxu0 %v3322
        %4431 = vmatpush1.bf16.msra.mxu0 %v3321
        %4432 = vmatprep.subr.bf16.mxu0 %v3342
        %4433 = vmatpush1.bf16.msra.mxu0 %v3341
        %4434 = vmatprep.subr.bf16.mxu0 %v3362
        %4435 = vmatpush1.bf16.msra.mxu0 %v3361
        %4436 = vmatprep.subr.bf16.mxu0 %v3382
        %4437 = vmatpush1.bf16.msra.mxu0 %v3381
        %4438 = vmatprep.subr.bf16.mxu0 %v3402
        %4439 = vmatpush1.bf16.msra.mxu0 %v3401
        %4440 = vmatprep.subr.bf16.mxu0 %v3422
        %4441 = vmatpush1.bf16.msra.mxu0 %v3421
        %4442 = vmatprep.subr.bf16.mxu0 %v3442
        %4443 = vmatpush1.bf16.msra.mxu0 %v3441
        %4444 = vmatprep.mubr.bf16.mxu0 %v248
        %4445 = vmatmul.mubr.bf16.gmra.mrb[0].mxu0 %v247
        %v4446 = vpop.f32.mrb[0].mxu0
        %v4447 = vadd.f32 %v4384, %v4446
        %v4448 = vpop.f32.mrb[0].mxu0
        %v4449 = vadd.f32 %v4386, %v4448
        %v4450 = vpop.f32.mrb[0].mxu0
        %v4451 = vadd.f32 %v4388, %v4450
        %v4452 = vpop.f32.mrb[0].mxu0
        %v4453 = vadd.f32 %v4390, %v4452
        %4454 = vmatprep.mubr.bf16.mxu0 %v252
        %4455 = vmatmul.mubr.bf16.gmra.mrb[0].mxu0 %v251
        %v4456 = vpop.f32.mrb[0].mxu0
        %v4457 = vadd.f32 %v4394, %v4456
        %v4458 = vpop.f32.mrb[0].mxu0
        %v4459 = vadd.f32 %v4396, %v4458
        %v4460 = vpop.f32.mrb[0].mxu0
        %v4461 = vadd.f32 %v4398, %v4460
        %v4462 = vpop.f32.mrb[0].mxu0
        %v4463 = vadd.f32 %v4400, %v4462
        %4464 = vmatprep.mubr.bf16.mxu0 %v256
        %4465 = vmatmul.mubr.bf16.gmra.mrb[0].mxu0 %v255
        %v4466 = vpop.f32.mrb[0].mxu0
        %v4467 = vadd.f32 %v4404, %v4466
        %v4468 = vpop.f32.mrb[0].mxu0
        %v4469 = vadd.f32 %v4406, %v4468
        %v4470 = vpop.f32.mrb[0].mxu0
        %v4471 = vadd.f32 %v4408, %v4470
        %v4472 = vpop.f32.mrb[0].mxu0
        %v4473 = vadd.f32 %v4410, %v4472
        %4474 = vdwg.mxu0
        %4475 = vmatprep.subr.bf16.mxu0 %v2824
        %4476 = vmatpush1.bf16.msra.mxu0 %v2823
        %4477 = vmatprep.subr.bf16.mxu0 %v2844
        %4478 = vmatpush1.bf16.msra.mxu0 %v2843
        %4479 = vmatprep.subr.bf16.mxu0 %v2864
        %4480 = vmatpush1.bf16.msra.mxu0 %v2863
        %4481 = vmatprep.subr.bf16.mxu0 %v2884
        %4482 = vmatpush1.bf16.msra.mxu0 %v2883
        %4483 = vmatprep.subr.bf16.mxu0 %v2904
        %4484 = vmatpush1.bf16.msra.mxu0 %v2903
        %4485 = vmatprep.subr.bf16.mxu0 %v2924
        %4486 = vmatpush1.bf16.msra.mxu0 %v2923
        %4487 = vmatprep.subr.bf16.mxu0 %v2944
        %4488 = vmatpush1.bf16.msra.mxu0 %v2943
        %4489 = vmatprep.subr.bf16.mxu0 %v2964
        %4490 = vmatpush1.bf16.msra.mxu0 %v2963
        %4491 = vmatprep.subr.bf16.mxu0 %v2984
        %4492 = vmatpush1.bf16.msra.mxu0 %v2983
        %4493 = vmatprep.subr.bf16.mxu0 %v3004
        %4494 = vmatpush1.bf16.msra.mxu0 %v3003
        %4495 = vmatprep.subr.bf16.mxu0 %v3024
        %4496 = vmatpush1.bf16.msra.mxu0 %v3023
        %4497 = vmatprep.subr.bf16.mxu0 %v3044
        %4498 = vmatpush1.bf16.msra.mxu0 %v3043
        %4499 = vmatprep.subr.bf16.mxu0 %v3064
        %4500 = vmatpush1.bf16.msra.mxu0 %v3063
        %4501 = vmatprep.subr.bf16.mxu0 %v3084
        %4502 = vmatpush1.bf16.msra.mxu0 %v3083
        %4503 = vmatprep.subr.bf16.mxu0 %v3104
        %4504 = vmatpush1.bf16.msra.mxu0 %v3103
        %4505 = vmatprep.subr.bf16.mxu0 %v3124
        %4506 = vmatpush1.bf16.msra.mxu0 %v3123
        %4507 = vmatprep.mubr.bf16.mxu0 %v246
        %4508 = vmatmul.mubr.bf16.gmra.mrb[0].mxu0 %v245
        %v4509 = vpop.f32.mrb[0].mxu0
        %v4510 = vadd.f32 0.0, %v4509
        %v4511 = vpop.f32.mrb[0].mxu0
        %v4512 = vadd.f32 0.0, %v4511
        %v4513 = vpop.f32.mrb[0].mxu0
        %v4514 = vadd.f32 0.0, %v4513
        %v4515 = vpop.f32.mrb[0].mxu0
        %v4516 = vadd.f32 0.0, %v4515
        %4517 = vmatprep.mubr.bf16.mxu0 %v250
        %4518 = vmatmul.mubr.bf16.gmra.mrb[0].mxu0 %v249
        %v4519 = vpop.f32.mrb[0].mxu0
        %v4520 = vadd.f32 0.0, %v4519
        %v4521 = vpop.f32.mrb[0].mxu0
        %v4522 = vadd.f32 0.0, %v4521
        %v4523 = vpop.f32.mrb[0].mxu0
        %v4524 = vadd.f32 0.0, %v4523
        %v4525 = vpop.f32.mrb[0].mxu0
        %v4526 = vadd.f32 0.0, %v4525
        %4527 = vmatprep.mubr.bf16.mxu0 %v254
        %4528 = vmatmul.mubr.bf16.gmra.mrb[0].mxu0 %v253
        %v4529 = vpop.f32.mrb[0].mxu0
        %v4530 = vadd.f32 0.0, %v4529
        %v4531 = vpop.f32.mrb[0].mxu0
        %v4532 = vadd.f32 0.0, %v4531
        %v4533 = vpop.f32.mrb[0].mxu0
        %v4534 = vadd.f32 0.0, %v4533
        %v4535 = vpop.f32.mrb[0].mxu0
        %v4536 = vadd.f32 0.0, %v4535
        %4537 = vdwg.mxu0
        %4538 = vmatprep.subr.bf16.mxu0 %v3144
        %4539 = vmatpush1.bf16.msra.mxu0 %v3143
        %4540 = vmatprep.subr.bf16.mxu0 %v3164
        %4541 = vmatpush1.bf16.msra.mxu0 %v3163
        %4542 = vmatprep.subr.bf16.mxu0 %v3184
        %4543 = vmatpush1.bf16.msra.mxu0 %v3183
        %4544 = vmatprep.subr.bf16.mxu0 %v3204
        %4545 = vmatpush1.bf16.msra.mxu0 %v3203
        %4546 = vmatprep.subr.bf16.mxu0 %v3224
        %4547 = vmatpush1.bf16.msra.mxu0 %v3223
        %4548 = vmatprep.subr.bf16.mxu0 %v3244
        %4549 = vmatpush1.bf16.msra.mxu0 %v3243
        %4550 = vmatprep.subr.bf16.mxu0 %v3264
        %4551 = vmatpush1.bf16.msra.mxu0 %v3263
        %4552 = vmatprep.subr.bf16.mxu0 %v3284
        %4553 = vmatpush1.bf16.msra.mxu0 %v3283
        %4554 = vmatprep.subr.bf16.mxu0 %v3304
        %4555 = vmatpush1.bf16.msra.mxu0 %v3303
        %4556 = vmatprep.subr.bf16.mxu0 %v3324
        %4557 = vmatpush1.bf16.msra.mxu0 %v3323
        %4558 = vmatprep.subr.bf16.mxu0 %v3344
        %4559 = vmatpush1.bf16.msra.mxu0 %v3343
        %4560 = vmatprep.subr.bf16.mxu0 %v3364
        %4561 = vmatpush1.bf16.msra.mxu0 %v3363
        %4562 = vmatprep.subr.bf16.mxu0 %v3384
        %4563 = vmatpush1.bf16.msra.mxu0 %v3383
        %4564 = vmatprep.subr.bf16.mxu0 %v3404
        %4565 = vmatpush1.bf16.msra.mxu0 %v3403
        %4566 = vmatprep.subr.bf16.mxu0 %v3424
        %4567 = vmatpush1.bf16.msra.mxu0 %v3423
        %4568 = vmatprep.subr.bf16.mxu0 %v3444
        %4569 = vmatpush1.bf16.msra.mxu0 %v3443
        %4570 = vmatprep.mubr.bf16.mxu0 %v248
        %4571 = vmatmul.mubr.bf16.gmra.mrb[0].mxu0 %v247
        %v4572 = vpop.f32.mrb[0].mxu0
        %v4573 = vadd.f32 %v4510, %v4572
        %v4574 = vpop.f32.mrb[0].mxu0
        %v4575 = vadd.f32 %v4512, %v4574
        %v4576 = vpop.f32.mrb[0].mxu0
        %v4577 = vadd.f32 %v4514, %v4576
        %v4578 = vpop.f32.mrb[0].mxu0
        %v4579 = vadd.f32 %v4516, %v4578
        %4580 = vmatprep.mubr.bf16.mxu0 %v252
        %4581 = vmatmul.mubr.bf16.gmra.mrb[0].mxu0 %v251
        %v4582 = vpop.f32.mrb[0].mxu0
        %v4583 = vadd.f32 %v4520, %v4582
        %v4584 = vpop.f32.mrb[0].mxu0
        %v4585 = vadd.f32 %v4522, %v4584
        %v4586 = vpop.f32.mrb[0].mxu0
        %v4587 = vadd.f32 %v4524, %v4586
        %v4588 = vpop.f32.mrb[0].mxu0
        %v4589 = vadd.f32 %v4526, %v4588
        %4590 = vmatprep.mubr.bf16.mxu0 %v256
        %4591 = vmatmul.mubr.bf16.gmra.mrb[0].mxu0 %v255
        %v4592 = vpop.f32.mrb[0].mxu0
        %v4593 = vadd.f32 %v4530, %v4592
        %v4594 = vpop.f32.mrb[0].mxu0
        %v4595 = vadd.f32 %v4532, %v4594
        %v4596 = vpop.f32.mrb[0].mxu0
        %v4597 = vadd.f32 %v4534, %v4596
        %v4598 = vpop.f32.mrb[0].mxu0
        %v4599 = vadd.f32 %v4536, %v4598
        %4600 = vdwg.mxu0
        %4601 = vmatprep.subr.bf16.mxu0 %v2826
        %4602 = vmatpush1.bf16.msra.mxu0 %v2825
        %4603 = vmatprep.subr.bf16.mxu0 %v2846
        %4604 = vmatpush1.bf16.msra.mxu0 %v2845
        %4605 = vmatprep.subr.bf16.mxu0 %v2866
        %4606 = vmatpush1.bf16.msra.mxu0 %v2865
        %4607 = vmatprep.subr.bf16.mxu0 %v2886
        %4608 = vmatpush1.bf16.msra.mxu0 %v2885
        %4609 = vmatprep.subr.bf16.mxu0 %v2906
        %4610 = vmatpush1.bf16.msra.mxu0 %v2905
        %4611 = vmatprep.subr.bf16.mxu0 %v2926
        %4612 = vmatpush1.bf16.msra.mxu0 %v2925
        %4613 = vmatprep.subr.bf16.mxu0 %v2946
        %4614 = vmatpush1.bf16.msra.mxu0 %v2945
        %4615 = vmatprep.subr.bf16.mxu0 %v2966
        %4616 = vmatpush1.bf16.msra.mxu0 %v2965
        %4617 = vmatprep.subr.bf16.mxu0 %v2986
        %4618 = vmatpush1.bf16.msra.mxu0 %v2985
        %4619 = vmatprep.subr.bf16.mxu0 %v3006
        %4620 = vmatpush1.bf16.msra.mxu0 %v3005
        %4621 = vmatprep.subr.bf16.mxu0 %v3026
        %4622 = vmatpush1.bf16.msra.mxu0 %v3025
        %4623 = vmatprep.subr.bf16.mxu0 %v3046
        %4624 = vmatpush1.bf16.msra.mxu0 %v3045
        %4625 = vmatprep.subr.bf16.mxu0 %v3066
        %4626 = vmatpush1.bf16.msra.mxu0 %v3065
        %4627 = vmatprep.subr.bf16.mxu0 %v3086
        %4628 = vmatpush1.bf16.msra.mxu0 %v3085
        %4629 = vmatprep.subr.bf16.mxu0 %v3106
        %4630 = vmatpush1.bf16.msra.mxu0 %v3105
        %4631 = vmatprep.subr.bf16.mxu0 %v3126
        %4632 = vmatpush1.bf16.msra.mxu0 %v3125
        %4633 = vmatprep.mubr.bf16.mxu0 %v246
        %4634 = vmatmul.mubr.bf16.gmra.mrb[0].mxu0 %v245
        %v4635 = vpop.f32.mrb[0].mxu0
        %v4636 = vadd.f32 0.0, %v4635
        %v4637 = vpop.f32.mrb[0].mxu0
        %v4638 = vadd.f32 0.0, %v4637
        %v4639 = vpop.f32.mrb[0].mxu0
        %v4640 = vadd.f32 0.0, %v4639
        %v4641 = vpop.f32.mrb[0].mxu0
        %v4642 = vadd.f32 0.0, %v4641
        %4643 = vmatprep.mubr.bf16.mxu0 %v250
        %4644 = vmatmul.mubr.bf16.gmra.mrb[0].mxu0 %v249
        %v4645 = vpop.f32.mrb[0].mxu0
        %v4646 = vadd.f32 0.0, %v4645
        %v4647 = vpop.f32.mrb[0].mxu0
        %v4648 = vadd.f32 0.0, %v4647
        %v4649 = vpop.f32.mrb[0].mxu0
        %v4650 = vadd.f32 0.0, %v4649
        %v4651 = vpop.f32.mrb[0].mxu0
        %v4652 = vadd.f32 0.0, %v4651
        %4653 = vmatprep.mubr.bf16.mxu0 %v254
        %4654 = vmatmul.mubr.bf16.gmra.mrb[0].mxu0 %v253
        %v4655 = vpop.f32.mrb[0].mxu0
        %v4656 = vadd.f32 0.0, %v4655
        %v4657 = vpop.f32.mrb[0].mxu0
        %v4658 = vadd.f32 0.0, %v4657
        %v4659 = vpop.f32.mrb[0].mxu0
        %v4660 = vadd.f32 0.0, %v4659
        %v4661 = vpop.f32.mrb[0].mxu0
        %v4662 = vadd.f32 0.0, %v4661
        %4663 = vdwg.mxu0
        %4664 = vmatprep.subr.bf16.mxu0 %v3146
        %4665 = vmatpush1.bf16.msra.mxu0 %v3145
        %4666 = vmatprep.subr.bf16.mxu0 %v3166
        %4667 = vmatpush1.bf16.msra.mxu0 %v3165
        %4668 = vmatprep.subr.bf16.mxu0 %v3186
        %4669 = vmatpush1.bf16.msra.mxu0 %v3185
        %4670 = vmatprep.subr.bf16.mxu0 %v3206
        %4671 = vmatpush1.bf16.msra.mxu0 %v3205
        %4672 = vmatprep.subr.bf16.mxu0 %v3226
        %4673 = vmatpush1.bf16.msra.mxu0 %v3225
        %4674 = vmatprep.subr.bf16.mxu0 %v3246
        %4675 = vmatpush1.bf16.msra.mxu0 %v3245
        %4676 = vmatprep.subr.bf16.mxu0 %v3266
        %4677 = vmatpush1.bf16.msra.mxu0 %v3265
        %4678 = vmatprep.subr.bf16.mxu0 %v3286
        %4679 = vmatpush1.bf16.msra.mxu0 %v3285
        %4680 = vmatprep.subr.bf16.mxu0 %v3306
        %4681 = vmatpush1.bf16.msra.mxu0 %v3305
        %4682 = vmatprep.subr.bf16.mxu0 %v3326
        %4683 = vmatpush1.bf16.msra.mxu0 %v3325
        %4684 = vmatprep.subr.bf16.mxu0 %v3346
        %4685 = vmatpush1.bf16.msra.mxu0 %v3345
        %4686 = vmatprep.subr.bf16.mxu0 %v3366
        %4687 = vmatpush1.bf16.msra.mxu0 %v3365
        %4688 = vmatprep.subr.bf16.mxu0 %v3386
        %4689 = vmatpush1.bf16.msra.mxu0 %v3385
        %4690 = vmatprep.subr.bf16.mxu0 %v3406
        %4691 = vmatpush1.bf16.msra.mxu0 %v3405
        %4692 = vmatprep.subr.bf16.mxu0 %v3426
        %4693 = vmatpush1.bf16.msra.mxu0 %v3425
        %4694 = vmatprep.subr.bf16.mxu0 %v3446
        %4695 = vmatpush1.bf16.msra.mxu0 %v3445
        %4696 = vmatprep.mubr.bf16.mxu0 %v248
        %4697 = vmatmul.mubr.bf16.gmra.mrb[0].mxu0 %v247
        %v4698 = vpop.f32.mrb[0].mxu0
        %v4699 = vadd.f32 %v4636, %v4698
        %v4700 = vpop.f32.mrb[0].mxu0
        %v4701 = vadd.f32 %v4638, %v4700
        %v4702 = vpop.f32.mrb[0].mxu0
        %v4703 = vadd.f32 %v4640, %v4702
        %v4704 = vpop.f32.mrb[0].mxu0
        %v4705 = vadd.f32 %v4642, %v4704
        %4706 = vmatprep.mubr.bf16.mxu0 %v252
        %4707 = vmatmul.mubr.bf16.gmra.mrb[0].mxu0 %v251
        %v4708 = vpop.f32.mrb[0].mxu0
        %v4709 = vadd.f32 %v4646, %v4708
        %v4710 = vpop.f32.mrb[0].mxu0
        %v4711 = vadd.f32 %v4648, %v4710
        %v4712 = vpop.f32.mrb[0].mxu0
        %v4713 = vadd.f32 %v4650, %v4712
        %v4714 = vpop.f32.mrb[0].mxu0
        %v4715 = vadd.f32 %v4652, %v4714
        %4716 = vmatprep.mubr.bf16.mxu0 %v256
        %4717 = vmatmul.mubr.bf16.gmra.mrb[0].mxu0 %v255
        %v4718 = vpop.f32.mrb[0].mxu0
        %v4719 = vadd.f32 %v4656, %v4718
        %v4720 = vpop.f32.mrb[0].mxu0
        %v4721 = vadd.f32 %v4658, %v4720
        %v4722 = vpop.f32.mrb[0].mxu0
        %v4723 = vadd.f32 %v4660, %v4722
        %v4724 = vpop.f32.mrb[0].mxu0
        %v4725 = vadd.f32 %v4662, %v4724
        %4726 = vdwg.mxu0
        %4727 = vmatprep.subr.bf16.mxu0 %v2828
        %4728 = vmatpush1.bf16.msra.mxu0 %v2827
        %4729 = vmatprep.subr.bf16.mxu0 %v2848
        %4730 = vmatpush1.bf16.msra.mxu0 %v2847
        %4731 = vmatprep.subr.bf16.mxu0 %v2868
        %4732 = vmatpush1.bf16.msra.mxu0 %v2867
        %4733 = vmatprep.subr.bf16.mxu0 %v2888
        %4734 = vmatpush1.bf16.msra.mxu0 %v2887
        %4735 = vmatprep.subr.bf16.mxu0 %v2908
        %4736 = vmatpush1.bf16.msra.mxu0 %v2907
        %4737 = vmatprep.subr.bf16.mxu0 %v2928
        %4738 = vmatpush1.bf16.msra.mxu0 %v2927
        %4739 = vmatprep.subr.bf16.mxu0 %v2948
        %4740 = vmatpush1.bf16.msra.mxu0 %v2947
        %4741 = vmatprep.subr.bf16.mxu0 %v2968
        %4742 = vmatpush1.bf16.msra.mxu0 %v2967
        %4743 = vmatprep.subr.bf16.mxu0 %v2988
        %4744 = vmatpush1.bf16.msra.mxu0 %v2987
        %4745 = vmatprep.subr.bf16.mxu0 %v3008
        %4746 = vmatpush1.bf16.msra.mxu0 %v3007
        %4747 = vmatprep.subr.bf16.mxu0 %v3028
        %4748 = vmatpush1.bf16.msra.mxu0 %v3027
        %4749 = vmatprep.subr.bf16.mxu0 %v3048
        %4750 = vmatpush1.bf16.msra.mxu0 %v3047
        %4751 = vmatprep.subr.bf16.mxu0 %v3068
        %4752 = vmatpush1.bf16.msra.mxu0 %v3067
        %4753 = vmatprep.subr.bf16.mxu0 %v3088
        %4754 = vmatpush1.bf16.msra.mxu0 %v3087
        %4755 = vmatprep.subr.bf16.mxu0 %v3108
        %4756 = vmatpush1.bf16.msra.mxu0 %v3107
        %4757 = vmatprep.subr.bf16.mxu0 %v3128
        %4758 = vmatpush1.bf16.msra.mxu0 %v3127
        %4759 = vmatprep.mubr.bf16.mxu0 %v246
        %4760 = vmatmul.mubr.bf16.gmra.mrb[0].mxu0 %v245
        %v4761 = vpop.f32.mrb[0].mxu0
        %v4762 = vadd.f32 0.0, %v4761
        %v4763 = vpop.f32.mrb[0].mxu0
        %v4764 = vadd.f32 0.0, %v4763
        %v4765 = vpop.f32.mrb[0].mxu0
        %v4766 = vadd.f32 0.0, %v4765
        %v4767 = vpop.f32.mrb[0].mxu0
        %v4768 = vadd.f32 0.0, %v4767
        %4769 = vmatprep.mubr.bf16.mxu0 %v250
        %4770 = vmatmul.mubr.bf16.gmra.mrb[0].mxu0 %v249
        %v4771 = vpop.f32.mrb[0].mxu0
        %v4772 = vadd.f32 0.0, %v4771
        %v4773 = vpop.f32.mrb[0].mxu0
        %v4774 = vadd.f32 0.0, %v4773
        %v4775 = vpop.f32.mrb[0].mxu0
        %v4776 = vadd.f32 0.0, %v4775
        %v4777 = vpop.f32.mrb[0].mxu0
        %v4778 = vadd.f32 0.0, %v4777
        %4779 = vmatprep.mubr.bf16.mxu0 %v254
        %4780 = vmatmul.mubr.bf16.gmra.mrb[0].mxu0 %v253
        %v4781 = vpop.f32.mrb[0].mxu0
        %v4782 = vadd.f32 0.0, %v4781
        %v4783 = vpop.f32.mrb[0].mxu0
        %v4784 = vadd.f32 0.0, %v4783
        %v4785 = vpop.f32.mrb[0].mxu0
        %v4786 = vadd.f32 0.0, %v4785
        %v4787 = vpop.f32.mrb[0].mxu0
        %v4788 = vadd.f32 0.0, %v4787
        %4789 = vdwg.mxu0
        %4790 = vmatprep.subr.bf16.mxu0 %v3148
        %4791 = vmatpush1.bf16.msra.mxu0 %v3147
        %4792 = vmatprep.subr.bf16.mxu0 %v3168
        %4793 = vmatpush1.bf16.msra.mxu0 %v3167
        %4794 = vmatprep.subr.bf16.mxu0 %v3188
        %4795 = vmatpush1.bf16.msra.mxu0 %v3187
        %4796 = vmatprep.subr.bf16.mxu0 %v3208
        %4797 = vmatpush1.bf16.msra.mxu0 %v3207
        %4798 = vmatprep.subr.bf16.mxu0 %v3228
        %4799 = vmatpush1.bf16.msra.mxu0 %v3227
        %4800 = vmatprep.subr.bf16.mxu0 %v3248
        %4801 = vmatpush1.bf16.msra.mxu0 %v3247
        %4802 = vmatprep.subr.bf16.mxu0 %v3268
        %4803 = vmatpush1.bf16.msra.mxu0 %v3267
        %4804 = vmatprep.subr.bf16.mxu0 %v3288
        %4805 = vmatpush1.bf16.msra.mxu0 %v3287
        %4806 = vmatprep.subr.bf16.mxu0 %v3308
        %4807 = vmatpush1.bf16.msra.mxu0 %v3307
        %4808 = vmatprep.subr.bf16.mxu0 %v3328
        %4809 = vmatpush1.bf16.msra.mxu0 %v3327
        %4810 = vmatprep.subr.bf16.mxu0 %v3348
        %4811 = vmatpush1.bf16.msra.mxu0 %v3347
        %4812 = vmatprep.subr.bf16.mxu0 %v3368
        %4813 = vmatpush1.bf16.msra.mxu0 %v3367
        %4814 = vmatprep.subr.bf16.mxu0 %v3388
        %4815 = vmatpush1.bf16.msra.mxu0 %v3387
        %4816 = vmatprep.subr.bf16.mxu0 %v3408
        %4817 = vmatpush1.bf16.msra.mxu0 %v3407
        %4818 = vmatprep.subr.bf16.mxu0 %v3428
        %4819 = vmatpush1.bf16.msra.mxu0 %v3427
        %4820 = vmatprep.subr.bf16.mxu0 %v3448
        %4821 = vmatpush1.bf16.msra.mxu0 %v3447
        %4822 = vmatprep.mubr.bf16.mxu0 %v248
        %4823 = vmatmul.mubr.bf16.gmra.mrb[0].mxu0 %v247
        %v4824 = vpop.f32.mrb[0].mxu0
        %v4825 = vadd.f32 %v4762, %v4824
        %v4826 = vpop.f32.mrb[0].mxu0
        %v4827 = vadd.f32 %v4764, %v4826
        %v4828 = vpop.f32.mrb[0].mxu0
        %v4829 = vadd.f32 %v4766, %v4828
        %v4830 = vpop.f32.mrb[0].mxu0
        %v4831 = vadd.f32 %v4768, %v4830
        %4832 = vmatprep.mubr.bf16.mxu0 %v252
        %4833 = vmatmul.mubr.bf16.gmra.mrb[0].mxu0 %v251
        %v4834 = vpop.f32.mrb[0].mxu0
        %v4835 = vadd.f32 %v4772, %v4834
        %v4836 = vpop.f32.mrb[0].mxu0
        %v4837 = vadd.f32 %v4774, %v4836
        %v4838 = vpop.f32.mrb[0].mxu0
        %v4839 = vadd.f32 %v4776, %v4838
        %v4840 = vpop.f32.mrb[0].mxu0
        %v4841 = vadd.f32 %v4778, %v4840
        %4842 = vmatprep.mubr.bf16.mxu0 %v256
        %4843 = vmatmul.mubr.bf16.gmra.mrb[0].mxu0 %v255
        %v4844 = vpop.f32.mrb[0].mxu0
        %v4845 = vadd.f32 %v4782, %v4844
        %v4846 = vpop.f32.mrb[0].mxu0
        %v4847 = vadd.f32 %v4784, %v4846
        %v4848 = vpop.f32.mrb[0].mxu0
        %v4849 = vadd.f32 %v4786, %v4848
        %v4850 = vpop.f32.mrb[0].mxu0
        %v4851 = vadd.f32 %v4788, %v4850
        %4852 = vdwg.mxu0
        %4853 = vmatprep.subr.bf16.mxu0 %v2830
        %4854 = vmatpush1.bf16.msra.mxu0 %v2829
        %4855 = vmatprep.subr.bf16.mxu0 %v2850
        %4856 = vmatpush1.bf16.msra.mxu0 %v2849
        %4857 = vmatprep.subr.bf16.mxu0 %v2870
        %4858 = vmatpush1.bf16.msra.mxu0 %v2869
        %4859 = vmatprep.subr.bf16.mxu0 %v2890
        %4860 = vmatpush1.bf16.msra.mxu0 %v2889
        %4861 = vmatprep.subr.bf16.mxu0 %v2910
        %4862 = vmatpush1.bf16.msra.mxu0 %v2909
        %4863 = vmatprep.subr.bf16.mxu0 %v2930
        %4864 = vmatpush1.bf16.msra.mxu0 %v2929
        %4865 = vmatprep.subr.bf16.mxu0 %v2950
        %4866 = vmatpush1.bf16.msra.mxu0 %v2949
        %4867 = vmatprep.subr.bf16.mxu0 %v2970
        %4868 = vmatpush1.bf16.msra.mxu0 %v2969
        %4869 = vmatprep.subr.bf16.mxu0 %v2990
        %4870 = vmatpush1.bf16.msra.mxu0 %v2989
        %4871 = vmatprep.subr.bf16.mxu0 %v3010
        %4872 = vmatpush1.bf16.msra.mxu0 %v3009
        %4873 = vmatprep.subr.bf16.mxu0 %v3030
        %4874 = vmatpush1.bf16.msra.mxu0 %v3029
        %4875 = vmatprep.subr.bf16.mxu0 %v3050
        %4876 = vmatpush1.bf16.msra.mxu0 %v3049
        %4877 = vmatprep.subr.bf16.mxu0 %v3070
        %4878 = vmatpush1.bf16.msra.mxu0 %v3069
        %4879 = vmatprep.subr.bf16.mxu0 %v3090
        %4880 = vmatpush1.bf16.msra.mxu0 %v3089
        %4881 = vmatprep.subr.bf16.mxu0 %v3110
        %4882 = vmatpush1.bf16.msra.mxu0 %v3109
        %4883 = vmatprep.subr.bf16.mxu0 %v3130
        %4884 = vmatpush1.bf16.msra.mxu0 %v3129
        %4885 = vmatprep.mubr.bf16.mxu0 %v246
        %4886 = vmatmul.mubr.bf16.gmra.mrb[0].mxu0 %v245
        %v4887 = vpop.f32.mrb[0].mxu0
        %v4888 = vadd.f32 0.0, %v4887
        %v4889 = vpop.f32.mrb[0].mxu0
        %v4890 = vadd.f32 0.0, %v4889
        %v4891 = vpop.f32.mrb[0].mxu0
        %v4892 = vadd.f32 0.0, %v4891
        %v4893 = vpop.f32.mrb[0].mxu0
        %v4894 = vadd.f32 0.0, %v4893
        %4895 = vmatprep.mubr.bf16.mxu0 %v250
        %4896 = vmatmul.mubr.bf16.gmra.mrb[0].mxu0 %v249
        %v4897 = vpop.f32.mrb[0].mxu0
        %v4898 = vadd.f32 0.0, %v4897
        %v4899 = vpop.f32.mrb[0].mxu0
        %v4900 = vadd.f32 0.0, %v4899
        %v4901 = vpop.f32.mrb[0].mxu0
        %v4902 = vadd.f32 0.0, %v4901
        %v4903 = vpop.f32.mrb[0].mxu0
        %v4904 = vadd.f32 0.0, %v4903
        %4905 = vmatprep.mubr.bf16.mxu0 %v254
        %4906 = vmatmul.mubr.bf16.gmra.mrb[0].mxu0 %v253
        %v4907 = vpop.f32.mrb[0].mxu0
        %v4908 = vadd.f32 0.0, %v4907
        %v4909 = vpop.f32.mrb[0].mxu0
        %v4910 = vadd.f32 0.0, %v4909
        %v4911 = vpop.f32.mrb[0].mxu0
        %v4912 = vadd.f32 0.0, %v4911
        %v4913 = vpop.f32.mrb[0].mxu0
        %v4914 = vadd.f32 0.0, %v4913
        %4915 = vdwg.mxu0
        %4916 = vmatprep.subr.bf16.mxu0 %v3150
        %4917 = vmatpush1.bf16.msra.mxu0 %v3149
        %4918 = vmatprep.subr.bf16.mxu0 %v3170
        %4919 = vmatpush1.bf16.msra.mxu0 %v3169
        %4920 = vmatprep.subr.bf16.mxu0 %v3190
        %4921 = vmatpush1.bf16.msra.mxu0 %v3189
        %4922 = vmatprep.subr.bf16.mxu0 %v3210
        %4923 = vmatpush1.bf16.msra.mxu0 %v3209
        %4924 = vmatprep.subr.bf16.mxu0 %v3230
        %4925 = vmatpush1.bf16.msra.mxu0 %v3229
        %4926 = vmatprep.subr.bf16.mxu0 %v3250
        %4927 = vmatpush1.bf16.msra.mxu0 %v3249
        %4928 = vmatprep.subr.bf16.mxu0 %v3270
        %4929 = vmatpush1.bf16.msra.mxu0 %v3269
        %4930 = vmatprep.subr.bf16.mxu0 %v3290
        %4931 = vmatpush1.bf16.msra.mxu0 %v3289
        %4932 = vmatprep.subr.bf16.mxu0 %v3310
        %4933 = vmatpush1.bf16.msra.mxu0 %v3309
        %4934 = vmatprep.subr.bf16.mxu0 %v3330
        %4935 = vmatpush1.bf16.msra.mxu0 %v3329
        %4936 = vmatprep.subr.bf16.mxu0 %v3350
        %4937 = vmatpush1.bf16.msra.mxu0 %v3349
        %4938 = vmatprep.subr.bf16.mxu0 %v3370
        %4939 = vmatpush1.bf16.msra.mxu0 %v3369
        %4940 = vmatprep.subr.bf16.mxu0 %v3390
        %4941 = vmatpush1.bf16.msra.mxu0 %v3389
        %4942 = vmatprep.subr.bf16.mxu0 %v3410
        %4943 = vmatpush1.bf16.msra.mxu0 %v3409
        %4944 = vmatprep.subr.bf16.mxu0 %v3430
        %4945 = vmatpush1.bf16.msra.mxu0 %v3429
        %4946 = vmatprep.subr.bf16.mxu0 %v3450
        %4947 = vmatpush1.bf16.msra.mxu0 %v3449
        %4948 = vmatprep.mubr.bf16.mxu0 %v248
        %4949 = vmatmul.mubr.bf16.gmra.mrb[0].mxu0 %v247
        %v4950 = vpop.f32.mrb[0].mxu0
        %v4951 = vadd.f32 %v4888, %v4950
        %v4952 = vpop.f32.mrb[0].mxu0
        %v4953 = vadd.f32 %v4890, %v4952
        %v4954 = vpop.f32.mrb[0].mxu0
        %v4955 = vadd.f32 %v4892, %v4954
        %v4956 = vpop.f32.mrb[0].mxu0
        %v4957 = vadd.f32 %v4894, %v4956
        %4958 = vmatprep.mubr.bf16.mxu0 %v252
        %4959 = vmatmul.mubr.bf16.gmra.mrb[0].mxu0 %v251
        %v4960 = vpop.f32.mrb[0].mxu0
        %v4961 = vadd.f32 %v4898, %v4960
        %v4962 = vpop.f32.mrb[0].mxu0
        %v4963 = vadd.f32 %v4900, %v4962
        %v4964 = vpop.f32.mrb[0].mxu0
        %v4965 = vadd.f32 %v4902, %v4964
        %v4966 = vpop.f32.mrb[0].mxu0
        %v4967 = vadd.f32 %v4904, %v4966
        %4968 = vmatprep.mubr.bf16.mxu0 %v256
        %4969 = vmatmul.mubr.bf16.gmra.mrb[0].mxu0 %v255
        %v4970 = vpop.f32.mrb[0].mxu0
        %v4971 = vadd.f32 %v4908, %v4970
        %v4972 = vpop.f32.mrb[0].mxu0
        %v4973 = vadd.f32 %v4910, %v4972
        %v4974 = vpop.f32.mrb[0].mxu0
        %v4975 = vadd.f32 %v4912, %v4974
        %v4976 = vpop.f32.mrb[0].mxu0
        %v4977 = vadd.f32 %v4914, %v4976
        %4978 = vdwg.mxu0
        %4979 = vmatprep.subr.bf16.mxu0 %v2832
        %4980 = vmatpush1.bf16.msra.mxu0 %v2831
        %4981 = vmatprep.subr.bf16.mxu0 %v2852
        %4982 = vmatpush1.bf16.msra.mxu0 %v2851
        %4983 = vmatprep.subr.bf16.mxu0 %v2872
        %4984 = vmatpush1.bf16.msra.mxu0 %v2871
        %4985 = vmatprep.subr.bf16.mxu0 %v2892
        %4986 = vmatpush1.bf16.msra.mxu0 %v2891
        %4987 = vmatprep.subr.bf16.mxu0 %v2912
        %4988 = vmatpush1.bf16.msra.mxu0 %v2911
        %4989 = vmatprep.subr.bf16.mxu0 %v2932
        %4990 = vmatpush1.bf16.msra.mxu0 %v2931
        %4991 = vmatprep.subr.bf16.mxu0 %v2952
        %4992 = vmatpush1.bf16.msra.mxu0 %v2951
        %4993 = vmatprep.subr.bf16.mxu0 %v2972
        %4994 = vmatpush1.bf16.msra.mxu0 %v2971
        %4995 = vmatprep.subr.bf16.mxu0 %v2992
        %4996 = vmatpush1.bf16.msra.mxu0 %v2991
        %4997 = vmatprep.subr.bf16.mxu0 %v3012
        %4998 = vmatpush1.bf16.msra.mxu0 %v3011
        %4999 = vmatprep.subr.bf16.mxu0 %v3032
        %5000 = vmatpush1.bf16.msra.mxu0 %v3031
        %5001 = vmatprep.subr.bf16.mxu0 %v3052
        %5002 = vmatpush1.bf16.msra.mxu0 %v3051
        %5003 = vmatprep.subr.bf16.mxu0 %v3072
        %5004 = vmatpush1.bf16.msra.mxu0 %v3071
        %5005 = vmatprep.subr.bf16.mxu0 %v3092
        %5006 = vmatpush1.bf16.msra.mxu0 %v3091
        %5007 = vmatprep.subr.bf16.mxu0 %v3112
        %5008 = vmatpush1.bf16.msra.mxu0 %v3111
        %5009 = vmatprep.subr.bf16.mxu0 %v3132
        %5010 = vmatpush1.bf16.msra.mxu0 %v3131
        %5011 = vmatprep.mubr.bf16.mxu0 %v246
        %5012 = vmatmul.mubr.bf16.gmra.mrb[0].mxu0 %v245
        %v5013 = vpop.f32.mrb[0].mxu0
        %v5014 = vadd.f32 0.0, %v5013
        %v5015 = vpop.f32.mrb[0].mxu0
        %v5016 = vadd.f32 0.0, %v5015
        %v5017 = vpop.f32.mrb[0].mxu0
        %v5018 = vadd.f32 0.0, %v5017
        %v5019 = vpop.f32.mrb[0].mxu0
        %v5020 = vadd.f32 0.0, %v5019
        %5021 = vmatprep.mubr.bf16.mxu0 %v250
        %5022 = vmatmul.mubr.bf16.gmra.mrb[0].mxu0 %v249
        %v5023 = vpop.f32.mrb[0].mxu0
        %v5024 = vadd.f32 0.0, %v5023
        %v5025 = vpop.f32.mrb[0].mxu0
        %v5026 = vadd.f32 0.0, %v5025
        %v5027 = vpop.f32.mrb[0].mxu0
        %v5028 = vadd.f32 0.0, %v5027
        %v5029 = vpop.f32.mrb[0].mxu0
        %v5030 = vadd.f32 0.0, %v5029
        %5031 = vmatprep.mubr.bf16.mxu0 %v254
        %5032 = vmatmul.mubr.bf16.gmra.mrb[0].mxu0 %v253
        %v5033 = vpop.f32.mrb[0].mxu0
        %v5034 = vadd.f32 0.0, %v5033
        %v5035 = vpop.f32.mrb[0].mxu0
        %v5036 = vadd.f32 0.0, %v5035
        %v5037 = vpop.f32.mrb[0].mxu0
        %v5038 = vadd.f32 0.0, %v5037
        %v5039 = vpop.f32.mrb[0].mxu0
        %v5040 = vadd.f32 0.0, %v5039
        %5041 = vdwg.mxu0
        %5042 = vmatprep.subr.bf16.mxu0 %v3152
        %5043 = vmatpush1.bf16.msra.mxu0 %v3151
        %5044 = vmatprep.subr.bf16.mxu0 %v3172
        %5045 = vmatpush1.bf16.msra.mxu0 %v3171
        %5046 = vmatprep.subr.bf16.mxu0 %v3192
        %5047 = vmatpush1.bf16.msra.mxu0 %v3191
        %5048 = vmatprep.subr.bf16.mxu0 %v3212
        %5049 = vmatpush1.bf16.msra.mxu0 %v3211
        %5050 = vmatprep.subr.bf16.mxu0 %v3232
        %5051 = vmatpush1.bf16.msra.mxu0 %v3231
        %5052 = vmatprep.subr.bf16.mxu0 %v3252
        %5053 = vmatpush1.bf16.msra.mxu0 %v3251
        %5054 = vmatprep.subr.bf16.mxu0 %v3272
        %5055 = vmatpush1.bf16.msra.mxu0 %v3271
        %5056 = vmatprep.subr.bf16.mxu0 %v3292
        %5057 = vmatpush1.bf16.msra.mxu0 %v3291
        %5058 = vmatprep.subr.bf16.mxu0 %v3312
        %5059 = vmatpush1.bf16.msra.mxu0 %v3311
        %5060 = vmatprep.subr.bf16.mxu0 %v3332
        %5061 = vmatpush1.bf16.msra.mxu0 %v3331
        %5062 = vmatprep.subr.bf16.mxu0 %v3352
        %5063 = vmatpush1.bf16.msra.mxu0 %v3351
        %5064 = vmatprep.subr.bf16.mxu0 %v3372
        %5065 = vmatpush1.bf16.msra.mxu0 %v3371
        %5066 = vmatprep.subr.bf16.mxu0 %v3392
        %5067 = vmatpush1.bf16.msra.mxu0 %v3391
        %5068 = vmatprep.subr.bf16.mxu0 %v3412
        %5069 = vmatpush1.bf16.msra.mxu0 %v3411
        %5070 = vmatprep.subr.bf16.mxu0 %v3432
        %5071 = vmatpush1.bf16.msra.mxu0 %v3431
        %5072 = vmatprep.subr.bf16.mxu0 %v3452
        %5073 = vmatpush1.bf16.msra.mxu0 %v3451
        %5074 = vmatprep.mubr.bf16.mxu0 %v248
        %5075 = vmatmul.mubr.bf16.gmra.mrb[0].mxu0 %v247
        %v5076 = vpop.f32.mrb[0].mxu0
        %v5077 = vadd.f32 %v5014, %v5076
        %v5078 = vpop.f32.mrb[0].mxu0
        %v5079 = vadd.f32 %v5016, %v5078
        %v5080 = vpop.f32.mrb[0].mxu0
        %v5081 = vadd.f32 %v5018, %v5080
        %v5082 = vpop.f32.mrb[0].mxu0
        %v5083 = vadd.f32 %v5020, %v5082
        %5084 = vmatprep.mubr.bf16.mxu0 %v252
        %5085 = vmatmul.mubr.bf16.gmra.mrb[0].mxu0 %v251
        %v5086 = vpop.f32.mrb[0].mxu0
        %v5087 = vadd.f32 %v5024, %v5086
        %v5088 = vpop.f32.mrb[0].mxu0
        %v5089 = vadd.f32 %v5026, %v5088
        %v5090 = vpop.f32.mrb[0].mxu0
        %v5091 = vadd.f32 %v5028, %v5090
        %v5092 = vpop.f32.mrb[0].mxu0
        %v5093 = vadd.f32 %v5030, %v5092
        %5094 = vmatprep.mubr.bf16.mxu0 %v256
        %5095 = vmatmul.mubr.bf16.gmra.mrb[0].mxu0 %v255
        %v5096 = vpop.f32.mrb[0].mxu0
        %v5097 = vadd.f32 %v5034, %v5096
        %v5098 = vpop.f32.mrb[0].mxu0
        %v5099 = vadd.f32 %v5036, %v5098
        %v5100 = vpop.f32.mrb[0].mxu0
        %v5101 = vadd.f32 %v5038, %v5100
        %v5102 = vpop.f32.mrb[0].mxu0
        %v5103 = vadd.f32 %v5040, %v5102
        %5104 = vdwg.mxu0
        %5105 = vmatprep.subr.bf16.mxu0 %v2834
        %5106 = vmatpush1.bf16.msra.mxu0 %v2833
        %5107 = vmatprep.subr.bf16.mxu0 %v2854
        %5108 = vmatpush1.bf16.msra.mxu0 %v2853
        %5109 = vmatprep.subr.bf16.mxu0 %v2874
        %5110 = vmatpush1.bf16.msra.mxu0 %v2873
        %5111 = vmatprep.subr.bf16.mxu0 %v2894
        %5112 = vmatpush1.bf16.msra.mxu0 %v2893
        %5113 = vmatprep.subr.bf16.mxu0 %v2914
        %5114 = vmatpush1.bf16.msra.mxu0 %v2913
        %5115 = vmatprep.subr.bf16.mxu0 %v2934
        %5116 = vmatpush1.bf16.msra.mxu0 %v2933
        %5117 = vmatprep.subr.bf16.mxu0 %v2954
        %5118 = vmatpush1.bf16.msra.mxu0 %v2953
        %5119 = vmatprep.subr.bf16.mxu0 %v2974
        %5120 = vmatpush1.bf16.msra.mxu0 %v2973
        %5121 = vmatprep.subr.bf16.mxu0 %v2994
        %5122 = vmatpush1.bf16.msra.mxu0 %v2993
        %5123 = vmatprep.subr.bf16.mxu0 %v3014
        %5124 = vmatpush1.bf16.msra.mxu0 %v3013
        %5125 = vmatprep.subr.bf16.mxu0 %v3034
        %5126 = vmatpush1.bf16.msra.mxu0 %v3033
        %5127 = vmatprep.subr.bf16.mxu0 %v3054
        %5128 = vmatpush1.bf16.msra.mxu0 %v3053
        %5129 = vmatprep.subr.bf16.mxu0 %v3074
        %5130 = vmatpush1.bf16.msra.mxu0 %v3073
        %5131 = vmatprep.subr.bf16.mxu0 %v3094
        %5132 = vmatpush1.bf16.msra.mxu0 %v3093
        %5133 = vmatprep.subr.bf16.mxu0 %v3114
        %5134 = vmatpush1.bf16.msra.mxu0 %v3113
        %5135 = vmatprep.subr.bf16.mxu0 %v3134
        %5136 = vmatpush1.bf16.msra.mxu0 %v3133
        %5137 = vmatprep.mubr.bf16.mxu0 %v246
        %5138 = vmatmul.mubr.bf16.gmra.mrb[0].mxu0 %v245
        %v5139 = vpop.f32.mrb[0].mxu0
        %v5140 = vadd.f32 0.0, %v5139
        %v5141 = vpop.f32.mrb[0].mxu0
        %v5142 = vadd.f32 0.0, %v5141
        %v5143 = vpop.f32.mrb[0].mxu0
        %v5144 = vadd.f32 0.0, %v5143
        %v5145 = vpop.f32.mrb[0].mxu0
        %v5146 = vadd.f32 0.0, %v5145
        %5147 = vmatprep.mubr.bf16.mxu0 %v250
        %5148 = vmatmul.mubr.bf16.gmra.mrb[0].mxu0 %v249
        %v5149 = vpop.f32.mrb[0].mxu0
        %v5150 = vadd.f32 0.0, %v5149
        %v5151 = vpop.f32.mrb[0].mxu0
        %v5152 = vadd.f32 0.0, %v5151
        %v5153 = vpop.f32.mrb[0].mxu0
        %v5154 = vadd.f32 0.0, %v5153
        %v5155 = vpop.f32.mrb[0].mxu0
        %v5156 = vadd.f32 0.0, %v5155
        %5157 = vmatprep.mubr.bf16.mxu0 %v254
        %5158 = vmatmul.mubr.bf16.gmra.mrb[0].mxu0 %v253
        %v5159 = vpop.f32.mrb[0].mxu0
        %v5160 = vadd.f32 0.0, %v5159
        %v5161 = vpop.f32.mrb[0].mxu0
        %v5162 = vadd.f32 0.0, %v5161
        %v5163 = vpop.f32.mrb[0].mxu0
        %v5164 = vadd.f32 0.0, %v5163
        %v5165 = vpop.f32.mrb[0].mxu0
        %v5166 = vadd.f32 0.0, %v5165
        %5167 = vdwg.mxu0
        %5168 = vmatprep.subr.bf16.mxu0 %v3154
        %5169 = vmatpush1.bf16.msra.mxu0 %v3153
        %5170 = vmatprep.subr.bf16.mxu0 %v3174
        %5171 = vmatpush1.bf16.msra.mxu0 %v3173
        %5172 = vmatprep.subr.bf16.mxu0 %v3194
        %5173 = vmatpush1.bf16.msra.mxu0 %v3193
        %5174 = vmatprep.subr.bf16.mxu0 %v3214
        %5175 = vmatpush1.bf16.msra.mxu0 %v3213
        %5176 = vmatprep.subr.bf16.mxu0 %v3234
        %5177 = vmatpush1.bf16.msra.mxu0 %v3233
        %5178 = vmatprep.subr.bf16.mxu0 %v3254
        %5179 = vmatpush1.bf16.msra.mxu0 %v3253
        %5180 = vmatprep.subr.bf16.mxu0 %v3274
        %5181 = vmatpush1.bf16.msra.mxu0 %v3273
        %5182 = vmatprep.subr.bf16.mxu0 %v3294
        %5183 = vmatpush1.bf16.msra.mxu0 %v3293
        %5184 = vmatprep.subr.bf16.mxu0 %v3314
        %5185 = vmatpush1.bf16.msra.mxu0 %v3313
        %5186 = vmatprep.subr.bf16.mxu0 %v3334
        %5187 = vmatpush1.bf16.msra.mxu0 %v3333
        %5188 = vmatprep.subr.bf16.mxu0 %v3354
        %5189 = vmatpush1.bf16.msra.mxu0 %v3353
        %5190 = vmatprep.subr.bf16.mxu0 %v3374
        %5191 = vmatpush1.bf16.msra.mxu0 %v3373
        %5192 = vmatprep.subr.bf16.mxu0 %v3394
        %5193 = vmatpush1.bf16.msra.mxu0 %v3393
        %5194 = vmatprep.subr.bf16.mxu0 %v3414
        %5195 = vmatpush1.bf16.msra.mxu0 %v3413
        %5196 = vmatprep.subr.bf16.mxu0 %v3434
        %5197 = vmatpush1.bf16.msra.mxu0 %v3433
        %5198 = vmatprep.subr.bf16.mxu0 %v3454
        %5199 = vmatpush1.bf16.msra.mxu0 %v3453
        %5200 = vmatprep.mubr.bf16.mxu0 %v248
        %5201 = vmatmul.mubr.bf16.gmra.mrb[0].mxu0 %v247
        %v5202 = vpop.f32.mrb[0].mxu0
        %v5203 = vadd.f32 %v5140, %v5202
        %v5204 = vpop.f32.mrb[0].mxu0
        %v5205 = vadd.f32 %v5142, %v5204
        %v5206 = vpop.f32.mrb[0].mxu0
        %v5207 = vadd.f32 %v5144, %v5206
        %v5208 = vpop.f32.mrb[0].mxu0
        %v5209 = vadd.f32 %v5146, %v5208
        %5210 = vmatprep.mubr.bf16.mxu0 %v252
        %5211 = vmatmul.mubr.bf16.gmra.mrb[0].mxu0 %v251
        %v5212 = vpop.f32.mrb[0].mxu0
        %v5213 = vadd.f32 %v5150, %v5212
        %v5214 = vpop.f32.mrb[0].mxu0
        %v5215 = vadd.f32 %v5152, %v5214
        %v5216 = vpop.f32.mrb[0].mxu0
        %v5217 = vadd.f32 %v5154, %v5216
        %v5218 = vpop.f32.mrb[0].mxu0
        %v5219 = vadd.f32 %v5156, %v5218
        %5220 = vmatprep.mubr.bf16.mxu0 %v256
        %5221 = vmatmul.mubr.bf16.gmra.mrb[0].mxu0 %v255
        %v5222 = vpop.f32.mrb[0].mxu0
        %v5223 = vadd.f32 %v5160, %v5222
        %v5224 = vpop.f32.mrb[0].mxu0
        %v5225 = vadd.f32 %v5162, %v5224
        %v5226 = vpop.f32.mrb[0].mxu0
        %v5227 = vadd.f32 %v5164, %v5226
        %v5228 = vpop.f32.mrb[0].mxu0
        %v5229 = vadd.f32 %v5166, %v5228
        %5230 = vdwg.mxu0
        %5231 = vmatprep.subr.bf16.mxu0 %v2836
        %5232 = vmatpush1.bf16.msra.mxu0 %v2835
        %5233 = vmatprep.subr.bf16.mxu0 %v2856
        %5234 = vmatpush1.bf16.msra.mxu0 %v2855
        %5235 = vmatprep.subr.bf16.mxu0 %v2876
        %5236 = vmatpush1.bf16.msra.mxu0 %v2875
        %5237 = vmatprep.subr.bf16.mxu0 %v2896
        %5238 = vmatpush1.bf16.msra.mxu0 %v2895
        %5239 = vmatprep.subr.bf16.mxu0 %v2916
        %5240 = vmatpush1.bf16.msra.mxu0 %v2915
        %5241 = vmatprep.subr.bf16.mxu0 %v2936
        %5242 = vmatpush1.bf16.msra.mxu0 %v2935
        %5243 = vmatprep.subr.bf16.mxu0 %v2956
        %5244 = vmatpush1.bf16.msra.mxu0 %v2955
        %5245 = vmatprep.subr.bf16.mxu0 %v2976
        %5246 = vmatpush1.bf16.msra.mxu0 %v2975
        %5247 = vmatprep.subr.bf16.mxu0 %v2996
        %5248 = vmatpush1.bf16.msra.mxu0 %v2995
        %5249 = vmatprep.subr.bf16.mxu0 %v3016
        %5250 = vmatpush1.bf16.msra.mxu0 %v3015
        %5251 = vmatprep.subr.bf16.mxu0 %v3036
        %5252 = vmatpush1.bf16.msra.mxu0 %v3035
        %5253 = vmatprep.subr.bf16.mxu0 %v3056
        %5254 = vmatpush1.bf16.msra.mxu0 %v3055
        %5255 = vmatprep.subr.bf16.mxu0 %v3076
        %5256 = vmatpush1.bf16.msra.mxu0 %v3075
        %5257 = vmatprep.subr.bf16.mxu0 %v3096
        %5258 = vmatpush1.bf16.msra.mxu0 %v3095
        %5259 = vmatprep.subr.bf16.mxu0 %v3116
        %5260 = vmatpush1.bf16.msra.mxu0 %v3115
        %5261 = vmatprep.subr.bf16.mxu0 %v3136
        %5262 = vmatpush1.bf16.msra.mxu0 %v3135
        %5263 = vmatprep.mubr.bf16.mxu0 %v246
        %5264 = vmatmul.mubr.bf16.gmra.mrb[0].mxu0 %v245
        %v5265 = vpop.f32.mrb[0].mxu0
        %v5266 = vadd.f32 0.0, %v5265
        %v5267 = vpop.f32.mrb[0].mxu0
        %v5268 = vadd.f32 0.0, %v5267
        %v5269 = vpop.f32.mrb[0].mxu0
        %v5270 = vadd.f32 0.0, %v5269
        %v5271 = vpop.f32.mrb[0].mxu0
        %v5272 = vadd.f32 0.0, %v5271
        %5273 = vmatprep.mubr.bf16.mxu0 %v250
        %5274 = vmatmul.mubr.bf16.gmra.mrb[0].mxu0 %v249
        %v5275 = vpop.f32.mrb[0].mxu0
        %v5276 = vadd.f32 0.0, %v5275
        %v5277 = vpop.f32.mrb[0].mxu0
        %v5278 = vadd.f32 0.0, %v5277
        %v5279 = vpop.f32.mrb[0].mxu0
        %v5280 = vadd.f32 0.0, %v5279
        %v5281 = vpop.f32.mrb[0].mxu0
        %v5282 = vadd.f32 0.0, %v5281
        %5283 = vmatprep.mubr.bf16.mxu0 %v254
        %5284 = vmatmul.mubr.bf16.gmra.mrb[0].mxu0 %v253
        %v5285 = vpop.f32.mrb[0].mxu0
        %v5286 = vadd.f32 0.0, %v5285
        %v5287 = vpop.f32.mrb[0].mxu0
        %v5288 = vadd.f32 0.0, %v5287
        %v5289 = vpop.f32.mrb[0].mxu0
        %v5290 = vadd.f32 0.0, %v5289
        %v5291 = vpop.f32.mrb[0].mxu0
        %v5292 = vadd.f32 0.0, %v5291
        %5293 = vdwg.mxu0
        %5294 = vmatprep.subr.bf16.mxu0 %v3156
        %5295 = vmatpush1.bf16.msra.mxu0 %v3155
        %5296 = vmatprep.subr.bf16.mxu0 %v3176
        %5297 = vmatpush1.bf16.msra.mxu0 %v3175
        %5298 = vmatprep.subr.bf16.mxu0 %v3196
        %5299 = vmatpush1.bf16.msra.mxu0 %v3195
        %5300 = vmatprep.subr.bf16.mxu0 %v3216
        %5301 = vmatpush1.bf16.msra.mxu0 %v3215
        %5302 = vmatprep.subr.bf16.mxu0 %v3236
        %5303 = vmatpush1.bf16.msra.mxu0 %v3235
        %5304 = vmatprep.subr.bf16.mxu0 %v3256
        %5305 = vmatpush1.bf16.msra.mxu0 %v3255
        %5306 = vmatprep.subr.bf16.mxu0 %v3276
        %5307 = vmatpush1.bf16.msra.mxu0 %v3275
        %5308 = vmatprep.subr.bf16.mxu0 %v3296
        %5309 = vmatpush1.bf16.msra.mxu0 %v3295
        %5310 = vmatprep.subr.bf16.mxu0 %v3316
        %5311 = vmatpush1.bf16.msra.mxu0 %v3315
        %5312 = vmatprep.subr.bf16.mxu0 %v3336
        %5313 = vmatpush1.bf16.msra.mxu0 %v3335
        %5314 = vmatprep.subr.bf16.mxu0 %v3356
        %5315 = vmatpush1.bf16.msra.mxu0 %v3355
        %5316 = vmatprep.subr.bf16.mxu0 %v3376
        %5317 = vmatpush1.bf16.msra.mxu0 %v3375
        %5318 = vmatprep.subr.bf16.mxu0 %v3396
        %5319 = vmatpush1.bf16.msra.mxu0 %v3395
        %5320 = vmatprep.subr.bf16.mxu0 %v3416
        %5321 = vmatpush1.bf16.msra.mxu0 %v3415
        %5322 = vmatprep.subr.bf16.mxu0 %v3436
        %5323 = vmatpush1.bf16.msra.mxu0 %v3435
        %5324 = vmatprep.subr.bf16.mxu0 %v3456
        %5325 = vmatpush1.bf16.msra.mxu0 %v3455
        %5326 = vmatprep.mubr.bf16.mxu0 %v248
        %5327 = vmatmul.mubr.bf16.gmra.mrb[0].mxu0 %v247
        %v5328 = vpop.f32.mrb[0].mxu0
        %v5329 = vadd.f32 %v5266, %v5328
        %v5330 = vpop.f32.mrb[0].mxu0
        %v5331 = vadd.f32 %v5268, %v5330
        %v5332 = vpop.f32.mrb[0].mxu0
        %v5333 = vadd.f32 %v5270, %v5332
        %v5334 = vpop.f32.mrb[0].mxu0
        %v5335 = vadd.f32 %v5272, %v5334
        %5336 = vmatprep.mubr.bf16.mxu0 %v252
        %5337 = vmatmul.mubr.bf16.gmra.mrb[0].mxu0 %v251
        %v5338 = vpop.f32.mrb[0].mxu0
        %v5339 = vadd.f32 %v5276, %v5338
        %v5340 = vpop.f32.mrb[0].mxu0
        %v5341 = vadd.f32 %v5278, %v5340
        %v5342 = vpop.f32.mrb[0].mxu0
        %v5343 = vadd.f32 %v5280, %v5342
        %v5344 = vpop.f32.mrb[0].mxu0
        %v5345 = vadd.f32 %v5282, %v5344
        %5346 = vmatprep.mubr.bf16.mxu0 %v256
        %5347 = vmatmul.mubr.bf16.gmra.mrb[0].mxu0 %v255
        %v5348 = vpop.f32.mrb[0].mxu0
        %v5349 = vadd.f32 %v5286, %v5348
        %v5350 = vpop.f32.mrb[0].mxu0
        %v5351 = vadd.f32 %v5288, %v5350
        %v5352 = vpop.f32.mrb[0].mxu0
        %v5353 = vadd.f32 %v5290, %v5352
        %v5354 = vpop.f32.mrb[0].mxu0
        %v5355 = vadd.f32 %v5292, %v5354
        %5356 = vdwg.mxu0
        %v5357 = vmax.f32 %v4195, 0.0
        %v5358 = vmax.f32 %v4199, 0.0
        %v5359 = vmax.f32 %v4205, 0.0
        %v5360 = vmax.f32 %v4209, 0.0
        %v5361 = vmax.f32 %v4215, 0.0
        %v5362 = vmax.f32 %v4219, 0.0
        %v5363 = vpack.c.bf16 %v5358, %v5357
        %v5364 = vpack.c.bf16 %v5360, %v5359
        %v5365 = vpack.c.bf16 %v5362, %v5361
        %v5366 = vld [vmem:[#allocation6] sm:$0xff]
        %v5367 = vld [vmem:[#allocation6 + $0x8] sm:$0xff]
        %v5368 = vld [vmem:[#allocation6 + $0x10] sm:$0xff]
        %v5369 = vld [vmem:[#allocation6 + $0x18] sm:$0xff]
        %v5370 = vld [vmem:[#allocation6 + $0x20] sm:$0xff]
        %v5371 = vld [vmem:[#allocation6 + $0x28] sm:$0xff]
        %v5372 = vld [vmem:[#allocation6 + $0x30] sm:$0xff]
        %v5373 = vld [vmem:[#allocation6 + $0x38] sm:$0xff]
        %v5374 = vld [vmem:[#allocation6 + $0x40] sm:$0xff]
        %v5375 = vld [vmem:[#allocation6 + $0x48] sm:$0xff]
        %v5376 = vld [vmem:[#allocation6 + $0x50] sm:$0xff]
        %v5377 = vld [vmem:[#allocation6 + $0x58] sm:$0xff]
        %v5378 = vld [vmem:[#allocation6 + $0x60] sm:$0xff]
        %v5379 = vld [vmem:[#allocation6 + $0x68] sm:$0xff]
        %v5380 = vld [vmem:[#allocation6 + $0x70] sm:$0xff]
        %v5381 = vld [vmem:[#allocation6 + $0x78] sm:$0xff]
        %v5382 = vld [vmem:[#allocation6 + $0x80] sm:$0xff]
        %v5383 = vld [vmem:[#allocation6 + $0x88] sm:$0xff]
        %v5384 = vld [vmem:[#allocation6 + $0x90] sm:$0xff]
        %v5385 = vld [vmem:[#allocation6 + $0x98] sm:$0xff]
        %v5386 = vld [vmem:[#allocation6 + $0xa0] sm:$0xff]
        %v5387 = vld [vmem:[#allocation6 + $0xa8] sm:$0xff]
        %v5388 = vld [vmem:[#allocation6 + $0xb0] sm:$0xff]
        %v5389 = vld [vmem:[#allocation6 + $0xb8] sm:$0xff]
        %v5390 = vld [vmem:[#allocation6 + $0xc0] sm:$0xff]
        %v5391 = vld [vmem:[#allocation6 + $0xc8] sm:$0xff]
        %v5392 = vld [vmem:[#allocation6 + $0xd0] sm:$0xff]
        %v5393 = vld [vmem:[#allocation6 + $0xd8] sm:$0xff]
        %v5394 = vld [vmem:[#allocation6 + $0xe0] sm:$0xff]
        %v5395 = vld [vmem:[#allocation6 + $0xe8] sm:$0xff]
        %v5396 = vld [vmem:[#allocation6 + $0xf0] sm:$0xff]
        %v5397 = vld [vmem:[#allocation6 + $0xf8] sm:$0xff]
        %v5430 = vunpack.c.l.b16 %v5366
        %v5431 = vunpack.c.h.b16 %v5366
        %v5432 = vunpack.c.l.b16 %v5367
        %v5433 = vunpack.c.h.b16 %v5367
        %v5434 = vunpack.c.l.b16 %v5368
        %v5435 = vunpack.c.h.b16 %v5368
        %v5436 = vunpack.c.l.b16 %v5369
        %v5437 = vunpack.c.h.b16 %v5369
        %v5438 = vunpack.c.l.b16 %v5370
        %v5439 = vunpack.c.h.b16 %v5370
        %v5440 = vunpack.c.l.b16 %v5371
        %v5441 = vunpack.c.h.b16 %v5371
        %v5442 = vunpack.c.l.b16 %v5372
        %v5443 = vunpack.c.h.b16 %v5372
        %v5444 = vunpack.c.l.b16 %v5373
        %v5445 = vunpack.c.h.b16 %v5373
        %v5446 = vunpack.c.l.b16 %v5374
        %v5447 = vunpack.c.h.b16 %v5374
        %v5448 = vunpack.c.l.b16 %v5375
        %v5449 = vunpack.c.h.b16 %v5375
        %v5450 = vunpack.c.l.b16 %v5376
        %v5451 = vunpack.c.h.b16 %v5376
        %v5452 = vunpack.c.l.b16 %v5377
        %v5453 = vunpack.c.h.b16 %v5377
        %v5454 = vunpack.c.l.b16 %v5378
        %v5455 = vunpack.c.h.b16 %v5378
        %v5456 = vunpack.c.l.b16 %v5379
        %v5457 = vunpack.c.h.b16 %v5379
        %v5458 = vunpack.c.l.b16 %v5380
        %v5459 = vunpack.c.h.b16 %v5380
        %v5460 = vunpack.c.l.b16 %v5381
        %v5461 = vunpack.c.h.b16 %v5381
        %v5462 = vunpack.c.l.b16 %v5382
        %v5463 = vunpack.c.h.b16 %v5382
        %v5464 = vunpack.c.l.b16 %v5383
        %v5465 = vunpack.c.h.b16 %v5383
        %v5466 = vunpack.c.l.b16 %v5384
        %v5467 = vunpack.c.h.b16 %v5384
        %v5468 = vunpack.c.l.b16 %v5385
        %v5469 = vunpack.c.h.b16 %v5385
        %v5470 = vunpack.c.l.b16 %v5386
        %v5471 = vunpack.c.h.b16 %v5386
        %v5472 = vunpack.c.l.b16 %v5387
        %v5473 = vunpack.c.h.b16 %v5387
        %v5474 = vunpack.c.l.b16 %v5388
        %v5475 = vunpack.c.h.b16 %v5388
        %v5476 = vunpack.c.l.b16 %v5389
        %v5477 = vunpack.c.h.b16 %v5389
        %v5478 = vunpack.c.l.b16 %v5390
        %v5479 = vunpack.c.h.b16 %v5390
        %v5480 = vunpack.c.l.b16 %v5391
        %v5481 = vunpack.c.h.b16 %v5391
        %v5482 = vunpack.c.l.b16 %v5392
        %v5483 = vunpack.c.h.b16 %v5392
        %v5484 = vunpack.c.l.b16 %v5393
        %v5485 = vunpack.c.h.b16 %v5393
        %v5486 = vunpack.c.l.b16 %v5394
        %v5487 = vunpack.c.h.b16 %v5394
        %v5488 = vunpack.c.l.b16 %v5395
        %v5489 = vunpack.c.h.b16 %v5395
        %v5490 = vunpack.c.l.b16 %v5396
        %v5491 = vunpack.c.h.b16 %v5396
        %v5492 = vunpack.c.l.b16 %v5397
        %v5493 = vunpack.c.h.b16 %v5397
        %v5494 = vpack.c.b16 %v5434, %v5430
        %v5495 = vpack.c.b16 %v5435, %v5431
        %v5496 = vpack.c.b16 %v5436, %v5432
        %v5497 = vpack.c.b16 %v5437, %v5433
        %v5498 = vpack.c.b16 %v5442, %v5438
        %v5499 = vpack.c.b16 %v5443, %v5439
        %v5500 = vpack.c.b16 %v5444, %v5440
        %v5501 = vpack.c.b16 %v5445, %v5441
        %v5502 = vpack.c.b16 %v5450, %v5446
        %v5503 = vpack.c.b16 %v5451, %v5447
        %v5504 = vpack.c.b16 %v5452, %v5448
        %v5505 = vpack.c.b16 %v5453, %v5449
        %v5506 = vpack.c.b16 %v5458, %v5454
        %v5507 = vpack.c.b16 %v5459, %v5455
        %v5508 = vpack.c.b16 %v5460, %v5456
        %v5509 = vpack.c.b16 %v5461, %v5457
        %v5510 = vpack.c.b16 %v5466, %v5462
        %v5511 = vpack.c.b16 %v5467, %v5463
        %v5512 = vpack.c.b16 %v5468, %v5464
        %v5513 = vpack.c.b16 %v5469, %v5465
        %v5514 = vpack.c.b16 %v5474, %v5470
        %v5515 = vpack.c.b16 %v5475, %v5471
        %v5516 = vpack.c.b16 %v5476, %v5472
        %v5517 = vpack.c.b16 %v5477, %v5473
        %v5518 = vpack.c.b16 %v5482, %v5478
        %v5519 = vpack.c.b16 %v5483, %v5479
        %v5520 = vpack.c.b16 %v5484, %v5480
        %v5521 = vpack.c.b16 %v5485, %v5481
        %v5522 = vpack.c.b16 %v5490, %v5486
        %v5523 = vpack.c.b16 %v5491, %v5487
        %v5524 = vpack.c.b16 %v5492, %v5488
        %v5525 = vpack.c.b16 %v5493, %v5489
        %5558 = vmatprep.subr.bf16.mxu0 %v5495
        %5559 = vmatpush1.bf16.msra.mxu0 %v5494
        %5560 = vmatprep.subr.bf16.mxu0 %v5499
        %5561 = vmatpush1.bf16.msra.mxu0 %v5498
        %5562 = vmatprep.subr.bf16.mxu0 %v5503
        %5563 = vmatpush1.bf16.msra.mxu0 %v5502
        %5564 = vmatprep.subr.bf16.mxu0 %v5507
        %5565 = vmatpush1.bf16.msra.mxu0 %v5506
        %5566 = vmatprep.subr.bf16.mxu0 %v5511
        %5567 = vmatpush1.bf16.msra.mxu0 %v5510
        %5568 = vmatprep.subr.bf16.mxu0 %v5515
        %5569 = vmatpush1.bf16.msra.mxu0 %v5514
        %5570 = vmatprep.subr.bf16.mxu0 %v5519
        %5571 = vmatpush1.bf16.msra.mxu0 %v5518
        %5572 = vmatprep.subr.bf16.mxu0 %v5523
        %5573 = vmatpush1.bf16.msra.mxu0 %v5522
        %5574 = vmatprep.subr.bf16.mxu0 0
        %5575 = vmatpush1.bf16.msra.mxu0 0
        %5576 = vmatprep.subr.bf16.mxu0 0
        %5577 = vmatpush1.bf16.msra.mxu0 0
        %5578 = vmatprep.subr.bf16.mxu0 0
        %5579 = vmatpush1.bf16.msra.mxu0 0
        %5580 = vmatprep.subr.bf16.mxu0 0
        %5581 = vmatpush1.bf16.msra.mxu0 0
        %5582 = vmatprep.subr.bf16.mxu0 0
        %5583 = vmatpush1.bf16.msra.mxu0 0
        %5584 = vmatprep.subr.bf16.mxu0 0
        %5585 = vmatpush1.bf16.msra.mxu0 0
        %5586 = vmatprep.subr.bf16.mxu0 0
        %5587 = vmatpush1.bf16.msra.mxu0 0
        %5588 = vmatprep.subr.bf16.mxu0 0
        %5589 = vmatpush1.bf16.msra.mxu0 0
        %5590 = vmatprep.mubr.bf16.mxu0 0
        %5591 = vmatmul.mubr.bf16.gmra.mrb[0].mxu0 %v5363
        %v5592 = vpop.f32.mrb[0].mxu0
        %v5593 = vadd.f32 0.0, %v5592
        %v5594 = vpop.f32.mrb[0].mxu0
        %v5595 = vadd.f32 0.0, %v5594
        %v5596 = vpop.f32.mrb[0].mxu0
        %v5597 = vadd.f32 0.0, %v5596
        %v5598 = vpop.f32.mrb[0].mxu0
        %v5599 = vadd.f32 0.0, %v5598
        %5600 = vmatprep.mubr.bf16.mxu0 0
        %5601 = vmatmul.mubr.bf16.gmra.mrb[0].mxu0 %v5364
        %v5602 = vpop.f32.mrb[0].mxu0
        %v5603 = vadd.f32 0.0, %v5602
        %v5604 = vpop.f32.mrb[0].mxu0
        %v5605 = vadd.f32 0.0, %v5604
        %v5606 = vpop.f32.mrb[0].mxu0
        %v5607 = vadd.f32 0.0, %v5606
        %v5608 = vpop.f32.mrb[0].mxu0
        %v5609 = vadd.f32 0.0, %v5608
        %5610 = vmatprep.mubr.bf16.mxu0 0
        %5611 = vmatmul.mubr.bf16.gmra.mrb[0].mxu0 %v5365
        %v5612 = vpop.f32.mrb[0].mxu0
        %v5613 = vadd.f32 0.0, %v5612
        %v5614 = vpop.f32.mrb[0].mxu0
        %v5615 = vadd.f32 0.0, %v5614
        %v5616 = vpop.f32.mrb[0].mxu0
        %v5617 = vadd.f32 0.0, %v5616
        %v5618 = vpop.f32.mrb[0].mxu0
        %v5619 = vadd.f32 0.0, %v5618
        %5620 = vdwg.mxu0
        %5621 = vmatprep.subr.bf16.mxu0 %v5497
        %5622 = vmatpush1.bf16.msra.mxu0 %v5496
        %5623 = vmatprep.subr.bf16.mxu0 %v5501
        %5624 = vmatpush1.bf16.msra.mxu0 %v5500
        %5625 = vmatprep.subr.bf16.mxu0 %v5505
        %5626 = vmatpush1.bf16.msra.mxu0 %v5504
        %5627 = vmatprep.subr.bf16.mxu0 %v5509
        %5628 = vmatpush1.bf16.msra.mxu0 %v5508
        %5629 = vmatprep.subr.bf16.mxu0 %v5513
        %5630 = vmatpush1.bf16.msra.mxu0 %v5512
        %5631 = vmatprep.subr.bf16.mxu0 %v5517
        %5632 = vmatpush1.bf16.msra.mxu0 %v5516
        %5633 = vmatprep.subr.bf16.mxu0 %v5521
        %5634 = vmatpush1.bf16.msra.mxu0 %v5520
        %5635 = vmatprep.subr.bf16.mxu0 %v5525
        %5636 = vmatpush1.bf16.msra.mxu0 %v5524
        %5637 = vmatprep.subr.bf16.mxu0 0
        %5638 = vmatpush1.bf16.msra.mxu0 0
        %5639 = vmatprep.subr.bf16.mxu0 0
        %5640 = vmatpush1.bf16.msra.mxu0 0
        %5641 = vmatprep.subr.bf16.mxu0 0
        %5642 = vmatpush1.bf16.msra.mxu0 0
        %5643 = vmatprep.subr.bf16.mxu0 0
        %5644 = vmatpush1.bf16.msra.mxu0 0
        %5645 = vmatprep.subr.bf16.mxu0 0
        %5646 = vmatpush1.bf16.msra.mxu0 0
        %5647 = vmatprep.subr.bf16.mxu0 0
        %5648 = vmatpush1.bf16.msra.mxu0 0
        %5649 = vmatprep.subr.bf16.mxu0 0
        %5650 = vmatpush1.bf16.msra.mxu0 0
        %5651 = vmatprep.subr.bf16.mxu0 0
        %5652 = vmatpush1.bf16.msra.mxu0 0
        %5653 = vmatprep.mubr.bf16.mxu0 0
        %5654 = vmatmul.mubr.bf16.gmra.mrb[0].mxu0 %v5363
        %v5655 = vpop.f32.mrb[0].mxu0
        %v5656 = vadd.f32 0.0, %v5655
        %v5657 = vpop.f32.mrb[0].mxu0
        %v5658 = vadd.f32 0.0, %v5657
        %v5659 = vpop.f32.mrb[0].mxu0
        %v5660 = vadd.f32 0.0, %v5659
        %v5661 = vpop.f32.mrb[0].mxu0
        %v5662 = vadd.f32 0.0, %v5661
        %5663 = vmatprep.mubr.bf16.mxu0 0
        %5664 = vmatmul.mubr.bf16.gmra.mrb[0].mxu0 %v5364
        %v5665 = vpop.f32.mrb[0].mxu0
        %v5666 = vadd.f32 0.0, %v5665
        %v5667 = vpop.f32.mrb[0].mxu0
        %v5668 = vadd.f32 0.0, %v5667
        %v5669 = vpop.f32.mrb[0].mxu0
        %v5670 = vadd.f32 0.0, %v5669
        %v5671 = vpop.f32.mrb[0].mxu0
        %v5672 = vadd.f32 0.0, %v5671
        %5673 = vmatprep.mubr.bf16.mxu0 0
        %5674 = vmatmul.mubr.bf16.gmra.mrb[0].mxu0 %v5365
        %v5675 = vpop.f32.mrb[0].mxu0
        %v5676 = vadd.f32 0.0, %v5675
        %v5677 = vpop.f32.mrb[0].mxu0
        %v5678 = vadd.f32 0.0, %v5677
        %v5679 = vpop.f32.mrb[0].mxu0
        %v5680 = vadd.f32 0.0, %v5679
        %v5681 = vpop.f32.mrb[0].mxu0
        %v5682 = vadd.f32 0.0, %v5681
        %5683 = vdwg.mxu0
        %v5684 = vxor.u32 %v5593, 2147483648
        %v5685 = vxor.u32 %v5595, 2147483648
        %v5686 = vxor.u32 %v5656, 2147483648
        %v5687 = vxor.u32 %v5658, 2147483648
        %v5688 = vxor.u32 %v5597, 2147483648
        %v5689 = vxor.u32 %v5599, 2147483648
        %v5690 = vxor.u32 %v5660, 2147483648
        %v5691 = vxor.u32 %v5662, 2147483648
        %v5692 = vxor.u32 %v5603, 2147483648
        %v5693 = vxor.u32 %v5605, 2147483648
        %v5694 = vxor.u32 %v5666, 2147483648
        %v5695 = vxor.u32 %v5668, 2147483648
        %v5696 = vxor.u32 %v5607, 2147483648
        %v5697 = vxor.u32 %v5609, 2147483648
        %v5698 = vxor.u32 %v5670, 2147483648
        %v5699 = vxor.u32 %v5672, 2147483648
        %v5700 = vxor.u32 %v5613, 2147483648
        %v5701 = vxor.u32 %v5615, 2147483648
        %v5702 = vxor.u32 %v5676, 2147483648
        %v5703 = vxor.u32 %v5678, 2147483648
        %v5704 = vxor.u32 %v5617, 2147483648
        %v5705 = vxor.u32 %v5619, 2147483648
        %v5706 = vxor.u32 %v5680, 2147483648
        %v5707 = vxor.u32 %v5682, 2147483648
        %v5708 = vmul.f32 %v5684, 1.442695
        %v5709 = vpow.pop %v5708
        %v5710 = vmul.f32 %v5685, 1.442695
        %v5711 = vpow.pop %v5710
        %v5712 = vmul.f32 %v5686, 1.442695
        %v5713 = vpow.pop %v5712
        %v5714 = vmul.f32 %v5687, 1.442695
        %v5715 = vpow.pop %v5714
        %v5716 = vmul.f32 %v5688, 1.442695
        %v5717 = vpow.pop %v5716
        %v5718 = vmul.f32 %v5689, 1.442695
        %v5719 = vpow.pop %v5718
        %v5720 = vmul.f32 %v5690, 1.442695
        %v5721 = vpow.pop %v5720
        %v5722 = vmul.f32 %v5691, 1.442695
        %v5723 = vpow.pop %v5722
        %v5724 = vmul.f32 %v5692, 1.442695
        %v5725 = vpow.pop %v5724
        %v5726 = vmul.f32 %v5693, 1.442695
        %v5727 = vpow.pop %v5726
        %v5728 = vmul.f32 %v5694, 1.442695
        %v5729 = vpow.pop %v5728
        %v5730 = vmul.f32 %v5695, 1.442695
        %v5731 = vpow.pop %v5730
        %v5732 = vmul.f32 %v5696, 1.442695
        %v5733 = vpow.pop %v5732
        %v5734 = vmul.f32 %v5697, 1.442695
        %v5735 = vpow.pop %v5734
        %v5736 = vmul.f32 %v5698, 1.442695
        %v5737 = vpow.pop %v5736
        %v5738 = vmul.f32 %v5699, 1.442695
        %v5739 = vpow.pop %v5738
        %v5740 = vmul.f32 %v5700, 1.442695
        %v5741 = vpow.pop %v5740
        %v5742 = vmul.f32 %v5701, 1.442695
        %v5743 = vpow.pop %v5742
        %v5744 = vmul.f32 %v5702, 1.442695
        %v5745 = vpow.pop %v5744
        %v5746 = vmul.f32 %v5703, 1.442695
        %v5747 = vpow.pop %v5746
        %v5748 = vmul.f32 %v5704, 1.442695
        %v5749 = vpow.pop %v5748
        %v5750 = vmul.f32 %v5705, 1.442695
        %v5751 = vpow.pop %v5750
        %v5752 = vmul.f32 %v5706, 1.442695
        %v5753 = vpow.pop %v5752
        %v5754 = vmul.f32 %v5707, 1.442695
        %v5755 = vpow.pop %v5754
        %v5756 = vadd.f32 %v5709, 1.0
        %v5757 = vadd.f32 %v5711, 1.0
        %v5758 = vadd.f32 %v5713, 1.0
        %v5759 = vadd.f32 %v5715, 1.0
        %v5760 = vadd.f32 %v5717, 1.0
        %v5761 = vadd.f32 %v5719, 1.0
        %v5762 = vadd.f32 %v5721, 1.0
        %v5763 = vadd.f32 %v5723, 1.0
        %v5764 = vadd.f32 %v5725, 1.0
        %v5765 = vadd.f32 %v5727, 1.0
        %v5766 = vadd.f32 %v5729, 1.0
        %v5767 = vadd.f32 %v5731, 1.0
        %v5768 = vadd.f32 %v5733, 1.0
        %v5769 = vadd.f32 %v5735, 1.0
        %v5770 = vadd.f32 %v5737, 1.0
        %v5771 = vadd.f32 %v5739, 1.0
        %v5772 = vadd.f32 %v5741, 1.0
        %v5773 = vadd.f32 %v5743, 1.0
        %v5774 = vadd.f32 %v5745, 1.0
        %v5775 = vadd.f32 %v5747, 1.0
        %v5776 = vadd.f32 %v5749, 1.0
        %v5777 = vadd.f32 %v5751, 1.0
        %v5778 = vadd.f32 %v5753, 1.0
        %v5779 = vadd.f32 %v5755, 1.0
        %v5780 = vrcp.pop %v5756
        %v5781 = vmul.f32 1.0, %v5780
        %v5782 = vrcp.pop %v5757
        %v5783 = vmul.f32 1.0, %v5782
        %v5784 = vrcp.pop %v5758
        %v5785 = vmul.f32 1.0, %v5784
        %v5786 = vrcp.pop %v5759
        %v5787 = vmul.f32 1.0, %v5786
        %v5788 = vrcp.pop %v5760
        %v5789 = vmul.f32 1.0, %v5788
        %v5790 = vrcp.pop %v5761
        %v5791 = vmul.f32 1.0, %v5790
        %v5792 = vrcp.pop %v5762
        %v5793 = vmul.f32 1.0, %v5792
        %v5794 = vrcp.pop %v5763
        %v5795 = vmul.f32 1.0, %v5794
        %v5796 = vrcp.pop %v5764
        %v5797 = vmul.f32 1.0, %v5796
        %v5798 = vrcp.pop %v5765
        %v5799 = vmul.f32 1.0, %v5798
        %v5800 = vrcp.pop %v5766
        %v5801 = vmul.f32 1.0, %v5800
        %v5802 = vrcp.pop %v5767
        %v5803 = vmul.f32 1.0, %v5802
        %v5804 = vrcp.pop %v5768
        %v5805 = vmul.f32 1.0, %v5804
        %v5806 = vrcp.pop %v5769
        %v5807 = vmul.f32 1.0, %v5806
        %v5808 = vrcp.pop %v5770
        %v5809 = vmul.f32 1.0, %v5808
        %v5810 = vrcp.pop %v5771
        %v5811 = vmul.f32 1.0, %v5810
        %v5812 = vrcp.pop %v5772
        %v5813 = vmul.f32 1.0, %v5812
        %v5814 = vrcp.pop %v5773
        %v5815 = vmul.f32 1.0, %v5814
        %v5816 = vrcp.pop %v5774
        %v5817 = vmul.f32 1.0, %v5816
        %v5818 = vrcp.pop %v5775
        %v5819 = vmul.f32 1.0, %v5818
        %v5820 = vrcp.pop %v5776
        %v5821 = vmul.f32 1.0, %v5820
        %v5822 = vrcp.pop %v5777
        %v5823 = vmul.f32 1.0, %v5822
        %v5824 = vrcp.pop %v5778
        %v5825 = vmul.f32 1.0, %v5824
        %v5826 = vrcp.pop %v5779
        %v5827 = vmul.f32 1.0, %v5826
        %v5828 = vmul.f32 %v221, %v5781
        %v5829 = vmul.f32 %v222, %v5783
        %v5830 = vmul.f32 %v223, %v5785
        %v5831 = vmul.f32 %v224, %v5787
        %v5832 = vmul.f32 %v225, %v5789
        %v5833 = vmul.f32 %v226, %v5791
        %v5834 = vmul.f32 %v227, %v5793
        %v5835 = vmul.f32 %v228, %v5795
        %v5836 = vmul.f32 %v229, %v5797
        %v5837 = vmul.f32 %v230, %v5799
        %v5838 = vmul.f32 %v231, %v5801
        %v5839 = vmul.f32 %v232, %v5803
        %v5840 = vmul.f32 %v233, %v5805
        %v5841 = vmul.f32 %v234, %v5807
        %v5842 = vmul.f32 %v235, %v5809
        %v5843 = vmul.f32 %v236, %v5811
        %v5844 = vmul.f32 %v237, %v5813
        %v5845 = vmul.f32 %v238, %v5815
        %v5846 = vmul.f32 %v239, %v5817
        %v5847 = vmul.f32 %v240, %v5819
        %v5848 = vmul.f32 %v241, %v5821
        %v5849 = vmul.f32 %v242, %v5823
        %v5850 = vmul.f32 %v243, %v5825
        %v5851 = vmul.f32 %v244, %v5827
        %v5852 = vrot.slane %v5828, 4
        %v5853 = vadd.f32 %v5828, %v5852
        %v5854 = vrot.slane %v5853, 2
        %v5855 = vadd.f32 %v5853, %v5854
        %v5856 = vrot.slane %v5855, 1
        %v5857 = vadd.f32 %v5855, %v5856
        %v5858 = vrot.slane %v5829, 4
        %v5859 = vadd.f32 %v5829, %v5858
        %v5860 = vrot.slane %v5859, 2
        %v5861 = vadd.f32 %v5859, %v5860
        %v5862 = vrot.slane %v5861, 1
        %v5863 = vadd.f32 %v5861, %v5862
        %v5864 = vrot.slane %v5830, 4
        %v5865 = vadd.f32 %v5830, %v5864
        %v5866 = vrot.slane %v5865, 2
        %v5867 = vadd.f32 %v5865, %v5866
        %v5868 = vrot.slane %v5867, 1
        %v5869 = vadd.f32 %v5867, %v5868
        %v5870 = vrot.slane %v5831, 4
        %v5871 = vadd.f32 %v5831, %v5870
        %v5872 = vrot.slane %v5871, 2
        %v5873 = vadd.f32 %v5871, %v5872
        %v5874 = vrot.slane %v5873, 1
        %v5875 = vadd.f32 %v5873, %v5874
        %v5876 = vrot.slane %v5832, 4
        %v5877 = vadd.f32 %v5832, %v5876
        %v5878 = vrot.slane %v5877, 2
        %v5879 = vadd.f32 %v5877, %v5878
        %v5880 = vrot.slane %v5879, 1
        %v5881 = vadd.f32 %v5879, %v5880
        %v5882 = vrot.slane %v5833, 4
        %v5883 = vadd.f32 %v5833, %v5882
        %v5884 = vrot.slane %v5883, 2
        %v5885 = vadd.f32 %v5883, %v5884
        %v5886 = vrot.slane %v5885, 1
        %v5887 = vadd.f32 %v5885, %v5886
        %v5888 = vrot.slane %v5834, 4
        %v5889 = vadd.f32 %v5834, %v5888
        %v5890 = vrot.slane %v5889, 2
        %v5891 = vadd.f32 %v5889, %v5890
        %v5892 = vrot.slane %v5891, 1
        %v5893 = vadd.f32 %v5891, %v5892
        %v5894 = vrot.slane %v5835, 4
        %v5895 = vadd.f32 %v5835, %v5894
        %v5896 = vrot.slane %v5895, 2
        %v5897 = vadd.f32 %v5895, %v5896
        %v5898 = vrot.slane %v5897, 1
        %v5899 = vadd.f32 %v5897, %v5898
        %v5900 = vrot.slane %v5836, 4
        %v5901 = vadd.f32 %v5836, %v5900
        %v5902 = vrot.slane %v5901, 2
        %v5903 = vadd.f32 %v5901, %v5902
        %v5904 = vrot.slane %v5903, 1
        %v5905 = vadd.f32 %v5903, %v5904
        %v5906 = vrot.slane %v5837, 4
        %v5907 = vadd.f32 %v5837, %v5906
        %v5908 = vrot.slane %v5907, 2
        %v5909 = vadd.f32 %v5907, %v5908
        %v5910 = vrot.slane %v5909, 1
        %v5911 = vadd.f32 %v5909, %v5910
        %v5912 = vrot.slane %v5838, 4
        %v5913 = vadd.f32 %v5838, %v5912
        %v5914 = vrot.slane %v5913, 2
        %v5915 = vadd.f32 %v5913, %v5914
        %v5916 = vrot.slane %v5915, 1
        %v5917 = vadd.f32 %v5915, %v5916
        %v5918 = vrot.slane %v5839, 4
        %v5919 = vadd.f32 %v5839, %v5918
        %v5920 = vrot.slane %v5919, 2
        %v5921 = vadd.f32 %v5919, %v5920
        %v5922 = vrot.slane %v5921, 1
        %v5923 = vadd.f32 %v5921, %v5922
        %v5924 = vrot.slane %v5840, 4
        %v5925 = vadd.f32 %v5840, %v5924
        %v5926 = vrot.slane %v5925, 2
        %v5927 = vadd.f32 %v5925, %v5926
        %v5928 = vrot.slane %v5927, 1
        %v5929 = vadd.f32 %v5927, %v5928
        %v5930 = vrot.slane %v5841, 4
        %v5931 = vadd.f32 %v5841, %v5930
        %v5932 = vrot.slane %v5931, 2
        %v5933 = vadd.f32 %v5931, %v5932
        %v5934 = vrot.slane %v5933, 1
        %v5935 = vadd.f32 %v5933, %v5934
        %v5936 = vrot.slane %v5842, 4
        %v5937 = vadd.f32 %v5842, %v5936
        %v5938 = vrot.slane %v5937, 2
        %v5939 = vadd.f32 %v5937, %v5938
        %v5940 = vrot.slane %v5939, 1
        %v5941 = vadd.f32 %v5939, %v5940
        %v5942 = vrot.slane %v5843, 4
        %v5943 = vadd.f32 %v5843, %v5942
        %v5944 = vrot.slane %v5943, 2
        %v5945 = vadd.f32 %v5943, %v5944
        %v5946 = vrot.slane %v5945, 1
        %v5947 = vadd.f32 %v5945, %v5946
        %v5948 = vrot.slane %v5844, 4
        %v5949 = vadd.f32 %v5844, %v5948
        %v5950 = vrot.slane %v5949, 2
        %v5951 = vadd.f32 %v5949, %v5950
        %v5952 = vrot.slane %v5951, 1
        %v5953 = vadd.f32 %v5951, %v5952
        %v5954 = vrot.slane %v5845, 4
        %v5955 = vadd.f32 %v5845, %v5954
        %v5956 = vrot.slane %v5955, 2
        %v5957 = vadd.f32 %v5955, %v5956
        %v5958 = vrot.slane %v5957, 1
        %v5959 = vadd.f32 %v5957, %v5958
        %v5960 = vrot.slane %v5846, 4
        %v5961 = vadd.f32 %v5846, %v5960
        %v5962 = vrot.slane %v5961, 2
        %v5963 = vadd.f32 %v5961, %v5962
        %v5964 = vrot.slane %v5963, 1
        %v5965 = vadd.f32 %v5963, %v5964
        %v5966 = vrot.slane %v5847, 4
        %v5967 = vadd.f32 %v5847, %v5966
        %v5968 = vrot.slane %v5967, 2
        %v5969 = vadd.f32 %v5967, %v5968
        %v5970 = vrot.slane %v5969, 1
        %v5971 = vadd.f32 %v5969, %v5970
        %v5972 = vrot.slane %v5848, 4
        %v5973 = vadd.f32 %v5848, %v5972
        %v5974 = vrot.slane %v5973, 2
        %v5975 = vadd.f32 %v5973, %v5974
        %v5976 = vrot.slane %v5975, 1
        %v5977 = vadd.f32 %v5975, %v5976
        %v5978 = vrot.slane %v5849, 4
        %v5979 = vadd.f32 %v5849, %v5978
        %v5980 = vrot.slane %v5979, 2
        %v5981 = vadd.f32 %v5979, %v5980
        %v5982 = vrot.slane %v5981, 1
        %v5983 = vadd.f32 %v5981, %v5982
        %v5984 = vrot.slane %v5850, 4
        %v5985 = vadd.f32 %v5850, %v5984
        %v5986 = vrot.slane %v5985, 2
        %v5987 = vadd.f32 %v5985, %v5986
        %v5988 = vrot.slane %v5987, 1
        %v5989 = vadd.f32 %v5987, %v5988
        %v5990 = vrot.slane %v5851, 4
        %v5991 = vadd.f32 %v5851, %v5990
        %v5992 = vrot.slane %v5991, 2
        %v5993 = vadd.f32 %v5991, %v5992
        %v5994 = vrot.slane %v5993, 1
        %v5995 = vadd.f32 %v5993, %v5994
        %v5996 = vrcp.pop 8.0
        %v5997 = vmul.f32 %v5857, %v5996
        %v5998 = vmul.f32 %v5863, %v5996
        %v5999 = vmul.f32 %v5869, %v5996
        %v6000 = vmul.f32 %v5875, %v5996
        %v6001 = vmul.f32 %v5881, %v5996
        %v6002 = vmul.f32 %v5887, %v5996
        %v6003 = vmul.f32 %v5893, %v5996
        %v6004 = vmul.f32 %v5899, %v5996
        %v6005 = vmul.f32 %v5905, %v5996
        %v6006 = vmul.f32 %v5911, %v5996
        %v6007 = vmul.f32 %v5917, %v5996
        %v6008 = vmul.f32 %v5923, %v5996
        %v6009 = vmul.f32 %v5929, %v5996
        %v6010 = vmul.f32 %v5935, %v5996
        %v6011 = vmul.f32 %v5941, %v5996
        %v6012 = vmul.f32 %v5947, %v5996
        %v6013 = vmul.f32 %v5953, %v5996
        %v6014 = vmul.f32 %v5959, %v5996
        %v6015 = vmul.f32 %v5965, %v5996
        %v6016 = vmul.f32 %v5971, %v5996
        %v6017 = vmul.f32 %v5977, %v5996
        %v6018 = vmul.f32 %v5983, %v5996
        %v6019 = vmul.f32 %v5989, %v5996
        %v6020 = vmul.f32 %v5995, %v5996
        %vm6045 = vcmask 1041409
        %v6046 = vsel %vm6045, %v6001, %v5997
        %vm6047 = vcmask 1042434
        %v6048 = vsel %vm6047, %v6005, %v6046
        %vm6049 = vcmask 1043459
        %v6050 = vsel %vm6049, %v6009, %v6048
        %vm6051 = vcmask 1044484
        %v6052 = vsel %vm6051, %v6013, %v6050
        %vm6053 = vcmask 1045509
        %v6054 = vsel %vm6053, %v6017, %v6052
        %v6055 = vsel %vm6045, %v6002, %v5998
        %v6056 = vsel %vm6047, %v6006, %v6055
        %v6057 = vsel %vm6049, %v6010, %v6056
        %v6058 = vsel %vm6051, %v6014, %v6057
        %v6059 = vsel %vm6053, %v6018, %v6058
        %v6060 = vsel %vm6045, %v6003, %v5999
        %v6061 = vsel %vm6047, %v6007, %v6060
        %v6062 = vsel %vm6049, %v6011, %v6061
        %v6063 = vsel %vm6051, %v6015, %v6062
        %v6064 = vsel %vm6053, %v6019, %v6063
        %v6065 = vsel %vm6045, %v6004, %v6000
        %v6066 = vsel %vm6047, %v6008, %v6065
        %v6067 = vsel %vm6049, %v6012, %v6066
        %v6068 = vsel %vm6051, %v6016, %v6067
        %v6069 = vsel %vm6053, %v6020, %v6068
        %6074 = vst [vmem:[%s219] sm:$0x3f] %v6054
        %6075 = vst [vmem:[%s219 + $0x8] sm:$0x3f] %v6059
        %6076 = vst [vmem:[%s219 + $0x10] sm:$0x3f] %v6064
        %6077 = vst [vmem:[%s219 + $0x18] sm:$0x3f] %v6069
        %v6078 = vmax.f32 %v4197, 0.0
        %v6079 = vmax.f32 %v4201, 0.0
        %v6080 = vmax.f32 %v4207, 0.0
        %v6081 = vmax.f32 %v4211, 0.0
        %v6082 = vmax.f32 %v4217, 0.0
        %v6083 = vmax.f32 %v4221, 0.0
        %v6084 = vpack.c.bf16 %v6079, %v6078
        %v6085 = vpack.c.bf16 %v6081, %v6080
        %v6086 = vpack.c.bf16 %v6083, %v6082
        %s6087 = scalar_lea.vmem [#allocation6], 256
        %v6088 = vld [vmem:[%s6087] sm:$0xff]
        %v6089 = vld [vmem:[%s6087 + $0x8] sm:$0xff]
        %v6090 = vld [vmem:[%s6087 + $0x10] sm:$0xff]
        %v6091 = vld [vmem:[%s6087 + $0x18] sm:$0xff]
        %v6092 = vld [vmem:[%s6087 + $0x20] sm:$0xff]
        %v6093 = vld [vmem:[%s6087 + $0x28] sm:$0xff]
        %v6094 = vld [vmem:[%s6087 + $0x30] sm:$0xff]
        %v6095 = vld [vmem:[%s6087 + $0x38] sm:$0xff]
        %v6096 = vld [vmem:[%s6087 + $0x40] sm:$0xff]
        %v6097 = vld [vmem:[%s6087 + $0x48] sm:$0xff]
        %v6098 = vld [vmem:[%s6087 + $0x50] sm:$0xff]
        %v6099 = vld [vmem:[%s6087 + $0x58] sm:$0xff]
        %v6100 = vld [vmem:[%s6087 + $0x60] sm:$0xff]
        %v6101 = vld [vmem:[%s6087 + $0x68] sm:$0xff]
        %v6102 = vld [vmem:[%s6087 + $0x70] sm:$0xff]
        %v6103 = vld [vmem:[%s6087 + $0x78] sm:$0xff]
        %v6104 = vld [vmem:[%s6087 + $0x80] sm:$0xff]
        %v6105 = vld [vmem:[%s6087 + $0x88] sm:$0xff]
        %v6106 = vld [vmem:[%s6087 + $0x90] sm:$0xff]
        %v6107 = vld [vmem:[%s6087 + $0x98] sm:$0xff]
        %v6108 = vld [vmem:[%s6087 + $0xa0] sm:$0xff]
        %v6109 = vld [vmem:[%s6087 + $0xa8] sm:$0xff]
        %v6110 = vld [vmem:[%s6087 + $0xb0] sm:$0xff]
        %v6111 = vld [vmem:[%s6087 + $0xb8] sm:$0xff]
        %v6112 = vld [vmem:[%s6087 + $0xc0] sm:$0xff]
        %v6113 = vld [vmem:[%s6087 + $0xc8] sm:$0xff]
        %v6114 = vld [vmem:[%s6087 + $0xd0] sm:$0xff]
        %v6115 = vld [vmem:[%s6087 + $0xd8] sm:$0xff]
        %v6116 = vld [vmem:[%s6087 + $0xe0] sm:$0xff]
        %v6117 = vld [vmem:[%s6087 + $0xe8] sm:$0xff]
        %v6118 = vld [vmem:[%s6087 + $0xf0] sm:$0xff]
        %v6119 = vld [vmem:[%s6087 + $0xf8] sm:$0xff]
        %v6152 = vunpack.c.l.b16 %v6088
        %v6153 = vunpack.c.h.b16 %v6088
        %v6154 = vunpack.c.l.b16 %v6089
        %v6155 = vunpack.c.h.b16 %v6089
        %v6156 = vunpack.c.l.b16 %v6090
        %v6157 = vunpack.c.h.b16 %v6090
        %v6158 = vunpack.c.l.b16 %v6091
        %v6159 = vunpack.c.h.b16 %v6091
        %v6160 = vunpack.c.l.b16 %v6092
        %v6161 = vunpack.c.h.b16 %v6092
        %v6162 = vunpack.c.l.b16 %v6093
        %v6163 = vunpack.c.h.b16 %v6093
        %v6164 = vunpack.c.l.b16 %v6094
        %v6165 = vunpack.c.h.b16 %v6094
        %v6166 = vunpack.c.l.b16 %v6095
        %v6167 = vunpack.c.h.b16 %v6095
        %v6168 = vunpack.c.l.b16 %v6096
        %v6169 = vunpack.c.h.b16 %v6096
        %v6170 = vunpack.c.l.b16 %v6097
        %v6171 = vunpack.c.h.b16 %v6097
        %v6172 = vunpack.c.l.b16 %v6098
        %v6173 = vunpack.c.h.b16 %v6098
        %v6174 = vunpack.c.l.b16 %v6099
        %v6175 = vunpack.c.h.b16 %v6099
        %v6176 = vunpack.c.l.b16 %v6100
        %v6177 = vunpack.c.h.b16 %v6100
        %v6178 = vunpack.c.l.b16 %v6101
        %v6179 = vunpack.c.h.b16 %v6101
        %v6180 = vunpack.c.l.b16 %v6102
        %v6181 = vunpack.c.h.b16 %v6102
        %v6182 = vunpack.c.l.b16 %v6103
        %v6183 = vunpack.c.h.b16 %v6103
        %v6184 = vunpack.c.l.b16 %v6104
        %v6185 = vunpack.c.h.b16 %v6104
        %v6186 = vunpack.c.l.b16 %v6105
        %v6187 = vunpack.c.h.b16 %v6105
        %v6188 = vunpack.c.l.b16 %v6106
        %v6189 = vunpack.c.h.b16 %v6106
        %v6190 = vunpack.c.l.b16 %v6107
        %v6191 = vunpack.c.h.b16 %v6107
        %v6192 = vunpack.c.l.b16 %v6108
        %v6193 = vunpack.c.h.b16 %v6108
        %v6194 = vunpack.c.l.b16 %v6109
        %v6195 = vunpack.c.h.b16 %v6109
        %v6196 = vunpack.c.l.b16 %v6110
        %v6197 = vunpack.c.h.b16 %v6110
        %v6198 = vunpack.c.l.b16 %v6111
        %v6199 = vunpack.c.h.b16 %v6111
        %v6200 = vunpack.c.l.b16 %v6112
        %v6201 = vunpack.c.h.b16 %v6112
        %v6202 = vunpack.c.l.b16 %v6113
        %v6203 = vunpack.c.h.b16 %v6113
        %v6204 = vunpack.c.l.b16 %v6114
        %v6205 = vunpack.c.h.b16 %v6114
        %v6206 = vunpack.c.l.b16 %v6115
        %v6207 = vunpack.c.h.b16 %v6115
        %v6208 = vunpack.c.l.b16 %v6116
        %v6209 = vunpack.c.h.b16 %v6116
        %v6210 = vunpack.c.l.b16 %v6117
        %v6211 = vunpack.c.h.b16 %v6117
        %v6212 = vunpack.c.l.b16 %v6118
        %v6213 = vunpack.c.h.b16 %v6118
        %v6214 = vunpack.c.l.b16 %v6119
        %v6215 = vunpack.c.h.b16 %v6119
        %v6216 = vpack.c.b16 %v6156, %v6152
        %v6217 = vpack.c.b16 %v6157, %v6153
        %v6218 = vpack.c.b16 %v6158, %v6154
        %v6219 = vpack.c.b16 %v6159, %v6155
        %v6220 = vpack.c.b16 %v6164, %v6160
        %v6221 = vpack.c.b16 %v6165, %v6161
        %v6222 = vpack.c.b16 %v6166, %v6162
        %v6223 = vpack.c.b16 %v6167, %v6163
        %v6224 = vpack.c.b16 %v6172, %v6168
        %v6225 = vpack.c.b16 %v6173, %v6169
        %v6226 = vpack.c.b16 %v6174, %v6170
        %v6227 = vpack.c.b16 %v6175, %v6171
        %v6228 = vpack.c.b16 %v6180, %v6176
        %v6229 = vpack.c.b16 %v6181, %v6177
        %v6230 = vpack.c.b16 %v6182, %v6178
        %v6231 = vpack.c.b16 %v6183, %v6179
        %v6232 = vpack.c.b16 %v6188, %v6184
        %v6233 = vpack.c.b16 %v6189, %v6185
        %v6234 = vpack.c.b16 %v6190, %v6186
        %v6235 = vpack.c.b16 %v6191, %v6187
        %v6236 = vpack.c.b16 %v6196, %v6192
        %v6237 = vpack.c.b16 %v6197, %v6193
        %v6238 = vpack.c.b16 %v6198, %v6194
        %v6239 = vpack.c.b16 %v6199, %v6195
        %v6240 = vpack.c.b16 %v6204, %v6200
        %v6241 = vpack.c.b16 %v6205, %v6201
        %v6242 = vpack.c.b16 %v6206, %v6202
        %v6243 = vpack.c.b16 %v6207, %v6203
        %v6244 = vpack.c.b16 %v6212, %v6208
        %v6245 = vpack.c.b16 %v6213, %v6209
        %v6246 = vpack.c.b16 %v6214, %v6210
        %v6247 = vpack.c.b16 %v6215, %v6211
        %6280 = vmatprep.subr.bf16.mxu0 %v6217
        %6281 = vmatpush1.bf16.msra.mxu0 %v6216
        %6282 = vmatprep.subr.bf16.mxu0 %v6221
        %6283 = vmatpush1.bf16.msra.mxu0 %v6220
        %6284 = vmatprep.subr.bf16.mxu0 %v6225
        %6285 = vmatpush1.bf16.msra.mxu0 %v6224
        %6286 = vmatprep.subr.bf16.mxu0 %v6229
        %6287 = vmatpush1.bf16.msra.mxu0 %v6228
        %6288 = vmatprep.subr.bf16.mxu0 %v6233
        %6289 = vmatpush1.bf16.msra.mxu0 %v6232
        %6290 = vmatprep.subr.bf16.mxu0 %v6237
        %6291 = vmatpush1.bf16.msra.mxu0 %v6236
        %6292 = vmatprep.subr.bf16.mxu0 %v6241
        %6293 = vmatpush1.bf16.msra.mxu0 %v6240
        %6294 = vmatprep.subr.bf16.mxu0 %v6245
        %6295 = vmatpush1.bf16.msra.mxu0 %v6244
        %6296 = vmatprep.subr.bf16.mxu0 0
        %6297 = vmatpush1.bf16.msra.mxu0 0
        %6298 = vmatprep.subr.bf16.mxu0 0
        %6299 = vmatpush1.bf16.msra.mxu0 0
        %6300 = vmatprep.subr.bf16.mxu0 0
        %6301 = vmatpush1.bf16.msra.mxu0 0
        %6302 = vmatprep.subr.bf16.mxu0 0
        %6303 = vmatpush1.bf16.msra.mxu0 0
        %6304 = vmatprep.subr.bf16.mxu0 0
        %6305 = vmatpush1.bf16.msra.mxu0 0
        %6306 = vmatprep.subr.bf16.mxu0 0
        %6307 = vmatpush1.bf16.msra.mxu0 0
        %6308 = vmatprep.subr.bf16.mxu0 0
        %6309 = vmatpush1.bf16.msra.mxu0 0
        %6310 = vmatprep.subr.bf16.mxu0 0
        %6311 = vmatpush1.bf16.msra.mxu0 0
        %6312 = vmatprep.mubr.bf16.mxu0 0
        %6313 = vmatmul.mubr.bf16.gmra.mrb[0].mxu0 %v6084
        %v6314 = vpop.f32.mrb[0].mxu0
        %v6315 = vadd.f32 0.0, %v6314
        %v6316 = vpop.f32.mrb[0].mxu0
        %v6317 = vadd.f32 0.0, %v6316
        %v6318 = vpop.f32.mrb[0].mxu0
        %v6319 = vadd.f32 0.0, %v6318
        %v6320 = vpop.f32.mrb[0].mxu0
        %v6321 = vadd.f32 0.0, %v6320
        %6322 = vmatprep.mubr.bf16.mxu0 0
        %6323 = vmatmul.mubr.bf16.gmra.mrb[0].mxu0 %v6085
        %v6324 = vpop.f32.mrb[0].mxu0
        %v6325 = vadd.f32 0.0, %v6324
        %v6326 = vpop.f32.mrb[0].mxu0
        %v6327 = vadd.f32 0.0, %v6326
        %v6328 = vpop.f32.mrb[0].mxu0
        %v6329 = vadd.f32 0.0, %v6328
        %v6330 = vpop.f32.mrb[0].mxu0
        %v6331 = vadd.f32 0.0, %v6330
        %6332 = vmatprep.mubr.bf16.mxu0 0
        %6333 = vmatmul.mubr.bf16.gmra.mrb[0].mxu0 %v6086
        %v6334 = vpop.f32.mrb[0].mxu0
        %v6335 = vadd.f32 0.0, %v6334
        %v6336 = vpop.f32.mrb[0].mxu0
        %v6337 = vadd.f32 0.0, %v6336
        %v6338 = vpop.f32.mrb[0].mxu0
        %v6339 = vadd.f32 0.0, %v6338
        %v6340 = vpop.f32.mrb[0].mxu0
        %v6341 = vadd.f32 0.0, %v6340
        %6342 = vdwg.mxu0
        %6343 = vmatprep.subr.bf16.mxu0 %v6219
        %6344 = vmatpush1.bf16.msra.mxu0 %v6218
        %6345 = vmatprep.subr.bf16.mxu0 %v6223
        %6346 = vmatpush1.bf16.msra.mxu0 %v6222
        %6347 = vmatprep.subr.bf16.mxu0 %v6227
        %6348 = vmatpush1.bf16.msra.mxu0 %v6226
        %6349 = vmatprep.subr.bf16.mxu0 %v6231
        %6350 = vmatpush1.bf16.msra.mxu0 %v6230
        %6351 = vmatprep.subr.bf16.mxu0 %v6235
        %6352 = vmatpush1.bf16.msra.mxu0 %v6234
        %6353 = vmatprep.subr.bf16.mxu0 %v6239
        %6354 = vmatpush1.bf16.msra.mxu0 %v6238
        %6355 = vmatprep.subr.bf16.mxu0 %v6243
        %6356 = vmatpush1.bf16.msra.mxu0 %v6242
        %6357 = vmatprep.subr.bf16.mxu0 %v6247
        %6358 = vmatpush1.bf16.msra.mxu0 %v6246
        %6359 = vmatprep.subr.bf16.mxu0 0
        %6360 = vmatpush1.bf16.msra.mxu0 0
        %6361 = vmatprep.subr.bf16.mxu0 0
        %6362 = vmatpush1.bf16.msra.mxu0 0
        %6363 = vmatprep.subr.bf16.mxu0 0
        %6364 = vmatpush1.bf16.msra.mxu0 0
        %6365 = vmatprep.subr.bf16.mxu0 0
        %6366 = vmatpush1.bf16.msra.mxu0 0
        %6367 = vmatprep.subr.bf16.mxu0 0
        %6368 = vmatpush1.bf16.msra.mxu0 0
        %6369 = vmatprep.subr.bf16.mxu0 0
        %6370 = vmatpush1.bf16.msra.mxu0 0
        %6371 = vmatprep.subr.bf16.mxu0 0
        %6372 = vmatpush1.bf16.msra.mxu0 0
        %6373 = vmatprep.subr.bf16.mxu0 0
        %6374 = vmatpush1.bf16.msra.mxu0 0
        %6375 = vmatprep.mubr.bf16.mxu0 0
        %6376 = vmatmul.mubr.bf16.gmra.mrb[0].mxu0 %v6084
        %v6377 = vpop.f32.mrb[0].mxu0
        %v6378 = vadd.f32 0.0, %v6377
        %v6379 = vpop.f32.mrb[0].mxu0
        %v6380 = vadd.f32 0.0, %v6379
        %v6381 = vpop.f32.mrb[0].mxu0
        %v6382 = vadd.f32 0.0, %v6381
        %v6383 = vpop.f32.mrb[0].mxu0
        %v6384 = vadd.f32 0.0, %v6383
        %6385 = vmatprep.mubr.bf16.mxu0 0
        %6386 = vmatmul.mubr.bf16.gmra.mrb[0].mxu0 %v6085
        %v6387 = vpop.f32.mrb[0].mxu0
        %v6388 = vadd.f32 0.0, %v6387
        %v6389 = vpop.f32.mrb[0].mxu0
        %v6390 = vadd.f32 0.0, %v6389
        %v6391 = vpop.f32.mrb[0].mxu0
        %v6392 = vadd.f32 0.0, %v6391
        %v6393 = vpop.f32.mrb[0].mxu0
        %v6394 = vadd.f32 0.0, %v6393
        %6395 = vmatprep.mubr.bf16.mxu0 0
        %6396 = vmatmul.mubr.bf16.gmra.mrb[0].mxu0 %v6086
        %v6397 = vpop.f32.mrb[0].mxu0
        %v6398 = vadd.f32 0.0, %v6397
        %v6399 = vpop.f32.mrb[0].mxu0
        %v6400 = vadd.f32 0.0, %v6399
        %v6401 = vpop.f32.mrb[0].mxu0
        %v6402 = vadd.f32 0.0, %v6401
        %v6403 = vpop.f32.mrb[0].mxu0
        %v6404 = vadd.f32 0.0, %v6403
        %6405 = vdwg.mxu0
        %v6406 = vxor.u32 %v6315, 2147483648
        %v6407 = vxor.u32 %v6317, 2147483648
        %v6408 = vxor.u32 %v6378, 2147483648
        %v6409 = vxor.u32 %v6380, 2147483648
        %v6410 = vxor.u32 %v6319, 2147483648
        %v6411 = vxor.u32 %v6321, 2147483648
        %v6412 = vxor.u32 %v6382, 2147483648
        %v6413 = vxor.u32 %v6384, 2147483648
        %v6414 = vxor.u32 %v6325, 2147483648
        %v6415 = vxor.u32 %v6327, 2147483648
        %v6416 = vxor.u32 %v6388, 2147483648
        %v6417 = vxor.u32 %v6390, 2147483648
        %v6418 = vxor.u32 %v6329, 2147483648
        %v6419 = vxor.u32 %v6331, 2147483648
        %v6420 = vxor.u32 %v6392, 2147483648
        %v6421 = vxor.u32 %v6394, 2147483648
        %v6422 = vxor.u32 %v6335, 2147483648
        %v6423 = vxor.u32 %v6337, 2147483648
        %v6424 = vxor.u32 %v6398, 2147483648
        %v6425 = vxor.u32 %v6400, 2147483648
        %v6426 = vxor.u32 %v6339, 2147483648
        %v6427 = vxor.u32 %v6341, 2147483648
        %v6428 = vxor.u32 %v6402, 2147483648
        %v6429 = vxor.u32 %v6404, 2147483648
        %v6430 = vmul.f32 %v6406, 1.442695
        %v6431 = vpow.pop %v6430
        %v6432 = vmul.f32 %v6407, 1.442695
        %v6433 = vpow.pop %v6432
        %v6434 = vmul.f32 %v6408, 1.442695
        %v6435 = vpow.pop %v6434
        %v6436 = vmul.f32 %v6409, 1.442695
        %v6437 = vpow.pop %v6436
        %v6438 = vmul.f32 %v6410, 1.442695
        %v6439 = vpow.pop %v6438
        %v6440 = vmul.f32 %v6411, 1.442695
        %v6441 = vpow.pop %v6440
        %v6442 = vmul.f32 %v6412, 1.442695
        %v6443 = vpow.pop %v6442
        %v6444 = vmul.f32 %v6413, 1.442695
        %v6445 = vpow.pop %v6444
        %v6446 = vmul.f32 %v6414, 1.442695
        %v6447 = vpow.pop %v6446
        %v6448 = vmul.f32 %v6415, 1.442695
        %v6449 = vpow.pop %v6448
        %v6450 = vmul.f32 %v6416, 1.442695
        %v6451 = vpow.pop %v6450
        %v6452 = vmul.f32 %v6417, 1.442695
        %v6453 = vpow.pop %v6452
        %v6454 = vmul.f32 %v6418, 1.442695
        %v6455 = vpow.pop %v6454
        %v6456 = vmul.f32 %v6419, 1.442695
        %v6457 = vpow.pop %v6456
        %v6458 = vmul.f32 %v6420, 1.442695
        %v6459 = vpow.pop %v6458
        %v6460 = vmul.f32 %v6421, 1.442695
        %v6461 = vpow.pop %v6460
        %v6462 = vmul.f32 %v6422, 1.442695
        %v6463 = vpow.pop %v6462
        %v6464 = vmul.f32 %v6423, 1.442695
        %v6465 = vpow.pop %v6464
        %v6466 = vmul.f32 %v6424, 1.442695
        %v6467 = vpow.pop %v6466
        %v6468 = vmul.f32 %v6425, 1.442695
        %v6469 = vpow.pop %v6468
        %v6470 = vmul.f32 %v6426, 1.442695
        %v6471 = vpow.pop %v6470
        %v6472 = vmul.f32 %v6427, 1.442695
        %v6473 = vpow.pop %v6472
        %v6474 = vmul.f32 %v6428, 1.442695
        %v6475 = vpow.pop %v6474
        %v6476 = vmul.f32 %v6429, 1.442695
        %v6477 = vpow.pop %v6476
        %v6478 = vadd.f32 %v6431, 1.0
        %v6479 = vadd.f32 %v6433, 1.0
        %v6480 = vadd.f32 %v6435, 1.0
        %v6481 = vadd.f32 %v6437, 1.0
        %v6482 = vadd.f32 %v6439, 1.0
        %v6483 = vadd.f32 %v6441, 1.0
        %v6484 = vadd.f32 %v6443, 1.0
        %v6485 = vadd.f32 %v6445, 1.0
        %v6486 = vadd.f32 %v6447, 1.0
        %v6487 = vadd.f32 %v6449, 1.0
        %v6488 = vadd.f32 %v6451, 1.0
        %v6489 = vadd.f32 %v6453, 1.0
        %v6490 = vadd.f32 %v6455, 1.0
        %v6491 = vadd.f32 %v6457, 1.0
        %v6492 = vadd.f32 %v6459, 1.0
        %v6493 = vadd.f32 %v6461, 1.0
        %v6494 = vadd.f32 %v6463, 1.0
        %v6495 = vadd.f32 %v6465, 1.0
        %v6496 = vadd.f32 %v6467, 1.0
        %v6497 = vadd.f32 %v6469, 1.0
        %v6498 = vadd.f32 %v6471, 1.0
        %v6499 = vadd.f32 %v6473, 1.0
        %v6500 = vadd.f32 %v6475, 1.0
        %v6501 = vadd.f32 %v6477, 1.0
        %v6502 = vrcp.pop %v6478
        %v6503 = vmul.f32 1.0, %v6502
        %v6504 = vrcp.pop %v6479
        %v6505 = vmul.f32 1.0, %v6504
        %v6506 = vrcp.pop %v6480
        %v6507 = vmul.f32 1.0, %v6506
        %v6508 = vrcp.pop %v6481
        %v6509 = vmul.f32 1.0, %v6508
        %v6510 = vrcp.pop %v6482
        %v6511 = vmul.f32 1.0, %v6510
        %v6512 = vrcp.pop %v6483
        %v6513 = vmul.f32 1.0, %v6512
        %v6514 = vrcp.pop %v6484
        %v6515 = vmul.f32 1.0, %v6514
        %v6516 = vrcp.pop %v6485
        %v6517 = vmul.f32 1.0, %v6516
        %v6518 = vrcp.pop %v6486
        %v6519 = vmul.f32 1.0, %v6518
        %v6520 = vrcp.pop %v6487
        %v6521 = vmul.f32 1.0, %v6520
        %v6522 = vrcp.pop %v6488
        %v6523 = vmul.f32 1.0, %v6522
        %v6524 = vrcp.pop %v6489
        %v6525 = vmul.f32 1.0, %v6524
        %v6526 = vrcp.pop %v6490
        %v6527 = vmul.f32 1.0, %v6526
        %v6528 = vrcp.pop %v6491
        %v6529 = vmul.f32 1.0, %v6528
        %v6530 = vrcp.pop %v6492
        %v6531 = vmul.f32 1.0, %v6530
        %v6532 = vrcp.pop %v6493
        %v6533 = vmul.f32 1.0, %v6532
        %v6534 = vrcp.pop %v6494
        %v6535 = vmul.f32 1.0, %v6534
        %v6536 = vrcp.pop %v6495
        %v6537 = vmul.f32 1.0, %v6536
        %v6538 = vrcp.pop %v6496
        %v6539 = vmul.f32 1.0, %v6538
        %v6540 = vrcp.pop %v6497
        %v6541 = vmul.f32 1.0, %v6540
        %v6542 = vrcp.pop %v6498
        %v6543 = vmul.f32 1.0, %v6542
        %v6544 = vrcp.pop %v6499
        %v6545 = vmul.f32 1.0, %v6544
        %v6546 = vrcp.pop %v6500
        %v6547 = vmul.f32 1.0, %v6546
        %v6548 = vrcp.pop %v6501
        %v6549 = vmul.f32 1.0, %v6548
        %v6550 = vmul.f32 %v4321, %v4323
        %v6551 = vmul.f32 %v4325, %v4327
        %v6552 = vmul.f32 %v4331, %v4333
        %v6553 = vmul.f32 %v4335, %v4337
        %v6554 = vmul.f32 %v4341, %v4343
        %v6555 = vmul.f32 %v4345, %v4347
        %v6556 = vmax.f32 %v6550, 0.0
        %v6557 = vmax.f32 %v6551, 0.0
        %v6558 = vmax.f32 %v6552, 0.0
        %v6559 = vmax.f32 %v6553, 0.0
        %v6560 = vmax.f32 %v6554, 0.0
        %v6561 = vmax.f32 %v6555, 0.0
        %v6562 = vpack.c.bf16 %v6557, %v6556
        %v6563 = vpack.c.bf16 %v6559, %v6558
        %v6564 = vpack.c.bf16 %v6561, %v6560
        %s6565 = scalar_lea.vmem [#allocation6], 512
        %v6566 = vld [vmem:[%s6565] sm:$0xff]
        %v6567 = vld [vmem:[%s6565 + $0x8] sm:$0xff]
        %v6568 = vld [vmem:[%s6565 + $0x10] sm:$0xff]
        %v6569 = vld [vmem:[%s6565 + $0x18] sm:$0xff]
        %v6570 = vld [vmem:[%s6565 + $0x20] sm:$0xff]
        %v6571 = vld [vmem:[%s6565 + $0x28] sm:$0xff]
        %v6572 = vld [vmem:[%s6565 + $0x30] sm:$0xff]
        %v6573 = vld [vmem:[%s6565 + $0x38] sm:$0xff]
        %v6574 = vld [vmem:[%s6565 + $0x40] sm:$0xff]
        %v6575 = vld [vmem:[%s6565 + $0x48] sm:$0xff]
        %v6576 = vld [vmem:[%s6565 + $0x50] sm:$0xff]
        %v6577 = vld [vmem:[%s6565 + $0x58] sm:$0xff]
        %v6578 = vld [vmem:[%s6565 + $0x60] sm:$0xff]
        %v6579 = vld [vmem:[%s6565 + $0x68] sm:$0xff]
        %v6580 = vld [vmem:[%s6565 + $0x70] sm:$0xff]
        %v6581 = vld [vmem:[%s6565 + $0x78] sm:$0xff]
        %v6582 = vld [vmem:[%s6565 + $0x80] sm:$0xff]
        %v6583 = vld [vmem:[%s6565 + $0x88] sm:$0xff]
        %v6584 = vld [vmem:[%s6565 + $0x90] sm:$0xff]
        %v6585 = vld [vmem:[%s6565 + $0x98] sm:$0xff]
        %v6586 = vld [vmem:[%s6565 + $0xa0] sm:$0xff]
        %v6587 = vld [vmem:[%s6565 + $0xa8] sm:$0xff]
        %v6588 = vld [vmem:[%s6565 + $0xb0] sm:$0xff]
        %v6589 = vld [vmem:[%s6565 + $0xb8] sm:$0xff]
        %v6590 = vld [vmem:[%s6565 + $0xc0] sm:$0xff]
        %v6591 = vld [vmem:[%s6565 + $0xc8] sm:$0xff]
        %v6592 = vld [vmem:[%s6565 + $0xd0] sm:$0xff]
        %v6593 = vld [vmem:[%s6565 + $0xd8] sm:$0xff]
        %v6594 = vld [vmem:[%s6565 + $0xe0] sm:$0xff]
        %v6595 = vld [vmem:[%s6565 + $0xe8] sm:$0xff]
        %v6596 = vld [vmem:[%s6565 + $0xf0] sm:$0xff]
        %v6597 = vld [vmem:[%s6565 + $0xf8] sm:$0xff]
        %v6630 = vunpack.c.l.b16 %v6566
        %v6631 = vunpack.c.h.b16 %v6566
        %v6632 = vunpack.c.l.b16 %v6567
        %v6633 = vunpack.c.h.b16 %v6567
        %v6634 = vunpack.c.l.b16 %v6568
        %v6635 = vunpack.c.h.b16 %v6568
        %v6636 = vunpack.c.l.b16 %v6569
        %v6637 = vunpack.c.h.b16 %v6569
        %v6638 = vunpack.c.l.b16 %v6570
        %v6639 = vunpack.c.h.b16 %v6570
        %v6640 = vunpack.c.l.b16 %v6571
        %v6641 = vunpack.c.h.b16 %v6571
        %v6642 = vunpack.c.l.b16 %v6572
        %v6643 = vunpack.c.h.b16 %v6572
        %v6644 = vunpack.c.l.b16 %v6573
        %v6645 = vunpack.c.h.b16 %v6573
        %v6646 = vunpack.c.l.b16 %v6574
        %v6647 = vunpack.c.h.b16 %v6574
        %v6648 = vunpack.c.l.b16 %v6575
        %v6649 = vunpack.c.h.b16 %v6575
        %v6650 = vunpack.c.l.b16 %v6576
        %v6651 = vunpack.c.h.b16 %v6576
        %v6652 = vunpack.c.l.b16 %v6577
        %v6653 = vunpack.c.h.b16 %v6577
        %v6654 = vunpack.c.l.b16 %v6578
        %v6655 = vunpack.c.h.b16 %v6578
        %v6656 = vunpack.c.l.b16 %v6579
        %v6657 = vunpack.c.h.b16 %v6579
        %v6658 = vunpack.c.l.b16 %v6580
        %v6659 = vunpack.c.h.b16 %v6580
        %v6660 = vunpack.c.l.b16 %v6581
        %v6661 = vunpack.c.h.b16 %v6581
        %v6662 = vunpack.c.l.b16 %v6582
        %v6663 = vunpack.c.h.b16 %v6582
        %v6664 = vunpack.c.l.b16 %v6583
        %v6665 = vunpack.c.h.b16 %v6583
        %v6666 = vunpack.c.l.b16 %v6584
        %v6667 = vunpack.c.h.b16 %v6584
        %v6668 = vunpack.c.l.b16 %v6585
        %v6669 = vunpack.c.h.b16 %v6585
        %v6670 = vunpack.c.l.b16 %v6586
        %v6671 = vunpack.c.h.b16 %v6586
        %v6672 = vunpack.c.l.b16 %v6587
        %v6673 = vunpack.c.h.b16 %v6587
        %v6674 = vunpack.c.l.b16 %v6588
        %v6675 = vunpack.c.h.b16 %v6588
        %v6676 = vunpack.c.l.b16 %v6589
        %v6677 = vunpack.c.h.b16 %v6589
        %v6678 = vunpack.c.l.b16 %v6590
        %v6679 = vunpack.c.h.b16 %v6590
        %v6680 = vunpack.c.l.b16 %v6591
        %v6681 = vunpack.c.h.b16 %v6591
        %v6682 = vunpack.c.l.b16 %v6592
        %v6683 = vunpack.c.h.b16 %v6592
        %v6684 = vunpack.c.l.b16 %v6593
        %v6685 = vunpack.c.h.b16 %v6593
        %v6686 = vunpack.c.l.b16 %v6594
        %v6687 = vunpack.c.h.b16 %v6594
        %v6688 = vunpack.c.l.b16 %v6595
        %v6689 = vunpack.c.h.b16 %v6595
        %v6690 = vunpack.c.l.b16 %v6596
        %v6691 = vunpack.c.h.b16 %v6596
        %v6692 = vunpack.c.l.b16 %v6597
        %v6693 = vunpack.c.h.b16 %v6597
        %v6694 = vpack.c.b16 %v6634, %v6630
        %v6695 = vpack.c.b16 %v6635, %v6631
        %v6696 = vpack.c.b16 %v6636, %v6632
        %v6697 = vpack.c.b16 %v6637, %v6633
        %v6698 = vpack.c.b16 %v6642, %v6638
        %v6699 = vpack.c.b16 %v6643, %v6639
        %v6700 = vpack.c.b16 %v6644, %v6640
        %v6701 = vpack.c.b16 %v6645, %v6641
        %v6702 = vpack.c.b16 %v6650, %v6646
        %v6703 = vpack.c.b16 %v6651, %v6647
        %v6704 = vpack.c.b16 %v6652, %v6648
        %v6705 = vpack.c.b16 %v6653, %v6649
        %v6706 = vpack.c.b16 %v6658, %v6654
        %v6707 = vpack.c.b16 %v6659, %v6655
        %v6708 = vpack.c.b16 %v6660, %v6656
        %v6709 = vpack.c.b16 %v6661, %v6657
        %v6710 = vpack.c.b16 %v6666, %v6662
        %v6711 = vpack.c.b16 %v6667, %v6663
        %v6712 = vpack.c.b16 %v6668, %v6664
        %v6713 = vpack.c.b16 %v6669, %v6665
        %v6714 = vpack.c.b16 %v6674, %v6670
        %v6715 = vpack.c.b16 %v6675, %v6671
        %v6716 = vpack.c.b16 %v6676, %v6672
        %v6717 = vpack.c.b16 %v6677, %v6673
        %v6718 = vpack.c.b16 %v6682, %v6678
        %v6719 = vpack.c.b16 %v6683, %v6679
        %v6720 = vpack.c.b16 %v6684, %v6680
        %v6721 = vpack.c.b16 %v6685, %v6681
        %v6722 = vpack.c.b16 %v6690, %v6686
        %v6723 = vpack.c.b16 %v6691, %v6687
        %v6724 = vpack.c.b16 %v6692, %v6688
        %v6725 = vpack.c.b16 %v6693, %v6689
        %6758 = vmatprep.subr.bf16.mxu0 %v6695
        %6759 = vmatpush1.bf16.msra.mxu0 %v6694
        %6760 = vmatprep.subr.bf16.mxu0 %v6699
        %6761 = vmatpush1.bf16.msra.mxu0 %v6698
        %6762 = vmatprep.subr.bf16.mxu0 %v6703
        %6763 = vmatpush1.bf16.msra.mxu0 %v6702
        %6764 = vmatprep.subr.bf16.mxu0 %v6707
        %6765 = vmatpush1.bf16.msra.mxu0 %v6706
        %6766 = vmatprep.subr.bf16.mxu0 %v6711
        %6767 = vmatpush1.bf16.msra.mxu0 %v6710
        %6768 = vmatprep.subr.bf16.mxu0 %v6715
        %6769 = vmatpush1.bf16.msra.mxu0 %v6714
        %6770 = vmatprep.subr.bf16.mxu0 %v6719
        %6771 = vmatpush1.bf16.msra.mxu0 %v6718
        %6772 = vmatprep.subr.bf16.mxu0 %v6723
        %6773 = vmatpush1.bf16.msra.mxu0 %v6722
        %6774 = vmatprep.subr.bf16.mxu0 0
        %6775 = vmatpush1.bf16.msra.mxu0 0
        %6776 = vmatprep.subr.bf16.mxu0 0
        %6777 = vmatpush1.bf16.msra.mxu0 0
        %6778 = vmatprep.subr.bf16.mxu0 0
        %6779 = vmatpush1.bf16.msra.mxu0 0
        %6780 = vmatprep.subr.bf16.mxu0 0
        %6781 = vmatpush1.bf16.msra.mxu0 0
        %6782 = vmatprep.subr.bf16.mxu0 0
        %6783 = vmatpush1.bf16.msra.mxu0 0
        %6784 = vmatprep.subr.bf16.mxu0 0
        %6785 = vmatpush1.bf16.msra.mxu0 0
        %6786 = vmatprep.subr.bf16.mxu0 0
        %6787 = vmatpush1.bf16.msra.mxu0 0
        %6788 = vmatprep.subr.bf16.mxu0 0
        %6789 = vmatpush1.bf16.msra.mxu0 0
        %6790 = vmatprep.mubr.bf16.mxu0 0
        %6791 = vmatmul.mubr.bf16.gmra.mrb[0].mxu0 %v6562
        %v6792 = vpop.f32.mrb[0].mxu0
        %v6793 = vadd.f32 0.0, %v6792
        %v6794 = vpop.f32.mrb[0].mxu0
        %v6795 = vadd.f32 0.0, %v6794
        %v6796 = vpop.f32.mrb[0].mxu0
        %v6797 = vadd.f32 0.0, %v6796
        %v6798 = vpop.f32.mrb[0].mxu0
        %v6799 = vadd.f32 0.0, %v6798
        %6800 = vmatprep.mubr.bf16.mxu0 0
        %6801 = vmatmul.mubr.bf16.gmra.mrb[0].mxu0 %v6563
        %v6802 = vpop.f32.mrb[0].mxu0
        %v6803 = vadd.f32 0.0, %v6802
        %v6804 = vpop.f32.mrb[0].mxu0
        %v6805 = vadd.f32 0.0, %v6804
        %v6806 = vpop.f32.mrb[0].mxu0
        %v6807 = vadd.f32 0.0, %v6806
        %v6808 = vpop.f32.mrb[0].mxu0
        %v6809 = vadd.f32 0.0, %v6808
        %6810 = vmatprep.mubr.bf16.mxu0 0
        %6811 = vmatmul.mubr.bf16.gmra.mrb[0].mxu0 %v6564
        %v6812 = vpop.f32.mrb[0].mxu0
        %v6813 = vadd.f32 0.0, %v6812
        %v6814 = vpop.f32.mrb[0].mxu0
        %v6815 = vadd.f32 0.0, %v6814
        %v6816 = vpop.f32.mrb[0].mxu0
        %v6817 = vadd.f32 0.0, %v6816
        %v6818 = vpop.f32.mrb[0].mxu0
        %v6819 = vadd.f32 0.0, %v6818
        %6820 = vdwg.mxu0
        %6821 = vmatprep.subr.bf16.mxu0 %v6697
        %6822 = vmatpush1.bf16.msra.mxu0 %v6696
        %6823 = vmatprep.subr.bf16.mxu0 %v6701
        %6824 = vmatpush1.bf16.msra.mxu0 %v6700
        %6825 = vmatprep.subr.bf16.mxu0 %v6705
        %6826 = vmatpush1.bf16.msra.mxu0 %v6704
        %6827 = vmatprep.subr.bf16.mxu0 %v6709
        %6828 = vmatpush1.bf16.msra.mxu0 %v6708
        %6829 = vmatprep.subr.bf16.mxu0 %v6713
        %6830 = vmatpush1.bf16.msra.mxu0 %v6712
        %6831 = vmatprep.subr.bf16.mxu0 %v6717
        %6832 = vmatpush1.bf16.msra.mxu0 %v6716
        %6833 = vmatprep.subr.bf16.mxu0 %v6721
        %6834 = vmatpush1.bf16.msra.mxu0 %v6720
        %6835 = vmatprep.subr.bf16.mxu0 %v6725
        %6836 = vmatpush1.bf16.msra.mxu0 %v6724
        %6837 = vmatprep.subr.bf16.mxu0 0
        %6838 = vmatpush1.bf16.msra.mxu0 0
        %6839 = vmatprep.subr.bf16.mxu0 0
        %6840 = vmatpush1.bf16.msra.mxu0 0
        %6841 = vmatprep.subr.bf16.mxu0 0
        %6842 = vmatpush1.bf16.msra.mxu0 0
        %6843 = vmatprep.subr.bf16.mxu0 0
        %6844 = vmatpush1.bf16.msra.mxu0 0
        %6845 = vmatprep.subr.bf16.mxu0 0
        %6846 = vmatpush1.bf16.msra.mxu0 0
        %6847 = vmatprep.subr.bf16.mxu0 0
        %6848 = vmatpush1.bf16.msra.mxu0 0
        %6849 = vmatprep.subr.bf16.mxu0 0
        %6850 = vmatpush1.bf16.msra.mxu0 0
        %6851 = vmatprep.subr.bf16.mxu0 0
        %6852 = vmatpush1.bf16.msra.mxu0 0
        %6853 = vmatprep.mubr.bf16.mxu0 0
        %6854 = vmatmul.mubr.bf16.gmra.mrb[0].mxu0 %v6562
        %v6855 = vpop.f32.mrb[0].mxu0
        %v6856 = vadd.f32 0.0, %v6855
        %v6857 = vpop.f32.mrb[0].mxu0
        %v6858 = vadd.f32 0.0, %v6857
        %v6859 = vpop.f32.mrb[0].mxu0
        %v6860 = vadd.f32 0.0, %v6859
        %v6861 = vpop.f32.mrb[0].mxu0
        %v6862 = vadd.f32 0.0, %v6861
        %6863 = vmatprep.mubr.bf16.mxu0 0
        %6864 = vmatmul.mubr.bf16.gmra.mrb[0].mxu0 %v6563
        %v6865 = vpop.f32.mrb[0].mxu0
        %v6866 = vadd.f32 0.0, %v6865
        %v6867 = vpop.f32.mrb[0].mxu0
        %v6868 = vadd.f32 0.0, %v6867
        %v6869 = vpop.f32.mrb[0].mxu0
        %v6870 = vadd.f32 0.0, %v6869
        %v6871 = vpop.f32.mrb[0].mxu0
        %v6872 = vadd.f32 0.0, %v6871
        %6873 = vmatprep.mubr.bf16.mxu0 0
        %6874 = vmatmul.mubr.bf16.gmra.mrb[0].mxu0 %v6564
        %v6875 = vpop.f32.mrb[0].mxu0
        %v6876 = vadd.f32 0.0, %v6875
        %v6877 = vpop.f32.mrb[0].mxu0
        %v6878 = vadd.f32 0.0, %v6877
        %v6879 = vpop.f32.mrb[0].mxu0
        %v6880 = vadd.f32 0.0, %v6879
        %v6881 = vpop.f32.mrb[0].mxu0
        %v6882 = vadd.f32 0.0, %v6881
        %6883 = vdwg.mxu0
        %v6884 = vxor.u32 %v6793, 2147483648
        %v6885 = vxor.u32 %v6795, 2147483648
        %v6886 = vxor.u32 %v6856, 2147483648
        %v6887 = vxor.u32 %v6858, 2147483648
        %v6888 = vxor.u32 %v6797, 2147483648
        %v6889 = vxor.u32 %v6799, 2147483648
        %v6890 = vxor.u32 %v6860, 2147483648
        %v6891 = vxor.u32 %v6862, 2147483648
        %v6892 = vxor.u32 %v6803, 2147483648
        %v6893 = vxor.u32 %v6805, 2147483648
        %v6894 = vxor.u32 %v6866, 2147483648
        %v6895 = vxor.u32 %v6868, 2147483648
        %v6896 = vxor.u32 %v6807, 2147483648
        %v6897 = vxor.u32 %v6809, 2147483648
        %v6898 = vxor.u32 %v6870, 2147483648
        %v6899 = vxor.u32 %v6872, 2147483648
        %v6900 = vxor.u32 %v6813, 2147483648
        %v6901 = vxor.u32 %v6815, 2147483648
        %v6902 = vxor.u32 %v6876, 2147483648
        %v6903 = vxor.u32 %v6878, 2147483648
        %v6904 = vxor.u32 %v6817, 2147483648
        %v6905 = vxor.u32 %v6819, 2147483648
        %v6906 = vxor.u32 %v6880, 2147483648
        %v6907 = vxor.u32 %v6882, 2147483648
        %v6908 = vmul.f32 %v6884, 1.442695
        %v6909 = vpow.pop %v6908
        %v6910 = vmul.f32 %v6885, 1.442695
        %v6911 = vpow.pop %v6910
        %v6912 = vmul.f32 %v6886, 1.442695
        %v6913 = vpow.pop %v6912
        %v6914 = vmul.f32 %v6887, 1.442695
        %v6915 = vpow.pop %v6914
        %v6916 = vmul.f32 %v6888, 1.442695
        %v6917 = vpow.pop %v6916
        %v6918 = vmul.f32 %v6889, 1.442695
        %v6919 = vpow.pop %v6918
        %v6920 = vmul.f32 %v6890, 1.442695
        %v6921 = vpow.pop %v6920
        %v6922 = vmul.f32 %v6891, 1.442695
        %v6923 = vpow.pop %v6922
        %v6924 = vmul.f32 %v6892, 1.442695
        %v6925 = vpow.pop %v6924
        %v6926 = vmul.f32 %v6893, 1.442695
        %v6927 = vpow.pop %v6926
        %v6928 = vmul.f32 %v6894, 1.442695
        %v6929 = vpow.pop %v6928
        %v6930 = vmul.f32 %v6895, 1.442695
        %v6931 = vpow.pop %v6930
        %v6932 = vmul.f32 %v6896, 1.442695
        %v6933 = vpow.pop %v6932
        %v6934 = vmul.f32 %v6897, 1.442695
        %v6935 = vpow.pop %v6934
        %v6936 = vmul.f32 %v6898, 1.442695
        %v6937 = vpow.pop %v6936
        %v6938 = vmul.f32 %v6899, 1.442695
        %v6939 = vpow.pop %v6938
        %v6940 = vmul.f32 %v6900, 1.442695
        %v6941 = vpow.pop %v6940
        %v6942 = vmul.f32 %v6901, 1.442695
        %v6943 = vpow.pop %v6942
        %v6944 = vmul.f32 %v6902, 1.442695
        %v6945 = vpow.pop %v6944
        %v6946 = vmul.f32 %v6903, 1.442695
        %v6947 = vpow.pop %v6946
        %v6948 = vmul.f32 %v6904, 1.442695
        %v6949 = vpow.pop %v6948
        %v6950 = vmul.f32 %v6905, 1.442695
        %v6951 = vpow.pop %v6950
        %v6952 = vmul.f32 %v6906, 1.442695
        %v6953 = vpow.pop %v6952
        %v6954 = vmul.f32 %v6907, 1.442695
        %v6955 = vpow.pop %v6954
        %v6956 = vadd.f32 %v6909, 1.0
        %v6957 = vadd.f32 %v6911, 1.0
        %v6958 = vadd.f32 %v6913, 1.0
        %v6959 = vadd.f32 %v6915, 1.0
        %v6960 = vadd.f32 %v6917, 1.0
        %v6961 = vadd.f32 %v6919, 1.0
        %v6962 = vadd.f32 %v6921, 1.0
        %v6963 = vadd.f32 %v6923, 1.0
        %v6964 = vadd.f32 %v6925, 1.0
        %v6965 = vadd.f32 %v6927, 1.0
        %v6966 = vadd.f32 %v6929, 1.0
        %v6967 = vadd.f32 %v6931, 1.0
        %v6968 = vadd.f32 %v6933, 1.0
        %v6969 = vadd.f32 %v6935, 1.0
        %v6970 = vadd.f32 %v6937, 1.0
        %v6971 = vadd.f32 %v6939, 1.0
        %v6972 = vadd.f32 %v6941, 1.0
        %v6973 = vadd.f32 %v6943, 1.0
        %v6974 = vadd.f32 %v6945, 1.0
        %v6975 = vadd.f32 %v6947, 1.0
        %v6976 = vadd.f32 %v6949, 1.0
        %v6977 = vadd.f32 %v6951, 1.0
        %v6978 = vadd.f32 %v6953, 1.0
        %v6979 = vadd.f32 %v6955, 1.0
        %v6980 = vrcp.pop %v6956
        %v6981 = vmul.f32 1.0, %v6980
        %v6982 = vrcp.pop %v6957
        %v6983 = vmul.f32 1.0, %v6982
        %v6984 = vrcp.pop %v6958
        %v6985 = vmul.f32 1.0, %v6984
        %v6986 = vrcp.pop %v6959
        %v6987 = vmul.f32 1.0, %v6986
        %v6988 = vrcp.pop %v6960
        %v6989 = vmul.f32 1.0, %v6988
        %v6990 = vrcp.pop %v6961
        %v6991 = vmul.f32 1.0, %v6990
        %v6992 = vrcp.pop %v6962
        %v6993 = vmul.f32 1.0, %v6992
        %v6994 = vrcp.pop %v6963
        %v6995 = vmul.f32 1.0, %v6994
        %v6996 = vrcp.pop %v6964
        %v6997 = vmul.f32 1.0, %v6996
        %v6998 = vrcp.pop %v6965
        %v6999 = vmul.f32 1.0, %v6998
        %v7000 = vrcp.pop %v6966
        %v7001 = vmul.f32 1.0, %v7000
        %v7002 = vrcp.pop %v6967
        %v7003 = vmul.f32 1.0, %v7002
        %v7004 = vrcp.pop %v6968
        %v7005 = vmul.f32 1.0, %v7004
        %v7006 = vrcp.pop %v6969
        %v7007 = vmul.f32 1.0, %v7006
        %v7008 = vrcp.pop %v6970
        %v7009 = vmul.f32 1.0, %v7008
        %v7010 = vrcp.pop %v6971
        %v7011 = vmul.f32 1.0, %v7010
        %v7012 = vrcp.pop %v6972
        %v7013 = vmul.f32 1.0, %v7012
        %v7014 = vrcp.pop %v6973
        %v7015 = vmul.f32 1.0, %v7014
        %v7016 = vrcp.pop %v6974
        %v7017 = vmul.f32 1.0, %v7016
        %v7018 = vrcp.pop %v6975
        %v7019 = vmul.f32 1.0, %v7018
        %v7020 = vrcp.pop %v6976
        %v7021 = vmul.f32 1.0, %v7020
        %v7022 = vrcp.pop %v6977
        %v7023 = vmul.f32 1.0, %v7022
        %v7024 = vrcp.pop %v6978
        %v7025 = vmul.f32 1.0, %v7024
        %v7026 = vrcp.pop %v6979
        %v7027 = vmul.f32 1.0, %v7026
        %v7028 = vadd.f32 %v6503, %v6981
        %v7029 = vadd.f32 %v6505, %v6983
        %v7030 = vadd.f32 %v6507, %v6985
        %v7031 = vadd.f32 %v6509, %v6987
        %v7032 = vadd.f32 %v6511, %v6989
        %v7033 = vadd.f32 %v6513, %v6991
        %v7034 = vadd.f32 %v6515, %v6993
        %v7035 = vadd.f32 %v6517, %v6995
        %v7036 = vadd.f32 %v6519, %v6997
        %v7037 = vadd.f32 %v6521, %v6999
        %v7038 = vadd.f32 %v6523, %v7001
        %v7039 = vadd.f32 %v6525, %v7003
        %v7040 = vadd.f32 %v6527, %v7005
        %v7041 = vadd.f32 %v6529, %v7007
        %v7042 = vadd.f32 %v6531, %v7009
        %v7043 = vadd.f32 %v6533, %v7011
        %v7044 = vadd.f32 %v6535, %v7013
        %v7045 = vadd.f32 %v6537, %v7015
        %v7046 = vadd.f32 %v6539, %v7017
        %v7047 = vadd.f32 %v6541, %v7019
        %v7048 = vadd.f32 %v6543, %v7021
        %v7049 = vadd.f32 %v6545, %v7023
        %v7050 = vadd.f32 %v6547, %v7025
        %v7051 = vadd.f32 %v6549, %v7027
        %v7052 = vmul.f32 %v221, %v7028
        %v7053 = vmul.f32 %v222, %v7029
        %v7054 = vmul.f32 %v223, %v7030
        %v7055 = vmul.f32 %v224, %v7031
        %v7056 = vmul.f32 %v225, %v7032
        %v7057 = vmul.f32 %v226, %v7033
        %v7058 = vmul.f32 %v227, %v7034
        %v7059 = vmul.f32 %v228, %v7035
        %v7060 = vmul.f32 %v229, %v7036
        %v7061 = vmul.f32 %v230, %v7037
        %v7062 = vmul.f32 %v231, %v7038
        %v7063 = vmul.f32 %v232, %v7039
        %v7064 = vmul.f32 %v233, %v7040
        %v7065 = vmul.f32 %v234, %v7041
        %v7066 = vmul.f32 %v235, %v7042
        %v7067 = vmul.f32 %v236, %v7043
        %v7068 = vmul.f32 %v237, %v7044
        %v7069 = vmul.f32 %v238, %v7045
        %v7070 = vmul.f32 %v239, %v7046
        %v7071 = vmul.f32 %v240, %v7047
        %v7072 = vmul.f32 %v241, %v7048
        %v7073 = vmul.f32 %v242, %v7049
        %v7074 = vmul.f32 %v243, %v7050
        %v7075 = vmul.f32 %v244, %v7051
        %v7076 = vmul.f32 %v7052, 0.5
        %v7077 = vmul.f32 %v7053, 0.5
        %v7078 = vmul.f32 %v7054, 0.5
        %v7079 = vmul.f32 %v7055, 0.5
        %v7080 = vmul.f32 %v7056, 0.5
        %v7081 = vmul.f32 %v7057, 0.5
        %v7082 = vmul.f32 %v7058, 0.5
        %v7083 = vmul.f32 %v7059, 0.5
        %v7084 = vmul.f32 %v7060, 0.5
        %v7085 = vmul.f32 %v7061, 0.5
        %v7086 = vmul.f32 %v7062, 0.5
        %v7087 = vmul.f32 %v7063, 0.5
        %v7088 = vmul.f32 %v7064, 0.5
        %v7089 = vmul.f32 %v7065, 0.5
        %v7090 = vmul.f32 %v7066, 0.5
        %v7091 = vmul.f32 %v7067, 0.5
        %v7092 = vmul.f32 %v7068, 0.5
        %v7093 = vmul.f32 %v7069, 0.5
        %v7094 = vmul.f32 %v7070, 0.5
        %v7095 = vmul.f32 %v7071, 0.5
        %v7096 = vmul.f32 %v7072, 0.5
        %v7097 = vmul.f32 %v7073, 0.5
        %v7098 = vmul.f32 %v7074, 0.5
        %v7099 = vmul.f32 %v7075, 0.5
        %v7100 = vrot.slane %v7076, 4
        %v7101 = vadd.f32 %v7076, %v7100
        %v7102 = vrot.slane %v7101, 2
        %v7103 = vadd.f32 %v7101, %v7102
        %v7104 = vrot.slane %v7103, 1
        %v7105 = vadd.f32 %v7103, %v7104
        %v7106 = vrot.slane %v7077, 4
        %v7107 = vadd.f32 %v7077, %v7106
        %v7108 = vrot.slane %v7107, 2
        %v7109 = vadd.f32 %v7107, %v7108
        %v7110 = vrot.slane %v7109, 1
        %v7111 = vadd.f32 %v7109, %v7110
        %v7112 = vrot.slane %v7078, 4
        %v7113 = vadd.f32 %v7078, %v7112
        %v7114 = vrot.slane %v7113, 2
        %v7115 = vadd.f32 %v7113, %v7114
        %v7116 = vrot.slane %v7115, 1
        %v7117 = vadd.f32 %v7115, %v7116
        %v7118 = vrot.slane %v7079, 4
        %v7119 = vadd.f32 %v7079, %v7118
        %v7120 = vrot.slane %v7119, 2
        %v7121 = vadd.f32 %v7119, %v7120
        %v7122 = vrot.slane %v7121, 1
        %v7123 = vadd.f32 %v7121, %v7122
        %v7124 = vrot.slane %v7080, 4
        %v7125 = vadd.f32 %v7080, %v7124
        %v7126 = vrot.slane %v7125, 2
        %v7127 = vadd.f32 %v7125, %v7126
        %v7128 = vrot.slane %v7127, 1
        %v7129 = vadd.f32 %v7127, %v7128
        %v7130 = vrot.slane %v7081, 4
        %v7131 = vadd.f32 %v7081, %v7130
        %v7132 = vrot.slane %v7131, 2
        %v7133 = vadd.f32 %v7131, %v7132
        %v7134 = vrot.slane %v7133, 1
        %v7135 = vadd.f32 %v7133, %v7134
        %v7136 = vrot.slane %v7082, 4
        %v7137 = vadd.f32 %v7082, %v7136
        %v7138 = vrot.slane %v7137, 2
        %v7139 = vadd.f32 %v7137, %v7138
        %v7140 = vrot.slane %v7139, 1
        %v7141 = vadd.f32 %v7139, %v7140
        %v7142 = vrot.slane %v7083, 4
        %v7143 = vadd.f32 %v7083, %v7142
        %v7144 = vrot.slane %v7143, 2
        %v7145 = vadd.f32 %v7143, %v7144
        %v7146 = vrot.slane %v7145, 1
        %v7147 = vadd.f32 %v7145, %v7146
        %v7148 = vrot.slane %v7084, 4
        %v7149 = vadd.f32 %v7084, %v7148
        %v7150 = vrot.slane %v7149, 2
        %v7151 = vadd.f32 %v7149, %v7150
        %v7152 = vrot.slane %v7151, 1
        %v7153 = vadd.f32 %v7151, %v7152
        %v7154 = vrot.slane %v7085, 4
        %v7155 = vadd.f32 %v7085, %v7154
        %v7156 = vrot.slane %v7155, 2
        %v7157 = vadd.f32 %v7155, %v7156
        %v7158 = vrot.slane %v7157, 1
        %v7159 = vadd.f32 %v7157, %v7158
        %v7160 = vrot.slane %v7086, 4
        %v7161 = vadd.f32 %v7086, %v7160
        %v7162 = vrot.slane %v7161, 2
        %v7163 = vadd.f32 %v7161, %v7162
        %v7164 = vrot.slane %v7163, 1
        %v7165 = vadd.f32 %v7163, %v7164
        %v7166 = vrot.slane %v7087, 4
        %v7167 = vadd.f32 %v7087, %v7166
        %v7168 = vrot.slane %v7167, 2
        %v7169 = vadd.f32 %v7167, %v7168
        %v7170 = vrot.slane %v7169, 1
        %v7171 = vadd.f32 %v7169, %v7170
        %v7172 = vrot.slane %v7088, 4
        %v7173 = vadd.f32 %v7088, %v7172
        %v7174 = vrot.slane %v7173, 2
        %v7175 = vadd.f32 %v7173, %v7174
        %v7176 = vrot.slane %v7175, 1
        %v7177 = vadd.f32 %v7175, %v7176
        %v7178 = vrot.slane %v7089, 4
        %v7179 = vadd.f32 %v7089, %v7178
        %v7180 = vrot.slane %v7179, 2
        %v7181 = vadd.f32 %v7179, %v7180
        %v7182 = vrot.slane %v7181, 1
        %v7183 = vadd.f32 %v7181, %v7182
        %v7184 = vrot.slane %v7090, 4
        %v7185 = vadd.f32 %v7090, %v7184
        %v7186 = vrot.slane %v7185, 2
        %v7187 = vadd.f32 %v7185, %v7186
        %v7188 = vrot.slane %v7187, 1
        %v7189 = vadd.f32 %v7187, %v7188
        %v7190 = vrot.slane %v7091, 4
        %v7191 = vadd.f32 %v7091, %v7190
        %v7192 = vrot.slane %v7191, 2
        %v7193 = vadd.f32 %v7191, %v7192
        %v7194 = vrot.slane %v7193, 1
        %v7195 = vadd.f32 %v7193, %v7194
        %v7196 = vrot.slane %v7092, 4
        %v7197 = vadd.f32 %v7092, %v7196
        %v7198 = vrot.slane %v7197, 2
        %v7199 = vadd.f32 %v7197, %v7198
        %v7200 = vrot.slane %v7199, 1
        %v7201 = vadd.f32 %v7199, %v7200
        %v7202 = vrot.slane %v7093, 4
        %v7203 = vadd.f32 %v7093, %v7202
        %v7204 = vrot.slane %v7203, 2
        %v7205 = vadd.f32 %v7203, %v7204
        %v7206 = vrot.slane %v7205, 1
        %v7207 = vadd.f32 %v7205, %v7206
        %v7208 = vrot.slane %v7094, 4
        %v7209 = vadd.f32 %v7094, %v7208
        %v7210 = vrot.slane %v7209, 2
        %v7211 = vadd.f32 %v7209, %v7210
        %v7212 = vrot.slane %v7211, 1
        %v7213 = vadd.f32 %v7211, %v7212
        %v7214 = vrot.slane %v7095, 4
        %v7215 = vadd.f32 %v7095, %v7214
        %v7216 = vrot.slane %v7215, 2
        %v7217 = vadd.f32 %v7215, %v7216
        %v7218 = vrot.slane %v7217, 1
        %v7219 = vadd.f32 %v7217, %v7218
        %v7220 = vrot.slane %v7096, 4
        %v7221 = vadd.f32 %v7096, %v7220
        %v7222 = vrot.slane %v7221, 2
        %v7223 = vadd.f32 %v7221, %v7222
        %v7224 = vrot.slane %v7223, 1
        %v7225 = vadd.f32 %v7223, %v7224
        %v7226 = vrot.slane %v7097, 4
        %v7227 = vadd.f32 %v7097, %v7226
        %v7228 = vrot.slane %v7227, 2
        %v7229 = vadd.f32 %v7227, %v7228
        %v7230 = vrot.slane %v7229, 1
        %v7231 = vadd.f32 %v7229, %v7230
        %v7232 = vrot.slane %v7098, 4
        %v7233 = vadd.f32 %v7098, %v7232
        %v7234 = vrot.slane %v7233, 2
        %v7235 = vadd.f32 %v7233, %v7234
        %v7236 = vrot.slane %v7235, 1
        %v7237 = vadd.f32 %v7235, %v7236
        %v7238 = vrot.slane %v7099, 4
        %v7239 = vadd.f32 %v7099, %v7238
        %v7240 = vrot.slane %v7239, 2
        %v7241 = vadd.f32 %v7239, %v7240
        %v7242 = vrot.slane %v7241, 1
        %v7243 = vadd.f32 %v7241, %v7242
        %v7244 = vmul.f32 %v7105, %v5996
        %v7245 = vmul.f32 %v7111, %v5996
        %v7246 = vmul.f32 %v7117, %v5996
        %v7247 = vmul.f32 %v7123, %v5996
        %v7248 = vmul.f32 %v7129, %v5996
        %v7249 = vmul.f32 %v7135, %v5996
        %v7250 = vmul.f32 %v7141, %v5996
        %v7251 = vmul.f32 %v7147, %v5996
        %v7252 = vmul.f32 %v7153, %v5996
        %v7253 = vmul.f32 %v7159, %v5996
        %v7254 = vmul.f32 %v7165, %v5996
        %v7255 = vmul.f32 %v7171, %v5996
        %v7256 = vmul.f32 %v7177, %v5996
        %v7257 = vmul.f32 %v7183, %v5996
        %v7258 = vmul.f32 %v7189, %v5996
        %v7259 = vmul.f32 %v7195, %v5996
        %v7260 = vmul.f32 %v7201, %v5996
        %v7261 = vmul.f32 %v7207, %v5996
        %v7262 = vmul.f32 %v7213, %v5996
        %v7263 = vmul.f32 %v7219, %v5996
        %v7264 = vmul.f32 %v7225, %v5996
        %v7265 = vmul.f32 %v7231, %v5996
        %v7266 = vmul.f32 %v7237, %v5996
        %v7267 = vmul.f32 %v7243, %v5996
        %v7292 = vsel %vm6045, %v7248, %v7244
        %v7293 = vsel %vm6047, %v7252, %v7292
        %v7294 = vsel %vm6049, %v7256, %v7293
        %v7295 = vsel %vm6051, %v7260, %v7294
        %v7296 = vsel %vm6053, %v7264, %v7295
        %v7297 = vsel %vm6045, %v7249, %v7245
        %v7298 = vsel %vm6047, %v7253, %v7297
        %v7299 = vsel %vm6049, %v7257, %v7298
        %v7300 = vsel %vm6051, %v7261, %v7299
        %v7301 = vsel %vm6053, %v7265, %v7300
        %v7302 = vsel %vm6045, %v7250, %v7246
        %v7303 = vsel %vm6047, %v7254, %v7302
        %v7304 = vsel %vm6049, %v7258, %v7303
        %v7305 = vsel %vm6051, %v7262, %v7304
        %v7306 = vsel %vm6053, %v7266, %v7305
        %v7307 = vsel %vm6045, %v7251, %v7247
        %v7308 = vsel %vm6047, %v7255, %v7307
        %v7309 = vsel %vm6049, %v7259, %v7308
        %v7310 = vsel %vm6051, %v7263, %v7309
        %v7311 = vsel %vm6053, %v7267, %v7310
        %s7316 = scalar_lea.vmem %s219, 32
        %7317 = vst [vmem:[%s7316] sm:$0x3f] %v7296
        %7318 = vst [vmem:[%s7316 + $0x8] sm:$0x3f] %v7301
        %7319 = vst [vmem:[%s7316 + $0x10] sm:$0x3f] %v7306
        %7320 = vst [vmem:[%s7316 + $0x18] sm:$0x3f] %v7311
        %v7321 = vmax.f32 %v4447, 0.0
        %v7322 = vmax.f32 %v4451, 0.0
        %v7323 = vmax.f32 %v4457, 0.0
        %v7324 = vmax.f32 %v4461, 0.0
        %v7325 = vmax.f32 %v4467, 0.0
        %v7326 = vmax.f32 %v4471, 0.0
        %v7327 = vpack.c.bf16 %v7322, %v7321
        %v7328 = vpack.c.bf16 %v7324, %v7323
        %v7329 = vpack.c.bf16 %v7326, %v7325
        %s7330 = scalar_lea.vmem [#allocation6], 768
        %v7331 = vld [vmem:[%s7330] sm:$0xff]
        %v7332 = vld [vmem:[%s7330 + $0x8] sm:$0xff]
        %v7333 = vld [vmem:[%s7330 + $0x10] sm:$0xff]
        %v7334 = vld [vmem:[%s7330 + $0x18] sm:$0xff]
        %v7335 = vld [vmem:[%s7330 + $0x20] sm:$0xff]
        %v7336 = vld [vmem:[%s7330 + $0x28] sm:$0xff]
        %v7337 = vld [vmem:[%s7330 + $0x30] sm:$0xff]
        %v7338 = vld [vmem:[%s7330 + $0x38] sm:$0xff]
        %v7339 = vld [vmem:[%s7330 + $0x40] sm:$0xff]
        %v7340 = vld [vmem:[%s7330 + $0x48] sm:$0xff]
        %v7341 = vld [vmem:[%s7330 + $0x50] sm:$0xff]
        %v7342 = vld [vmem:[%s7330 + $0x58] sm:$0xff]
        %v7343 = vld [vmem:[%s7330 + $0x60] sm:$0xff]
        %v7344 = vld [vmem:[%s7330 + $0x68] sm:$0xff]
        %v7345 = vld [vmem:[%s7330 + $0x70] sm:$0xff]
        %v7346 = vld [vmem:[%s7330 + $0x78] sm:$0xff]
        %v7347 = vld [vmem:[%s7330 + $0x80] sm:$0xff]
        %v7348 = vld [vmem:[%s7330 + $0x88] sm:$0xff]
        %v7349 = vld [vmem:[%s7330 + $0x90] sm:$0xff]
        %v7350 = vld [vmem:[%s7330 + $0x98] sm:$0xff]
        %v7351 = vld [vmem:[%s7330 + $0xa0] sm:$0xff]
        %v7352 = vld [vmem:[%s7330 + $0xa8] sm:$0xff]
        %v7353 = vld [vmem:[%s7330 + $0xb0] sm:$0xff]
        %v7354 = vld [vmem:[%s7330 + $0xb8] sm:$0xff]
        %v7355 = vld [vmem:[%s7330 + $0xc0] sm:$0xff]
        %v7356 = vld [vmem:[%s7330 + $0xc8] sm:$0xff]
        %v7357 = vld [vmem:[%s7330 + $0xd0] sm:$0xff]
        %v7358 = vld [vmem:[%s7330 + $0xd8] sm:$0xff]
        %v7359 = vld [vmem:[%s7330 + $0xe0] sm:$0xff]
        %v7360 = vld [vmem:[%s7330 + $0xe8] sm:$0xff]
        %v7361 = vld [vmem:[%s7330 + $0xf0] sm:$0xff]
        %v7362 = vld [vmem:[%s7330 + $0xf8] sm:$0xff]
        %v7395 = vunpack.c.l.b16 %v7331
        %v7396 = vunpack.c.h.b16 %v7331
        %v7397 = vunpack.c.l.b16 %v7332
        %v7398 = vunpack.c.h.b16 %v7332
        %v7399 = vunpack.c.l.b16 %v7333
        %v7400 = vunpack.c.h.b16 %v7333
        %v7401 = vunpack.c.l.b16 %v7334
        %v7402 = vunpack.c.h.b16 %v7334
        %v7403 = vunpack.c.l.b16 %v7335
        %v7404 = vunpack.c.h.b16 %v7335
        %v7405 = vunpack.c.l.b16 %v7336
        %v7406 = vunpack.c.h.b16 %v7336
        %v7407 = vunpack.c.l.b16 %v7337
        %v7408 = vunpack.c.h.b16 %v7337
        %v7409 = vunpack.c.l.b16 %v7338
        %v7410 = vunpack.c.h.b16 %v7338
        %v7411 = vunpack.c.l.b16 %v7339
        %v7412 = vunpack.c.h.b16 %v7339
        %v7413 = vunpack.c.l.b16 %v7340
        %v7414 = vunpack.c.h.b16 %v7340
        %v7415 = vunpack.c.l.b16 %v7341
        %v7416 = vunpack.c.h.b16 %v7341
        %v7417 = vunpack.c.l.b16 %v7342
        %v7418 = vunpack.c.h.b16 %v7342
        %v7419 = vunpack.c.l.b16 %v7343
        %v7420 = vunpack.c.h.b16 %v7343
        %v7421 = vunpack.c.l.b16 %v7344
        %v7422 = vunpack.c.h.b16 %v7344
        %v7423 = vunpack.c.l.b16 %v7345
        %v7424 = vunpack.c.h.b16 %v7345
        %v7425 = vunpack.c.l.b16 %v7346
        %v7426 = vunpack.c.h.b16 %v7346
        %v7427 = vunpack.c.l.b16 %v7347
        %v7428 = vunpack.c.h.b16 %v7347
        %v7429 = vunpack.c.l.b16 %v7348
        %v7430 = vunpack.c.h.b16 %v7348
        %v7431 = vunpack.c.l.b16 %v7349
        %v7432 = vunpack.c.h.b16 %v7349
        %v7433 = vunpack.c.l.b16 %v7350
        %v7434 = vunpack.c.h.b16 %v7350
        %v7435 = vunpack.c.l.b16 %v7351
        %v7436 = vunpack.c.h.b16 %v7351
        %v7437 = vunpack.c.l.b16 %v7352
        %v7438 = vunpack.c.h.b16 %v7352
        %v7439 = vunpack.c.l.b16 %v7353
        %v7440 = vunpack.c.h.b16 %v7353
        %v7441 = vunpack.c.l.b16 %v7354
        %v7442 = vunpack.c.h.b16 %v7354
        %v7443 = vunpack.c.l.b16 %v7355
        %v7444 = vunpack.c.h.b16 %v7355
        %v7445 = vunpack.c.l.b16 %v7356
        %v7446 = vunpack.c.h.b16 %v7356
        %v7447 = vunpack.c.l.b16 %v7357
        %v7448 = vunpack.c.h.b16 %v7357
        %v7449 = vunpack.c.l.b16 %v7358
        %v7450 = vunpack.c.h.b16 %v7358
        %v7451 = vunpack.c.l.b16 %v7359
        %v7452 = vunpack.c.h.b16 %v7359
        %v7453 = vunpack.c.l.b16 %v7360
        %v7454 = vunpack.c.h.b16 %v7360
        %v7455 = vunpack.c.l.b16 %v7361
        %v7456 = vunpack.c.h.b16 %v7361
        %v7457 = vunpack.c.l.b16 %v7362
        %v7458 = vunpack.c.h.b16 %v7362
        %v7459 = vpack.c.b16 %v7399, %v7395
        %v7460 = vpack.c.b16 %v7400, %v7396
        %v7461 = vpack.c.b16 %v7401, %v7397
        %v7462 = vpack.c.b16 %v7402, %v7398
        %v7463 = vpack.c.b16 %v7407, %v7403
        %v7464 = vpack.c.b16 %v7408, %v7404
        %v7465 = vpack.c.b16 %v7409, %v7405
        %v7466 = vpack.c.b16 %v7410, %v7406
        %v7467 = vpack.c.b16 %v7415, %v7411
        %v7468 = vpack.c.b16 %v7416, %v7412
        %v7469 = vpack.c.b16 %v7417, %v7413
        %v7470 = vpack.c.b16 %v7418, %v7414
        %v7471 = vpack.c.b16 %v7423, %v7419
        %v7472 = vpack.c.b16 %v7424, %v7420
        %v7473 = vpack.c.b16 %v7425, %v7421
        %v7474 = vpack.c.b16 %v7426, %v7422
        %v7475 = vpack.c.b16 %v7431, %v7427
        %v7476 = vpack.c.b16 %v7432, %v7428
        %v7477 = vpack.c.b16 %v7433, %v7429
        %v7478 = vpack.c.b16 %v7434, %v7430
        %v7479 = vpack.c.b16 %v7439, %v7435
        %v7480 = vpack.c.b16 %v7440, %v7436
        %v7481 = vpack.c.b16 %v7441, %v7437
        %v7482 = vpack.c.b16 %v7442, %v7438
        %v7483 = vpack.c.b16 %v7447, %v7443
        %v7484 = vpack.c.b16 %v7448, %v7444
        %v7485 = vpack.c.b16 %v7449, %v7445
        %v7486 = vpack.c.b16 %v7450, %v7446
        %v7487 = vpack.c.b16 %v7455, %v7451
        %v7488 = vpack.c.b16 %v7456, %v7452
        %v7489 = vpack.c.b16 %v7457, %v7453
        %v7490 = vpack.c.b16 %v7458, %v7454
        %7523 = vmatprep.subr.bf16.mxu0 %v7460
        %7524 = vmatpush1.bf16.msra.mxu0 %v7459
        %7525 = vmatprep.subr.bf16.mxu0 %v7464
        %7526 = vmatpush1.bf16.msra.mxu0 %v7463
        %7527 = vmatprep.subr.bf16.mxu0 %v7468
        %7528 = vmatpush1.bf16.msra.mxu0 %v7467
        %7529 = vmatprep.subr.bf16.mxu0 %v7472
        %7530 = vmatpush1.bf16.msra.mxu0 %v7471
        %7531 = vmatprep.subr.bf16.mxu0 %v7476
        %7532 = vmatpush1.bf16.msra.mxu0 %v7475
        %7533 = vmatprep.subr.bf16.mxu0 %v7480
        %7534 = vmatpush1.bf16.msra.mxu0 %v7479
        %7535 = vmatprep.subr.bf16.mxu0 %v7484
        %7536 = vmatpush1.bf16.msra.mxu0 %v7483
        %7537 = vmatprep.subr.bf16.mxu0 %v7488
        %7538 = vmatpush1.bf16.msra.mxu0 %v7487
        %7539 = vmatprep.subr.bf16.mxu0 0
        %7540 = vmatpush1.bf16.msra.mxu0 0
        %7541 = vmatprep.subr.bf16.mxu0 0
        %7542 = vmatpush1.bf16.msra.mxu0 0
        %7543 = vmatprep.subr.bf16.mxu0 0
        %7544 = vmatpush1.bf16.msra.mxu0 0
        %7545 = vmatprep.subr.bf16.mxu0 0
        %7546 = vmatpush1.bf16.msra.mxu0 0
        %7547 = vmatprep.subr.bf16.mxu0 0
        %7548 = vmatpush1.bf16.msra.mxu0 0
        %7549 = vmatprep.subr.bf16.mxu0 0
        %7550 = vmatpush1.bf16.msra.mxu0 0
        %7551 = vmatprep.subr.bf16.mxu0 0
        %7552 = vmatpush1.bf16.msra.mxu0 0
        %7553 = vmatprep.subr.bf16.mxu0 0
        %7554 = vmatpush1.bf16.msra.mxu0 0
        %7555 = vmatprep.mubr.bf16.mxu0 0
        %7556 = vmatmul.mubr.bf16.gmra.mrb[0].mxu0 %v7327
        %v7557 = vpop.f32.mrb[0].mxu0
        %v7558 = vadd.f32 0.0, %v7557
        %v7559 = vpop.f32.mrb[0].mxu0
        %v7560 = vadd.f32 0.0, %v7559
        %v7561 = vpop.f32.mrb[0].mxu0
        %v7562 = vadd.f32 0.0, %v7561
        %v7563 = vpop.f32.mrb[0].mxu0
        %v7564 = vadd.f32 0.0, %v7563
        %7565 = vmatprep.mubr.bf16.mxu0 0
        %7566 = vmatmul.mubr.bf16.gmra.mrb[0].mxu0 %v7328
        %v7567 = vpop.f32.mrb[0].mxu0
        %v7568 = vadd.f32 0.0, %v7567
        %v7569 = vpop.f32.mrb[0].mxu0
        %v7570 = vadd.f32 0.0, %v7569
        %v7571 = vpop.f32.mrb[0].mxu0
        %v7572 = vadd.f32 0.0, %v7571
        %v7573 = vpop.f32.mrb[0].mxu0
        %v7574 = vadd.f32 0.0, %v7573
        %7575 = vmatprep.mubr.bf16.mxu0 0
        %7576 = vmatmul.mubr.bf16.gmra.mrb[0].mxu0 %v7329
        %v7577 = vpop.f32.mrb[0].mxu0
        %v7578 = vadd.f32 0.0, %v7577
        %v7579 = vpop.f32.mrb[0].mxu0
        %v7580 = vadd.f32 0.0, %v7579
        %v7581 = vpop.f32.mrb[0].mxu0
        %v7582 = vadd.f32 0.0, %v7581
        %v7583 = vpop.f32.mrb[0].mxu0
        %v7584 = vadd.f32 0.0, %v7583
        %7585 = vdwg.mxu0
        %7586 = vmatprep.subr.bf16.mxu0 %v7462
        %7587 = vmatpush1.bf16.msra.mxu0 %v7461
        %7588 = vmatprep.subr.bf16.mxu0 %v7466
        %7589 = vmatpush1.bf16.msra.mxu0 %v7465
        %7590 = vmatprep.subr.bf16.mxu0 %v7470
        %7591 = vmatpush1.bf16.msra.mxu0 %v7469
        %7592 = vmatprep.subr.bf16.mxu0 %v7474
        %7593 = vmatpush1.bf16.msra.mxu0 %v7473
        %7594 = vmatprep.subr.bf16.mxu0 %v7478
        %7595 = vmatpush1.bf16.msra.mxu0 %v7477
        %7596 = vmatprep.subr.bf16.mxu0 %v7482
        %7597 = vmatpush1.bf16.msra.mxu0 %v7481
        %7598 = vmatprep.subr.bf16.mxu0 %v7486
        %7599 = vmatpush1.bf16.msra.mxu0 %v7485
        %7600 = vmatprep.subr.bf16.mxu0 %v7490
        %7601 = vmatpush1.bf16.msra.mxu0 %v7489
        %7602 = vmatprep.subr.bf16.mxu0 0
        %7603 = vmatpush1.bf16.msra.mxu0 0
        %7604 = vmatprep.subr.bf16.mxu0 0
        %7605 = vmatpush1.bf16.msra.mxu0 0
        %7606 = vmatprep.subr.bf16.mxu0 0
        %7607 = vmatpush1.bf16.msra.mxu0 0
        %7608 = vmatprep.subr.bf16.mxu0 0
        %7609 = vmatpush1.bf16.msra.mxu0 0
        %7610 = vmatprep.subr.bf16.mxu0 0
        %7611 = vmatpush1.bf16.msra.mxu0 0
        %7612 = vmatprep.subr.bf16.mxu0 0
        %7613 = vmatpush1.bf16.msra.mxu0 0
        %7614 = vmatprep.subr.bf16.mxu0 0
        %7615 = vmatpush1.bf16.msra.mxu0 0
        %7616 = vmatprep.subr.bf16.mxu0 0
        %7617 = vmatpush1.bf16.msra.mxu0 0
        %7618 = vmatprep.mubr.bf16.mxu0 0
        %7619 = vmatmul.mubr.bf16.gmra.mrb[0].mxu0 %v7327
        %v7620 = vpop.f32.mrb[0].mxu0
        %v7621 = vadd.f32 0.0, %v7620
        %v7622 = vpop.f32.mrb[0].mxu0
        %v7623 = vadd.f32 0.0, %v7622
        %v7624 = vpop.f32.mrb[0].mxu0
        %v7625 = vadd.f32 0.0, %v7624
        %v7626 = vpop.f32.mrb[0].mxu0
        %v7627 = vadd.f32 0.0, %v7626
        %7628 = vmatprep.mubr.bf16.mxu0 0
        %7629 = vmatmul.mubr.bf16.gmra.mrb[0].mxu0 %v7328
        %v7630 = vpop.f32.mrb[0].mxu0
        %v7631 = vadd.f32 0.0, %v7630
        %v7632 = vpop.f32.mrb[0].mxu0
        %v7633 = vadd.f32 0.0, %v7632
        %v7634 = vpop.f32.mrb[0].mxu0
        %v7635 = vadd.f32 0.0, %v7634
        %v7636 = vpop.f32.mrb[0].mxu0
        %v7637 = vadd.f32 0.0, %v7636
        %7638 = vmatprep.mubr.bf16.mxu0 0
        %7639 = vmatmul.mubr.bf16.gmra.mrb[0].mxu0 %v7329
        %v7640 = vpop.f32.mrb[0].mxu0
        %v7641 = vadd.f32 0.0, %v7640
        %v7642 = vpop.f32.mrb[0].mxu0
        %v7643 = vadd.f32 0.0, %v7642
        %v7644 = vpop.f32.mrb[0].mxu0
        %v7645 = vadd.f32 0.0, %v7644
        %v7646 = vpop.f32.mrb[0].mxu0
        %v7647 = vadd.f32 0.0, %v7646
        %7648 = vdwg.mxu0
        %v7649 = vxor.u32 %v7558, 2147483648
        %v7650 = vxor.u32 %v7560, 2147483648
        %v7651 = vxor.u32 %v7621, 2147483648
        %v7652 = vxor.u32 %v7623, 2147483648
        %v7653 = vxor.u32 %v7562, 2147483648
        %v7654 = vxor.u32 %v7564, 2147483648
        %v7655 = vxor.u32 %v7625, 2147483648
        %v7656 = vxor.u32 %v7627, 2147483648
        %v7657 = vxor.u32 %v7568, 2147483648
        %v7658 = vxor.u32 %v7570, 2147483648
        %v7659 = vxor.u32 %v7631, 2147483648
        %v7660 = vxor.u32 %v7633, 2147483648
        %v7661 = vxor.u32 %v7572, 2147483648
        %v7662 = vxor.u32 %v7574, 2147483648
        %v7663 = vxor.u32 %v7635, 2147483648
        %v7664 = vxor.u32 %v7637, 2147483648
        %v7665 = vxor.u32 %v7578, 2147483648
        %v7666 = vxor.u32 %v7580, 2147483648
        %v7667 = vxor.u32 %v7641, 2147483648
        %v7668 = vxor.u32 %v7643, 2147483648
        %v7669 = vxor.u32 %v7582, 2147483648
        %v7670 = vxor.u32 %v7584, 2147483648
        %v7671 = vxor.u32 %v7645, 2147483648
        %v7672 = vxor.u32 %v7647, 2147483648
        %v7673 = vmul.f32 %v7649, 1.442695
        %v7674 = vpow.pop %v7673
        %v7675 = vmul.f32 %v7650, 1.442695
        %v7676 = vpow.pop %v7675
        %v7677 = vmul.f32 %v7651, 1.442695
        %v7678 = vpow.pop %v7677
        %v7679 = vmul.f32 %v7652, 1.442695
        %v7680 = vpow.pop %v7679
        %v7681 = vmul.f32 %v7653, 1.442695
        %v7682 = vpow.pop %v7681
        %v7683 = vmul.f32 %v7654, 1.442695
        %v7684 = vpow.pop %v7683
        %v7685 = vmul.f32 %v7655, 1.442695
        %v7686 = vpow.pop %v7685
        %v7687 = vmul.f32 %v7656, 1.442695
        %v7688 = vpow.pop %v7687
        %v7689 = vmul.f32 %v7657, 1.442695
        %v7690 = vpow.pop %v7689
        %v7691 = vmul.f32 %v7658, 1.442695
        %v7692 = vpow.pop %v7691
        %v7693 = vmul.f32 %v7659, 1.442695
        %v7694 = vpow.pop %v7693
        %v7695 = vmul.f32 %v7660, 1.442695
        %v7696 = vpow.pop %v7695
        %v7697 = vmul.f32 %v7661, 1.442695
        %v7698 = vpow.pop %v7697
        %v7699 = vmul.f32 %v7662, 1.442695
        %v7700 = vpow.pop %v7699
        %v7701 = vmul.f32 %v7663, 1.442695
        %v7702 = vpow.pop %v7701
        %v7703 = vmul.f32 %v7664, 1.442695
        %v7704 = vpow.pop %v7703
        %v7705 = vmul.f32 %v7665, 1.442695
        %v7706 = vpow.pop %v7705
        %v7707 = vmul.f32 %v7666, 1.442695
        %v7708 = vpow.pop %v7707
        %v7709 = vmul.f32 %v7667, 1.442695
        %v7710 = vpow.pop %v7709
        %v7711 = vmul.f32 %v7668, 1.442695
        %v7712 = vpow.pop %v7711
        %v7713 = vmul.f32 %v7669, 1.442695
        %v7714 = vpow.pop %v7713
        %v7715 = vmul.f32 %v7670, 1.442695
        %v7716 = vpow.pop %v7715
        %v7717 = vmul.f32 %v7671, 1.442695
        %v7718 = vpow.pop %v7717
        %v7719 = vmul.f32 %v7672, 1.442695
        %v7720 = vpow.pop %v7719
        %v7721 = vadd.f32 %v7674, 1.0
        %v7722 = vadd.f32 %v7676, 1.0
        %v7723 = vadd.f32 %v7678, 1.0
        %v7724 = vadd.f32 %v7680, 1.0
        %v7725 = vadd.f32 %v7682, 1.0
        %v7726 = vadd.f32 %v7684, 1.0
        %v7727 = vadd.f32 %v7686, 1.0
        %v7728 = vadd.f32 %v7688, 1.0
        %v7729 = vadd.f32 %v7690, 1.0
        %v7730 = vadd.f32 %v7692, 1.0
        %v7731 = vadd.f32 %v7694, 1.0
        %v7732 = vadd.f32 %v7696, 1.0
        %v7733 = vadd.f32 %v7698, 1.0
        %v7734 = vadd.f32 %v7700, 1.0
        %v7735 = vadd.f32 %v7702, 1.0
        %v7736 = vadd.f32 %v7704, 1.0
        %v7737 = vadd.f32 %v7706, 1.0
        %v7738 = vadd.f32 %v7708, 1.0
        %v7739 = vadd.f32 %v7710, 1.0
        %v7740 = vadd.f32 %v7712, 1.0
        %v7741 = vadd.f32 %v7714, 1.0
        %v7742 = vadd.f32 %v7716, 1.0
        %v7743 = vadd.f32 %v7718, 1.0
        %v7744 = vadd.f32 %v7720, 1.0
        %v7745 = vrcp.pop %v7721
        %v7746 = vmul.f32 1.0, %v7745
        %v7747 = vrcp.pop %v7722
        %v7748 = vmul.f32 1.0, %v7747
        %v7749 = vrcp.pop %v7723
        %v7750 = vmul.f32 1.0, %v7749
        %v7751 = vrcp.pop %v7724
        %v7752 = vmul.f32 1.0, %v7751
        %v7753 = vrcp.pop %v7725
        %v7754 = vmul.f32 1.0, %v7753
        %v7755 = vrcp.pop %v7726
        %v7756 = vmul.f32 1.0, %v7755
        %v7757 = vrcp.pop %v7727
        %v7758 = vmul.f32 1.0, %v7757
        %v7759 = vrcp.pop %v7728
        %v7760 = vmul.f32 1.0, %v7759
        %v7761 = vrcp.pop %v7729
        %v7762 = vmul.f32 1.0, %v7761
        %v7763 = vrcp.pop %v7730
        %v7764 = vmul.f32 1.0, %v7763
        %v7765 = vrcp.pop %v7731
        %v7766 = vmul.f32 1.0, %v7765
        %v7767 = vrcp.pop %v7732
        %v7768 = vmul.f32 1.0, %v7767
        %v7769 = vrcp.pop %v7733
        %v7770 = vmul.f32 1.0, %v7769
        %v7771 = vrcp.pop %v7734
        %v7772 = vmul.f32 1.0, %v7771
        %v7773 = vrcp.pop %v7735
        %v7774 = vmul.f32 1.0, %v7773
        %v7775 = vrcp.pop %v7736
        %v7776 = vmul.f32 1.0, %v7775
        %v7777 = vrcp.pop %v7737
        %v7778 = vmul.f32 1.0, %v7777
        %v7779 = vrcp.pop %v7738
        %v7780 = vmul.f32 1.0, %v7779
        %v7781 = vrcp.pop %v7739
        %v7782 = vmul.f32 1.0, %v7781
        %v7783 = vrcp.pop %v7740
        %v7784 = vmul.f32 1.0, %v7783
        %v7785 = vrcp.pop %v7741
        %v7786 = vmul.f32 1.0, %v7785
        %v7787 = vrcp.pop %v7742
        %v7788 = vmul.f32 1.0, %v7787
        %v7789 = vrcp.pop %v7743
        %v7790 = vmul.f32 1.0, %v7789
        %v7791 = vrcp.pop %v7744
        %v7792 = vmul.f32 1.0, %v7791
        %v7793 = vmul.f32 %v4449, %v4573
        %v7794 = vmul.f32 %v4453, %v4577
        %v7795 = vmul.f32 %v4459, %v4583
        %v7796 = vmul.f32 %v4463, %v4587
        %v7797 = vmul.f32 %v4469, %v4593
        %v7798 = vmul.f32 %v4473, %v4597
        %v7799 = vmax.f32 %v7793, 0.0
        %v7800 = vmax.f32 %v7794, 0.0
        %v7801 = vmax.f32 %v7795, 0.0
        %v7802 = vmax.f32 %v7796, 0.0
        %v7803 = vmax.f32 %v7797, 0.0
        %v7804 = vmax.f32 %v7798, 0.0
        %v7805 = vpack.c.bf16 %v7800, %v7799
        %v7806 = vpack.c.bf16 %v7802, %v7801
        %v7807 = vpack.c.bf16 %v7804, %v7803
        %s7808 = scalar_lea.vmem [#allocation6], 1024
        %v7809 = vld [vmem:[%s7808] sm:$0xff]
        %v7810 = vld [vmem:[%s7808 + $0x8] sm:$0xff]
        %v7811 = vld [vmem:[%s7808 + $0x10] sm:$0xff]
        %v7812 = vld [vmem:[%s7808 + $0x18] sm:$0xff]
        %v7813 = vld [vmem:[%s7808 + $0x20] sm:$0xff]
        %v7814 = vld [vmem:[%s7808 + $0x28] sm:$0xff]
        %v7815 = vld [vmem:[%s7808 + $0x30] sm:$0xff]
        %v7816 = vld [vmem:[%s7808 + $0x38] sm:$0xff]
        %v7817 = vld [vmem:[%s7808 + $0x40] sm:$0xff]
        %v7818 = vld [vmem:[%s7808 + $0x48] sm:$0xff]
        %v7819 = vld [vmem:[%s7808 + $0x50] sm:$0xff]
        %v7820 = vld [vmem:[%s7808 + $0x58] sm:$0xff]
        %v7821 = vld [vmem:[%s7808 + $0x60] sm:$0xff]
        %v7822 = vld [vmem:[%s7808 + $0x68] sm:$0xff]
        %v7823 = vld [vmem:[%s7808 + $0x70] sm:$0xff]
        %v7824 = vld [vmem:[%s7808 + $0x78] sm:$0xff]
        %v7825 = vld [vmem:[%s7808 + $0x80] sm:$0xff]
        %v7826 = vld [vmem:[%s7808 + $0x88] sm:$0xff]
        %v7827 = vld [vmem:[%s7808 + $0x90] sm:$0xff]
        %v7828 = vld [vmem:[%s7808 + $0x98] sm:$0xff]
        %v7829 = vld [vmem:[%s7808 + $0xa0] sm:$0xff]
        %v7830 = vld [vmem:[%s7808 + $0xa8] sm:$0xff]
        %v7831 = vld [vmem:[%s7808 + $0xb0] sm:$0xff]
        %v7832 = vld [vmem:[%s7808 + $0xb8] sm:$0xff]
        %v7833 = vld [vmem:[%s7808 + $0xc0] sm:$0xff]
        %v7834 = vld [vmem:[%s7808 + $0xc8] sm:$0xff]
        %v7835 = vld [vmem:[%s7808 + $0xd0] sm:$0xff]
        %v7836 = vld [vmem:[%s7808 + $0xd8] sm:$0xff]
        %v7837 = vld [vmem:[%s7808 + $0xe0] sm:$0xff]
        %v7838 = vld [vmem:[%s7808 + $0xe8] sm:$0xff]
        %v7839 = vld [vmem:[%s7808 + $0xf0] sm:$0xff]
        %v7840 = vld [vmem:[%s7808 + $0xf8] sm:$0xff]
        %v7873 = vunpack.c.l.b16 %v7809
        %v7874 = vunpack.c.h.b16 %v7809
        %v7875 = vunpack.c.l.b16 %v7810
        %v7876 = vunpack.c.h.b16 %v7810
        %v7877 = vunpack.c.l.b16 %v7811
        %v7878 = vunpack.c.h.b16 %v7811
        %v7879 = vunpack.c.l.b16 %v7812
        %v7880 = vunpack.c.h.b16 %v7812
        %v7881 = vunpack.c.l.b16 %v7813
        %v7882 = vunpack.c.h.b16 %v7813
        %v7883 = vunpack.c.l.b16 %v7814
        %v7884 = vunpack.c.h.b16 %v7814
        %v7885 = vunpack.c.l.b16 %v7815
        %v7886 = vunpack.c.h.b16 %v7815
        %v7887 = vunpack.c.l.b16 %v7816
        %v7888 = vunpack.c.h.b16 %v7816
        %v7889 = vunpack.c.l.b16 %v7817
        %v7890 = vunpack.c.h.b16 %v7817
        %v7891 = vunpack.c.l.b16 %v7818
        %v7892 = vunpack.c.h.b16 %v7818
        %v7893 = vunpack.c.l.b16 %v7819
        %v7894 = vunpack.c.h.b16 %v7819
        %v7895 = vunpack.c.l.b16 %v7820
        %v7896 = vunpack.c.h.b16 %v7820
        %v7897 = vunpack.c.l.b16 %v7821
        %v7898 = vunpack.c.h.b16 %v7821
        %v7899 = vunpack.c.l.b16 %v7822
        %v7900 = vunpack.c.h.b16 %v7822
        %v7901 = vunpack.c.l.b16 %v7823
        %v7902 = vunpack.c.h.b16 %v7823
        %v7903 = vunpack.c.l.b16 %v7824
        %v7904 = vunpack.c.h.b16 %v7824
        %v7905 = vunpack.c.l.b16 %v7825
        %v7906 = vunpack.c.h.b16 %v7825
        %v7907 = vunpack.c.l.b16 %v7826
        %v7908 = vunpack.c.h.b16 %v7826
        %v7909 = vunpack.c.l.b16 %v7827
        %v7910 = vunpack.c.h.b16 %v7827
        %v7911 = vunpack.c.l.b16 %v7828
        %v7912 = vunpack.c.h.b16 %v7828
        %v7913 = vunpack.c.l.b16 %v7829
        %v7914 = vunpack.c.h.b16 %v7829
        %v7915 = vunpack.c.l.b16 %v7830
        %v7916 = vunpack.c.h.b16 %v7830
        %v7917 = vunpack.c.l.b16 %v7831
        %v7918 = vunpack.c.h.b16 %v7831
        %v7919 = vunpack.c.l.b16 %v7832
        %v7920 = vunpack.c.h.b16 %v7832
        %v7921 = vunpack.c.l.b16 %v7833
        %v7922 = vunpack.c.h.b16 %v7833
        %v7923 = vunpack.c.l.b16 %v7834
        %v7924 = vunpack.c.h.b16 %v7834
        %v7925 = vunpack.c.l.b16 %v7835
        %v7926 = vunpack.c.h.b16 %v7835
        %v7927 = vunpack.c.l.b16 %v7836
        %v7928 = vunpack.c.h.b16 %v7836
        %v7929 = vunpack.c.l.b16 %v7837
        %v7930 = vunpack.c.h.b16 %v7837
        %v7931 = vunpack.c.l.b16 %v7838
        %v7932 = vunpack.c.h.b16 %v7838
        %v7933 = vunpack.c.l.b16 %v7839
        %v7934 = vunpack.c.h.b16 %v7839
        %v7935 = vunpack.c.l.b16 %v7840
        %v7936 = vunpack.c.h.b16 %v7840
        %v7937 = vpack.c.b16 %v7877, %v7873
        %v7938 = vpack.c.b16 %v7878, %v7874
        %v7939 = vpack.c.b16 %v7879, %v7875
        %v7940 = vpack.c.b16 %v7880, %v7876
        %v7941 = vpack.c.b16 %v7885, %v7881
        %v7942 = vpack.c.b16 %v7886, %v7882
        %v7943 = vpack.c.b16 %v7887, %v7883
        %v7944 = vpack.c.b16 %v7888, %v7884
        %v7945 = vpack.c.b16 %v7893, %v7889
        %v7946 = vpack.c.b16 %v7894, %v7890
        %v7947 = vpack.c.b16 %v7895, %v7891
        %v7948 = vpack.c.b16 %v7896, %v7892
        %v7949 = vpack.c.b16 %v7901, %v7897
        %v7950 = vpack.c.b16 %v7902, %v7898
        %v7951 = vpack.c.b16 %v7903, %v7899
        %v7952 = vpack.c.b16 %v7904, %v7900
        %v7953 = vpack.c.b16 %v7909, %v7905
        %v7954 = vpack.c.b16 %v7910, %v7906
        %v7955 = vpack.c.b16 %v7911, %v7907
        %v7956 = vpack.c.b16 %v7912, %v7908
        %v7957 = vpack.c.b16 %v7917, %v7913
        %v7958 = vpack.c.b16 %v7918, %v7914
        %v7959 = vpack.c.b16 %v7919, %v7915
        %v7960 = vpack.c.b16 %v7920, %v7916
        %v7961 = vpack.c.b16 %v7925, %v7921
        %v7962 = vpack.c.b16 %v7926, %v7922
        %v7963 = vpack.c.b16 %v7927, %v7923
        %v7964 = vpack.c.b16 %v7928, %v7924
        %v7965 = vpack.c.b16 %v7933, %v7929
        %v7966 = vpack.c.b16 %v7934, %v7930
        %v7967 = vpack.c.b16 %v7935, %v7931
        %v7968 = vpack.c.b16 %v7936, %v7932
        %8001 = vmatprep.subr.bf16.mxu0 %v7938
        %8002 = vmatpush1.bf16.msra.mxu0 %v7937
        %8003 = vmatprep.subr.bf16.mxu0 %v7942
        %8004 = vmatpush1.bf16.msra.mxu0 %v7941
        %8005 = vmatprep.subr.bf16.mxu0 %v7946
        %8006 = vmatpush1.bf16.msra.mxu0 %v7945
        %8007 = vmatprep.subr.bf16.mxu0 %v7950
        %8008 = vmatpush1.bf16.msra.mxu0 %v7949
        %8009 = vmatprep.subr.bf16.mxu0 %v7954
        %8010 = vmatpush1.bf16.msra.mxu0 %v7953
        %8011 = vmatprep.subr.bf16.mxu0 %v7958
        %8012 = vmatpush1.bf16.msra.mxu0 %v7957
        %8013 = vmatprep.subr.bf16.mxu0 %v7962
        %8014 = vmatpush1.bf16.msra.mxu0 %v7961
        %8015 = vmatprep.subr.bf16.mxu0 %v7966
        %8016 = vmatpush1.bf16.msra.mxu0 %v7965
        %8017 = vmatprep.subr.bf16.mxu0 0
        %8018 = vmatpush1.bf16.msra.mxu0 0
        %8019 = vmatprep.subr.bf16.mxu0 0
        %8020 = vmatpush1.bf16.msra.mxu0 0
        %8021 = vmatprep.subr.bf16.mxu0 0
        %8022 = vmatpush1.bf16.msra.mxu0 0
        %8023 = vmatprep.subr.bf16.mxu0 0
        %8024 = vmatpush1.bf16.msra.mxu0 0
        %8025 = vmatprep.subr.bf16.mxu0 0
        %8026 = vmatpush1.bf16.msra.mxu0 0
        %8027 = vmatprep.subr.bf16.mxu0 0
        %8028 = vmatpush1.bf16.msra.mxu0 0
        %8029 = vmatprep.subr.bf16.mxu0 0
        %8030 = vmatpush1.bf16.msra.mxu0 0
        %8031 = vmatprep.subr.bf16.mxu0 0
        %8032 = vmatpush1.bf16.msra.mxu0 0
        %8033 = vmatprep.mubr.bf16.mxu0 0
        %8034 = vmatmul.mubr.bf16.gmra.mrb[0].mxu0 %v7805
        %v8035 = vpop.f32.mrb[0].mxu0
        %v8036 = vadd.f32 0.0, %v8035
        %v8037 = vpop.f32.mrb[0].mxu0
        %v8038 = vadd.f32 0.0, %v8037
        %v8039 = vpop.f32.mrb[0].mxu0
        %v8040 = vadd.f32 0.0, %v8039
        %v8041 = vpop.f32.mrb[0].mxu0
        %v8042 = vadd.f32 0.0, %v8041
        %8043 = vmatprep.mubr.bf16.mxu0 0
        %8044 = vmatmul.mubr.bf16.gmra.mrb[0].mxu0 %v7806
        %v8045 = vpop.f32.mrb[0].mxu0
        %v8046 = vadd.f32 0.0, %v8045
        %v8047 = vpop.f32.mrb[0].mxu0
        %v8048 = vadd.f32 0.0, %v8047
        %v8049 = vpop.f32.mrb[0].mxu0
        %v8050 = vadd.f32 0.0, %v8049
        %v8051 = vpop.f32.mrb[0].mxu0
        %v8052 = vadd.f32 0.0, %v8051
        %8053 = vmatprep.mubr.bf16.mxu0 0
        %8054 = vmatmul.mubr.bf16.gmra.mrb[0].mxu0 %v7807
        %v8055 = vpop.f32.mrb[0].mxu0
        %v8056 = vadd.f32 0.0, %v8055
        %v8057 = vpop.f32.mrb[0].mxu0
        %v8058 = vadd.f32 0.0, %v8057
        %v8059 = vpop.f32.mrb[0].mxu0
        %v8060 = vadd.f32 0.0, %v8059
        %v8061 = vpop.f32.mrb[0].mxu0
        %v8062 = vadd.f32 0.0, %v8061
        %8063 = vdwg.mxu0
        %8064 = vmatprep.subr.bf16.mxu0 %v7940
        %8065 = vmatpush1.bf16.msra.mxu0 %v7939
        %8066 = vmatprep.subr.bf16.mxu0 %v7944
        %8067 = vmatpush1.bf16.msra.mxu0 %v7943
        %8068 = vmatprep.subr.bf16.mxu0 %v7948
        %8069 = vmatpush1.bf16.msra.mxu0 %v7947
        %8070 = vmatprep.subr.bf16.mxu0 %v7952
        %8071 = vmatpush1.bf16.msra.mxu0 %v7951
        %8072 = vmatprep.subr.bf16.mxu0 %v7956
        %8073 = vmatpush1.bf16.msra.mxu0 %v7955
        %8074 = vmatprep.subr.bf16.mxu0 %v7960
        %8075 = vmatpush1.bf16.msra.mxu0 %v7959
        %8076 = vmatprep.subr.bf16.mxu0 %v7964
        %8077 = vmatpush1.bf16.msra.mxu0 %v7963
        %8078 = vmatprep.subr.bf16.mxu0 %v7968
        %8079 = vmatpush1.bf16.msra.mxu0 %v7967
        %8080 = vmatprep.subr.bf16.mxu0 0
        %8081 = vmatpush1.bf16.msra.mxu0 0
        %8082 = vmatprep.subr.bf16.mxu0 0
        %8083 = vmatpush1.bf16.msra.mxu0 0
        %8084 = vmatprep.subr.bf16.mxu0 0
        %8085 = vmatpush1.bf16.msra.mxu0 0
        %8086 = vmatprep.subr.bf16.mxu0 0
        %8087 = vmatpush1.bf16.msra.mxu0 0
        %8088 = vmatprep.subr.bf16.mxu0 0
        %8089 = vmatpush1.bf16.msra.mxu0 0
        %8090 = vmatprep.subr.bf16.mxu0 0
        %8091 = vmatpush1.bf16.msra.mxu0 0
        %8092 = vmatprep.subr.bf16.mxu0 0
        %8093 = vmatpush1.bf16.msra.mxu0 0
        %8094 = vmatprep.subr.bf16.mxu0 0
        %8095 = vmatpush1.bf16.msra.mxu0 0
        %8096 = vmatprep.mubr.bf16.mxu0 0
        %8097 = vmatmul.mubr.bf16.gmra.mrb[0].mxu0 %v7805
        %v8098 = vpop.f32.mrb[0].mxu0
        %v8099 = vadd.f32 0.0, %v8098
        %v8100 = vpop.f32.mrb[0].mxu0
        %v8101 = vadd.f32 0.0, %v8100
        %v8102 = vpop.f32.mrb[0].mxu0
        %v8103 = vadd.f32 0.0, %v8102
        %v8104 = vpop.f32.mrb[0].mxu0
        %v8105 = vadd.f32 0.0, %v8104
        %8106 = vmatprep.mubr.bf16.mxu0 0
        %8107 = vmatmul.mubr.bf16.gmra.mrb[0].mxu0 %v7806
        %v8108 = vpop.f32.mrb[0].mxu0
        %v8109 = vadd.f32 0.0, %v8108
        %v8110 = vpop.f32.mrb[0].mxu0
        %v8111 = vadd.f32 0.0, %v8110
        %v8112 = vpop.f32.mrb[0].mxu0
        %v8113 = vadd.f32 0.0, %v8112
        %v8114 = vpop.f32.mrb[0].mxu0
        %v8115 = vadd.f32 0.0, %v8114
        %8116 = vmatprep.mubr.bf16.mxu0 0
        %8117 = vmatmul.mubr.bf16.gmra.mrb[0].mxu0 %v7807
        %v8118 = vpop.f32.mrb[0].mxu0
        %v8119 = vadd.f32 0.0, %v8118
        %v8120 = vpop.f32.mrb[0].mxu0
        %v8121 = vadd.f32 0.0, %v8120
        %v8122 = vpop.f32.mrb[0].mxu0
        %v8123 = vadd.f32 0.0, %v8122
        %v8124 = vpop.f32.mrb[0].mxu0
        %v8125 = vadd.f32 0.0, %v8124
        %8126 = vdwg.mxu0
        %v8127 = vxor.u32 %v8036, 2147483648
        %v8128 = vxor.u32 %v8038, 2147483648
        %v8129 = vxor.u32 %v8099, 2147483648
        %v8130 = vxor.u32 %v8101, 2147483648
        %v8131 = vxor.u32 %v8040, 2147483648
        %v8132 = vxor.u32 %v8042, 2147483648
        %v8133 = vxor.u32 %v8103, 2147483648
        %v8134 = vxor.u32 %v8105, 2147483648
        %v8135 = vxor.u32 %v8046, 2147483648
        %v8136 = vxor.u32 %v8048, 2147483648
        %v8137 = vxor.u32 %v8109, 2147483648
        %v8138 = vxor.u32 %v8111, 2147483648
        %v8139 = vxor.u32 %v8050, 2147483648
        %v8140 = vxor.u32 %v8052, 2147483648
        %v8141 = vxor.u32 %v8113, 2147483648
        %v8142 = vxor.u32 %v8115, 2147483648
        %v8143 = vxor.u32 %v8056, 2147483648
        %v8144 = vxor.u32 %v8058, 2147483648
        %v8145 = vxor.u32 %v8119, 2147483648
        %v8146 = vxor.u32 %v8121, 2147483648
        %v8147 = vxor.u32 %v8060, 2147483648
        %v8148 = vxor.u32 %v8062, 2147483648
        %v8149 = vxor.u32 %v8123, 2147483648
        %v8150 = vxor.u32 %v8125, 2147483648
        %v8151 = vmul.f32 %v8127, 1.442695
        %v8152 = vpow.pop %v8151
        %v8153 = vmul.f32 %v8128, 1.442695
        %v8154 = vpow.pop %v8153
        %v8155 = vmul.f32 %v8129, 1.442695
        %v8156 = vpow.pop %v8155
        %v8157 = vmul.f32 %v8130, 1.442695
        %v8158 = vpow.pop %v8157
        %v8159 = vmul.f32 %v8131, 1.442695
        %v8160 = vpow.pop %v8159
        %v8161 = vmul.f32 %v8132, 1.442695
        %v8162 = vpow.pop %v8161
        %v8163 = vmul.f32 %v8133, 1.442695
        %v8164 = vpow.pop %v8163
        %v8165 = vmul.f32 %v8134, 1.442695
        %v8166 = vpow.pop %v8165
        %v8167 = vmul.f32 %v8135, 1.442695
        %v8168 = vpow.pop %v8167
        %v8169 = vmul.f32 %v8136, 1.442695
        %v8170 = vpow.pop %v8169
        %v8171 = vmul.f32 %v8137, 1.442695
        %v8172 = vpow.pop %v8171
        %v8173 = vmul.f32 %v8138, 1.442695
        %v8174 = vpow.pop %v8173
        %v8175 = vmul.f32 %v8139, 1.442695
        %v8176 = vpow.pop %v8175
        %v8177 = vmul.f32 %v8140, 1.442695
        %v8178 = vpow.pop %v8177
        %v8179 = vmul.f32 %v8141, 1.442695
        %v8180 = vpow.pop %v8179
        %v8181 = vmul.f32 %v8142, 1.442695
        %v8182 = vpow.pop %v8181
        %v8183 = vmul.f32 %v8143, 1.442695
        %v8184 = vpow.pop %v8183
        %v8185 = vmul.f32 %v8144, 1.442695
        %v8186 = vpow.pop %v8185
        %v8187 = vmul.f32 %v8145, 1.442695
        %v8188 = vpow.pop %v8187
        %v8189 = vmul.f32 %v8146, 1.442695
        %v8190 = vpow.pop %v8189
        %v8191 = vmul.f32 %v8147, 1.442695
        %v8192 = vpow.pop %v8191
        %v8193 = vmul.f32 %v8148, 1.442695
        %v8194 = vpow.pop %v8193
        %v8195 = vmul.f32 %v8149, 1.442695
        %v8196 = vpow.pop %v8195
        %v8197 = vmul.f32 %v8150, 1.442695
        %v8198 = vpow.pop %v8197
        %v8199 = vadd.f32 %v8152, 1.0
        %v8200 = vadd.f32 %v8154, 1.0
        %v8201 = vadd.f32 %v8156, 1.0
        %v8202 = vadd.f32 %v8158, 1.0
        %v8203 = vadd.f32 %v8160, 1.0
        %v8204 = vadd.f32 %v8162, 1.0
        %v8205 = vadd.f32 %v8164, 1.0
        %v8206 = vadd.f32 %v8166, 1.0
        %v8207 = vadd.f32 %v8168, 1.0
        %v8208 = vadd.f32 %v8170, 1.0
        %v8209 = vadd.f32 %v8172, 1.0
        %v8210 = vadd.f32 %v8174, 1.0
        %v8211 = vadd.f32 %v8176, 1.0
        %v8212 = vadd.f32 %v8178, 1.0
        %v8213 = vadd.f32 %v8180, 1.0
        %v8214 = vadd.f32 %v8182, 1.0
        %v8215 = vadd.f32 %v8184, 1.0
        %v8216 = vadd.f32 %v8186, 1.0
        %v8217 = vadd.f32 %v8188, 1.0
        %v8218 = vadd.f32 %v8190, 1.0
        %v8219 = vadd.f32 %v8192, 1.0
        %v8220 = vadd.f32 %v8194, 1.0
        %v8221 = vadd.f32 %v8196, 1.0
        %v8222 = vadd.f32 %v8198, 1.0
        %v8223 = vrcp.pop %v8199
        %v8224 = vmul.f32 1.0, %v8223
        %v8225 = vrcp.pop %v8200
        %v8226 = vmul.f32 1.0, %v8225
        %v8227 = vrcp.pop %v8201
        %v8228 = vmul.f32 1.0, %v8227
        %v8229 = vrcp.pop %v8202
        %v8230 = vmul.f32 1.0, %v8229
        %v8231 = vrcp.pop %v8203
        %v8232 = vmul.f32 1.0, %v8231
        %v8233 = vrcp.pop %v8204
        %v8234 = vmul.f32 1.0, %v8233
        %v8235 = vrcp.pop %v8205
        %v8236 = vmul.f32 1.0, %v8235
        %v8237 = vrcp.pop %v8206
        %v8238 = vmul.f32 1.0, %v8237
        %v8239 = vrcp.pop %v8207
        %v8240 = vmul.f32 1.0, %v8239
        %v8241 = vrcp.pop %v8208
        %v8242 = vmul.f32 1.0, %v8241
        %v8243 = vrcp.pop %v8209
        %v8244 = vmul.f32 1.0, %v8243
        %v8245 = vrcp.pop %v8210
        %v8246 = vmul.f32 1.0, %v8245
        %v8247 = vrcp.pop %v8211
        %v8248 = vmul.f32 1.0, %v8247
        %v8249 = vrcp.pop %v8212
        %v8250 = vmul.f32 1.0, %v8249
        %v8251 = vrcp.pop %v8213
        %v8252 = vmul.f32 1.0, %v8251
        %v8253 = vrcp.pop %v8214
        %v8254 = vmul.f32 1.0, %v8253
        %v8255 = vrcp.pop %v8215
        %v8256 = vmul.f32 1.0, %v8255
        %v8257 = vrcp.pop %v8216
        %v8258 = vmul.f32 1.0, %v8257
        %v8259 = vrcp.pop %v8217
        %v8260 = vmul.f32 1.0, %v8259
        %v8261 = vrcp.pop %v8218
        %v8262 = vmul.f32 1.0, %v8261
        %v8263 = vrcp.pop %v8219
        %v8264 = vmul.f32 1.0, %v8263
        %v8265 = vrcp.pop %v8220
        %v8266 = vmul.f32 1.0, %v8265
        %v8267 = vrcp.pop %v8221
        %v8268 = vmul.f32 1.0, %v8267
        %v8269 = vrcp.pop %v8222
        %v8270 = vmul.f32 1.0, %v8269
        %v8271 = vadd.f32 %v7746, %v8224
        %v8272 = vadd.f32 %v7748, %v8226
        %v8273 = vadd.f32 %v7750, %v8228
        %v8274 = vadd.f32 %v7752, %v8230
        %v8275 = vadd.f32 %v7754, %v8232
        %v8276 = vadd.f32 %v7756, %v8234
        %v8277 = vadd.f32 %v7758, %v8236
        %v8278 = vadd.f32 %v7760, %v8238
        %v8279 = vadd.f32 %v7762, %v8240
        %v8280 = vadd.f32 %v7764, %v8242
        %v8281 = vadd.f32 %v7766, %v8244
        %v8282 = vadd.f32 %v7768, %v8246
        %v8283 = vadd.f32 %v7770, %v8248
        %v8284 = vadd.f32 %v7772, %v8250
        %v8285 = vadd.f32 %v7774, %v8252
        %v8286 = vadd.f32 %v7776, %v8254
        %v8287 = vadd.f32 %v7778, %v8256
        %v8288 = vadd.f32 %v7780, %v8258
        %v8289 = vadd.f32 %v7782, %v8260
        %v8290 = vadd.f32 %v7784, %v8262
        %v8291 = vadd.f32 %v7786, %v8264
        %v8292 = vadd.f32 %v7788, %v8266
        %v8293 = vadd.f32 %v7790, %v8268
        %v8294 = vadd.f32 %v7792, %v8270
        %v8295 = vmul.f32 %v4575, %v4699
        %v8296 = vmul.f32 %v4579, %v4703
        %v8297 = vmul.f32 %v4585, %v4709
        %v8298 = vmul.f32 %v4589, %v4713
        %v8299 = vmul.f32 %v4595, %v4719
        %v8300 = vmul.f32 %v4599, %v4723
        %v8301 = vmul.f32 %v8295, %v4701
        %v8302 = vmul.f32 %v8296, %v4705
        %v8303 = vmul.f32 %v8297, %v4711
        %v8304 = vmul.f32 %v8298, %v4715
        %v8305 = vmul.f32 %v8299, %v4721
        %v8306 = vmul.f32 %v8300, %v4725
        %v8307 = vmax.f32 %v8301, 0.0
        %v8308 = vmax.f32 %v8302, 0.0
        %v8309 = vmax.f32 %v8303, 0.0
        %v8310 = vmax.f32 %v8304, 0.0
        %v8311 = vmax.f32 %v8305, 0.0
        %v8312 = vmax.f32 %v8306, 0.0
        %v8313 = vpack.c.bf16 %v8308, %v8307
        %v8314 = vpack.c.bf16 %v8310, %v8309
        %v8315 = vpack.c.bf16 %v8312, %v8311
        %s8316 = scalar_lea.vmem [#allocation6], 1280
        %v8317 = vld [vmem:[%s8316] sm:$0xff]
        %v8318 = vld [vmem:[%s8316 + $0x8] sm:$0xff]
        %v8319 = vld [vmem:[%s8316 + $0x10] sm:$0xff]
        %v8320 = vld [vmem:[%s8316 + $0x18] sm:$0xff]
        %v8321 = vld [vmem:[%s8316 + $0x20] sm:$0xff]
        %v8322 = vld [vmem:[%s8316 + $0x28] sm:$0xff]
        %v8323 = vld [vmem:[%s8316 + $0x30] sm:$0xff]
        %v8324 = vld [vmem:[%s8316 + $0x38] sm:$0xff]
        %v8325 = vld [vmem:[%s8316 + $0x40] sm:$0xff]
        %v8326 = vld [vmem:[%s8316 + $0x48] sm:$0xff]
        %v8327 = vld [vmem:[%s8316 + $0x50] sm:$0xff]
        %v8328 = vld [vmem:[%s8316 + $0x58] sm:$0xff]
        %v8329 = vld [vmem:[%s8316 + $0x60] sm:$0xff]
        %v8330 = vld [vmem:[%s8316 + $0x68] sm:$0xff]
        %v8331 = vld [vmem:[%s8316 + $0x70] sm:$0xff]
        %v8332 = vld [vmem:[%s8316 + $0x78] sm:$0xff]
        %v8333 = vld [vmem:[%s8316 + $0x80] sm:$0xff]
        %v8334 = vld [vmem:[%s8316 + $0x88] sm:$0xff]
        %v8335 = vld [vmem:[%s8316 + $0x90] sm:$0xff]
        %v8336 = vld [vmem:[%s8316 + $0x98] sm:$0xff]
        %v8337 = vld [vmem:[%s8316 + $0xa0] sm:$0xff]
        %v8338 = vld [vmem:[%s8316 + $0xa8] sm:$0xff]
        %v8339 = vld [vmem:[%s8316 + $0xb0] sm:$0xff]
        %v8340 = vld [vmem:[%s8316 + $0xb8] sm:$0xff]
        %v8341 = vld [vmem:[%s8316 + $0xc0] sm:$0xff]
        %v8342 = vld [vmem:[%s8316 + $0xc8] sm:$0xff]
        %v8343 = vld [vmem:[%s8316 + $0xd0] sm:$0xff]
        %v8344 = vld [vmem:[%s8316 + $0xd8] sm:$0xff]
        %v8345 = vld [vmem:[%s8316 + $0xe0] sm:$0xff]
        %v8346 = vld [vmem:[%s8316 + $0xe8] sm:$0xff]
        %v8347 = vld [vmem:[%s8316 + $0xf0] sm:$0xff]
        %v8348 = vld [vmem:[%s8316 + $0xf8] sm:$0xff]
        %v8381 = vunpack.c.l.b16 %v8317
        %v8382 = vunpack.c.h.b16 %v8317
        %v8383 = vunpack.c.l.b16 %v8318
        %v8384 = vunpack.c.h.b16 %v8318
        %v8385 = vunpack.c.l.b16 %v8319
        %v8386 = vunpack.c.h.b16 %v8319
        %v8387 = vunpack.c.l.b16 %v8320
        %v8388 = vunpack.c.h.b16 %v8320
        %v8389 = vunpack.c.l.b16 %v8321
        %v8390 = vunpack.c.h.b16 %v8321
        %v8391 = vunpack.c.l.b16 %v8322
        %v8392 = vunpack.c.h.b16 %v8322
        %v8393 = vunpack.c.l.b16 %v8323
        %v8394 = vunpack.c.h.b16 %v8323
        %v8395 = vunpack.c.l.b16 %v8324
        %v8396 = vunpack.c.h.b16 %v8324
        %v8397 = vunpack.c.l.b16 %v8325
        %v8398 = vunpack.c.h.b16 %v8325
        %v8399 = vunpack.c.l.b16 %v8326
        %v8400 = vunpack.c.h.b16 %v8326
        %v8401 = vunpack.c.l.b16 %v8327
        %v8402 = vunpack.c.h.b16 %v8327
        %v8403 = vunpack.c.l.b16 %v8328
        %v8404 = vunpack.c.h.b16 %v8328
        %v8405 = vunpack.c.l.b16 %v8329
        %v8406 = vunpack.c.h.b16 %v8329
        %v8407 = vunpack.c.l.b16 %v8330
        %v8408 = vunpack.c.h.b16 %v8330
        %v8409 = vunpack.c.l.b16 %v8331
        %v8410 = vunpack.c.h.b16 %v8331
        %v8411 = vunpack.c.l.b16 %v8332
        %v8412 = vunpack.c.h.b16 %v8332
        %v8413 = vunpack.c.l.b16 %v8333
        %v8414 = vunpack.c.h.b16 %v8333
        %v8415 = vunpack.c.l.b16 %v8334
        %v8416 = vunpack.c.h.b16 %v8334
        %v8417 = vunpack.c.l.b16 %v8335
        %v8418 = vunpack.c.h.b16 %v8335
        %v8419 = vunpack.c.l.b16 %v8336
        %v8420 = vunpack.c.h.b16 %v8336
        %v8421 = vunpack.c.l.b16 %v8337
        %v8422 = vunpack.c.h.b16 %v8337
        %v8423 = vunpack.c.l.b16 %v8338
        %v8424 = vunpack.c.h.b16 %v8338
        %v8425 = vunpack.c.l.b16 %v8339
        %v8426 = vunpack.c.h.b16 %v8339
        %v8427 = vunpack.c.l.b16 %v8340
        %v8428 = vunpack.c.h.b16 %v8340
        %v8429 = vunpack.c.l.b16 %v8341
        %v8430 = vunpack.c.h.b16 %v8341
        %v8431 = vunpack.c.l.b16 %v8342
        %v8432 = vunpack.c.h.b16 %v8342
        %v8433 = vunpack.c.l.b16 %v8343
        %v8434 = vunpack.c.h.b16 %v8343
        %v8435 = vunpack.c.l.b16 %v8344
        %v8436 = vunpack.c.h.b16 %v8344
        %v8437 = vunpack.c.l.b16 %v8345
        %v8438 = vunpack.c.h.b16 %v8345
        %v8439 = vunpack.c.l.b16 %v8346
        %v8440 = vunpack.c.h.b16 %v8346
        %v8441 = vunpack.c.l.b16 %v8347
        %v8442 = vunpack.c.h.b16 %v8347
        %v8443 = vunpack.c.l.b16 %v8348
        %v8444 = vunpack.c.h.b16 %v8348
        %v8445 = vpack.c.b16 %v8385, %v8381
        %v8446 = vpack.c.b16 %v8386, %v8382
        %v8447 = vpack.c.b16 %v8387, %v8383
        %v8448 = vpack.c.b16 %v8388, %v8384
        %v8449 = vpack.c.b16 %v8393, %v8389
        %v8450 = vpack.c.b16 %v8394, %v8390
        %v8451 = vpack.c.b16 %v8395, %v8391
        %v8452 = vpack.c.b16 %v8396, %v8392
        %v8453 = vpack.c.b16 %v8401, %v8397
        %v8454 = vpack.c.b16 %v8402, %v8398
        %v8455 = vpack.c.b16 %v8403, %v8399
        %v8456 = vpack.c.b16 %v8404, %v8400
        %v8457 = vpack.c.b16 %v8409, %v8405
        %v8458 = vpack.c.b16 %v8410, %v8406
        %v8459 = vpack.c.b16 %v8411, %v8407
        %v8460 = vpack.c.b16 %v8412, %v8408
        %v8461 = vpack.c.b16 %v8417, %v8413
        %v8462 = vpack.c.b16 %v8418, %v8414
        %v8463 = vpack.c.b16 %v8419, %v8415
        %v8464 = vpack.c.b16 %v8420, %v8416
        %v8465 = vpack.c.b16 %v8425, %v8421
        %v8466 = vpack.c.b16 %v8426, %v8422
        %v8467 = vpack.c.b16 %v8427, %v8423
        %v8468 = vpack.c.b16 %v8428, %v8424
        %v8469 = vpack.c.b16 %v8433, %v8429
        %v8470 = vpack.c.b16 %v8434, %v8430
        %v8471 = vpack.c.b16 %v8435, %v8431
        %v8472 = vpack.c.b16 %v8436, %v8432
        %v8473 = vpack.c.b16 %v8441, %v8437
        %v8474 = vpack.c.b16 %v8442, %v8438
        %v8475 = vpack.c.b16 %v8443, %v8439
        %v8476 = vpack.c.b16 %v8444, %v8440
        %8509 = vmatprep.subr.bf16.mxu0 %v8446
        %8510 = vmatpush1.bf16.msra.mxu0 %v8445
        %8511 = vmatprep.subr.bf16.mxu0 %v8450
        %8512 = vmatpush1.bf16.msra.mxu0 %v8449
        %8513 = vmatprep.subr.bf16.mxu0 %v8454
        %8514 = vmatpush1.bf16.msra.mxu0 %v8453
        %8515 = vmatprep.subr.bf16.mxu0 %v8458
        %8516 = vmatpush1.bf16.msra.mxu0 %v8457
        %8517 = vmatprep.subr.bf16.mxu0 %v8462
        %8518 = vmatpush1.bf16.msra.mxu0 %v8461
        %8519 = vmatprep.subr.bf16.mxu0 %v8466
        %8520 = vmatpush1.bf16.msra.mxu0 %v8465
        %8521 = vmatprep.subr.bf16.mxu0 %v8470
        %8522 = vmatpush1.bf16.msra.mxu0 %v8469
        %8523 = vmatprep.subr.bf16.mxu0 %v8474
        %8524 = vmatpush1.bf16.msra.mxu0 %v8473
        %8525 = vmatprep.subr.bf16.mxu0 0
        %8526 = vmatpush1.bf16.msra.mxu0 0
        %8527 = vmatprep.subr.bf16.mxu0 0
        %8528 = vmatpush1.bf16.msra.mxu0 0
        %8529 = vmatprep.subr.bf16.mxu0 0
        %8530 = vmatpush1.bf16.msra.mxu0 0
        %8531 = vmatprep.subr.bf16.mxu0 0
        %8532 = vmatpush1.bf16.msra.mxu0 0
        %8533 = vmatprep.subr.bf16.mxu0 0
        %8534 = vmatpush1.bf16.msra.mxu0 0
        %8535 = vmatprep.subr.bf16.mxu0 0
        %8536 = vmatpush1.bf16.msra.mxu0 0
        %8537 = vmatprep.subr.bf16.mxu0 0
        %8538 = vmatpush1.bf16.msra.mxu0 0
        %8539 = vmatprep.subr.bf16.mxu0 0
        %8540 = vmatpush1.bf16.msra.mxu0 0
        %8541 = vmatprep.mubr.bf16.mxu0 0
        %8542 = vmatmul.mubr.bf16.gmra.mrb[0].mxu0 %v8313
        %v8543 = vpop.f32.mrb[0].mxu0
        %v8544 = vadd.f32 0.0, %v8543
        %v8545 = vpop.f32.mrb[0].mxu0
        %v8546 = vadd.f32 0.0, %v8545
        %v8547 = vpop.f32.mrb[0].mxu0
        %v8548 = vadd.f32 0.0, %v8547
        %v8549 = vpop.f32.mrb[0].mxu0
        %v8550 = vadd.f32 0.0, %v8549
        %8551 = vmatprep.mubr.bf16.mxu0 0
        %8552 = vmatmul.mubr.bf16.gmra.mrb[0].mxu0 %v8314
        %v8553 = vpop.f32.mrb[0].mxu0
        %v8554 = vadd.f32 0.0, %v8553
        %v8555 = vpop.f32.mrb[0].mxu0
        %v8556 = vadd.f32 0.0, %v8555
        %v8557 = vpop.f32.mrb[0].mxu0
        %v8558 = vadd.f32 0.0, %v8557
        %v8559 = vpop.f32.mrb[0].mxu0
        %v8560 = vadd.f32 0.0, %v8559
        %8561 = vmatprep.mubr.bf16.mxu0 0
        %8562 = vmatmul.mubr.bf16.gmra.mrb[0].mxu0 %v8315
        %v8563 = vpop.f32.mrb[0].mxu0
        %v8564 = vadd.f32 0.0, %v8563
        %v8565 = vpop.f32.mrb[0].mxu0
        %v8566 = vadd.f32 0.0, %v8565
        %v8567 = vpop.f32.mrb[0].mxu0
        %v8568 = vadd.f32 0.0, %v8567
        %v8569 = vpop.f32.mrb[0].mxu0
        %v8570 = vadd.f32 0.0, %v8569
        %8571 = vdwg.mxu0
        %8572 = vmatprep.subr.bf16.mxu0 %v8448
        %8573 = vmatpush1.bf16.msra.mxu0 %v8447
        %8574 = vmatprep.subr.bf16.mxu0 %v8452
        %8575 = vmatpush1.bf16.msra.mxu0 %v8451
        %8576 = vmatprep.subr.bf16.mxu0 %v8456
        %8577 = vmatpush1.bf16.msra.mxu0 %v8455
        %8578 = vmatprep.subr.bf16.mxu0 %v8460
        %8579 = vmatpush1.bf16.msra.mxu0 %v8459
        %8580 = vmatprep.subr.bf16.mxu0 %v8464
        %8581 = vmatpush1.bf16.msra.mxu0 %v8463
        %8582 = vmatprep.subr.bf16.mxu0 %v8468
        %8583 = vmatpush1.bf16.msra.mxu0 %v8467
        %8584 = vmatprep.subr.bf16.mxu0 %v8472
        %8585 = vmatpush1.bf16.msra.mxu0 %v8471
        %8586 = vmatprep.subr.bf16.mxu0 %v8476
        %8587 = vmatpush1.bf16.msra.mxu0 %v8475
        %8588 = vmatprep.subr.bf16.mxu0 0
        %8589 = vmatpush1.bf16.msra.mxu0 0
        %8590 = vmatprep.subr.bf16.mxu0 0
        %8591 = vmatpush1.bf16.msra.mxu0 0
        %8592 = vmatprep.subr.bf16.mxu0 0
        %8593 = vmatpush1.bf16.msra.mxu0 0
        %8594 = vmatprep.subr.bf16.mxu0 0
        %8595 = vmatpush1.bf16.msra.mxu0 0
        %8596 = vmatprep.subr.bf16.mxu0 0
        %8597 = vmatpush1.bf16.msra.mxu0 0
        %8598 = vmatprep.subr.bf16.mxu0 0
        %8599 = vmatpush1.bf16.msra.mxu0 0
        %8600 = vmatprep.subr.bf16.mxu0 0
        %8601 = vmatpush1.bf16.msra.mxu0 0
        %8602 = vmatprep.subr.bf16.mxu0 0
        %8603 = vmatpush1.bf16.msra.mxu0 0
        %8604 = vmatprep.mubr.bf16.mxu0 0
        %8605 = vmatmul.mubr.bf16.gmra.mrb[0].mxu0 %v8313
        %v8606 = vpop.f32.mrb[0].mxu0
        %v8607 = vadd.f32 0.0, %v8606
        %v8608 = vpop.f32.mrb[0].mxu0
        %v8609 = vadd.f32 0.0, %v8608
        %v8610 = vpop.f32.mrb[0].mxu0
        %v8611 = vadd.f32 0.0, %v8610
        %v8612 = vpop.f32.mrb[0].mxu0
        %v8613 = vadd.f32 0.0, %v8612
        %8614 = vmatprep.mubr.bf16.mxu0 0
        %8615 = vmatmul.mubr.bf16.gmra.mrb[0].mxu0 %v8314
        %v8616 = vpop.f32.mrb[0].mxu0
        %v8617 = vadd.f32 0.0, %v8616
        %v8618 = vpop.f32.mrb[0].mxu0
        %v8619 = vadd.f32 0.0, %v8618
        %v8620 = vpop.f32.mrb[0].mxu0
        %v8621 = vadd.f32 0.0, %v8620
        %v8622 = vpop.f32.mrb[0].mxu0
        %v8623 = vadd.f32 0.0, %v8622
        %8624 = vmatprep.mubr.bf16.mxu0 0
        %8625 = vmatmul.mubr.bf16.gmra.mrb[0].mxu0 %v8315
        %v8626 = vpop.f32.mrb[0].mxu0
        %v8627 = vadd.f32 0.0, %v8626
        %v8628 = vpop.f32.mrb[0].mxu0
        %v8629 = vadd.f32 0.0, %v8628
        %v8630 = vpop.f32.mrb[0].mxu0
        %v8631 = vadd.f32 0.0, %v8630
        %v8632 = vpop.f32.mrb[0].mxu0
        %v8633 = vadd.f32 0.0, %v8632
        %8634 = vdwg.mxu0
        %v8635 = vxor.u32 %v8544, 2147483648
        %v8636 = vxor.u32 %v8546, 2147483648
        %v8637 = vxor.u32 %v8607, 2147483648
        %v8638 = vxor.u32 %v8609, 2147483648
        %v8639 = vxor.u32 %v8548, 2147483648
        %v8640 = vxor.u32 %v8550, 2147483648
        %v8641 = vxor.u32 %v8611, 2147483648
        %v8642 = vxor.u32 %v8613, 2147483648
        %v8643 = vxor.u32 %v8554, 2147483648
        %v8644 = vxor.u32 %v8556, 2147483648
        %v8645 = vxor.u32 %v8617, 2147483648
        %v8646 = vxor.u32 %v8619, 2147483648
        %v8647 = vxor.u32 %v8558, 2147483648
        %v8648 = vxor.u32 %v8560, 2147483648
        %v8649 = vxor.u32 %v8621, 2147483648
        %v8650 = vxor.u32 %v8623, 2147483648
        %v8651 = vxor.u32 %v8564, 2147483648
        %v8652 = vxor.u32 %v8566, 2147483648
        %v8653 = vxor.u32 %v8627, 2147483648
        %v8654 = vxor.u32 %v8629, 2147483648
        %v8655 = vxor.u32 %v8568, 2147483648
        %v8656 = vxor.u32 %v8570, 2147483648
        %v8657 = vxor.u32 %v8631, 2147483648
        %v8658 = vxor.u32 %v8633, 2147483648
        %v8659 = vmul.f32 %v8635, 1.442695
        %v8660 = vpow.pop %v8659
        %v8661 = vmul.f32 %v8636, 1.442695
        %v8662 = vpow.pop %v8661
        %v8663 = vmul.f32 %v8637, 1.442695
        %v8664 = vpow.pop %v8663
        %v8665 = vmul.f32 %v8638, 1.442695
        %v8666 = vpow.pop %v8665
        %v8667 = vmul.f32 %v8639, 1.442695
        %v8668 = vpow.pop %v8667
        %v8669 = vmul.f32 %v8640, 1.442695
        %v8670 = vpow.pop %v8669
        %v8671 = vmul.f32 %v8641, 1.442695
        %v8672 = vpow.pop %v8671
        %v8673 = vmul.f32 %v8642, 1.442695
        %v8674 = vpow.pop %v8673
        %v8675 = vmul.f32 %v8643, 1.442695
        %v8676 = vpow.pop %v8675
        %v8677 = vmul.f32 %v8644, 1.442695
        %v8678 = vpow.pop %v8677
        %v8679 = vmul.f32 %v8645, 1.442695
        %v8680 = vpow.pop %v8679
        %v8681 = vmul.f32 %v8646, 1.442695
        %v8682 = vpow.pop %v8681
        %v8683 = vmul.f32 %v8647, 1.442695
        %v8684 = vpow.pop %v8683
        %v8685 = vmul.f32 %v8648, 1.442695
        %v8686 = vpow.pop %v8685
        %v8687 = vmul.f32 %v8649, 1.442695
        %v8688 = vpow.pop %v8687
        %v8689 = vmul.f32 %v8650, 1.442695
        %v8690 = vpow.pop %v8689
        %v8691 = vmul.f32 %v8651, 1.442695
        %v8692 = vpow.pop %v8691
        %v8693 = vmul.f32 %v8652, 1.442695
        %v8694 = vpow.pop %v8693
        %v8695 = vmul.f32 %v8653, 1.442695
        %v8696 = vpow.pop %v8695
        %v8697 = vmul.f32 %v8654, 1.442695
        %v8698 = vpow.pop %v8697
        %v8699 = vmul.f32 %v8655, 1.442695
        %v8700 = vpow.pop %v8699
        %v8701 = vmul.f32 %v8656, 1.442695
        %v8702 = vpow.pop %v8701
        %v8703 = vmul.f32 %v8657, 1.442695
        %v8704 = vpow.pop %v8703
        %v8705 = vmul.f32 %v8658, 1.442695
        %v8706 = vpow.pop %v8705
        %v8707 = vadd.f32 %v8660, 1.0
        %v8708 = vadd.f32 %v8662, 1.0
        %v8709 = vadd.f32 %v8664, 1.0
        %v8710 = vadd.f32 %v8666, 1.0
        %v8711 = vadd.f32 %v8668, 1.0
        %v8712 = vadd.f32 %v8670, 1.0
        %v8713 = vadd.f32 %v8672, 1.0
        %v8714 = vadd.f32 %v8674, 1.0
        %v8715 = vadd.f32 %v8676, 1.0
        %v8716 = vadd.f32 %v8678, 1.0
        %v8717 = vadd.f32 %v8680, 1.0
        %v8718 = vadd.f32 %v8682, 1.0
        %v8719 = vadd.f32 %v8684, 1.0
        %v8720 = vadd.f32 %v8686, 1.0
        %v8721 = vadd.f32 %v8688, 1.0
        %v8722 = vadd.f32 %v8690, 1.0
        %v8723 = vadd.f32 %v8692, 1.0
        %v8724 = vadd.f32 %v8694, 1.0
        %v8725 = vadd.f32 %v8696, 1.0
        %v8726 = vadd.f32 %v8698, 1.0
        %v8727 = vadd.f32 %v8700, 1.0
        %v8728 = vadd.f32 %v8702, 1.0
        %v8729 = vadd.f32 %v8704, 1.0
        %v8730 = vadd.f32 %v8706, 1.0
        %v8731 = vrcp.pop %v8707
        %v8732 = vmul.f32 1.0, %v8731
        %v8733 = vrcp.pop %v8708
        %v8734 = vmul.f32 1.0, %v8733
        %v8735 = vrcp.pop %v8709
        %v8736 = vmul.f32 1.0, %v8735
        %v8737 = vrcp.pop %v8710
        %v8738 = vmul.f32 1.0, %v8737
        %v8739 = vrcp.pop %v8711
        %v8740 = vmul.f32 1.0, %v8739
        %v8741 = vrcp.pop %v8712
        %v8742 = vmul.f32 1.0, %v8741
        %v8743 = vrcp.pop %v8713
        %v8744 = vmul.f32 1.0, %v8743
        %v8745 = vrcp.pop %v8714
        %v8746 = vmul.f32 1.0, %v8745
        %v8747 = vrcp.pop %v8715
        %v8748 = vmul.f32 1.0, %v8747
        %v8749 = vrcp.pop %v8716
        %v8750 = vmul.f32 1.0, %v8749
        %v8751 = vrcp.pop %v8717
        %v8752 = vmul.f32 1.0, %v8751
        %v8753 = vrcp.pop %v8718
        %v8754 = vmul.f32 1.0, %v8753
        %v8755 = vrcp.pop %v8719
        %v8756 = vmul.f32 1.0, %v8755
        %v8757 = vrcp.pop %v8720
        %v8758 = vmul.f32 1.0, %v8757
        %v8759 = vrcp.pop %v8721
        %v8760 = vmul.f32 1.0, %v8759
        %v8761 = vrcp.pop %v8722
        %v8762 = vmul.f32 1.0, %v8761
        %v8763 = vrcp.pop %v8723
        %v8764 = vmul.f32 1.0, %v8763
        %v8765 = vrcp.pop %v8724
        %v8766 = vmul.f32 1.0, %v8765
        %v8767 = vrcp.pop %v8725
        %v8768 = vmul.f32 1.0, %v8767
        %v8769 = vrcp.pop %v8726
        %v8770 = vmul.f32 1.0, %v8769
        %v8771 = vrcp.pop %v8727
        %v8772 = vmul.f32 1.0, %v8771
        %v8773 = vrcp.pop %v8728
        %v8774 = vmul.f32 1.0, %v8773
        %v8775 = vrcp.pop %v8729
        %v8776 = vmul.f32 1.0, %v8775
        %v8777 = vrcp.pop %v8730
        %v8778 = vmul.f32 1.0, %v8777
        %v8779 = vadd.f32 %v8271, %v8732
        %v8780 = vadd.f32 %v8272, %v8734
        %v8781 = vadd.f32 %v8273, %v8736
        %v8782 = vadd.f32 %v8274, %v8738
        %v8783 = vadd.f32 %v8275, %v8740
        %v8784 = vadd.f32 %v8276, %v8742
        %v8785 = vadd.f32 %v8277, %v8744
        %v8786 = vadd.f32 %v8278, %v8746
        %v8787 = vadd.f32 %v8279, %v8748
        %v8788 = vadd.f32 %v8280, %v8750
        %v8789 = vadd.f32 %v8281, %v8752
        %v8790 = vadd.f32 %v8282, %v8754
        %v8791 = vadd.f32 %v8283, %v8756
        %v8792 = vadd.f32 %v8284, %v8758
        %v8793 = vadd.f32 %v8285, %v8760
        %v8794 = vadd.f32 %v8286, %v8762
        %v8795 = vadd.f32 %v8287, %v8764
        %v8796 = vadd.f32 %v8288, %v8766
        %v8797 = vadd.f32 %v8289, %v8768
        %v8798 = vadd.f32 %v8290, %v8770
        %v8799 = vadd.f32 %v8291, %v8772
        %v8800 = vadd.f32 %v8292, %v8774
        %v8801 = vadd.f32 %v8293, %v8776
        %v8802 = vadd.f32 %v8294, %v8778
        %v8803 = vmul.f32 %v221, %v8779
        %v8804 = vmul.f32 %v222, %v8780
        %v8805 = vmul.f32 %v223, %v8781
        %v8806 = vmul.f32 %v224, %v8782
        %v8807 = vmul.f32 %v225, %v8783
        %v8808 = vmul.f32 %v226, %v8784
        %v8809 = vmul.f32 %v227, %v8785
        %v8810 = vmul.f32 %v228, %v8786
        %v8811 = vmul.f32 %v229, %v8787
        %v8812 = vmul.f32 %v230, %v8788
        %v8813 = vmul.f32 %v231, %v8789
        %v8814 = vmul.f32 %v232, %v8790
        %v8815 = vmul.f32 %v233, %v8791
        %v8816 = vmul.f32 %v234, %v8792
        %v8817 = vmul.f32 %v235, %v8793
        %v8818 = vmul.f32 %v236, %v8794
        %v8819 = vmul.f32 %v237, %v8795
        %v8820 = vmul.f32 %v238, %v8796
        %v8821 = vmul.f32 %v239, %v8797
        %v8822 = vmul.f32 %v240, %v8798
        %v8823 = vmul.f32 %v241, %v8799
        %v8824 = vmul.f32 %v242, %v8800
        %v8825 = vmul.f32 %v243, %v8801
        %v8826 = vmul.f32 %v244, %v8802
        %v8827 = vmul.f32 %v8803, 0.33333334
        %v8828 = vmul.f32 %v8804, 0.33333334
        %v8829 = vmul.f32 %v8805, 0.33333334
        %v8830 = vmul.f32 %v8806, 0.33333334
        %v8831 = vmul.f32 %v8807, 0.33333334
        %v8832 = vmul.f32 %v8808, 0.33333334
        %v8833 = vmul.f32 %v8809, 0.33333334
        %v8834 = vmul.f32 %v8810, 0.33333334
        %v8835 = vmul.f32 %v8811, 0.33333334
        %v8836 = vmul.f32 %v8812, 0.33333334
        %v8837 = vmul.f32 %v8813, 0.33333334
        %v8838 = vmul.f32 %v8814, 0.33333334
        %v8839 = vmul.f32 %v8815, 0.33333334
        %v8840 = vmul.f32 %v8816, 0.33333334
        %v8841 = vmul.f32 %v8817, 0.33333334
        %v8842 = vmul.f32 %v8818, 0.33333334
        %v8843 = vmul.f32 %v8819, 0.33333334
        %v8844 = vmul.f32 %v8820, 0.33333334
        %v8845 = vmul.f32 %v8821, 0.33333334
        %v8846 = vmul.f32 %v8822, 0.33333334
        %v8847 = vmul.f32 %v8823, 0.33333334
        %v8848 = vmul.f32 %v8824, 0.33333334
        %v8849 = vmul.f32 %v8825, 0.33333334
        %v8850 = vmul.f32 %v8826, 0.33333334
        %v8851 = vrot.slane %v8827, 4
        %v8852 = vadd.f32 %v8827, %v8851
        %v8853 = vrot.slane %v8852, 2
        %v8854 = vadd.f32 %v8852, %v8853
        %v8855 = vrot.slane %v8854, 1
        %v8856 = vadd.f32 %v8854, %v8855
        %v8857 = vrot.slane %v8828, 4
        %v8858 = vadd.f32 %v8828, %v8857
        %v8859 = vrot.slane %v8858, 2
        %v8860 = vadd.f32 %v8858, %v8859
        %v8861 = vrot.slane %v8860, 1
        %v8862 = vadd.f32 %v8860, %v8861
        %v8863 = vrot.slane %v8829, 4
        %v8864 = vadd.f32 %v8829, %v8863
        %v8865 = vrot.slane %v8864, 2
        %v8866 = vadd.f32 %v8864, %v8865
        %v8867 = vrot.slane %v8866, 1
        %v8868 = vadd.f32 %v8866, %v8867
        %v8869 = vrot.slane %v8830, 4
        %v8870 = vadd.f32 %v8830, %v8869
        %v8871 = vrot.slane %v8870, 2
        %v8872 = vadd.f32 %v8870, %v8871
        %v8873 = vrot.slane %v8872, 1
        %v8874 = vadd.f32 %v8872, %v8873
        %v8875 = vrot.slane %v8831, 4
        %v8876 = vadd.f32 %v8831, %v8875
        %v8877 = vrot.slane %v8876, 2
        %v8878 = vadd.f32 %v8876, %v8877
        %v8879 = vrot.slane %v8878, 1
        %v8880 = vadd.f32 %v8878, %v8879
        %v8881 = vrot.slane %v8832, 4
        %v8882 = vadd.f32 %v8832, %v8881
        %v8883 = vrot.slane %v8882, 2
        %v8884 = vadd.f32 %v8882, %v8883
        %v8885 = vrot.slane %v8884, 1
        %v8886 = vadd.f32 %v8884, %v8885
        %v8887 = vrot.slane %v8833, 4
        %v8888 = vadd.f32 %v8833, %v8887
        %v8889 = vrot.slane %v8888, 2
        %v8890 = vadd.f32 %v8888, %v8889
        %v8891 = vrot.slane %v8890, 1
        %v8892 = vadd.f32 %v8890, %v8891
        %v8893 = vrot.slane %v8834, 4
        %v8894 = vadd.f32 %v8834, %v8893
        %v8895 = vrot.slane %v8894, 2
        %v8896 = vadd.f32 %v8894, %v8895
        %v8897 = vrot.slane %v8896, 1
        %v8898 = vadd.f32 %v8896, %v8897
        %v8899 = vrot.slane %v8835, 4
        %v8900 = vadd.f32 %v8835, %v8899
        %v8901 = vrot.slane %v8900, 2
        %v8902 = vadd.f32 %v8900, %v8901
        %v8903 = vrot.slane %v8902, 1
        %v8904 = vadd.f32 %v8902, %v8903
        %v8905 = vrot.slane %v8836, 4
        %v8906 = vadd.f32 %v8836, %v8905
        %v8907 = vrot.slane %v8906, 2
        %v8908 = vadd.f32 %v8906, %v8907
        %v8909 = vrot.slane %v8908, 1
        %v8910 = vadd.f32 %v8908, %v8909
        %v8911 = vrot.slane %v8837, 4
        %v8912 = vadd.f32 %v8837, %v8911
        %v8913 = vrot.slane %v8912, 2
        %v8914 = vadd.f32 %v8912, %v8913
        %v8915 = vrot.slane %v8914, 1
        %v8916 = vadd.f32 %v8914, %v8915
        %v8917 = vrot.slane %v8838, 4
        %v8918 = vadd.f32 %v8838, %v8917
        %v8919 = vrot.slane %v8918, 2
        %v8920 = vadd.f32 %v8918, %v8919
        %v8921 = vrot.slane %v8920, 1
        %v8922 = vadd.f32 %v8920, %v8921
        %v8923 = vrot.slane %v8839, 4
        %v8924 = vadd.f32 %v8839, %v8923
        %v8925 = vrot.slane %v8924, 2
        %v8926 = vadd.f32 %v8924, %v8925
        %v8927 = vrot.slane %v8926, 1
        %v8928 = vadd.f32 %v8926, %v8927
        %v8929 = vrot.slane %v8840, 4
        %v8930 = vadd.f32 %v8840, %v8929
        %v8931 = vrot.slane %v8930, 2
        %v8932 = vadd.f32 %v8930, %v8931
        %v8933 = vrot.slane %v8932, 1
        %v8934 = vadd.f32 %v8932, %v8933
        %v8935 = vrot.slane %v8841, 4
        %v8936 = vadd.f32 %v8841, %v8935
        %v8937 = vrot.slane %v8936, 2
        %v8938 = vadd.f32 %v8936, %v8937
        %v8939 = vrot.slane %v8938, 1
        %v8940 = vadd.f32 %v8938, %v8939
        %v8941 = vrot.slane %v8842, 4
        %v8942 = vadd.f32 %v8842, %v8941
        %v8943 = vrot.slane %v8942, 2
        %v8944 = vadd.f32 %v8942, %v8943
        %v8945 = vrot.slane %v8944, 1
        %v8946 = vadd.f32 %v8944, %v8945
        %v8947 = vrot.slane %v8843, 4
        %v8948 = vadd.f32 %v8843, %v8947
        %v8949 = vrot.slane %v8948, 2
        %v8950 = vadd.f32 %v8948, %v8949
        %v8951 = vrot.slane %v8950, 1
        %v8952 = vadd.f32 %v8950, %v8951
        %v8953 = vrot.slane %v8844, 4
        %v8954 = vadd.f32 %v8844, %v8953
        %v8955 = vrot.slane %v8954, 2
        %v8956 = vadd.f32 %v8954, %v8955
        %v8957 = vrot.slane %v8956, 1
        %v8958 = vadd.f32 %v8956, %v8957
        %v8959 = vrot.slane %v8845, 4
        %v8960 = vadd.f32 %v8845, %v8959
        %v8961 = vrot.slane %v8960, 2
        %v8962 = vadd.f32 %v8960, %v8961
        %v8963 = vrot.slane %v8962, 1
        %v8964 = vadd.f32 %v8962, %v8963
        %v8965 = vrot.slane %v8846, 4
        %v8966 = vadd.f32 %v8846, %v8965
        %v8967 = vrot.slane %v8966, 2
        %v8968 = vadd.f32 %v8966, %v8967
        %v8969 = vrot.slane %v8968, 1
        %v8970 = vadd.f32 %v8968, %v8969
        %v8971 = vrot.slane %v8847, 4
        %v8972 = vadd.f32 %v8847, %v8971
        %v8973 = vrot.slane %v8972, 2
        %v8974 = vadd.f32 %v8972, %v8973
        %v8975 = vrot.slane %v8974, 1
        %v8976 = vadd.f32 %v8974, %v8975
        %v8977 = vrot.slane %v8848, 4
        %v8978 = vadd.f32 %v8848, %v8977
        %v8979 = vrot.slane %v8978, 2
        %v8980 = vadd.f32 %v8978, %v8979
        %v8981 = vrot.slane %v8980, 1
        %v8982 = vadd.f32 %v8980, %v8981
        %v8983 = vrot.slane %v8849, 4
        %v8984 = vadd.f32 %v8849, %v8983
        %v8985 = vrot.slane %v8984, 2
        %v8986 = vadd.f32 %v8984, %v8985
        %v8987 = vrot.slane %v8986, 1
        %v8988 = vadd.f32 %v8986, %v8987
        %v8989 = vrot.slane %v8850, 4
        %v8990 = vadd.f32 %v8850, %v8989
        %v8991 = vrot.slane %v8990, 2
        %v8992 = vadd.f32 %v8990, %v8991
        %v8993 = vrot.slane %v8992, 1
        %v8994 = vadd.f32 %v8992, %v8993
        %v8995 = vmul.f32 %v8856, %v5996
        %v8996 = vmul.f32 %v8862, %v5996
        %v8997 = vmul.f32 %v8868, %v5996
        %v8998 = vmul.f32 %v8874, %v5996
        %v8999 = vmul.f32 %v8880, %v5996
        %v9000 = vmul.f32 %v8886, %v5996
        %v9001 = vmul.f32 %v8892, %v5996
        %v9002 = vmul.f32 %v8898, %v5996
        %v9003 = vmul.f32 %v8904, %v5996
        %v9004 = vmul.f32 %v8910, %v5996
        %v9005 = vmul.f32 %v8916, %v5996
        %v9006 = vmul.f32 %v8922, %v5996
        %v9007 = vmul.f32 %v8928, %v5996
        %v9008 = vmul.f32 %v8934, %v5996
        %v9009 = vmul.f32 %v8940, %v5996
        %v9010 = vmul.f32 %v8946, %v5996
        %v9011 = vmul.f32 %v8952, %v5996
        %v9012 = vmul.f32 %v8958, %v5996
        %v9013 = vmul.f32 %v8964, %v5996
        %v9014 = vmul.f32 %v8970, %v5996
        %v9015 = vmul.f32 %v8976, %v5996
        %v9016 = vmul.f32 %v8982, %v5996
        %v9017 = vmul.f32 %v8988, %v5996
        %v9018 = vmul.f32 %v8994, %v5996
        %v9043 = vsel %vm6045, %v8999, %v8995
        %v9044 = vsel %vm6047, %v9003, %v9043
        %v9045 = vsel %vm6049, %v9007, %v9044
        %v9046 = vsel %vm6051, %v9011, %v9045
        %v9047 = vsel %vm6053, %v9015, %v9046
        %v9048 = vsel %vm6045, %v9000, %v8996
        %v9049 = vsel %vm6047, %v9004, %v9048
        %v9050 = vsel %vm6049, %v9008, %v9049
        %v9051 = vsel %vm6051, %v9012, %v9050
        %v9052 = vsel %vm6053, %v9016, %v9051
        %v9053 = vsel %vm6045, %v9001, %v8997
        %v9054 = vsel %vm6047, %v9005, %v9053
        %v9055 = vsel %vm6049, %v9009, %v9054
        %v9056 = vsel %vm6051, %v9013, %v9055
        %v9057 = vsel %vm6053, %v9017, %v9056
        %v9058 = vsel %vm6045, %v9002, %v8998
        %v9059 = vsel %vm6047, %v9006, %v9058
        %v9060 = vsel %vm6049, %v9010, %v9059
        %v9061 = vsel %vm6051, %v9014, %v9060
        %v9062 = vsel %vm6053, %v9018, %v9061
        %s9067 = scalar_lea.vmem %s219, 64
        %9068 = vst [vmem:[%s9067] sm:$0x3f] %v9047
        %9069 = vst [vmem:[%s9067 + $0x8] sm:$0x3f] %v9052
        %9070 = vst [vmem:[%s9067 + $0x10] sm:$0x3f] %v9057
        %9071 = vst [vmem:[%s9067 + $0x18] sm:$0x3f] %v9062
        %v9072 = vmax.f32 %v4825, 0.0
        %v9073 = vmax.f32 %v4829, 0.0
        %v9074 = vmax.f32 %v4835, 0.0
        %v9075 = vmax.f32 %v4839, 0.0
        %v9076 = vmax.f32 %v4845, 0.0
        %v9077 = vmax.f32 %v4849, 0.0
        %v9078 = vpack.c.bf16 %v9073, %v9072
        %v9079 = vpack.c.bf16 %v9075, %v9074
        %v9080 = vpack.c.bf16 %v9077, %v9076
        %s9081 = scalar_lea.vmem [#allocation6], 1536
        %v9082 = vld [vmem:[%s9081] sm:$0xff]
        %v9083 = vld [vmem:[%s9081 + $0x8] sm:$0xff]
        %v9084 = vld [vmem:[%s9081 + $0x10] sm:$0xff]
        %v9085 = vld [vmem:[%s9081 + $0x18] sm:$0xff]
        %v9086 = vld [vmem:[%s9081 + $0x20] sm:$0xff]
        %v9087 = vld [vmem:[%s9081 + $0x28] sm:$0xff]
        %v9088 = vld [vmem:[%s9081 + $0x30] sm:$0xff]
        %v9089 = vld [vmem:[%s9081 + $0x38] sm:$0xff]
        %v9090 = vld [vmem:[%s9081 + $0x40] sm:$0xff]
        %v9091 = vld [vmem:[%s9081 + $0x48] sm:$0xff]
        %v9092 = vld [vmem:[%s9081 + $0x50] sm:$0xff]
        %v9093 = vld [vmem:[%s9081 + $0x58] sm:$0xff]
        %v9094 = vld [vmem:[%s9081 + $0x60] sm:$0xff]
        %v9095 = vld [vmem:[%s9081 + $0x68] sm:$0xff]
        %v9096 = vld [vmem:[%s9081 + $0x70] sm:$0xff]
        %v9097 = vld [vmem:[%s9081 + $0x78] sm:$0xff]
        %v9098 = vld [vmem:[%s9081 + $0x80] sm:$0xff]
        %v9099 = vld [vmem:[%s9081 + $0x88] sm:$0xff]
        %v9100 = vld [vmem:[%s9081 + $0x90] sm:$0xff]
        %v9101 = vld [vmem:[%s9081 + $0x98] sm:$0xff]
        %v9102 = vld [vmem:[%s9081 + $0xa0] sm:$0xff]
        %v9103 = vld [vmem:[%s9081 + $0xa8] sm:$0xff]
        %v9104 = vld [vmem:[%s9081 + $0xb0] sm:$0xff]
        %v9105 = vld [vmem:[%s9081 + $0xb8] sm:$0xff]
        %v9106 = vld [vmem:[%s9081 + $0xc0] sm:$0xff]
        %v9107 = vld [vmem:[%s9081 + $0xc8] sm:$0xff]
        %v9108 = vld [vmem:[%s9081 + $0xd0] sm:$0xff]
        %v9109 = vld [vmem:[%s9081 + $0xd8] sm:$0xff]
        %v9110 = vld [vmem:[%s9081 + $0xe0] sm:$0xff]
        %v9111 = vld [vmem:[%s9081 + $0xe8] sm:$0xff]
        %v9112 = vld [vmem:[%s9081 + $0xf0] sm:$0xff]
        %v9113 = vld [vmem:[%s9081 + $0xf8] sm:$0xff]
        %v9146 = vunpack.c.l.b16 %v9082
        %v9147 = vunpack.c.h.b16 %v9082
        %v9148 = vunpack.c.l.b16 %v9083
        %v9149 = vunpack.c.h.b16 %v9083
        %v9150 = vunpack.c.l.b16 %v9084
        %v9151 = vunpack.c.h.b16 %v9084
        %v9152 = vunpack.c.l.b16 %v9085
        %v9153 = vunpack.c.h.b16 %v9085
        %v9154 = vunpack.c.l.b16 %v9086
        %v9155 = vunpack.c.h.b16 %v9086
        %v9156 = vunpack.c.l.b16 %v9087
        %v9157 = vunpack.c.h.b16 %v9087
        %v9158 = vunpack.c.l.b16 %v9088
        %v9159 = vunpack.c.h.b16 %v9088
        %v9160 = vunpack.c.l.b16 %v9089
        %v9161 = vunpack.c.h.b16 %v9089
        %v9162 = vunpack.c.l.b16 %v9090
        %v9163 = vunpack.c.h.b16 %v9090
        %v9164 = vunpack.c.l.b16 %v9091
        %v9165 = vunpack.c.h.b16 %v9091
        %v9166 = vunpack.c.l.b16 %v9092
        %v9167 = vunpack.c.h.b16 %v9092
        %v9168 = vunpack.c.l.b16 %v9093
        %v9169 = vunpack.c.h.b16 %v9093
        %v9170 = vunpack.c.l.b16 %v9094
        %v9171 = vunpack.c.h.b16 %v9094
        %v9172 = vunpack.c.l.b16 %v9095
        %v9173 = vunpack.c.h.b16 %v9095
        %v9174 = vunpack.c.l.b16 %v9096
        %v9175 = vunpack.c.h.b16 %v9096
        %v9176 = vunpack.c.l.b16 %v9097
        %v9177 = vunpack.c.h.b16 %v9097
        %v9178 = vunpack.c.l.b16 %v9098
        %v9179 = vunpack.c.h.b16 %v9098
        %v9180 = vunpack.c.l.b16 %v9099
        %v9181 = vunpack.c.h.b16 %v9099
        %v9182 = vunpack.c.l.b16 %v9100
        %v9183 = vunpack.c.h.b16 %v9100
        %v9184 = vunpack.c.l.b16 %v9101
        %v9185 = vunpack.c.h.b16 %v9101
        %v9186 = vunpack.c.l.b16 %v9102
        %v9187 = vunpack.c.h.b16 %v9102
        %v9188 = vunpack.c.l.b16 %v9103
        %v9189 = vunpack.c.h.b16 %v9103
        %v9190 = vunpack.c.l.b16 %v9104
        %v9191 = vunpack.c.h.b16 %v9104
        %v9192 = vunpack.c.l.b16 %v9105
        %v9193 = vunpack.c.h.b16 %v9105
        %v9194 = vunpack.c.l.b16 %v9106
        %v9195 = vunpack.c.h.b16 %v9106
        %v9196 = vunpack.c.l.b16 %v9107
        %v9197 = vunpack.c.h.b16 %v9107
        %v9198 = vunpack.c.l.b16 %v9108
        %v9199 = vunpack.c.h.b16 %v9108
        %v9200 = vunpack.c.l.b16 %v9109
        %v9201 = vunpack.c.h.b16 %v9109
        %v9202 = vunpack.c.l.b16 %v9110
        %v9203 = vunpack.c.h.b16 %v9110
        %v9204 = vunpack.c.l.b16 %v9111
        %v9205 = vunpack.c.h.b16 %v9111
        %v9206 = vunpack.c.l.b16 %v9112
        %v9207 = vunpack.c.h.b16 %v9112
        %v9208 = vunpack.c.l.b16 %v9113
        %v9209 = vunpack.c.h.b16 %v9113
        %v9210 = vpack.c.b16 %v9150, %v9146
        %v9211 = vpack.c.b16 %v9151, %v9147
        %v9212 = vpack.c.b16 %v9152, %v9148
        %v9213 = vpack.c.b16 %v9153, %v9149
        %v9214 = vpack.c.b16 %v9158, %v9154
        %v9215 = vpack.c.b16 %v9159, %v9155
        %v9216 = vpack.c.b16 %v9160, %v9156
        %v9217 = vpack.c.b16 %v9161, %v9157
        %v9218 = vpack.c.b16 %v9166, %v9162
        %v9219 = vpack.c.b16 %v9167, %v9163
        %v9220 = vpack.c.b16 %v9168, %v9164
        %v9221 = vpack.c.b16 %v9169, %v9165
        %v9222 = vpack.c.b16 %v9174, %v9170
        %v9223 = vpack.c.b16 %v9175, %v9171
        %v9224 = vpack.c.b16 %v9176, %v9172
        %v9225 = vpack.c.b16 %v9177, %v9173
        %v9226 = vpack.c.b16 %v9182, %v9178
        %v9227 = vpack.c.b16 %v9183, %v9179
        %v9228 = vpack.c.b16 %v9184, %v9180
        %v9229 = vpack.c.b16 %v9185, %v9181
        %v9230 = vpack.c.b16 %v9190, %v9186
        %v9231 = vpack.c.b16 %v9191, %v9187
        %v9232 = vpack.c.b16 %v9192, %v9188
        %v9233 = vpack.c.b16 %v9193, %v9189
        %v9234 = vpack.c.b16 %v9198, %v9194
        %v9235 = vpack.c.b16 %v9199, %v9195
        %v9236 = vpack.c.b16 %v9200, %v9196
        %v9237 = vpack.c.b16 %v9201, %v9197
        %v9238 = vpack.c.b16 %v9206, %v9202
        %v9239 = vpack.c.b16 %v9207, %v9203
        %v9240 = vpack.c.b16 %v9208, %v9204
        %v9241 = vpack.c.b16 %v9209, %v9205
        %9274 = vmatprep.subr.bf16.mxu0 %v9211
        %9275 = vmatpush1.bf16.msra.mxu0 %v9210
        %9276 = vmatprep.subr.bf16.mxu0 %v9215
        %9277 = vmatpush1.bf16.msra.mxu0 %v9214
        %9278 = vmatprep.subr.bf16.mxu0 %v9219
        %9279 = vmatpush1.bf16.msra.mxu0 %v9218
        %9280 = vmatprep.subr.bf16.mxu0 %v9223
        %9281 = vmatpush1.bf16.msra.mxu0 %v9222
        %9282 = vmatprep.subr.bf16.mxu0 %v9227
        %9283 = vmatpush1.bf16.msra.mxu0 %v9226
        %9284 = vmatprep.subr.bf16.mxu0 %v9231
        %9285 = vmatpush1.bf16.msra.mxu0 %v9230
        %9286 = vmatprep.subr.bf16.mxu0 %v9235
        %9287 = vmatpush1.bf16.msra.mxu0 %v9234
        %9288 = vmatprep.subr.bf16.mxu0 %v9239
        %9289 = vmatpush1.bf16.msra.mxu0 %v9238
        %9290 = vmatprep.subr.bf16.mxu0 0
        %9291 = vmatpush1.bf16.msra.mxu0 0
        %9292 = vmatprep.subr.bf16.mxu0 0
        %9293 = vmatpush1.bf16.msra.mxu0 0
        %9294 = vmatprep.subr.bf16.mxu0 0
        %9295 = vmatpush1.bf16.msra.mxu0 0
        %9296 = vmatprep.subr.bf16.mxu0 0
        %9297 = vmatpush1.bf16.msra.mxu0 0
        %9298 = vmatprep.subr.bf16.mxu0 0
        %9299 = vmatpush1.bf16.msra.mxu0 0
        %9300 = vmatprep.subr.bf16.mxu0 0
        %9301 = vmatpush1.bf16.msra.mxu0 0
        %9302 = vmatprep.subr.bf16.mxu0 0
        %9303 = vmatpush1.bf16.msra.mxu0 0
        %9304 = vmatprep.subr.bf16.mxu0 0
        %9305 = vmatpush1.bf16.msra.mxu0 0
        %9306 = vmatprep.mubr.bf16.mxu0 0
        %9307 = vmatmul.mubr.bf16.gmra.mrb[0].mxu0 %v9078
        %v9308 = vpop.f32.mrb[0].mxu0
        %v9309 = vadd.f32 0.0, %v9308
        %v9310 = vpop.f32.mrb[0].mxu0
        %v9311 = vadd.f32 0.0, %v9310
        %v9312 = vpop.f32.mrb[0].mxu0
        %v9313 = vadd.f32 0.0, %v9312
        %v9314 = vpop.f32.mrb[0].mxu0
        %v9315 = vadd.f32 0.0, %v9314
        %9316 = vmatprep.mubr.bf16.mxu0 0
        %9317 = vmatmul.mubr.bf16.gmra.mrb[0].mxu0 %v9079
        %v9318 = vpop.f32.mrb[0].mxu0
        %v9319 = vadd.f32 0.0, %v9318
        %v9320 = vpop.f32.mrb[0].mxu0
        %v9321 = vadd.f32 0.0, %v9320
        %v9322 = vpop.f32.mrb[0].mxu0
        %v9323 = vadd.f32 0.0, %v9322
        %v9324 = vpop.f32.mrb[0].mxu0
        %v9325 = vadd.f32 0.0, %v9324
        %9326 = vmatprep.mubr.bf16.mxu0 0
        %9327 = vmatmul.mubr.bf16.gmra.mrb[0].mxu0 %v9080
        %v9328 = vpop.f32.mrb[0].mxu0
        %v9329 = vadd.f32 0.0, %v9328
        %v9330 = vpop.f32.mrb[0].mxu0
        %v9331 = vadd.f32 0.0, %v9330
        %v9332 = vpop.f32.mrb[0].mxu0
        %v9333 = vadd.f32 0.0, %v9332
        %v9334 = vpop.f32.mrb[0].mxu0
        %v9335 = vadd.f32 0.0, %v9334
        %9336 = vdwg.mxu0
        %9337 = vmatprep.subr.bf16.mxu0 %v9213
        %9338 = vmatpush1.bf16.msra.mxu0 %v9212
        %9339 = vmatprep.subr.bf16.mxu0 %v9217
        %9340 = vmatpush1.bf16.msra.mxu0 %v9216
        %9341 = vmatprep.subr.bf16.mxu0 %v9221
        %9342 = vmatpush1.bf16.msra.mxu0 %v9220
        %9343 = vmatprep.subr.bf16.mxu0 %v9225
        %9344 = vmatpush1.bf16.msra.mxu0 %v9224
        %9345 = vmatprep.subr.bf16.mxu0 %v9229
        %9346 = vmatpush1.bf16.msra.mxu0 %v9228
        %9347 = vmatprep.subr.bf16.mxu0 %v9233
        %9348 = vmatpush1.bf16.msra.mxu0 %v9232
        %9349 = vmatprep.subr.bf16.mxu0 %v9237
        %9350 = vmatpush1.bf16.msra.mxu0 %v9236
        %9351 = vmatprep.subr.bf16.mxu0 %v9241
        %9352 = vmatpush1.bf16.msra.mxu0 %v9240
        %9353 = vmatprep.subr.bf16.mxu0 0
        %9354 = vmatpush1.bf16.msra.mxu0 0
        %9355 = vmatprep.subr.bf16.mxu0 0
        %9356 = vmatpush1.bf16.msra.mxu0 0
        %9357 = vmatprep.subr.bf16.mxu0 0
        %9358 = vmatpush1.bf16.msra.mxu0 0
        %9359 = vmatprep.subr.bf16.mxu0 0
        %9360 = vmatpush1.bf16.msra.mxu0 0
        %9361 = vmatprep.subr.bf16.mxu0 0
        %9362 = vmatpush1.bf16.msra.mxu0 0
        %9363 = vmatprep.subr.bf16.mxu0 0
        %9364 = vmatpush1.bf16.msra.mxu0 0
        %9365 = vmatprep.subr.bf16.mxu0 0
        %9366 = vmatpush1.bf16.msra.mxu0 0
        %9367 = vmatprep.subr.bf16.mxu0 0
        %9368 = vmatpush1.bf16.msra.mxu0 0
        %9369 = vmatprep.mubr.bf16.mxu0 0
        %9370 = vmatmul.mubr.bf16.gmra.mrb[0].mxu0 %v9078
        %v9371 = vpop.f32.mrb[0].mxu0
        %v9372 = vadd.f32 0.0, %v9371
        %v9373 = vpop.f32.mrb[0].mxu0
        %v9374 = vadd.f32 0.0, %v9373
        %v9375 = vpop.f32.mrb[0].mxu0
        %v9376 = vadd.f32 0.0, %v9375
        %v9377 = vpop.f32.mrb[0].mxu0
        %v9378 = vadd.f32 0.0, %v9377
        %9379 = vmatprep.mubr.bf16.mxu0 0
        %9380 = vmatmul.mubr.bf16.gmra.mrb[0].mxu0 %v9079
        %v9381 = vpop.f32.mrb[0].mxu0
        %v9382 = vadd.f32 0.0, %v9381
        %v9383 = vpop.f32.mrb[0].mxu0
        %v9384 = vadd.f32 0.0, %v9383
        %v9385 = vpop.f32.mrb[0].mxu0
        %v9386 = vadd.f32 0.0, %v9385
        %v9387 = vpop.f32.mrb[0].mxu0
        %v9388 = vadd.f32 0.0, %v9387
        %9389 = vmatprep.mubr.bf16.mxu0 0
        %9390 = vmatmul.mubr.bf16.gmra.mrb[0].mxu0 %v9080
        %v9391 = vpop.f32.mrb[0].mxu0
        %v9392 = vadd.f32 0.0, %v9391
        %v9393 = vpop.f32.mrb[0].mxu0
        %v9394 = vadd.f32 0.0, %v9393
        %v9395 = vpop.f32.mrb[0].mxu0
        %v9396 = vadd.f32 0.0, %v9395
        %v9397 = vpop.f32.mrb[0].mxu0
        %v9398 = vadd.f32 0.0, %v9397
        %9399 = vdwg.mxu0
        %v9400 = vxor.u32 %v9309, 2147483648
        %v9401 = vxor.u32 %v9311, 2147483648
        %v9402 = vxor.u32 %v9372, 2147483648
        %v9403 = vxor.u32 %v9374, 2147483648
        %v9404 = vxor.u32 %v9313, 2147483648
        %v9405 = vxor.u32 %v9315, 2147483648
        %v9406 = vxor.u32 %v9376, 2147483648
        %v9407 = vxor.u32 %v9378, 2147483648
        %v9408 = vxor.u32 %v9319, 2147483648
        %v9409 = vxor.u32 %v9321, 2147483648
        %v9410 = vxor.u32 %v9382, 2147483648
        %v9411 = vxor.u32 %v9384, 2147483648
        %v9412 = vxor.u32 %v9323, 2147483648
        %v9413 = vxor.u32 %v9325, 2147483648
        %v9414 = vxor.u32 %v9386, 2147483648
        %v9415 = vxor.u32 %v9388, 2147483648
        %v9416 = vxor.u32 %v9329, 2147483648
        %v9417 = vxor.u32 %v9331, 2147483648
        %v9418 = vxor.u32 %v9392, 2147483648
        %v9419 = vxor.u32 %v9394, 2147483648
        %v9420 = vxor.u32 %v9333, 2147483648
        %v9421 = vxor.u32 %v9335, 2147483648
        %v9422 = vxor.u32 %v9396, 2147483648
        %v9423 = vxor.u32 %v9398, 2147483648
        %v9424 = vmul.f32 %v9400, 1.442695
        %v9425 = vpow.pop %v9424
        %v9426 = vmul.f32 %v9401, 1.442695
        %v9427 = vpow.pop %v9426
        %v9428 = vmul.f32 %v9402, 1.442695
        %v9429 = vpow.pop %v9428
        %v9430 = vmul.f32 %v9403, 1.442695
        %v9431 = vpow.pop %v9430
        %v9432 = vmul.f32 %v9404, 1.442695
        %v9433 = vpow.pop %v9432
        %v9434 = vmul.f32 %v9405, 1.442695
        %v9435 = vpow.pop %v9434
        %v9436 = vmul.f32 %v9406, 1.442695
        %v9437 = vpow.pop %v9436
        %v9438 = vmul.f32 %v9407, 1.442695
        %v9439 = vpow.pop %v9438
        %v9440 = vmul.f32 %v9408, 1.442695
        %v9441 = vpow.pop %v9440
        %v9442 = vmul.f32 %v9409, 1.442695
        %v9443 = vpow.pop %v9442
        %v9444 = vmul.f32 %v9410, 1.442695
        %v9445 = vpow.pop %v9444
        %v9446 = vmul.f32 %v9411, 1.442695
        %v9447 = vpow.pop %v9446
        %v9448 = vmul.f32 %v9412, 1.442695
        %v9449 = vpow.pop %v9448
        %v9450 = vmul.f32 %v9413, 1.442695
        %v9451 = vpow.pop %v9450
        %v9452 = vmul.f32 %v9414, 1.442695
        %v9453 = vpow.pop %v9452
        %v9454 = vmul.f32 %v9415, 1.442695
        %v9455 = vpow.pop %v9454
        %v9456 = vmul.f32 %v9416, 1.442695
        %v9457 = vpow.pop %v9456
        %v9458 = vmul.f32 %v9417, 1.442695
        %v9459 = vpow.pop %v9458
        %v9460 = vmul.f32 %v9418, 1.442695
        %v9461 = vpow.pop %v9460
        %v9462 = vmul.f32 %v9419, 1.442695
        %v9463 = vpow.pop %v9462
        %v9464 = vmul.f32 %v9420, 1.442695
        %v9465 = vpow.pop %v9464
        %v9466 = vmul.f32 %v9421, 1.442695
        %v9467 = vpow.pop %v9466
        %v9468 = vmul.f32 %v9422, 1.442695
        %v9469 = vpow.pop %v9468
        %v9470 = vmul.f32 %v9423, 1.442695
        %v9471 = vpow.pop %v9470
        %v9472 = vadd.f32 %v9425, 1.0
        %v9473 = vadd.f32 %v9427, 1.0
        %v9474 = vadd.f32 %v9429, 1.0
        %v9475 = vadd.f32 %v9431, 1.0
        %v9476 = vadd.f32 %v9433, 1.0
        %v9477 = vadd.f32 %v9435, 1.0
        %v9478 = vadd.f32 %v9437, 1.0
        %v9479 = vadd.f32 %v9439, 1.0
        %v9480 = vadd.f32 %v9441, 1.0
        %v9481 = vadd.f32 %v9443, 1.0
        %v9482 = vadd.f32 %v9445, 1.0
        %v9483 = vadd.f32 %v9447, 1.0
        %v9484 = vadd.f32 %v9449, 1.0
        %v9485 = vadd.f32 %v9451, 1.0
        %v9486 = vadd.f32 %v9453, 1.0
        %v9487 = vadd.f32 %v9455, 1.0
        %v9488 = vadd.f32 %v9457, 1.0
        %v9489 = vadd.f32 %v9459, 1.0
        %v9490 = vadd.f32 %v9461, 1.0
        %v9491 = vadd.f32 %v9463, 1.0
        %v9492 = vadd.f32 %v9465, 1.0
        %v9493 = vadd.f32 %v9467, 1.0
        %v9494 = vadd.f32 %v9469, 1.0
        %v9495 = vadd.f32 %v9471, 1.0
        %v9496 = vrcp.pop %v9472
        %v9497 = vmul.f32 1.0, %v9496
        %v9498 = vrcp.pop %v9473
        %v9499 = vmul.f32 1.0, %v9498
        %v9500 = vrcp.pop %v9474
        %v9501 = vmul.f32 1.0, %v9500
        %v9502 = vrcp.pop %v9475
        %v9503 = vmul.f32 1.0, %v9502
        %v9504 = vrcp.pop %v9476
        %v9505 = vmul.f32 1.0, %v9504
        %v9506 = vrcp.pop %v9477
        %v9507 = vmul.f32 1.0, %v9506
        %v9508 = vrcp.pop %v9478
        %v9509 = vmul.f32 1.0, %v9508
        %v9510 = vrcp.pop %v9479
        %v9511 = vmul.f32 1.0, %v9510
        %v9512 = vrcp.pop %v9480
        %v9513 = vmul.f32 1.0, %v9512
        %v9514 = vrcp.pop %v9481
        %v9515 = vmul.f32 1.0, %v9514
        %v9516 = vrcp.pop %v9482
        %v9517 = vmul.f32 1.0, %v9516
        %v9518 = vrcp.pop %v9483
        %v9519 = vmul.f32 1.0, %v9518
        %v9520 = vrcp.pop %v9484
        %v9521 = vmul.f32 1.0, %v9520
        %v9522 = vrcp.pop %v9485
        %v9523 = vmul.f32 1.0, %v9522
        %v9524 = vrcp.pop %v9486
        %v9525 = vmul.f32 1.0, %v9524
        %v9526 = vrcp.pop %v9487
        %v9527 = vmul.f32 1.0, %v9526
        %v9528 = vrcp.pop %v9488
        %v9529 = vmul.f32 1.0, %v9528
        %v9530 = vrcp.pop %v9489
        %v9531 = vmul.f32 1.0, %v9530
        %v9532 = vrcp.pop %v9490
        %v9533 = vmul.f32 1.0, %v9532
        %v9534 = vrcp.pop %v9491
        %v9535 = vmul.f32 1.0, %v9534
        %v9536 = vrcp.pop %v9492
        %v9537 = vmul.f32 1.0, %v9536
        %v9538 = vrcp.pop %v9493
        %v9539 = vmul.f32 1.0, %v9538
        %v9540 = vrcp.pop %v9494
        %v9541 = vmul.f32 1.0, %v9540
        %v9542 = vrcp.pop %v9495
        %v9543 = vmul.f32 1.0, %v9542
        %v9544 = vmul.f32 %v4827, %v4951
        %v9545 = vmul.f32 %v4831, %v4955
        %v9546 = vmul.f32 %v4837, %v4961
        %v9547 = vmul.f32 %v4841, %v4965
        %v9548 = vmul.f32 %v4847, %v4971
        %v9549 = vmul.f32 %v4851, %v4975
        %v9550 = vmax.f32 %v9544, 0.0
        %v9551 = vmax.f32 %v9545, 0.0
        %v9552 = vmax.f32 %v9546, 0.0
        %v9553 = vmax.f32 %v9547, 0.0
        %v9554 = vmax.f32 %v9548, 0.0
        %v9555 = vmax.f32 %v9549, 0.0
        %v9556 = vpack.c.bf16 %v9551, %v9550
        %v9557 = vpack.c.bf16 %v9553, %v9552
        %v9558 = vpack.c.bf16 %v9555, %v9554
        %s9559 = scalar_lea.vmem [#allocation6], 1792
        %v9560 = vld [vmem:[%s9559] sm:$0xff]
        %v9561 = vld [vmem:[%s9559 + $0x8] sm:$0xff]
        %v9562 = vld [vmem:[%s9559 + $0x10] sm:$0xff]
        %v9563 = vld [vmem:[%s9559 + $0x18] sm:$0xff]
        %v9564 = vld [vmem:[%s9559 + $0x20] sm:$0xff]
        %v9565 = vld [vmem:[%s9559 + $0x28] sm:$0xff]
        %v9566 = vld [vmem:[%s9559 + $0x30] sm:$0xff]
        %v9567 = vld [vmem:[%s9559 + $0x38] sm:$0xff]
        %v9568 = vld [vmem:[%s9559 + $0x40] sm:$0xff]
        %v9569 = vld [vmem:[%s9559 + $0x48] sm:$0xff]
        %v9570 = vld [vmem:[%s9559 + $0x50] sm:$0xff]
        %v9571 = vld [vmem:[%s9559 + $0x58] sm:$0xff]
        %v9572 = vld [vmem:[%s9559 + $0x60] sm:$0xff]
        %v9573 = vld [vmem:[%s9559 + $0x68] sm:$0xff]
        %v9574 = vld [vmem:[%s9559 + $0x70] sm:$0xff]
        %v9575 = vld [vmem:[%s9559 + $0x78] sm:$0xff]
        %v9576 = vld [vmem:[%s9559 + $0x80] sm:$0xff]
        %v9577 = vld [vmem:[%s9559 + $0x88] sm:$0xff]
        %v9578 = vld [vmem:[%s9559 + $0x90] sm:$0xff]
        %v9579 = vld [vmem:[%s9559 + $0x98] sm:$0xff]
        %v9580 = vld [vmem:[%s9559 + $0xa0] sm:$0xff]
        %v9581 = vld [vmem:[%s9559 + $0xa8] sm:$0xff]
        %v9582 = vld [vmem:[%s9559 + $0xb0] sm:$0xff]
        %v9583 = vld [vmem:[%s9559 + $0xb8] sm:$0xff]
        %v9584 = vld [vmem:[%s9559 + $0xc0] sm:$0xff]
        %v9585 = vld [vmem:[%s9559 + $0xc8] sm:$0xff]
        %v9586 = vld [vmem:[%s9559 + $0xd0] sm:$0xff]
        %v9587 = vld [vmem:[%s9559 + $0xd8] sm:$0xff]
        %v9588 = vld [vmem:[%s9559 + $0xe0] sm:$0xff]
        %v9589 = vld [vmem:[%s9559 + $0xe8] sm:$0xff]
        %v9590 = vld [vmem:[%s9559 + $0xf0] sm:$0xff]
        %v9591 = vld [vmem:[%s9559 + $0xf8] sm:$0xff]
        %v9624 = vunpack.c.l.b16 %v9560
        %v9625 = vunpack.c.h.b16 %v9560
        %v9626 = vunpack.c.l.b16 %v9561
        %v9627 = vunpack.c.h.b16 %v9561
        %v9628 = vunpack.c.l.b16 %v9562
        %v9629 = vunpack.c.h.b16 %v9562
        %v9630 = vunpack.c.l.b16 %v9563
        %v9631 = vunpack.c.h.b16 %v9563
        %v9632 = vunpack.c.l.b16 %v9564
        %v9633 = vunpack.c.h.b16 %v9564
        %v9634 = vunpack.c.l.b16 %v9565
        %v9635 = vunpack.c.h.b16 %v9565
        %v9636 = vunpack.c.l.b16 %v9566
        %v9637 = vunpack.c.h.b16 %v9566
        %v9638 = vunpack.c.l.b16 %v9567
        %v9639 = vunpack.c.h.b16 %v9567
        %v9640 = vunpack.c.l.b16 %v9568
        %v9641 = vunpack.c.h.b16 %v9568
        %v9642 = vunpack.c.l.b16 %v9569
        %v9643 = vunpack.c.h.b16 %v9569
        %v9644 = vunpack.c.l.b16 %v9570
        %v9645 = vunpack.c.h.b16 %v9570
        %v9646 = vunpack.c.l.b16 %v9571
        %v9647 = vunpack.c.h.b16 %v9571
        %v9648 = vunpack.c.l.b16 %v9572
        %v9649 = vunpack.c.h.b16 %v9572
        %v9650 = vunpack.c.l.b16 %v9573
        %v9651 = vunpack.c.h.b16 %v9573
        %v9652 = vunpack.c.l.b16 %v9574
        %v9653 = vunpack.c.h.b16 %v9574
        %v9654 = vunpack.c.l.b16 %v9575
        %v9655 = vunpack.c.h.b16 %v9575
        %v9656 = vunpack.c.l.b16 %v9576
        %v9657 = vunpack.c.h.b16 %v9576
        %v9658 = vunpack.c.l.b16 %v9577
        %v9659 = vunpack.c.h.b16 %v9577
        %v9660 = vunpack.c.l.b16 %v9578
        %v9661 = vunpack.c.h.b16 %v9578
        %v9662 = vunpack.c.l.b16 %v9579
        %v9663 = vunpack.c.h.b16 %v9579
        %v9664 = vunpack.c.l.b16 %v9580
        %v9665 = vunpack.c.h.b16 %v9580
        %v9666 = vunpack.c.l.b16 %v9581
        %v9667 = vunpack.c.h.b16 %v9581
        %v9668 = vunpack.c.l.b16 %v9582
        %v9669 = vunpack.c.h.b16 %v9582
        %v9670 = vunpack.c.l.b16 %v9583
        %v9671 = vunpack.c.h.b16 %v9583
        %v9672 = vunpack.c.l.b16 %v9584
        %v9673 = vunpack.c.h.b16 %v9584
        %v9674 = vunpack.c.l.b16 %v9585
        %v9675 = vunpack.c.h.b16 %v9585
        %v9676 = vunpack.c.l.b16 %v9586
        %v9677 = vunpack.c.h.b16 %v9586
        %v9678 = vunpack.c.l.b16 %v9587
        %v9679 = vunpack.c.h.b16 %v9587
        %v9680 = vunpack.c.l.b16 %v9588
        %v9681 = vunpack.c.h.b16 %v9588
        %v9682 = vunpack.c.l.b16 %v9589
        %v9683 = vunpack.c.h.b16 %v9589
        %v9684 = vunpack.c.l.b16 %v9590
        %v9685 = vunpack.c.h.b16 %v9590
        %v9686 = vunpack.c.l.b16 %v9591
        %v9687 = vunpack.c.h.b16 %v9591
        %v9688 = vpack.c.b16 %v9628, %v9624
        %v9689 = vpack.c.b16 %v9629, %v9625
        %v9690 = vpack.c.b16 %v9630, %v9626
        %v9691 = vpack.c.b16 %v9631, %v9627
        %v9692 = vpack.c.b16 %v9636, %v9632
        %v9693 = vpack.c.b16 %v9637, %v9633
        %v9694 = vpack.c.b16 %v9638, %v9634
        %v9695 = vpack.c.b16 %v9639, %v9635
        %v9696 = vpack.c.b16 %v9644, %v9640
        %v9697 = vpack.c.b16 %v9645, %v9641
        %v9698 = vpack.c.b16 %v9646, %v9642
        %v9699 = vpack.c.b16 %v9647, %v9643
        %v9700 = vpack.c.b16 %v9652, %v9648
        %v9701 = vpack.c.b16 %v9653, %v9649
        %v9702 = vpack.c.b16 %v9654, %v9650
        %v9703 = vpack.c.b16 %v9655, %v9651
        %v9704 = vpack.c.b16 %v9660, %v9656
        %v9705 = vpack.c.b16 %v9661, %v9657
        %v9706 = vpack.c.b16 %v9662, %v9658
        %v9707 = vpack.c.b16 %v9663, %v9659
        %v9708 = vpack.c.b16 %v9668, %v9664
        %v9709 = vpack.c.b16 %v9669, %v9665
        %v9710 = vpack.c.b16 %v9670, %v9666
        %v9711 = vpack.c.b16 %v9671, %v9667
        %v9712 = vpack.c.b16 %v9676, %v9672
        %v9713 = vpack.c.b16 %v9677, %v9673
        %v9714 = vpack.c.b16 %v9678, %v9674
        %v9715 = vpack.c.b16 %v9679, %v9675
        %v9716 = vpack.c.b16 %v9684, %v9680
        %v9717 = vpack.c.b16 %v9685, %v9681
        %v9718 = vpack.c.b16 %v9686, %v9682
        %v9719 = vpack.c.b16 %v9687, %v9683
        %9752 = vmatprep.subr.bf16.mxu0 %v9689
        %9753 = vmatpush1.bf16.msra.mxu0 %v9688
        %9754 = vmatprep.subr.bf16.mxu0 %v9693
        %9755 = vmatpush1.bf16.msra.mxu0 %v9692
        %9756 = vmatprep.subr.bf16.mxu0 %v9697
        %9757 = vmatpush1.bf16.msra.mxu0 %v9696
        %9758 = vmatprep.subr.bf16.mxu0 %v9701
        %9759 = vmatpush1.bf16.msra.mxu0 %v9700
        %9760 = vmatprep.subr.bf16.mxu0 %v9705
        %9761 = vmatpush1.bf16.msra.mxu0 %v9704
        %9762 = vmatprep.subr.bf16.mxu0 %v9709
        %9763 = vmatpush1.bf16.msra.mxu0 %v9708
        %9764 = vmatprep.subr.bf16.mxu0 %v9713
        %9765 = vmatpush1.bf16.msra.mxu0 %v9712
        %9766 = vmatprep.subr.bf16.mxu0 %v9717
        %9767 = vmatpush1.bf16.msra.mxu0 %v9716
        %9768 = vmatprep.subr.bf16.mxu0 0
        %9769 = vmatpush1.bf16.msra.mxu0 0
        %9770 = vmatprep.subr.bf16.mxu0 0
        %9771 = vmatpush1.bf16.msra.mxu0 0
        %9772 = vmatprep.subr.bf16.mxu0 0
        %9773 = vmatpush1.bf16.msra.mxu0 0
        %9774 = vmatprep.subr.bf16.mxu0 0
        %9775 = vmatpush1.bf16.msra.mxu0 0
        %9776 = vmatprep.subr.bf16.mxu0 0
        %9777 = vmatpush1.bf16.msra.mxu0 0
        %9778 = vmatprep.subr.bf16.mxu0 0
        %9779 = vmatpush1.bf16.msra.mxu0 0
        %9780 = vmatprep.subr.bf16.mxu0 0
        %9781 = vmatpush1.bf16.msra.mxu0 0
        %9782 = vmatprep.subr.bf16.mxu0 0
        %9783 = vmatpush1.bf16.msra.mxu0 0
        %9784 = vmatprep.mubr.bf16.mxu0 0
        %9785 = vmatmul.mubr.bf16.gmra.mrb[0].mxu0 %v9556
        %v9786 = vpop.f32.mrb[0].mxu0
        %v9787 = vadd.f32 0.0, %v9786
        %v9788 = vpop.f32.mrb[0].mxu0
        %v9789 = vadd.f32 0.0, %v9788
        %v9790 = vpop.f32.mrb[0].mxu0
        %v9791 = vadd.f32 0.0, %v9790
        %v9792 = vpop.f32.mrb[0].mxu0
        %v9793 = vadd.f32 0.0, %v9792
        %9794 = vmatprep.mubr.bf16.mxu0 0
        %9795 = vmatmul.mubr.bf16.gmra.mrb[0].mxu0 %v9557
        %v9796 = vpop.f32.mrb[0].mxu0
        %v9797 = vadd.f32 0.0, %v9796
        %v9798 = vpop.f32.mrb[0].mxu0
        %v9799 = vadd.f32 0.0, %v9798
        %v9800 = vpop.f32.mrb[0].mxu0
        %v9801 = vadd.f32 0.0, %v9800
        %v9802 = vpop.f32.mrb[0].mxu0
        %v9803 = vadd.f32 0.0, %v9802
        %9804 = vmatprep.mubr.bf16.mxu0 0
        %9805 = vmatmul.mubr.bf16.gmra.mrb[0].mxu0 %v9558
        %v9806 = vpop.f32.mrb[0].mxu0
        %v9807 = vadd.f32 0.0, %v9806
        %v9808 = vpop.f32.mrb[0].mxu0
        %v9809 = vadd.f32 0.0, %v9808
        %v9810 = vpop.f32.mrb[0].mxu0
        %v9811 = vadd.f32 0.0, %v9810
        %v9812 = vpop.f32.mrb[0].mxu0
        %v9813 = vadd.f32 0.0, %v9812
        %9814 = vdwg.mxu0
        %9815 = vmatprep.subr.bf16.mxu0 %v9691
        %9816 = vmatpush1.bf16.msra.mxu0 %v9690
        %9817 = vmatprep.subr.bf16.mxu0 %v9695
        %9818 = vmatpush1.bf16.msra.mxu0 %v9694
        %9819 = vmatprep.subr.bf16.mxu0 %v9699
        %9820 = vmatpush1.bf16.msra.mxu0 %v9698
        %9821 = vmatprep.subr.bf16.mxu0 %v9703
        %9822 = vmatpush1.bf16.msra.mxu0 %v9702
        %9823 = vmatprep.subr.bf16.mxu0 %v9707
        %9824 = vmatpush1.bf16.msra.mxu0 %v9706
        %9825 = vmatprep.subr.bf16.mxu0 %v9711
        %9826 = vmatpush1.bf16.msra.mxu0 %v9710
        %9827 = vmatprep.subr.bf16.mxu0 %v9715
        %9828 = vmatpush1.bf16.msra.mxu0 %v9714
        %9829 = vmatprep.subr.bf16.mxu0 %v9719
        %9830 = vmatpush1.bf16.msra.mxu0 %v9718
        %9831 = vmatprep.subr.bf16.mxu0 0
        %9832 = vmatpush1.bf16.msra.mxu0 0
        %9833 = vmatprep.subr.bf16.mxu0 0
        %9834 = vmatpush1.bf16.msra.mxu0 0
        %9835 = vmatprep.subr.bf16.mxu0 0
        %9836 = vmatpush1.bf16.msra.mxu0 0
        %9837 = vmatprep.subr.bf16.mxu0 0
        %9838 = vmatpush1.bf16.msra.mxu0 0
        %9839 = vmatprep.subr.bf16.mxu0 0
        %9840 = vmatpush1.bf16.msra.mxu0 0
        %9841 = vmatprep.subr.bf16.mxu0 0
        %9842 = vmatpush1.bf16.msra.mxu0 0
        %9843 = vmatprep.subr.bf16.mxu0 0
        %9844 = vmatpush1.bf16.msra.mxu0 0
        %9845 = vmatprep.subr.bf16.mxu0 0
        %9846 = vmatpush1.bf16.msra.mxu0 0
        %9847 = vmatprep.mubr.bf16.mxu0 0
        %9848 = vmatmul.mubr.bf16.gmra.mrb[0].mxu0 %v9556
        %v9849 = vpop.f32.mrb[0].mxu0
        %v9850 = vadd.f32 0.0, %v9849
        %v9851 = vpop.f32.mrb[0].mxu0
        %v9852 = vadd.f32 0.0, %v9851
        %v9853 = vpop.f32.mrb[0].mxu0
        %v9854 = vadd.f32 0.0, %v9853
        %v9855 = vpop.f32.mrb[0].mxu0
        %v9856 = vadd.f32 0.0, %v9855
        %9857 = vmatprep.mubr.bf16.mxu0 0
        %9858 = vmatmul.mubr.bf16.gmra.mrb[0].mxu0 %v9557
        %v9859 = vpop.f32.mrb[0].mxu0
        %v9860 = vadd.f32 0.0, %v9859
        %v9861 = vpop.f32.mrb[0].mxu0
        %v9862 = vadd.f32 0.0, %v9861
        %v9863 = vpop.f32.mrb[0].mxu0
        %v9864 = vadd.f32 0.0, %v9863
        %v9865 = vpop.f32.mrb[0].mxu0
        %v9866 = vadd.f32 0.0, %v9865
        %9867 = vmatprep.mubr.bf16.mxu0 0
        %9868 = vmatmul.mubr.bf16.gmra.mrb[0].mxu0 %v9558
        %v9869 = vpop.f32.mrb[0].mxu0
        %v9870 = vadd.f32 0.0, %v9869
        %v9871 = vpop.f32.mrb[0].mxu0
        %v9872 = vadd.f32 0.0, %v9871
        %v9873 = vpop.f32.mrb[0].mxu0
        %v9874 = vadd.f32 0.0, %v9873
        %v9875 = vpop.f32.mrb[0].mxu0
        %v9876 = vadd.f32 0.0, %v9875
        %9877 = vdwg.mxu0
        %v9878 = vxor.u32 %v9787, 2147483648
        %v9879 = vxor.u32 %v9789, 2147483648
        %v9880 = vxor.u32 %v9850, 2147483648
        %v9881 = vxor.u32 %v9852, 2147483648
        %v9882 = vxor.u32 %v9791, 2147483648
        %v9883 = vxor.u32 %v9793, 2147483648
        %v9884 = vxor.u32 %v9854, 2147483648
        %v9885 = vxor.u32 %v9856, 2147483648
        %v9886 = vxor.u32 %v9797, 2147483648
        %v9887 = vxor.u32 %v9799, 2147483648
        %v9888 = vxor.u32 %v9860, 2147483648
        %v9889 = vxor.u32 %v9862, 2147483648
        %v9890 = vxor.u32 %v9801, 2147483648
        %v9891 = vxor.u32 %v9803, 2147483648
        %v9892 = vxor.u32 %v9864, 2147483648
        %v9893 = vxor.u32 %v9866, 2147483648
        %v9894 = vxor.u32 %v9807, 2147483648
        %v9895 = vxor.u32 %v9809, 2147483648
        %v9896 = vxor.u32 %v9870, 2147483648
        %v9897 = vxor.u32 %v9872, 2147483648
        %v9898 = vxor.u32 %v9811, 2147483648
        %v9899 = vxor.u32 %v9813, 2147483648
        %v9900 = vxor.u32 %v9874, 2147483648
        %v9901 = vxor.u32 %v9876, 2147483648
        %v9902 = vmul.f32 %v9878, 1.442695
        %v9903 = vpow.pop %v9902
        %v9904 = vmul.f32 %v9879, 1.442695
        %v9905 = vpow.pop %v9904
        %v9906 = vmul.f32 %v9880, 1.442695
        %v9907 = vpow.pop %v9906
        %v9908 = vmul.f32 %v9881, 1.442695
        %v9909 = vpow.pop %v9908
        %v9910 = vmul.f32 %v9882, 1.442695
        %v9911 = vpow.pop %v9910
        %v9912 = vmul.f32 %v9883, 1.442695
        %v9913 = vpow.pop %v9912
        %v9914 = vmul.f32 %v9884, 1.442695
        %v9915 = vpow.pop %v9914
        %v9916 = vmul.f32 %v9885, 1.442695
        %v9917 = vpow.pop %v9916
        %v9918 = vmul.f32 %v9886, 1.442695
        %v9919 = vpow.pop %v9918
        %v9920 = vmul.f32 %v9887, 1.442695
        %v9921 = vpow.pop %v9920
        %v9922 = vmul.f32 %v9888, 1.442695
        %v9923 = vpow.pop %v9922
        %v9924 = vmul.f32 %v9889, 1.442695
        %v9925 = vpow.pop %v9924
        %v9926 = vmul.f32 %v9890, 1.442695
        %v9927 = vpow.pop %v9926
        %v9928 = vmul.f32 %v9891, 1.442695
        %v9929 = vpow.pop %v9928
        %v9930 = vmul.f32 %v9892, 1.442695
        %v9931 = vpow.pop %v9930
        %v9932 = vmul.f32 %v9893, 1.442695
        %v9933 = vpow.pop %v9932
        %v9934 = vmul.f32 %v9894, 1.442695
        %v9935 = vpow.pop %v9934
        %v9936 = vmul.f32 %v9895, 1.442695
        %v9937 = vpow.pop %v9936
        %v9938 = vmul.f32 %v9896, 1.442695
        %v9939 = vpow.pop %v9938
        %v9940 = vmul.f32 %v9897, 1.442695
        %v9941 = vpow.pop %v9940
        %v9942 = vmul.f32 %v9898, 1.442695
        %v9943 = vpow.pop %v9942
        %v9944 = vmul.f32 %v9899, 1.442695
        %v9945 = vpow.pop %v9944
        %v9946 = vmul.f32 %v9900, 1.442695
        %v9947 = vpow.pop %v9946
        %v9948 = vmul.f32 %v9901, 1.442695
        %v9949 = vpow.pop %v9948
        %v9950 = vadd.f32 %v9903, 1.0
        %v9951 = vadd.f32 %v9905, 1.0
        %v9952 = vadd.f32 %v9907, 1.0
        %v9953 = vadd.f32 %v9909, 1.0
        %v9954 = vadd.f32 %v9911, 1.0
        %v9955 = vadd.f32 %v9913, 1.0
        %v9956 = vadd.f32 %v9915, 1.0
        %v9957 = vadd.f32 %v9917, 1.0
        %v9958 = vadd.f32 %v9919, 1.0
        %v9959 = vadd.f32 %v9921, 1.0
        %v9960 = vadd.f32 %v9923, 1.0
        %v9961 = vadd.f32 %v9925, 1.0
        %v9962 = vadd.f32 %v9927, 1.0
        %v9963 = vadd.f32 %v9929, 1.0
        %v9964 = vadd.f32 %v9931, 1.0
        %v9965 = vadd.f32 %v9933, 1.0
        %v9966 = vadd.f32 %v9935, 1.0
        %v9967 = vadd.f32 %v9937, 1.0
        %v9968 = vadd.f32 %v9939, 1.0
        %v9969 = vadd.f32 %v9941, 1.0
        %v9970 = vadd.f32 %v9943, 1.0
        %v9971 = vadd.f32 %v9945, 1.0
        %v9972 = vadd.f32 %v9947, 1.0
        %v9973 = vadd.f32 %v9949, 1.0
        %v9974 = vrcp.pop %v9950
        %v9975 = vmul.f32 1.0, %v9974
        %v9976 = vrcp.pop %v9951
        %v9977 = vmul.f32 1.0, %v9976
        %v9978 = vrcp.pop %v9952
        %v9979 = vmul.f32 1.0, %v9978
        %v9980 = vrcp.pop %v9953
        %v9981 = vmul.f32 1.0, %v9980
        %v9982 = vrcp.pop %v9954
        %v9983 = vmul.f32 1.0, %v9982
        %v9984 = vrcp.pop %v9955
        %v9985 = vmul.f32 1.0, %v9984
        %v9986 = vrcp.pop %v9956
        %v9987 = vmul.f32 1.0, %v9986
        %v9988 = vrcp.pop %v9957
        %v9989 = vmul.f32 1.0, %v9988
        %v9990 = vrcp.pop %v9958
        %v9991 = vmul.f32 1.0, %v9990
        %v9992 = vrcp.pop %v9959
        %v9993 = vmul.f32 1.0, %v9992
        %v9994 = vrcp.pop %v9960
        %v9995 = vmul.f32 1.0, %v9994
        %v9996 = vrcp.pop %v9961
        %v9997 = vmul.f32 1.0, %v9996
        %v9998 = vrcp.pop %v9962
        %v9999 = vmul.f32 1.0, %v9998
        %v10000 = vrcp.pop %v9963
        %v10001 = vmul.f32 1.0, %v10000
        %v10002 = vrcp.pop %v9964
        %v10003 = vmul.f32 1.0, %v10002
        %v10004 = vrcp.pop %v9965
        %v10005 = vmul.f32 1.0, %v10004
        %v10006 = vrcp.pop %v9966
        %v10007 = vmul.f32 1.0, %v10006
        %v10008 = vrcp.pop %v9967
        %v10009 = vmul.f32 1.0, %v10008
        %v10010 = vrcp.pop %v9968
        %v10011 = vmul.f32 1.0, %v10010
        %v10012 = vrcp.pop %v9969
        %v10013 = vmul.f32 1.0, %v10012
        %v10014 = vrcp.pop %v9970
        %v10015 = vmul.f32 1.0, %v10014
        %v10016 = vrcp.pop %v9971
        %v10017 = vmul.f32 1.0, %v10016
        %v10018 = vrcp.pop %v9972
        %v10019 = vmul.f32 1.0, %v10018
        %v10020 = vrcp.pop %v9973
        %v10021 = vmul.f32 1.0, %v10020
        %v10022 = vadd.f32 %v9497, %v9975
        %v10023 = vadd.f32 %v9499, %v9977
        %v10024 = vadd.f32 %v9501, %v9979
        %v10025 = vadd.f32 %v9503, %v9981
        %v10026 = vadd.f32 %v9505, %v9983
        %v10027 = vadd.f32 %v9507, %v9985
        %v10028 = vadd.f32 %v9509, %v9987
        %v10029 = vadd.f32 %v9511, %v9989
        %v10030 = vadd.f32 %v9513, %v9991
        %v10031 = vadd.f32 %v9515, %v9993
        %v10032 = vadd.f32 %v9517, %v9995
        %v10033 = vadd.f32 %v9519, %v9997
        %v10034 = vadd.f32 %v9521, %v9999
        %v10035 = vadd.f32 %v9523, %v10001
        %v10036 = vadd.f32 %v9525, %v10003
        %v10037 = vadd.f32 %v9527, %v10005
        %v10038 = vadd.f32 %v9529, %v10007
        %v10039 = vadd.f32 %v9531, %v10009
        %v10040 = vadd.f32 %v9533, %v10011
        %v10041 = vadd.f32 %v9535, %v10013
        %v10042 = vadd.f32 %v9537, %v10015
        %v10043 = vadd.f32 %v9539, %v10017
        %v10044 = vadd.f32 %v9541, %v10019
        %v10045 = vadd.f32 %v9543, %v10021
        %v10046 = vmul.f32 %v4953, %v5077
        %v10047 = vmul.f32 %v4957, %v5081
        %v10048 = vmul.f32 %v4963, %v5087
        %v10049 = vmul.f32 %v4967, %v5091
        %v10050 = vmul.f32 %v4973, %v5097
        %v10051 = vmul.f32 %v4977, %v5101
        %v10052 = vmul.f32 %v10046, %v5079
        %v10053 = vmul.f32 %v10047, %v5083
        %v10054 = vmul.f32 %v10048, %v5089
        %v10055 = vmul.f32 %v10049, %v5093
        %v10056 = vmul.f32 %v10050, %v5099
        %v10057 = vmul.f32 %v10051, %v5103
        %v10058 = vmax.f32 %v10052, 0.0
        %v10059 = vmax.f32 %v10053, 0.0
        %v10060 = vmax.f32 %v10054, 0.0
        %v10061 = vmax.f32 %v10055, 0.0
        %v10062 = vmax.f32 %v10056, 0.0
        %v10063 = vmax.f32 %v10057, 0.0
        %v10064 = vpack.c.bf16 %v10059, %v10058
        %v10065 = vpack.c.bf16 %v10061, %v10060
        %v10066 = vpack.c.bf16 %v10063, %v10062
        %s10067 = scalar_lea.vmem [#allocation6], 2048
        %v10068 = vld [vmem:[%s10067] sm:$0xff]
        %v10069 = vld [vmem:[%s10067 + $0x8] sm:$0xff]
        %v10070 = vld [vmem:[%s10067 + $0x10] sm:$0xff]
        %v10071 = vld [vmem:[%s10067 + $0x18] sm:$0xff]
        %v10072 = vld [vmem:[%s10067 + $0x20] sm:$0xff]
        %v10073 = vld [vmem:[%s10067 + $0x28] sm:$0xff]
        %v10074 = vld [vmem:[%s10067 + $0x30] sm:$0xff]
        %v10075 = vld [vmem:[%s10067 + $0x38] sm:$0xff]
        %v10076 = vld [vmem:[%s10067 + $0x40] sm:$0xff]
        %v10077 = vld [vmem:[%s10067 + $0x48] sm:$0xff]
        %v10078 = vld [vmem:[%s10067 + $0x50] sm:$0xff]
        %v10079 = vld [vmem:[%s10067 + $0x58] sm:$0xff]
        %v10080 = vld [vmem:[%s10067 + $0x60] sm:$0xff]
        %v10081 = vld [vmem:[%s10067 + $0x68] sm:$0xff]
        %v10082 = vld [vmem:[%s10067 + $0x70] sm:$0xff]
        %v10083 = vld [vmem:[%s10067 + $0x78] sm:$0xff]
        %v10084 = vld [vmem:[%s10067 + $0x80] sm:$0xff]
        %v10085 = vld [vmem:[%s10067 + $0x88] sm:$0xff]
        %v10086 = vld [vmem:[%s10067 + $0x90] sm:$0xff]
        %v10087 = vld [vmem:[%s10067 + $0x98] sm:$0xff]
        %v10088 = vld [vmem:[%s10067 + $0xa0] sm:$0xff]
        %v10089 = vld [vmem:[%s10067 + $0xa8] sm:$0xff]
        %v10090 = vld [vmem:[%s10067 + $0xb0] sm:$0xff]
        %v10091 = vld [vmem:[%s10067 + $0xb8] sm:$0xff]
        %v10092 = vld [vmem:[%s10067 + $0xc0] sm:$0xff]
        %v10093 = vld [vmem:[%s10067 + $0xc8] sm:$0xff]
        %v10094 = vld [vmem:[%s10067 + $0xd0] sm:$0xff]
        %v10095 = vld [vmem:[%s10067 + $0xd8] sm:$0xff]
        %v10096 = vld [vmem:[%s10067 + $0xe0] sm:$0xff]
        %v10097 = vld [vmem:[%s10067 + $0xe8] sm:$0xff]
        %v10098 = vld [vmem:[%s10067 + $0xf0] sm:$0xff]
        %v10099 = vld [vmem:[%s10067 + $0xf8] sm:$0xff]
        %v10132 = vunpack.c.l.b16 %v10068
        %v10133 = vunpack.c.h.b16 %v10068
        %v10134 = vunpack.c.l.b16 %v10069
        %v10135 = vunpack.c.h.b16 %v10069
        %v10136 = vunpack.c.l.b16 %v10070
        %v10137 = vunpack.c.h.b16 %v10070
        %v10138 = vunpack.c.l.b16 %v10071
        %v10139 = vunpack.c.h.b16 %v10071
        %v10140 = vunpack.c.l.b16 %v10072
        %v10141 = vunpack.c.h.b16 %v10072
        %v10142 = vunpack.c.l.b16 %v10073
        %v10143 = vunpack.c.h.b16 %v10073
        %v10144 = vunpack.c.l.b16 %v10074
        %v10145 = vunpack.c.h.b16 %v10074
        %v10146 = vunpack.c.l.b16 %v10075
        %v10147 = vunpack.c.h.b16 %v10075
        %v10148 = vunpack.c.l.b16 %v10076
        %v10149 = vunpack.c.h.b16 %v10076
        %v10150 = vunpack.c.l.b16 %v10077
        %v10151 = vunpack.c.h.b16 %v10077
        %v10152 = vunpack.c.l.b16 %v10078
        %v10153 = vunpack.c.h.b16 %v10078
        %v10154 = vunpack.c.l.b16 %v10079
        %v10155 = vunpack.c.h.b16 %v10079
        %v10156 = vunpack.c.l.b16 %v10080
        %v10157 = vunpack.c.h.b16 %v10080
        %v10158 = vunpack.c.l.b16 %v10081
        %v10159 = vunpack.c.h.b16 %v10081
        %v10160 = vunpack.c.l.b16 %v10082
        %v10161 = vunpack.c.h.b16 %v10082
        %v10162 = vunpack.c.l.b16 %v10083
        %v10163 = vunpack.c.h.b16 %v10083
        %v10164 = vunpack.c.l.b16 %v10084
        %v10165 = vunpack.c.h.b16 %v10084
        %v10166 = vunpack.c.l.b16 %v10085
        %v10167 = vunpack.c.h.b16 %v10085
        %v10168 = vunpack.c.l.b16 %v10086
        %v10169 = vunpack.c.h.b16 %v10086
        %v10170 = vunpack.c.l.b16 %v10087
        %v10171 = vunpack.c.h.b16 %v10087
        %v10172 = vunpack.c.l.b16 %v10088
        %v10173 = vunpack.c.h.b16 %v10088
        %v10174 = vunpack.c.l.b16 %v10089
        %v10175 = vunpack.c.h.b16 %v10089
        %v10176 = vunpack.c.l.b16 %v10090
        %v10177 = vunpack.c.h.b16 %v10090
        %v10178 = vunpack.c.l.b16 %v10091
        %v10179 = vunpack.c.h.b16 %v10091
        %v10180 = vunpack.c.l.b16 %v10092
        %v10181 = vunpack.c.h.b16 %v10092
        %v10182 = vunpack.c.l.b16 %v10093
        %v10183 = vunpack.c.h.b16 %v10093
        %v10184 = vunpack.c.l.b16 %v10094
        %v10185 = vunpack.c.h.b16 %v10094
        %v10186 = vunpack.c.l.b16 %v10095
        %v10187 = vunpack.c.h.b16 %v10095
        %v10188 = vunpack.c.l.b16 %v10096
        %v10189 = vunpack.c.h.b16 %v10096
        %v10190 = vunpack.c.l.b16 %v10097
        %v10191 = vunpack.c.h.b16 %v10097
        %v10192 = vunpack.c.l.b16 %v10098
        %v10193 = vunpack.c.h.b16 %v10098
        %v10194 = vunpack.c.l.b16 %v10099
        %v10195 = vunpack.c.h.b16 %v10099
        %v10196 = vpack.c.b16 %v10136, %v10132
        %v10197 = vpack.c.b16 %v10137, %v10133
        %v10198 = vpack.c.b16 %v10138, %v10134
        %v10199 = vpack.c.b16 %v10139, %v10135
        %v10200 = vpack.c.b16 %v10144, %v10140
        %v10201 = vpack.c.b16 %v10145, %v10141
        %v10202 = vpack.c.b16 %v10146, %v10142
        %v10203 = vpack.c.b16 %v10147, %v10143
        %v10204 = vpack.c.b16 %v10152, %v10148
        %v10205 = vpack.c.b16 %v10153, %v10149
        %v10206 = vpack.c.b16 %v10154, %v10150
        %v10207 = vpack.c.b16 %v10155, %v10151
        %v10208 = vpack.c.b16 %v10160, %v10156
        %v10209 = vpack.c.b16 %v10161, %v10157
        %v10210 = vpack.c.b16 %v10162, %v10158
        %v10211 = vpack.c.b16 %v10163, %v10159
        %v10212 = vpack.c.b16 %v10168, %v10164
        %v10213 = vpack.c.b16 %v10169, %v10165
        %v10214 = vpack.c.b16 %v10170, %v10166
        %v10215 = vpack.c.b16 %v10171, %v10167
        %v10216 = vpack.c.b16 %v10176, %v10172
        %v10217 = vpack.c.b16 %v10177, %v10173
        %v10218 = vpack.c.b16 %v10178, %v10174
        %v10219 = vpack.c.b16 %v10179, %v10175
        %v10220 = vpack.c.b16 %v10184, %v10180
        %v10221 = vpack.c.b16 %v10185, %v10181
        %v10222 = vpack.c.b16 %v10186, %v10182
        %v10223 = vpack.c.b16 %v10187, %v10183
        %v10224 = vpack.c.b16 %v10192, %v10188
        %v10225 = vpack.c.b16 %v10193, %v10189
        %v10226 = vpack.c.b16 %v10194, %v10190
        %v10227 = vpack.c.b16 %v10195, %v10191
        %10260 = vmatprep.subr.bf16.mxu0 %v10197
        %10261 = vmatpush1.bf16.msra.mxu0 %v10196
        %10262 = vmatprep.subr.bf16.mxu0 %v10201
        %10263 = vmatpush1.bf16.msra.mxu0 %v10200
        %10264 = vmatprep.subr.bf16.mxu0 %v10205
        %10265 = vmatpush1.bf16.msra.mxu0 %v10204
        %10266 = vmatprep.subr.bf16.mxu0 %v10209
        %10267 = vmatpush1.bf16.msra.mxu0 %v10208
        %10268 = vmatprep.subr.bf16.mxu0 %v10213
        %10269 = vmatpush1.bf16.msra.mxu0 %v10212
        %10270 = vmatprep.subr.bf16.mxu0 %v10217
        %10271 = vmatpush1.bf16.msra.mxu0 %v10216
        %10272 = vmatprep.subr.bf16.mxu0 %v10221
        %10273 = vmatpush1.bf16.msra.mxu0 %v10220
        %10274 = vmatprep.subr.bf16.mxu0 %v10225
        %10275 = vmatpush1.bf16.msra.mxu0 %v10224
        %10276 = vmatprep.subr.bf16.mxu0 0
        %10277 = vmatpush1.bf16.msra.mxu0 0
        %10278 = vmatprep.subr.bf16.mxu0 0
        %10279 = vmatpush1.bf16.msra.mxu0 0
        %10280 = vmatprep.subr.bf16.mxu0 0
        %10281 = vmatpush1.bf16.msra.mxu0 0
        %10282 = vmatprep.subr.bf16.mxu0 0
        %10283 = vmatpush1.bf16.msra.mxu0 0
        %10284 = vmatprep.subr.bf16.mxu0 0
        %10285 = vmatpush1.bf16.msra.mxu0 0
        %10286 = vmatprep.subr.bf16.mxu0 0
        %10287 = vmatpush1.bf16.msra.mxu0 0
        %10288 = vmatprep.subr.bf16.mxu0 0
        %10289 = vmatpush1.bf16.msra.mxu0 0
        %10290 = vmatprep.subr.bf16.mxu0 0
        %10291 = vmatpush1.bf16.msra.mxu0 0
        %10292 = vmatprep.mubr.bf16.mxu0 0
        %10293 = vmatmul.mubr.bf16.gmra.mrb[0].mxu0 %v10064
        %v10294 = vpop.f32.mrb[0].mxu0
        %v10295 = vadd.f32 0.0, %v10294
        %v10296 = vpop.f32.mrb[0].mxu0
        %v10297 = vadd.f32 0.0, %v10296
        %v10298 = vpop.f32.mrb[0].mxu0
        %v10299 = vadd.f32 0.0, %v10298
        %v10300 = vpop.f32.mrb[0].mxu0
        %v10301 = vadd.f32 0.0, %v10300
        %10302 = vmatprep.mubr.bf16.mxu0 0
        %10303 = vmatmul.mubr.bf16.gmra.mrb[0].mxu0 %v10065
        %v10304 = vpop.f32.mrb[0].mxu0
        %v10305 = vadd.f32 0.0, %v10304
        %v10306 = vpop.f32.mrb[0].mxu0
        %v10307 = vadd.f32 0.0, %v10306
        %v10308 = vpop.f32.mrb[0].mxu0
        %v10309 = vadd.f32 0.0, %v10308
        %v10310 = vpop.f32.mrb[0].mxu0
        %v10311 = vadd.f32 0.0, %v10310
        %10312 = vmatprep.mubr.bf16.mxu0 0
        %10313 = vmatmul.mubr.bf16.gmra.mrb[0].mxu0 %v10066
        %v10314 = vpop.f32.mrb[0].mxu0
        %v10315 = vadd.f32 0.0, %v10314
        %v10316 = vpop.f32.mrb[0].mxu0
        %v10317 = vadd.f32 0.0, %v10316
        %v10318 = vpop.f32.mrb[0].mxu0
        %v10319 = vadd.f32 0.0, %v10318
        %v10320 = vpop.f32.mrb[0].mxu0
        %v10321 = vadd.f32 0.0, %v10320
        %10322 = vdwg.mxu0
        %10323 = vmatprep.subr.bf16.mxu0 %v10199
        %10324 = vmatpush1.bf16.msra.mxu0 %v10198
        %10325 = vmatprep.subr.bf16.mxu0 %v10203
        %10326 = vmatpush1.bf16.msra.mxu0 %v10202
        %10327 = vmatprep.subr.bf16.mxu0 %v10207
        %10328 = vmatpush1.bf16.msra.mxu0 %v10206
        %10329 = vmatprep.subr.bf16.mxu0 %v10211
        %10330 = vmatpush1.bf16.msra.mxu0 %v10210
        %10331 = vmatprep.subr.bf16.mxu0 %v10215
        %10332 = vmatpush1.bf16.msra.mxu0 %v10214
        %10333 = vmatprep.subr.bf16.mxu0 %v10219
        %10334 = vmatpush1.bf16.msra.mxu0 %v10218
        %10335 = vmatprep.subr.bf16.mxu0 %v10223
        %10336 = vmatpush1.bf16.msra.mxu0 %v10222
        %10337 = vmatprep.subr.bf16.mxu0 %v10227
        %10338 = vmatpush1.bf16.msra.mxu0 %v10226
        %10339 = vmatprep.subr.bf16.mxu0 0
        %10340 = vmatpush1.bf16.msra.mxu0 0
        %10341 = vmatprep.subr.bf16.mxu0 0
        %10342 = vmatpush1.bf16.msra.mxu0 0
        %10343 = vmatprep.subr.bf16.mxu0 0
        %10344 = vmatpush1.bf16.msra.mxu0 0
        %10345 = vmatprep.subr.bf16.mxu0 0
        %10346 = vmatpush1.bf16.msra.mxu0 0
        %10347 = vmatprep.subr.bf16.mxu0 0
        %10348 = vmatpush1.bf16.msra.mxu0 0
        %10349 = vmatprep.subr.bf16.mxu0 0
        %10350 = vmatpush1.bf16.msra.mxu0 0
        %10351 = vmatprep.subr.bf16.mxu0 0
        %10352 = vmatpush1.bf16.msra.mxu0 0
        %10353 = vmatprep.subr.bf16.mxu0 0
        %10354 = vmatpush1.bf16.msra.mxu0 0
        %10355 = vmatprep.mubr.bf16.mxu0 0
        %10356 = vmatmul.mubr.bf16.gmra.mrb[0].mxu0 %v10064
        %v10357 = vpop.f32.mrb[0].mxu0
        %v10358 = vadd.f32 0.0, %v10357
        %v10359 = vpop.f32.mrb[0].mxu0
        %v10360 = vadd.f32 0.0, %v10359
        %v10361 = vpop.f32.mrb[0].mxu0
        %v10362 = vadd.f32 0.0, %v10361
        %v10363 = vpop.f32.mrb[0].mxu0
        %v10364 = vadd.f32 0.0, %v10363
        %10365 = vmatprep.mubr.bf16.mxu0 0
        %10366 = vmatmul.mubr.bf16.gmra.mrb[0].mxu0 %v10065
        %v10367 = vpop.f32.mrb[0].mxu0
        %v10368 = vadd.f32 0.0, %v10367
        %v10369 = vpop.f32.mrb[0].mxu0
        %v10370 = vadd.f32 0.0, %v10369
        %v10371 = vpop.f32.mrb[0].mxu0
        %v10372 = vadd.f32 0.0, %v10371
        %v10373 = vpop.f32.mrb[0].mxu0
        %v10374 = vadd.f32 0.0, %v10373
        %10375 = vmatprep.mubr.bf16.mxu0 0
        %10376 = vmatmul.mubr.bf16.gmra.mrb[0].mxu0 %v10066
        %v10377 = vpop.f32.mrb[0].mxu0
        %v10378 = vadd.f32 0.0, %v10377
        %v10379 = vpop.f32.mrb[0].mxu0
        %v10380 = vadd.f32 0.0, %v10379
        %v10381 = vpop.f32.mrb[0].mxu0
        %v10382 = vadd.f32 0.0, %v10381
        %v10383 = vpop.f32.mrb[0].mxu0
        %v10384 = vadd.f32 0.0, %v10383
        %10385 = vdwg.mxu0
        %v10386 = vxor.u32 %v10295, 2147483648
        %v10387 = vxor.u32 %v10297, 2147483648
        %v10388 = vxor.u32 %v10358, 2147483648
        %v10389 = vxor.u32 %v10360, 2147483648
        %v10390 = vxor.u32 %v10299, 2147483648
        %v10391 = vxor.u32 %v10301, 2147483648
        %v10392 = vxor.u32 %v10362, 2147483648
        %v10393 = vxor.u32 %v10364, 2147483648
        %v10394 = vxor.u32 %v10305, 2147483648
        %v10395 = vxor.u32 %v10307, 2147483648
        %v10396 = vxor.u32 %v10368, 2147483648
        %v10397 = vxor.u32 %v10370, 2147483648
        %v10398 = vxor.u32 %v10309, 2147483648
        %v10399 = vxor.u32 %v10311, 2147483648
        %v10400 = vxor.u32 %v10372, 2147483648
        %v10401 = vxor.u32 %v10374, 2147483648
        %v10402 = vxor.u32 %v10315, 2147483648
        %v10403 = vxor.u32 %v10317, 2147483648
        %v10404 = vxor.u32 %v10378, 2147483648
        %v10405 = vxor.u32 %v10380, 2147483648
        %v10406 = vxor.u32 %v10319, 2147483648
        %v10407 = vxor.u32 %v10321, 2147483648
        %v10408 = vxor.u32 %v10382, 2147483648
        %v10409 = vxor.u32 %v10384, 2147483648
        %v10410 = vmul.f32 %v10386, 1.442695
        %v10411 = vpow.pop %v10410
        %v10412 = vmul.f32 %v10387, 1.442695
        %v10413 = vpow.pop %v10412
        %v10414 = vmul.f32 %v10388, 1.442695
        %v10415 = vpow.pop %v10414
        %v10416 = vmul.f32 %v10389, 1.442695
        %v10417 = vpow.pop %v10416
        %v10418 = vmul.f32 %v10390, 1.442695
        %v10419 = vpow.pop %v10418
        %v10420 = vmul.f32 %v10391, 1.442695
        %v10421 = vpow.pop %v10420
        %v10422 = vmul.f32 %v10392, 1.442695
        %v10423 = vpow.pop %v10422
        %v10424 = vmul.f32 %v10393, 1.442695
        %v10425 = vpow.pop %v10424
        %v10426 = vmul.f32 %v10394, 1.442695
        %v10427 = vpow.pop %v10426
        %v10428 = vmul.f32 %v10395, 1.442695
        %v10429 = vpow.pop %v10428
        %v10430 = vmul.f32 %v10396, 1.442695
        %v10431 = vpow.pop %v10430
        %v10432 = vmul.f32 %v10397, 1.442695
        %v10433 = vpow.pop %v10432
        %v10434 = vmul.f32 %v10398, 1.442695
        %v10435 = vpow.pop %v10434
        %v10436 = vmul.f32 %v10399, 1.442695
        %v10437 = vpow.pop %v10436
        %v10438 = vmul.f32 %v10400, 1.442695
        %v10439 = vpow.pop %v10438
        %v10440 = vmul.f32 %v10401, 1.442695
        %v10441 = vpow.pop %v10440
        %v10442 = vmul.f32 %v10402, 1.442695
        %v10443 = vpow.pop %v10442
        %v10444 = vmul.f32 %v10403, 1.442695
        %v10445 = vpow.pop %v10444
        %v10446 = vmul.f32 %v10404, 1.442695
        %v10447 = vpow.pop %v10446
        %v10448 = vmul.f32 %v10405, 1.442695
        %v10449 = vpow.pop %v10448
        %v10450 = vmul.f32 %v10406, 1.442695
        %v10451 = vpow.pop %v10450
        %v10452 = vmul.f32 %v10407, 1.442695
        %v10453 = vpow.pop %v10452
        %v10454 = vmul.f32 %v10408, 1.442695
        %v10455 = vpow.pop %v10454
        %v10456 = vmul.f32 %v10409, 1.442695
        %v10457 = vpow.pop %v10456
        %v10458 = vadd.f32 %v10411, 1.0
        %v10459 = vadd.f32 %v10413, 1.0
        %v10460 = vadd.f32 %v10415, 1.0
        %v10461 = vadd.f32 %v10417, 1.0
        %v10462 = vadd.f32 %v10419, 1.0
        %v10463 = vadd.f32 %v10421, 1.0
        %v10464 = vadd.f32 %v10423, 1.0
        %v10465 = vadd.f32 %v10425, 1.0
        %v10466 = vadd.f32 %v10427, 1.0
        %v10467 = vadd.f32 %v10429, 1.0
        %v10468 = vadd.f32 %v10431, 1.0
        %v10469 = vadd.f32 %v10433, 1.0
        %v10470 = vadd.f32 %v10435, 1.0
        %v10471 = vadd.f32 %v10437, 1.0
        %v10472 = vadd.f32 %v10439, 1.0
        %v10473 = vadd.f32 %v10441, 1.0
        %v10474 = vadd.f32 %v10443, 1.0
        %v10475 = vadd.f32 %v10445, 1.0
        %v10476 = vadd.f32 %v10447, 1.0
        %v10477 = vadd.f32 %v10449, 1.0
        %v10478 = vadd.f32 %v10451, 1.0
        %v10479 = vadd.f32 %v10453, 1.0
        %v10480 = vadd.f32 %v10455, 1.0
        %v10481 = vadd.f32 %v10457, 1.0
        %v10482 = vrcp.pop %v10458
        %v10483 = vmul.f32 1.0, %v10482
        %v10484 = vrcp.pop %v10459
        %v10485 = vmul.f32 1.0, %v10484
        %v10486 = vrcp.pop %v10460
        %v10487 = vmul.f32 1.0, %v10486
        %v10488 = vrcp.pop %v10461
        %v10489 = vmul.f32 1.0, %v10488
        %v10490 = vrcp.pop %v10462
        %v10491 = vmul.f32 1.0, %v10490
        %v10492 = vrcp.pop %v10463
        %v10493 = vmul.f32 1.0, %v10492
        %v10494 = vrcp.pop %v10464
        %v10495 = vmul.f32 1.0, %v10494
        %v10496 = vrcp.pop %v10465
        %v10497 = vmul.f32 1.0, %v10496
        %v10498 = vrcp.pop %v10466
        %v10499 = vmul.f32 1.0, %v10498
        %v10500 = vrcp.pop %v10467
        %v10501 = vmul.f32 1.0, %v10500
        %v10502 = vrcp.pop %v10468
        %v10503 = vmul.f32 1.0, %v10502
        %v10504 = vrcp.pop %v10469
        %v10505 = vmul.f32 1.0, %v10504
        %v10506 = vrcp.pop %v10470
        %v10507 = vmul.f32 1.0, %v10506
        %v10508 = vrcp.pop %v10471
        %v10509 = vmul.f32 1.0, %v10508
        %v10510 = vrcp.pop %v10472
        %v10511 = vmul.f32 1.0, %v10510
        %v10512 = vrcp.pop %v10473
        %v10513 = vmul.f32 1.0, %v10512
        %v10514 = vrcp.pop %v10474
        %v10515 = vmul.f32 1.0, %v10514
        %v10516 = vrcp.pop %v10475
        %v10517 = vmul.f32 1.0, %v10516
        %v10518 = vrcp.pop %v10476
        %v10519 = vmul.f32 1.0, %v10518
        %v10520 = vrcp.pop %v10477
        %v10521 = vmul.f32 1.0, %v10520
        %v10522 = vrcp.pop %v10478
        %v10523 = vmul.f32 1.0, %v10522
        %v10524 = vrcp.pop %v10479
        %v10525 = vmul.f32 1.0, %v10524
        %v10526 = vrcp.pop %v10480
        %v10527 = vmul.f32 1.0, %v10526
        %v10528 = vrcp.pop %v10481
        %v10529 = vmul.f32 1.0, %v10528
        %v10530 = vadd.f32 %v10022, %v10483
        %v10531 = vadd.f32 %v10023, %v10485
        %v10532 = vadd.f32 %v10024, %v10487
        %v10533 = vadd.f32 %v10025, %v10489
        %v10534 = vadd.f32 %v10026, %v10491
        %v10535 = vadd.f32 %v10027, %v10493
        %v10536 = vadd.f32 %v10028, %v10495
        %v10537 = vadd.f32 %v10029, %v10497
        %v10538 = vadd.f32 %v10030, %v10499
        %v10539 = vadd.f32 %v10031, %v10501
        %v10540 = vadd.f32 %v10032, %v10503
        %v10541 = vadd.f32 %v10033, %v10505
        %v10542 = vadd.f32 %v10034, %v10507
        %v10543 = vadd.f32 %v10035, %v10509
        %v10544 = vadd.f32 %v10036, %v10511
        %v10545 = vadd.f32 %v10037, %v10513
        %v10546 = vadd.f32 %v10038, %v10515
        %v10547 = vadd.f32 %v10039, %v10517
        %v10548 = vadd.f32 %v10040, %v10519
        %v10549 = vadd.f32 %v10041, %v10521
        %v10550 = vadd.f32 %v10042, %v10523
        %v10551 = vadd.f32 %v10043, %v10525
        %v10552 = vadd.f32 %v10044, %v10527
        %v10553 = vadd.f32 %v10045, %v10529
        %v10554 = vmul.f32 %v5203, %v5205
        %v10555 = vmul.f32 %v5207, %v5209
        %v10556 = vmul.f32 %v5213, %v5215
        %v10557 = vmul.f32 %v5217, %v5219
        %v10558 = vmul.f32 %v5223, %v5225
        %v10559 = vmul.f32 %v5227, %v5229
        %v10560 = vmul.f32 %v10554, %v5329
        %v10561 = vmul.f32 %v10555, %v5333
        %v10562 = vmul.f32 %v10556, %v5339
        %v10563 = vmul.f32 %v10557, %v5343
        %v10564 = vmul.f32 %v10558, %v5349
        %v10565 = vmul.f32 %v10559, %v5353
        %v10566 = vmul.f32 %v10560, %v5331
        %v10567 = vmul.f32 %v10561, %v5335
        %v10568 = vmul.f32 %v10562, %v5341
        %v10569 = vmul.f32 %v10563, %v5345
        %v10570 = vmul.f32 %v10564, %v5351
        %v10571 = vmul.f32 %v10565, %v5355
        %v10572 = vmax.f32 %v10566, 0.0
        %v10573 = vmax.f32 %v10567, 0.0
        %v10574 = vmax.f32 %v10568, 0.0
        %v10575 = vmax.f32 %v10569, 0.0
        %v10576 = vmax.f32 %v10570, 0.0
        %v10577 = vmax.f32 %v10571, 0.0
        %v10578 = vpack.c.bf16 %v10573, %v10572
        %v10579 = vpack.c.bf16 %v10575, %v10574
        %v10580 = vpack.c.bf16 %v10577, %v10576
        %s10581 = scalar_lea.vmem [#allocation6], 2304
        %v10582 = vld [vmem:[%s10581] sm:$0xff]
        %v10583 = vld [vmem:[%s10581 + $0x8] sm:$0xff]
        %v10584 = vld [vmem:[%s10581 + $0x10] sm:$0xff]
        %v10585 = vld [vmem:[%s10581 + $0x18] sm:$0xff]
        %v10586 = vld [vmem:[%s10581 + $0x20] sm:$0xff]
        %v10587 = vld [vmem:[%s10581 + $0x28] sm:$0xff]
        %v10588 = vld [vmem:[%s10581 + $0x30] sm:$0xff]
        %v10589 = vld [vmem:[%s10581 + $0x38] sm:$0xff]
        %v10590 = vld [vmem:[%s10581 + $0x40] sm:$0xff]
        %v10591 = vld [vmem:[%s10581 + $0x48] sm:$0xff]
        %v10592 = vld [vmem:[%s10581 + $0x50] sm:$0xff]
        %v10593 = vld [vmem:[%s10581 + $0x58] sm:$0xff]
        %v10594 = vld [vmem:[%s10581 + $0x60] sm:$0xff]
        %v10595 = vld [vmem:[%s10581 + $0x68] sm:$0xff]
        %v10596 = vld [vmem:[%s10581 + $0x70] sm:$0xff]
        %v10597 = vld [vmem:[%s10581 + $0x78] sm:$0xff]
        %v10598 = vld [vmem:[%s10581 + $0x80] sm:$0xff]
        %v10599 = vld [vmem:[%s10581 + $0x88] sm:$0xff]
        %v10600 = vld [vmem:[%s10581 + $0x90] sm:$0xff]
        %v10601 = vld [vmem:[%s10581 + $0x98] sm:$0xff]
        %v10602 = vld [vmem:[%s10581 + $0xa0] sm:$0xff]
        %v10603 = vld [vmem:[%s10581 + $0xa8] sm:$0xff]
        %v10604 = vld [vmem:[%s10581 + $0xb0] sm:$0xff]
        %v10605 = vld [vmem:[%s10581 + $0xb8] sm:$0xff]
        %v10606 = vld [vmem:[%s10581 + $0xc0] sm:$0xff]
        %v10607 = vld [vmem:[%s10581 + $0xc8] sm:$0xff]
        %v10608 = vld [vmem:[%s10581 + $0xd0] sm:$0xff]
        %v10609 = vld [vmem:[%s10581 + $0xd8] sm:$0xff]
        %v10610 = vld [vmem:[%s10581 + $0xe0] sm:$0xff]
        %v10611 = vld [vmem:[%s10581 + $0xe8] sm:$0xff]
        %v10612 = vld [vmem:[%s10581 + $0xf0] sm:$0xff]
        %v10613 = vld [vmem:[%s10581 + $0xf8] sm:$0xff]
        %v10646 = vunpack.c.l.b16 %v10582
        %v10647 = vunpack.c.h.b16 %v10582
        %v10648 = vunpack.c.l.b16 %v10583
        %v10649 = vunpack.c.h.b16 %v10583
        %v10650 = vunpack.c.l.b16 %v10584
        %v10651 = vunpack.c.h.b16 %v10584
        %v10652 = vunpack.c.l.b16 %v10585
        %v10653 = vunpack.c.h.b16 %v10585
        %v10654 = vunpack.c.l.b16 %v10586
        %v10655 = vunpack.c.h.b16 %v10586
        %v10656 = vunpack.c.l.b16 %v10587
        %v10657 = vunpack.c.h.b16 %v10587
        %v10658 = vunpack.c.l.b16 %v10588
        %v10659 = vunpack.c.h.b16 %v10588
        %v10660 = vunpack.c.l.b16 %v10589
        %v10661 = vunpack.c.h.b16 %v10589
        %v10662 = vunpack.c.l.b16 %v10590
        %v10663 = vunpack.c.h.b16 %v10590
        %v10664 = vunpack.c.l.b16 %v10591
        %v10665 = vunpack.c.h.b16 %v10591
        %v10666 = vunpack.c.l.b16 %v10592
        %v10667 = vunpack.c.h.b16 %v10592
        %v10668 = vunpack.c.l.b16 %v10593
        %v10669 = vunpack.c.h.b16 %v10593
        %v10670 = vunpack.c.l.b16 %v10594
        %v10671 = vunpack.c.h.b16 %v10594
        %v10672 = vunpack.c.l.b16 %v10595
        %v10673 = vunpack.c.h.b16 %v10595
        %v10674 = vunpack.c.l.b16 %v10596
        %v10675 = vunpack.c.h.b16 %v10596
        %v10676 = vunpack.c.l.b16 %v10597
        %v10677 = vunpack.c.h.b16 %v10597
        %v10678 = vunpack.c.l.b16 %v10598
        %v10679 = vunpack.c.h.b16 %v10598
        %v10680 = vunpack.c.l.b16 %v10599
        %v10681 = vunpack.c.h.b16 %v10599
        %v10682 = vunpack.c.l.b16 %v10600
        %v10683 = vunpack.c.h.b16 %v10600
        %v10684 = vunpack.c.l.b16 %v10601
        %v10685 = vunpack.c.h.b16 %v10601
        %v10686 = vunpack.c.l.b16 %v10602
        %v10687 = vunpack.c.h.b16 %v10602
        %v10688 = vunpack.c.l.b16 %v10603
        %v10689 = vunpack.c.h.b16 %v10603
        %v10690 = vunpack.c.l.b16 %v10604
        %v10691 = vunpack.c.h.b16 %v10604
        %v10692 = vunpack.c.l.b16 %v10605
        %v10693 = vunpack.c.h.b16 %v10605
        %v10694 = vunpack.c.l.b16 %v10606
        %v10695 = vunpack.c.h.b16 %v10606
        %v10696 = vunpack.c.l.b16 %v10607
        %v10697 = vunpack.c.h.b16 %v10607
        %v10698 = vunpack.c.l.b16 %v10608
        %v10699 = vunpack.c.h.b16 %v10608
        %v10700 = vunpack.c.l.b16 %v10609
        %v10701 = vunpack.c.h.b16 %v10609
        %v10702 = vunpack.c.l.b16 %v10610
        %v10703 = vunpack.c.h.b16 %v10610
        %v10704 = vunpack.c.l.b16 %v10611
        %v10705 = vunpack.c.h.b16 %v10611
        %v10706 = vunpack.c.l.b16 %v10612
        %v10707 = vunpack.c.h.b16 %v10612
        %v10708 = vunpack.c.l.b16 %v10613
        %v10709 = vunpack.c.h.b16 %v10613
        %v10710 = vpack.c.b16 %v10650, %v10646
        %v10711 = vpack.c.b16 %v10651, %v10647
        %v10712 = vpack.c.b16 %v10652, %v10648
        %v10713 = vpack.c.b16 %v10653, %v10649
        %v10714 = vpack.c.b16 %v10658, %v10654
        %v10715 = vpack.c.b16 %v10659, %v10655
        %v10716 = vpack.c.b16 %v10660, %v10656
        %v10717 = vpack.c.b16 %v10661, %v10657
        %v10718 = vpack.c.b16 %v10666, %v10662
        %v10719 = vpack.c.b16 %v10667, %v10663
        %v10720 = vpack.c.b16 %v10668, %v10664
        %v10721 = vpack.c.b16 %v10669, %v10665
        %v10722 = vpack.c.b16 %v10674, %v10670
        %v10723 = vpack.c.b16 %v10675, %v10671
        %v10724 = vpack.c.b16 %v10676, %v10672
        %v10725 = vpack.c.b16 %v10677, %v10673
        %v10726 = vpack.c.b16 %v10682, %v10678
        %v10727 = vpack.c.b16 %v10683, %v10679
        %v10728 = vpack.c.b16 %v10684, %v10680
        %v10729 = vpack.c.b16 %v10685, %v10681
        %v10730 = vpack.c.b16 %v10690, %v10686
        %v10731 = vpack.c.b16 %v10691, %v10687
        %v10732 = vpack.c.b16 %v10692, %v10688
        %v10733 = vpack.c.b16 %v10693, %v10689
        %v10734 = vpack.c.b16 %v10698, %v10694
        %v10735 = vpack.c.b16 %v10699, %v10695
        %v10736 = vpack.c.b16 %v10700, %v10696
        %v10737 = vpack.c.b16 %v10701, %v10697
        %v10738 = vpack.c.b16 %v10706, %v10702
        %v10739 = vpack.c.b16 %v10707, %v10703
        %v10740 = vpack.c.b16 %v10708, %v10704
        %v10741 = vpack.c.b16 %v10709, %v10705
        %10774 = vmatprep.subr.bf16.mxu0 %v10711
        %10775 = vmatpush1.bf16.msra.mxu0 %v10710
        %10776 = vmatprep.subr.bf16.mxu0 %v10715
        %10777 = vmatpush1.bf16.msra.mxu0 %v10714
        %10778 = vmatprep.subr.bf16.mxu0 %v10719
        %10779 = vmatpush1.bf16.msra.mxu0 %v10718
        %10780 = vmatprep.subr.bf16.mxu0 %v10723
        %10781 = vmatpush1.bf16.msra.mxu0 %v10722
        %10782 = vmatprep.subr.bf16.mxu0 %v10727
        %10783 = vmatpush1.bf16.msra.mxu0 %v10726
        %10784 = vmatprep.subr.bf16.mxu0 %v10731
        %10785 = vmatpush1.bf16.msra.mxu0 %v10730
        %10786 = vmatprep.subr.bf16.mxu0 %v10735
        %10787 = vmatpush1.bf16.msra.mxu0 %v10734
        %10788 = vmatprep.subr.bf16.mxu0 %v10739
        %10789 = vmatpush1.bf16.msra.mxu0 %v10738
        %10790 = vmatprep.subr.bf16.mxu0 0
        %10791 = vmatpush1.bf16.msra.mxu0 0
        %10792 = vmatprep.subr.bf16.mxu0 0
        %10793 = vmatpush1.bf16.msra.mxu0 0
        %10794 = vmatprep.subr.bf16.mxu0 0
        %10795 = vmatpush1.bf16.msra.mxu0 0
        %10796 = vmatprep.subr.bf16.mxu0 0
        %10797 = vmatpush1.bf16.msra.mxu0 0
        %10798 = vmatprep.subr.bf16.mxu0 0
        %10799 = vmatpush1.bf16.msra.mxu0 0
        %10800 = vmatprep.subr.bf16.mxu0 0
        %10801 = vmatpush1.bf16.msra.mxu0 0
        %10802 = vmatprep.subr.bf16.mxu0 0
        %10803 = vmatpush1.bf16.msra.mxu0 0
        %10804 = vmatprep.subr.bf16.mxu0 0
        %10805 = vmatpush1.bf16.msra.mxu0 0
        %10806 = vmatprep.mubr.bf16.mxu0 0
        %10807 = vmatmul.mubr.bf16.gmra.mrb[0].mxu0 %v10578
        %v10808 = vpop.f32.mrb[0].mxu0
        %v10809 = vadd.f32 0.0, %v10808
        %v10810 = vpop.f32.mrb[0].mxu0
        %v10811 = vadd.f32 0.0, %v10810
        %v10812 = vpop.f32.mrb[0].mxu0
        %v10813 = vadd.f32 0.0, %v10812
        %v10814 = vpop.f32.mrb[0].mxu0
        %v10815 = vadd.f32 0.0, %v10814
        %10816 = vmatprep.mubr.bf16.mxu0 0
        %10817 = vmatmul.mubr.bf16.gmra.mrb[0].mxu0 %v10579
        %v10818 = vpop.f32.mrb[0].mxu0
        %v10819 = vadd.f32 0.0, %v10818
        %v10820 = vpop.f32.mrb[0].mxu0
        %v10821 = vadd.f32 0.0, %v10820
        %v10822 = vpop.f32.mrb[0].mxu0
        %v10823 = vadd.f32 0.0, %v10822
        %v10824 = vpop.f32.mrb[0].mxu0
        %v10825 = vadd.f32 0.0, %v10824
        %10826 = vmatprep.mubr.bf16.mxu0 0
        %10827 = vmatmul.mubr.bf16.gmra.mrb[0].mxu0 %v10580
        %v10828 = vpop.f32.mrb[0].mxu0
        %v10829 = vadd.f32 0.0, %v10828
        %v10830 = vpop.f32.mrb[0].mxu0
        %v10831 = vadd.f32 0.0, %v10830
        %v10832 = vpop.f32.mrb[0].mxu0
        %v10833 = vadd.f32 0.0, %v10832
        %v10834 = vpop.f32.mrb[0].mxu0
        %v10835 = vadd.f32 0.0, %v10834
        %10836 = vdwg.mxu0
        %10837 = vmatprep.subr.bf16.mxu0 %v10713
        %10838 = vmatpush1.bf16.msra.mxu0 %v10712
        %10839 = vmatprep.subr.bf16.mxu0 %v10717
        %10840 = vmatpush1.bf16.msra.mxu0 %v10716
        %10841 = vmatprep.subr.bf16.mxu0 %v10721
        %10842 = vmatpush1.bf16.msra.mxu0 %v10720
        %10843 = vmatprep.subr.bf16.mxu0 %v10725
        %10844 = vmatpush1.bf16.msra.mxu0 %v10724
        %10845 = vmatprep.subr.bf16.mxu0 %v10729
        %10846 = vmatpush1.bf16.msra.mxu0 %v10728
        %10847 = vmatprep.subr.bf16.mxu0 %v10733
        %10848 = vmatpush1.bf16.msra.mxu0 %v10732
        %10849 = vmatprep.subr.bf16.mxu0 %v10737
        %10850 = vmatpush1.bf16.msra.mxu0 %v10736
        %10851 = vmatprep.subr.bf16.mxu0 %v10741
        %10852 = vmatpush1.bf16.msra.mxu0 %v10740
        %10853 = vmatprep.subr.bf16.mxu0 0
        %10854 = vmatpush1.bf16.msra.mxu0 0
        %10855 = vmatprep.subr.bf16.mxu0 0
        %10856 = vmatpush1.bf16.msra.mxu0 0
        %10857 = vmatprep.subr.bf16.mxu0 0
        %10858 = vmatpush1.bf16.msra.mxu0 0
        %10859 = vmatprep.subr.bf16.mxu0 0
        %10860 = vmatpush1.bf16.msra.mxu0 0
        %10861 = vmatprep.subr.bf16.mxu0 0
        %10862 = vmatpush1.bf16.msra.mxu0 0
        %10863 = vmatprep.subr.bf16.mxu0 0
        %10864 = vmatpush1.bf16.msra.mxu0 0
        %10865 = vmatprep.subr.bf16.mxu0 0
        %10866 = vmatpush1.bf16.msra.mxu0 0
        %10867 = vmatprep.subr.bf16.mxu0 0
        %10868 = vmatpush1.bf16.msra.mxu0 0
        %10869 = vmatprep.mubr.bf16.mxu0 0
        %10870 = vmatmul.mubr.bf16.gmra.mrb[0].mxu0 %v10578
        %v10871 = vpop.f32.mrb[0].mxu0
        %v10872 = vadd.f32 0.0, %v10871
        %v10873 = vpop.f32.mrb[0].mxu0
        %v10874 = vadd.f32 0.0, %v10873
        %v10875 = vpop.f32.mrb[0].mxu0
        %v10876 = vadd.f32 0.0, %v10875
        %v10877 = vpop.f32.mrb[0].mxu0
        %v10878 = vadd.f32 0.0, %v10877
        %10879 = vmatprep.mubr.bf16.mxu0 0
        %10880 = vmatmul.mubr.bf16.gmra.mrb[0].mxu0 %v10579
        %v10881 = vpop.f32.mrb[0].mxu0
        %v10882 = vadd.f32 0.0, %v10881
        %v10883 = vpop.f32.mrb[0].mxu0
        %v10884 = vadd.f32 0.0, %v10883
        %v10885 = vpop.f32.mrb[0].mxu0
        %v10886 = vadd.f32 0.0, %v10885
        %v10887 = vpop.f32.mrb[0].mxu0
        %v10888 = vadd.f32 0.0, %v10887
        %10889 = vmatprep.mubr.bf16.mxu0 0
        %10890 = vmatmul.mubr.bf16.gmra.mrb[0].mxu0 %v10580
        %v10891 = vpop.f32.mrb[0].mxu0
        %v10892 = vadd.f32 0.0, %v10891
        %v10893 = vpop.f32.mrb[0].mxu0
        %v10894 = vadd.f32 0.0, %v10893
        %v10895 = vpop.f32.mrb[0].mxu0
        %v10896 = vadd.f32 0.0, %v10895
        %v10897 = vpop.f32.mrb[0].mxu0
        %v10898 = vadd.f32 0.0, %v10897
        %10899 = vdwg.mxu0
        %v10900 = vxor.u32 %v10809, 2147483648
        %v10901 = vxor.u32 %v10811, 2147483648
        %v10902 = vxor.u32 %v10872, 2147483648
        %v10903 = vxor.u32 %v10874, 2147483648
        %v10904 = vxor.u32 %v10813, 2147483648
        %v10905 = vxor.u32 %v10815, 2147483648
        %v10906 = vxor.u32 %v10876, 2147483648
        %v10907 = vxor.u32 %v10878, 2147483648
        %v10908 = vxor.u32 %v10819, 2147483648
        %v10909 = vxor.u32 %v10821, 2147483648
        %v10910 = vxor.u32 %v10882, 2147483648
        %v10911 = vxor.u32 %v10884, 2147483648
        %v10912 = vxor.u32 %v10823, 2147483648
        %v10913 = vxor.u32 %v10825, 2147483648
        %v10914 = vxor.u32 %v10886, 2147483648
        %v10915 = vxor.u32 %v10888, 2147483648
        %v10916 = vxor.u32 %v10829, 2147483648
        %v10917 = vxor.u32 %v10831, 2147483648
        %v10918 = vxor.u32 %v10892, 2147483648
        %v10919 = vxor.u32 %v10894, 2147483648
        %v10920 = vxor.u32 %v10833, 2147483648
        %v10921 = vxor.u32 %v10835, 2147483648
        %v10922 = vxor.u32 %v10896, 2147483648
        %v10923 = vxor.u32 %v10898, 2147483648
        %v10924 = vmul.f32 %v10900, 1.442695
        %v10925 = vpow.pop %v10924
        %v10926 = vmul.f32 %v10901, 1.442695
        %v10927 = vpow.pop %v10926
        %v10928 = vmul.f32 %v10902, 1.442695
        %v10929 = vpow.pop %v10928
        %v10930 = vmul.f32 %v10903, 1.442695
        %v10931 = vpow.pop %v10930
        %v10932 = vmul.f32 %v10904, 1.442695
        %v10933 = vpow.pop %v10932
        %v10934 = vmul.f32 %v10905, 1.442695
        %v10935 = vpow.pop %v10934
        %v10936 = vmul.f32 %v10906, 1.442695
        %v10937 = vpow.pop %v10936
        %v10938 = vmul.f32 %v10907, 1.442695
        %v10939 = vpow.pop %v10938
        %v10940 = vmul.f32 %v10908, 1.442695
        %v10941 = vpow.pop %v10940
        %v10942 = vmul.f32 %v10909, 1.442695
        %v10943 = vpow.pop %v10942
        %v10944 = vmul.f32 %v10910, 1.442695
        %v10945 = vpow.pop %v10944
        %v10946 = vmul.f32 %v10911, 1.442695
        %v10947 = vpow.pop %v10946
        %v10948 = vmul.f32 %v10912, 1.442695
        %v10949 = vpow.pop %v10948
        %v10950 = vmul.f32 %v10913, 1.442695
        %v10951 = vpow.pop %v10950
        %v10952 = vmul.f32 %v10914, 1.442695
        %v10953 = vpow.pop %v10952
        %v10954 = vmul.f32 %v10915, 1.442695
        %v10955 = vpow.pop %v10954
        %v10956 = vmul.f32 %v10916, 1.442695
        %v10957 = vpow.pop %v10956
        %v10958 = vmul.f32 %v10917, 1.442695
        %v10959 = vpow.pop %v10958
        %v10960 = vmul.f32 %v10918, 1.442695
        %v10961 = vpow.pop %v10960
        %v10962 = vmul.f32 %v10919, 1.442695
        %v10963 = vpow.pop %v10962
        %v10964 = vmul.f32 %v10920, 1.442695
        %v10965 = vpow.pop %v10964
        %v10966 = vmul.f32 %v10921, 1.442695
        %v10967 = vpow.pop %v10966
        %v10968 = vmul.f32 %v10922, 1.442695
        %v10969 = vpow.pop %v10968
        %v10970 = vmul.f32 %v10923, 1.442695
        %v10971 = vpow.pop %v10970
        %v10972 = vadd.f32 %v10925, 1.0
        %v10973 = vadd.f32 %v10927, 1.0
        %v10974 = vadd.f32 %v10929, 1.0
        %v10975 = vadd.f32 %v10931, 1.0
        %v10976 = vadd.f32 %v10933, 1.0
        %v10977 = vadd.f32 %v10935, 1.0
        %v10978 = vadd.f32 %v10937, 1.0
        %v10979 = vadd.f32 %v10939, 1.0
        %v10980 = vadd.f32 %v10941, 1.0
        %v10981 = vadd.f32 %v10943, 1.0
        %v10982 = vadd.f32 %v10945, 1.0
        %v10983 = vadd.f32 %v10947, 1.0
        %v10984 = vadd.f32 %v10949, 1.0
        %v10985 = vadd.f32 %v10951, 1.0
        %v10986 = vadd.f32 %v10953, 1.0
        %v10987 = vadd.f32 %v10955, 1.0
        %v10988 = vadd.f32 %v10957, 1.0
        %v10989 = vadd.f32 %v10959, 1.0
        %v10990 = vadd.f32 %v10961, 1.0
        %v10991 = vadd.f32 %v10963, 1.0
        %v10992 = vadd.f32 %v10965, 1.0
        %v10993 = vadd.f32 %v10967, 1.0
        %v10994 = vadd.f32 %v10969, 1.0
        %v10995 = vadd.f32 %v10971, 1.0
        %v10996 = vrcp.pop %v10972
        %v10997 = vmul.f32 1.0, %v10996
        %v10998 = vrcp.pop %v10973
        %v10999 = vmul.f32 1.0, %v10998
        %v11000 = vrcp.pop %v10974
        %v11001 = vmul.f32 1.0, %v11000
        %v11002 = vrcp.pop %v10975
        %v11003 = vmul.f32 1.0, %v11002
        %v11004 = vrcp.pop %v10976
        %v11005 = vmul.f32 1.0, %v11004
        %v11006 = vrcp.pop %v10977
        %v11007 = vmul.f32 1.0, %v11006
        %v11008 = vrcp.pop %v10978
        %v11009 = vmul.f32 1.0, %v11008
        %v11010 = vrcp.pop %v10979
        %v11011 = vmul.f32 1.0, %v11010
        %v11012 = vrcp.pop %v10980
        %v11013 = vmul.f32 1.0, %v11012
        %v11014 = vrcp.pop %v10981
        %v11015 = vmul.f32 1.0, %v11014
        %v11016 = vrcp.pop %v10982
        %v11017 = vmul.f32 1.0, %v11016
        %v11018 = vrcp.pop %v10983
        %v11019 = vmul.f32 1.0, %v11018
        %v11020 = vrcp.pop %v10984
        %v11021 = vmul.f32 1.0, %v11020
        %v11022 = vrcp.pop %v10985
        %v11023 = vmul.f32 1.0, %v11022
        %v11024 = vrcp.pop %v10986
        %v11025 = vmul.f32 1.0, %v11024
        %v11026 = vrcp.pop %v10987
        %v11027 = vmul.f32 1.0, %v11026
        %v11028 = vrcp.pop %v10988
        %v11029 = vmul.f32 1.0, %v11028
        %v11030 = vrcp.pop %v10989
        %v11031 = vmul.f32 1.0, %v11030
        %v11032 = vrcp.pop %v10990
        %v11033 = vmul.f32 1.0, %v11032
        %v11034 = vrcp.pop %v10991
        %v11035 = vmul.f32 1.0, %v11034
        %v11036 = vrcp.pop %v10992
        %v11037 = vmul.f32 1.0, %v11036
        %v11038 = vrcp.pop %v10993
        %v11039 = vmul.f32 1.0, %v11038
        %v11040 = vrcp.pop %v10994
        %v11041 = vmul.f32 1.0, %v11040
        %v11042 = vrcp.pop %v10995
        %v11043 = vmul.f32 1.0, %v11042
        %v11044 = vadd.f32 %v10530, %v10997
        %v11045 = vadd.f32 %v10531, %v10999
        %v11046 = vadd.f32 %v10532, %v11001
        %v11047 = vadd.f32 %v10533, %v11003
        %v11048 = vadd.f32 %v10534, %v11005
        %v11049 = vadd.f32 %v10535, %v11007
        %v11050 = vadd.f32 %v10536, %v11009
        %v11051 = vadd.f32 %v10537, %v11011
        %v11052 = vadd.f32 %v10538, %v11013
        %v11053 = vadd.f32 %v10539, %v11015
        %v11054 = vadd.f32 %v10540, %v11017
        %v11055 = vadd.f32 %v10541, %v11019
        %v11056 = vadd.f32 %v10542, %v11021
        %v11057 = vadd.f32 %v10543, %v11023
        %v11058 = vadd.f32 %v10544, %v11025
        %v11059 = vadd.f32 %v10545, %v11027
        %v11060 = vadd.f32 %v10546, %v11029
        %v11061 = vadd.f32 %v10547, %v11031
        %v11062 = vadd.f32 %v10548, %v11033
        %v11063 = vadd.f32 %v10549, %v11035
        %v11064 = vadd.f32 %v10550, %v11037
        %v11065 = vadd.f32 %v10551, %v11039
        %v11066 = vadd.f32 %v10552, %v11041
        %v11067 = vadd.f32 %v10553, %v11043
        %v11068 = vmul.f32 %v221, %v11044
        %v11069 = vmul.f32 %v222, %v11045
        %v11070 = vmul.f32 %v223, %v11046
        %v11071 = vmul.f32 %v224, %v11047
        %v11072 = vmul.f32 %v225, %v11048
        %v11073 = vmul.f32 %v226, %v11049
        %v11074 = vmul.f32 %v227, %v11050
        %v11075 = vmul.f32 %v228, %v11051
        %v11076 = vmul.f32 %v229, %v11052
        %v11077 = vmul.f32 %v230, %v11053
        %v11078 = vmul.f32 %v231, %v11054
        %v11079 = vmul.f32 %v232, %v11055
        %v11080 = vmul.f32 %v233, %v11056
        %v11081 = vmul.f32 %v234, %v11057
        %v11082 = vmul.f32 %v235, %v11058
        %v11083 = vmul.f32 %v236, %v11059
        %v11084 = vmul.f32 %v237, %v11060
        %v11085 = vmul.f32 %v238, %v11061
        %v11086 = vmul.f32 %v239, %v11062
        %v11087 = vmul.f32 %v240, %v11063
        %v11088 = vmul.f32 %v241, %v11064
        %v11089 = vmul.f32 %v242, %v11065
        %v11090 = vmul.f32 %v243, %v11066
        %v11091 = vmul.f32 %v244, %v11067
        %v11092 = vmul.f32 %v11068, 0.25
        %v11093 = vmul.f32 %v11069, 0.25
        %v11094 = vmul.f32 %v11070, 0.25
        %v11095 = vmul.f32 %v11071, 0.25
        %v11096 = vmul.f32 %v11072, 0.25
        %v11097 = vmul.f32 %v11073, 0.25
        %v11098 = vmul.f32 %v11074, 0.25
        %v11099 = vmul.f32 %v11075, 0.25
        %v11100 = vmul.f32 %v11076, 0.25
        %v11101 = vmul.f32 %v11077, 0.25
        %v11102 = vmul.f32 %v11078, 0.25
        %v11103 = vmul.f32 %v11079, 0.25
        %v11104 = vmul.f32 %v11080, 0.25
        %v11105 = vmul.f32 %v11081, 0.25
        %v11106 = vmul.f32 %v11082, 0.25
        %v11107 = vmul.f32 %v11083, 0.25
        %v11108 = vmul.f32 %v11084, 0.25
        %v11109 = vmul.f32 %v11085, 0.25
        %v11110 = vmul.f32 %v11086, 0.25
        %v11111 = vmul.f32 %v11087, 0.25
        %v11112 = vmul.f32 %v11088, 0.25
        %v11113 = vmul.f32 %v11089, 0.25
        %v11114 = vmul.f32 %v11090, 0.25
        %v11115 = vmul.f32 %v11091, 0.25
        %v11116 = vrot.slane %v11092, 4
        %v11117 = vadd.f32 %v11092, %v11116
        %v11118 = vrot.slane %v11117, 2
        %v11119 = vadd.f32 %v11117, %v11118
        %v11120 = vrot.slane %v11119, 1
        %v11121 = vadd.f32 %v11119, %v11120
        %v11122 = vrot.slane %v11093, 4
        %v11123 = vadd.f32 %v11093, %v11122
        %v11124 = vrot.slane %v11123, 2
        %v11125 = vadd.f32 %v11123, %v11124
        %v11126 = vrot.slane %v11125, 1
        %v11127 = vadd.f32 %v11125, %v11126
        %v11128 = vrot.slane %v11094, 4
        %v11129 = vadd.f32 %v11094, %v11128
        %v11130 = vrot.slane %v11129, 2
        %v11131 = vadd.f32 %v11129, %v11130
        %v11132 = vrot.slane %v11131, 1
        %v11133 = vadd.f32 %v11131, %v11132
        %v11134 = vrot.slane %v11095, 4
        %v11135 = vadd.f32 %v11095, %v11134
        %v11136 = vrot.slane %v11135, 2
        %v11137 = vadd.f32 %v11135, %v11136
        %v11138 = vrot.slane %v11137, 1
        %v11139 = vadd.f32 %v11137, %v11138
        %v11140 = vrot.slane %v11096, 4
        %v11141 = vadd.f32 %v11096, %v11140
        %v11142 = vrot.slane %v11141, 2
        %v11143 = vadd.f32 %v11141, %v11142
        %v11144 = vrot.slane %v11143, 1
        %v11145 = vadd.f32 %v11143, %v11144
        %v11146 = vrot.slane %v11097, 4
        %v11147 = vadd.f32 %v11097, %v11146
        %v11148 = vrot.slane %v11147, 2
        %v11149 = vadd.f32 %v11147, %v11148
        %v11150 = vrot.slane %v11149, 1
        %v11151 = vadd.f32 %v11149, %v11150
        %v11152 = vrot.slane %v11098, 4
        %v11153 = vadd.f32 %v11098, %v11152
        %v11154 = vrot.slane %v11153, 2
        %v11155 = vadd.f32 %v11153, %v11154
        %v11156 = vrot.slane %v11155, 1
        %v11157 = vadd.f32 %v11155, %v11156
        %v11158 = vrot.slane %v11099, 4
        %v11159 = vadd.f32 %v11099, %v11158
        %v11160 = vrot.slane %v11159, 2
        %v11161 = vadd.f32 %v11159, %v11160
        %v11162 = vrot.slane %v11161, 1
        %v11163 = vadd.f32 %v11161, %v11162
        %v11164 = vrot.slane %v11100, 4
        %v11165 = vadd.f32 %v11100, %v11164
        %v11166 = vrot.slane %v11165, 2
        %v11167 = vadd.f32 %v11165, %v11166
        %v11168 = vrot.slane %v11167, 1
        %v11169 = vadd.f32 %v11167, %v11168
        %v11170 = vrot.slane %v11101, 4
        %v11171 = vadd.f32 %v11101, %v11170
        %v11172 = vrot.slane %v11171, 2
        %v11173 = vadd.f32 %v11171, %v11172
        %v11174 = vrot.slane %v11173, 1
        %v11175 = vadd.f32 %v11173, %v11174
        %v11176 = vrot.slane %v11102, 4
        %v11177 = vadd.f32 %v11102, %v11176
        %v11178 = vrot.slane %v11177, 2
        %v11179 = vadd.f32 %v11177, %v11178
        %v11180 = vrot.slane %v11179, 1
        %v11181 = vadd.f32 %v11179, %v11180
        %v11182 = vrot.slane %v11103, 4
        %v11183 = vadd.f32 %v11103, %v11182
        %v11184 = vrot.slane %v11183, 2
        %v11185 = vadd.f32 %v11183, %v11184
        %v11186 = vrot.slane %v11185, 1
        %v11187 = vadd.f32 %v11185, %v11186
        %v11188 = vrot.slane %v11104, 4
        %v11189 = vadd.f32 %v11104, %v11188
        %v11190 = vrot.slane %v11189, 2
        %v11191 = vadd.f32 %v11189, %v11190
        %v11192 = vrot.slane %v11191, 1
        %v11193 = vadd.f32 %v11191, %v11192
        %v11194 = vrot.slane %v11105, 4
        %v11195 = vadd.f32 %v11105, %v11194
        %v11196 = vrot.slane %v11195, 2
        %v11197 = vadd.f32 %v11195, %v11196
        %v11198 = vrot.slane %v11197, 1
        %v11199 = vadd.f32 %v11197, %v11198
        %v11200 = vrot.slane %v11106, 4
        %v11201 = vadd.f32 %v11106, %v11200
        %v11202 = vrot.slane %v11201, 2
        %v11203 = vadd.f32 %v11201, %v11202
        %v11204 = vrot.slane %v11203, 1
        %v11205 = vadd.f32 %v11203, %v11204
        %v11206 = vrot.slane %v11107, 4
        %v11207 = vadd.f32 %v11107, %v11206
        %v11208 = vrot.slane %v11207, 2
        %v11209 = vadd.f32 %v11207, %v11208
        %v11210 = vrot.slane %v11209, 1
        %v11211 = vadd.f32 %v11209, %v11210
        %v11212 = vrot.slane %v11108, 4
        %v11213 = vadd.f32 %v11108, %v11212
        %v11214 = vrot.slane %v11213, 2
        %v11215 = vadd.f32 %v11213, %v11214
        %v11216 = vrot.slane %v11215, 1
        %v11217 = vadd.f32 %v11215, %v11216
        %v11218 = vrot.slane %v11109, 4
        %v11219 = vadd.f32 %v11109, %v11218
        %v11220 = vrot.slane %v11219, 2
        %v11221 = vadd.f32 %v11219, %v11220
        %v11222 = vrot.slane %v11221, 1
        %v11223 = vadd.f32 %v11221, %v11222
        %v11224 = vrot.slane %v11110, 4
        %v11225 = vadd.f32 %v11110, %v11224
        %v11226 = vrot.slane %v11225, 2
        %v11227 = vadd.f32 %v11225, %v11226
        %v11228 = vrot.slane %v11227, 1
        %v11229 = vadd.f32 %v11227, %v11228
        %v11230 = vrot.slane %v11111, 4
        %v11231 = vadd.f32 %v11111, %v11230
        %v11232 = vrot.slane %v11231, 2
        %v11233 = vadd.f32 %v11231, %v11232
        %v11234 = vrot.slane %v11233, 1
        %v11235 = vadd.f32 %v11233, %v11234
        %v11236 = vrot.slane %v11112, 4
        %v11237 = vadd.f32 %v11112, %v11236
        %v11238 = vrot.slane %v11237, 2
        %v11239 = vadd.f32 %v11237, %v11238
        %v11240 = vrot.slane %v11239, 1
        %v11241 = vadd.f32 %v11239, %v11240
        %v11242 = vrot.slane %v11113, 4
        %v11243 = vadd.f32 %v11113, %v11242
        %v11244 = vrot.slane %v11243, 2
        %v11245 = vadd.f32 %v11243, %v11244
        %v11246 = vrot.slane %v11245, 1
        %v11247 = vadd.f32 %v11245, %v11246
        %v11248 = vrot.slane %v11114, 4
        %v11249 = vadd.f32 %v11114, %v11248
        %v11250 = vrot.slane %v11249, 2
        %v11251 = vadd.f32 %v11249, %v11250
        %v11252 = vrot.slane %v11251, 1
        %v11253 = vadd.f32 %v11251, %v11252
        %v11254 = vrot.slane %v11115, 4
        %v11255 = vadd.f32 %v11115, %v11254
        %v11256 = vrot.slane %v11255, 2
        %v11257 = vadd.f32 %v11255, %v11256
        %v11258 = vrot.slane %v11257, 1
        %v11259 = vadd.f32 %v11257, %v11258
        %v11260 = vmul.f32 %v11121, %v5996
        %v11261 = vmul.f32 %v11127, %v5996
        %v11262 = vmul.f32 %v11133, %v5996
        %v11263 = vmul.f32 %v11139, %v5996
        %v11264 = vmul.f32 %v11145, %v5996
        %v11265 = vmul.f32 %v11151, %v5996
        %v11266 = vmul.f32 %v11157, %v5996
        %v11267 = vmul.f32 %v11163, %v5996
        %v11268 = vmul.f32 %v11169, %v5996
        %v11269 = vmul.f32 %v11175, %v5996
        %v11270 = vmul.f32 %v11181, %v5996
        %v11271 = vmul.f32 %v11187, %v5996
        %v11272 = vmul.f32 %v11193, %v5996
        %v11273 = vmul.f32 %v11199, %v5996
        %v11274 = vmul.f32 %v11205, %v5996
        %v11275 = vmul.f32 %v11211, %v5996
        %v11276 = vmul.f32 %v11217, %v5996
        %v11277 = vmul.f32 %v11223, %v5996
        %v11278 = vmul.f32 %v11229, %v5996
        %v11279 = vmul.f32 %v11235, %v5996
        %v11280 = vmul.f32 %v11241, %v5996
        %v11281 = vmul.f32 %v11247, %v5996
        %v11282 = vmul.f32 %v11253, %v5996
        %v11283 = vmul.f32 %v11259, %v5996
        %v11308 = vsel %vm6045, %v11264, %v11260
        %v11309 = vsel %vm6047, %v11268, %v11308
        %v11310 = vsel %vm6049, %v11272, %v11309
        %v11311 = vsel %vm6051, %v11276, %v11310
        %v11312 = vsel %vm6053, %v11280, %v11311
        %v11313 = vsel %vm6045, %v11265, %v11261
        %v11314 = vsel %vm6047, %v11269, %v11313
        %v11315 = vsel %vm6049, %v11273, %v11314
        %v11316 = vsel %vm6051, %v11277, %v11315
        %v11317 = vsel %vm6053, %v11281, %v11316
        %v11318 = vsel %vm6045, %v11266, %v11262
        %v11319 = vsel %vm6047, %v11270, %v11318
        %v11320 = vsel %vm6049, %v11274, %v11319
        %v11321 = vsel %vm6051, %v11278, %v11320
        %v11322 = vsel %vm6053, %v11282, %v11321
        %v11323 = vsel %vm6045, %v11267, %v11263
        %v11324 = vsel %vm6047, %v11271, %v11323
        %v11325 = vsel %vm6049, %v11275, %v11324
        %v11326 = vsel %vm6051, %v11279, %v11325
        %v11327 = vsel %vm6053, %v11283, %v11326
        %s11332 = scalar_lea.vmem %s219, 96
        %11333 = vst [vmem:[%s11332] sm:$0x3f] %v11312
        %11334 = vst [vmem:[%s11332 + $0x8] sm:$0x3f] %v11317
        %11335 = vst [vmem:[%s11332 + $0x10] sm:$0x3f] %v11322
        %11336 = vst [vmem:[%s11332 + $0x18] sm:$0x3f] %v11327
        %p11337 = scmp.lt.s32.totalorder %s18, 1
        %s11338 = scalar_select %p11337, %s18, 1
        %s11339 = smul.addr %s11338, 16
        %s11340 = smul.addr %s11339, 8
        %s11341 = scalar_lea.vmem %s3, %s11340
        // Predicated region
        $region45: #{tpu_custom_call.1} parent=31 // pred_check
          %p11342 = pneg %p104
        $region46: #{tpu_custom_call.1} parent=31 // pred_check_branch
          %11344 = sbr.rel (%p11342) target = $region48
        $region47: #{tpu_custom_call.1} parent=31 // pred_region
          _
        $region48: #{tpu_custom_call.1} parent=31 // pred_fallthru
          _
      $region32: #{tpu_custom_call.1} parent=5 // pred_fallthru
        _
      %p11345 = scmp.le.s32.totalorder 2, %s13
      // Predicated region
      $region49: #{tpu_custom_call.1} parent=5 // pred_check
        %p11346 = pneg %p11345
      $region50: #{tpu_custom_call.1} parent=5 // pred_check_branch
        %11348 = sbr.rel (%p11346) target = $region52
      $region51: #{tpu_custom_call.1} parent=5 // pred_region
        %s11349 = ssub.s32 %s13, 2
        // Predicated region
        $region53: #{tpu_custom_call.1} parent=51 // pred_check
          %p11350 = pneg %p110
        $region54: #{tpu_custom_call.1} parent=51 // pred_check_branch
          %11352 = sbr.rel (%p11350) target = $region56
        $region55: #{tpu_custom_call.1} parent=51 // pred_region
          %p11353 = scmp.lt.s32.totalorder %s19, 1
          %s11354 = scalar_select %p11353, %s19, 1
          %s11355 = smul.addr %s11354, 16
          %s11356 = smul.addr %s11355, 8
          %s11357 = scalar_lea.vmem %s3, %s11356
        $region56: #{tpu_custom_call.1} parent=51 // pred_fallthru
          _
      $region52: #{tpu_custom_call.1} parent=5 // pred_fallthru
        _
    $region6: #{tpu_custom_call.1} parent=1 // loop_footer
      %s17 = sadd.s32 1, %s13
    $region7: #{tpu_custom_call.1} parent=1 // loop_footer_branch
      %12 = sbr.rel target = $region3
    $region8: #{tpu_custom_call.1} parent=1 // loop_exit
      _
    %11358 = vsyncpa [#allocation3], 1
    %s11359 = scalar_lea.sflag [#allocation3], 1
    %11360 = vsyncpa %s11359, 1
    %11361 = vsyncpa [#allocation5], 1

</llo_original>
